<compile_context>
chip_gen: v5e
topology: v5e:2x2
jax: 0.10.0
libtpu: 0.0.40
codegen_flags: <defaults>
</compile_context>

<pallas_src>
import functools

import jax
import jax.numpy as jnp
from jax.experimental import pallas as pl
from jax.experimental.pallas import tpu as pltpu

LANE = 128


def _round_up(x, m):
    return ((x + m - 1) // m) * m


# ---------------------------------------------------------------------------
# Fused kernel: all residual blocks + output head in one pallas_call.
# ---------------------------------------------------------------------------
def _tcn_fused_kernel(*refs, has_ds, dilations, ksize, pad, seq_len):
    """refs = (x, [w1,b1,w2,b2,(wd,bd)] per block, w_head, b_head, out, buf_a, buf_b).

    Activations live in two time-major bf16 VMEM buffers of shape
    (pad + L, TILE_N, CP); rows [0, pad) hold causal zeros.
    """
    nb = len(dilations)
    it = iter(refs)
    x_ref = next(it)
    blk_refs = []
    for i in range(nb):
        w1, b1, w2, b2 = next(it), next(it), next(it), next(it)
        wd, bd = (next(it), next(it)) if has_ds[i] else (None, None)
        blk_refs.append((w1, b1, w2, b2, wd, bd))
    wh, bh = next(it), next(it)
    o_ref = next(it)
    buf_a, buf_b = next(it), next(it)

    _, T, C = buf_a.shape
    L = seq_len

    # Zero the causal-padding rows every grid step (each core owns its own
    # scratch under "parallel" semantics, so no program_id==0 guard is safe).
    zpad = jnp.zeros((pad, T, C), jnp.bfloat16)
    buf_a[:pad, :, :] = zpad
    buf_b[:pad, :, :] = zpad
    buf_a[pad:, :, :] = x_ref[...]                      # (L, T, C) bf16 block input

    def causal_conv(src, w_ref, b_ref, dilation):
        """Causal dilated conv from a (pad+L, T, C) bf16 buffer -> (L*T, C) f32."""
        acc = None
        for k in range(ksize):
            shift = (ksize - 1 - k) * dilation          # static python int
            xs = src[pad - shift: pad - shift + L, :, :]  # dim-0 slice: tile-aligned
            xs2 = xs.reshape(L * T, C)                  # pure view (T%8==0, C%128==0)
            t = jnp.dot(xs2, w_ref[k], preferred_element_type=jnp.float32)
            acc = t if acc is None else acc + t         # init from first tap
        return acc + b_ref[...]                         # (L*T, C) f32

    out_val = None
    for i, (w1, b1, w2, b2, wd, bd) in enumerate(blk_refs):
        d = dilations[i]
        # conv1 -> relu (dropout == identity at inference); f32 elementwise math
        h = jnp.maximum(causal_conv(buf_a, w1, b1, d), 0.0)
        buf_b[pad:, :, :] = h.reshape(L, T, C).astype(jnp.bfloat16)
        # conv2 -> relu
        h = jnp.maximum(causal_conv(buf_b, w2, b2, d), 0.0)
        # residual path (1x1 downsample conv iff channel count changes)
        xin = buf_a[pad:, :, :].reshape(L * T, C)
        if wd is not None:
            res = jnp.dot(xin, wd[...], preferred_element_type=jnp.float32) + bd[...]
        else:
            res = xin.astype(jnp.float32)
        out_val = jnp.maximum(h + res, 0.0).reshape(L, T, C)   # f32 block output
        if i + 1 < nb:
            buf_a[pad:, :, :] = out_val.astype(jnp.bfloat16)   # next block's input

    # Output head: the module keeps only the last timestep, so compute just it.
    x_last = out_val[L - 1]                             # (T, C) f32
    y = jnp.dot(x_last.astype(jnp.bfloat16), wh[...],
                preferred_element_type=jnp.float32) + bh[...]
    o_ref[...] = jax.nn.sigmoid(y)                      # (T, CP) lane-dense store


# ---------------------------------------------------------------------------
# Wrapper (pallas_call plumbing)
# ---------------------------------------------------------------------------
def _num_tensorcores():
    kind = jax.devices()[0].device_kind.lower()
    # Megacore / dual-TensorCore generations get a 2-step "parallel" grid.
    return 2 if any(t in kind for t in ("v7", "v5p", "v4", "v3")) else 1


def tcn_forward(params, x, *, tile_n=None):
    """x: (N, L, C_in) float32  ->  (N, 1) float32 (sigmoid of last timestep)."""
    blocks = params["blocks"]
    nb = len(blocks)
    K = params["kernel_size"]
    CP = params["cp"]
    N, L, Cin = x.shape

    dilations = tuple(2 ** i for i in range(nb))        # pytorch_tcn default
    pad = (K - 1) * dilations[-1]                       # exact causal pad rows
    # (time-major dim-0 slices need no sublane alignment, so no round-up)

    if tile_n is None:
        # One grid step per TensorCore, capped so the two bf16 activation
        # buffers stay within ~24 MiB (v7x 64 MiB VMEM, headroom for weights).
        per_row = 2 * (pad + L) * CP * 2
        cap = max(8, ((24 << 20) // per_row) // 8 * 8)
        tile_n = min(_round_up(max(1, -(-N // _num_tensorcores())), 8), cap)

    n_tiles = -(-N // tile_n)
    n_pad = n_tiles * tile_n
    # Time-major bf16 input (L, Npad, CP): half-width DMA, lanes stay dense.
    xp = (jnp.zeros((L, n_pad, CP), jnp.bfloat16)
          .at[:, :N, :Cin].set(jnp.transpose(x, (1, 0, 2)).astype(jnp.bfloat16)))

    has_ds = tuple("wd" in blk for blk in blocks)

    kernel = functools.partial(
        _tcn_fused_kernel,
        has_ds=has_ds, dilations=dilations, ksize=K, pad=pad, seq_len=L)

    # Explicit VMEM budget hint (matters on v7x / small default scoped limits).
    w_bytes = sum(int(a.size) * a.dtype.itemsize
                  for blk in blocks for a in blk.values())
    w_bytes += sum(int(a.size) * a.dtype.itemsize for a in params["head"].values())
    vmem_est = (2 * (pad + L) * tile_n * CP * 2          # bf16 activation scratch
                + 2 * L * tile_n * CP * 2                # double-buffered input block
                + 2 * tile_n * CP * 4                    # output block
                + 2 * w_bytes)                           # weights (worst case 2-buf)
    vmem_limit = int(min(max(2 * vmem_est, 32 << 20), 56 << 20))

    def const_spec(shape, pm):
        idx = lambda n: (0,) * len(shape)
        if pm is None:
            return pl.BlockSpec(shape, idx)
        return pl.BlockSpec(shape, idx, pipeline_mode=pm)

    def call(single_buffer_weights):
        pm = pl.Buffered(1) if single_buffer_weights else None
        w_spec = const_spec((K, CP, CP), pm)
        m_spec = const_spec((CP, CP), pm)
        b_spec = const_spec((1, CP), pm)

        in_arrays = [xp]
        in_specs = [pl.BlockSpec((L, tile_n, CP), lambda n: (0, n, 0))]
        for blk in blocks:
            in_arrays += [blk["w1"], blk["b1"], blk["w2"], blk["b2"]]
            in_specs += [w_spec, b_spec, w_spec, b_spec]
            if "wd" in blk:
                in_arrays += [blk["wd"], blk["bd"]]
                in_specs += [m_spec, b_spec]
        in_arrays += [params["head"]["w"], params["head"]["b"]]
        in_specs += [m_spec, b_spec]

        return pl.pallas_call(
            kernel,
            out_shape=jax.ShapeDtypeStruct((n_pad, CP), jnp.float32),
            grid=(n_tiles,),
            in_specs=in_specs,
            out_specs=pl.BlockSpec((tile_n, CP), lambda n: (n, 0)),
            scratch_shapes=[
                pltpu.VMEM((pad + L, tile_n, CP), jnp.bfloat16),  # block input
                pltpu.VMEM((pad + L, tile_n, CP), jnp.bfloat16),  # conv1 output
            ],
            compiler_params=pltpu.CompilerParams(
                dimension_semantics=("parallel",),
                vmem_limit_bytes=vmem_limit),
        )(*in_arrays)

    try:
        y = call(True)        # single-buffer the grid-invariant weights
    except Exception:         # pipeline_mode=pl.Buffered(1) unsupported -> default
        y = call(False)

    return y[:N, :1]


# ---------------------------------------------------------------------------
# Deterministic synthetic parameter init (shapes follow the PyTorch module).
# Weights are channel-padded to a lane-dense multiple of 128 and stored bf16
# (f32 accumulation in-kernel); biases stay f32.
# ---------------------------------------------------------------------------
def _xavier_uniform(key, shape, fan_in, fan_out):
    lim = (6.0 / (fan_in + fan_out)) ** 0.5
    return jax.random.uniform(key, shape, jnp.float32, -lim, lim)


def _pad_to(a, shape, dtype):
    pads = [(0, s - d) for d, s in zip(a.shape, shape)]
    return jnp.pad(a, pads).astype(dtype)


def init_tcn_params(key, input_size, channels, kernel_size):
    CP = _round_up(max([input_size, *channels, 1]), LANE)
    blocks = []
    in_ch = input_size
    for out_ch in channels:
        key, k1, k2, k3, k4 = jax.random.split(key, 5)
        w1 = _xavier_uniform(k1, (kernel_size, in_ch, out_ch),
                             in_ch * kernel_size, out_ch * kernel_size)
        w2 = _xavier_uniform(k2, (kernel_size, out_ch, out_ch),
                             out_ch * kernel_size, out_ch * kernel_size)
        b1 = 0.05 * jax.random.normal(k3, (1, out_ch), jnp.float32)
        b2 = 0.05 * jax.random.normal(k4, (1, out_ch), jnp.float32)
        blk = {
            "w1": _pad_to(w1, (kernel_size, CP, CP), jnp.bfloat16),
            "b1": _pad_to(b1, (1, CP), jnp.float32),
            "w2": _pad_to(w2, (kernel_size, CP, CP), jnp.bfloat16),
            "b2": _pad_to(b2, (1, CP), jnp.float32),
        }
        if in_ch != out_ch:            # 1x1 "downsample" conv on the residual path
            key, kd = jax.random.split(key)
            wd = _xavier_uniform(kd, (in_ch, out_ch), in_ch, out_ch)
            blk["wd"] = _pad_to(wd, (CP, CP), jnp.bfloat16)
            blk["bd"] = jnp.zeros((1, CP), jnp.float32)
        blocks.append(blk)
        in_ch = out_ch
    key, kh = jax.random.split(key)
    wh = _xavier_uniform(kh, (in_ch, 1), in_ch, 1)         # output_projection = 1
    head = {"w": _pad_to(wh, (CP, CP), jnp.bfloat16),
            "b": jnp.zeros((1, CP), jnp.float32)}
    return {"blocks": blocks, "head": head,
            "kernel_size": kernel_size, "cp": CP}


# ---------------------------------------------------------------------------
# Pure-JAX reference (f32 math on the same padded weights) for validation.
# ---------------------------------------------------------------------------
def _tcn_reference(params, x):
    blocks = params["blocks"]
    K = params["kernel_size"]
    CP = params["cp"]
    N, L, Cin = x.shape
    h = jnp.zeros((N, L, CP), jnp.float32).at[:, :, :Cin].set(x)

    def conv(z, w, b, d):
        w = w.astype(jnp.float32)
        p = (K - 1) * d
        zp = jnp.pad(z, ((0, 0), (p, 0), (0, 0)))
        acc = 0.0
        for k in range(K):
            shift = (K - 1 - k) * d
            acc = acc + jnp.einsum("nlc,co->nlo",
                                   zp[:, p - shift: p - shift + L, :], w[k])
        return acc + b

    for i, blk in enumerate(blocks):
        d = 2 ** i
        a = jax.nn.relu(conv(h, blk["w1"], blk["b1"], d))
        a = jax.nn.relu(conv(a, blk["w2"], blk["b2"], d))
        if "wd" in blk:
            res = jnp.einsum("nlc,co->nlo", h,
                             blk["wd"].astype(jnp.float32)) + blk["bd"]
        else:
            res = h
        h = jax.nn.relu(a + res)
    y = h[:, -1, :] @ params["head"]["w"].astype(jnp.float32) + params["head"]["b"]
    return jax.nn.sigmoid(y)[:, :1]


# ---------------------------------------------------------------------------
if __name__ == "__main__":
    key = jax.random.PRNGKey(0)
    N, L = 16, 16                # batch, seq len
    input_size = 16              # small stand-in for the default 116 features
    channels = (24, 24)          # block 1 has a downsample residual, block 2 identity
    kernel_size = 4              # pytorch_tcn default

    pkey, xkey = jax.random.split(key)
    params = init_tcn_params(pkey, input_size, channels, kernel_size)
    x = jax.random.normal(xkey, (N, L, input_size), jnp.float32)   # NLC input

    out = jax.block_until_ready(tcn_forward(params, x))
    assert out.shape == (N, 1)
    assert bool(jnp.all((out >= 0.0) & (out <= 1.0)))              # sigmoid range

    ref = _tcn_reference(params, x)
    assert bool(jnp.all(jnp.abs(out - ref) < 5e-2)), "mismatch vs f32 reference"
    print("KERNEL_OK")
</pallas_src>

<mosaic_0001>
module attributes {stable_mosaic.version = 11 : i64} {
  func.func @_tcn_fused_kernel(%arg0: i32, %arg1: memref<16x16x128xbf16, #tpu.memory_space<vmem>>, %arg2: memref<4x128x128xbf16, #tpu.memory_space<vmem>>, %arg3: memref<1x128xf32, #tpu.memory_space<vmem>>, %arg4: memref<4x128x128xbf16, #tpu.memory_space<vmem>>, %arg5: memref<1x128xf32, #tpu.memory_space<vmem>>, %arg6: memref<128x128xbf16, #tpu.memory_space<vmem>>, %arg7: memref<1x128xf32, #tpu.memory_space<vmem>>, %arg8: memref<4x128x128xbf16, #tpu.memory_space<vmem>>, %arg9: memref<1x128xf32, #tpu.memory_space<vmem>>, %arg10: memref<4x128x128xbf16, #tpu.memory_space<vmem>>, %arg11: memref<1x128xf32, #tpu.memory_space<vmem>>, %arg12: memref<128x128xbf16, #tpu.memory_space<vmem>>, %arg13: memref<1x128xf32, #tpu.memory_space<vmem>>, %arg14: memref<16x128xf32, #tpu.memory_space<vmem>>, %arg15: memref<22x16x128xbf16, #tpu.memory_space<vmem>>, %arg16: memref<22x16x128xbf16, #tpu.memory_space<vmem>>) attributes {dimension_semantics = [#tpu.dimension_semantics<parallel>], iteration_bounds = array<i64: 1>, scalar_prefetch = 0 : i64, scratch_operands = 2 : i64, tpu.core_type = #tpu.core_type<tc>, window_params = [{transform_indices = @transform_0, window_bounds = array<i64: 16, 16, 128>}, {pipeline_mode = #tpu.pipeline_mode<synchronous>, transform_indices = @transform_1, window_bounds = array<i64: 4, 128, 128>}, {pipeline_mode = #tpu.pipeline_mode<synchronous>, transform_indices = @transform_2, window_bounds = array<i64: 1, 128>}, {pipeline_mode = #tpu.pipeline_mode<synchronous>, transform_indices = @transform_3, window_bounds = array<i64: 4, 128, 128>}, {pipeline_mode = #tpu.pipeline_mode<synchronous>, transform_indices = @transform_4, window_bounds = array<i64: 1, 128>}, {pipeline_mode = #tpu.pipeline_mode<synchronous>, transform_indices = @transform_5, window_bounds = array<i64: 128, 128>}, {pipeline_mode = #tpu.pipeline_mode<synchronous>, transform_indices = @transform_6, window_bounds = array<i64: 1, 128>}, {pipeline_mode = #tpu.pipeline_mode<synchronous>, transform_indices = @transform_7, window_bounds = array<i64: 4, 128, 128>}, {pipeline_mode = #tpu.pipeline_mode<synchronous>, transform_indices = @transform_8, window_bounds = array<i64: 1, 128>}, {pipeline_mode = #tpu.pipeline_mode<synchronous>, transform_indices = @transform_9, window_bounds = array<i64: 4, 128, 128>}, {pipeline_mode = #tpu.pipeline_mode<synchronous>, transform_indices = @transform_10, window_bounds = array<i64: 1, 128>}, {pipeline_mode = #tpu.pipeline_mode<synchronous>, transform_indices = @transform_11, window_bounds = array<i64: 128, 128>}, {pipeline_mode = #tpu.pipeline_mode<synchronous>, transform_indices = @transform_12, window_bounds = array<i64: 1, 128>}, {transform_indices = @transform_13, window_bounds = array<i64: 16, 128>}]} {
    %cst = arith.constant 0.000000e+00 : bf16
    %0 = vector.broadcast %cst : bf16 to vector<6x16x128xbf16>
    %c0 = arith.constant 0 : index
    %c0_0 = arith.constant 0 : index
    %c0_1 = arith.constant 0 : index
    %1 = vector.load %arg15[%c0, %c0_0, %c0_1] : memref<22x16x128xbf16, #tpu.memory_space<vmem>>, vector<6x16x128xbf16>
    tpu.vector_store %arg15[%c0, %c0_0, %c0_1], %0 {strides = array<i32>} : memref<22x16x128xbf16, #tpu.memory_space<vmem>>, vector<6x16x128xbf16>,
    %c0_2 = arith.constant 0 : index
    %c0_3 = arith.constant 0 : index
    %c0_4 = arith.constant 0 : index
    %2 = vector.load %arg16[%c0_2, %c0_3, %c0_4] : memref<22x16x128xbf16, #tpu.memory_space<vmem>>, vector<6x16x128xbf16>
    tpu.vector_store %arg16[%c0_2, %c0_3, %c0_4], %0 {strides = array<i32>} : memref<22x16x128xbf16, #tpu.memory_space<vmem>>, vector<6x16x128xbf16>,
    %c0_5 = arith.constant 0 : index
    %c0_6 = arith.constant 0 : index
    %c0_7 = arith.constant 0 : index
    %3 = vector.load %arg1[%c0_5, %c0_6, %c0_7] : memref<16x16x128xbf16, #tpu.memory_space<vmem>>, vector<16x16x128xbf16>
    %c6 = arith.constant 6 : index
    %c0_8 = arith.constant 0 : index
    %c0_9 = arith.constant 0 : index
    %4 = vector.load %arg15[%c6, %c0_8, %c0_9] : memref<22x16x128xbf16, #tpu.memory_space<vmem>>, vector<16x16x128xbf16>
    tpu.vector_store %arg15[%c6, %c0_8, %c0_9], %3 {strides = array<i32>} : memref<22x16x128xbf16, #tpu.memory_space<vmem>>, vector<16x16x128xbf16>,
    %c3 = arith.constant 3 : index
    %c0_10 = arith.constant 0 : index
    %c0_11 = arith.constant 0 : index
    %5 = vector.load %arg15[%c3, %c0_10, %c0_11] : memref<22x16x128xbf16, #tpu.memory_space<vmem>>, vector<16x16x128xbf16>
    %6 = vector.shape_cast %5 : vector<16x16x128xbf16> to vector<256x128xbf16>
    %c0_12 = arith.constant 0 : index
    %c0_13 = arith.constant 0 : index
    %c0_14 = arith.constant 0 : index
    %7 = vector.load %arg2[%c0_12, %c0_13, %c0_14] : memref<4x128x128xbf16, #tpu.memory_space<vmem>>, vector<1x128x128xbf16>
    %8 = vector.shape_cast %7 : vector<1x128x128xbf16> to vector<128x128xbf16>
    %cst_15 = arith.constant dense<0.000000e+00> : vector<256x128xf32>
    %9 = tpu.matmul %6, %8, %cst_15 {dimension_numbers = #tpu.dot_dimension_numbers<[1], [0], [0], [1], [0, 0, 1, 1], [], []>} : vector<256x128xbf16>, vector<128x128xbf16>, vector<256x128xf32> -> vector<256x128xf32>
    %c4 = arith.constant 4 : index
    %c0_16 = arith.constant 0 : index
    %c0_17 = arith.constant 0 : index
    %10 = vector.load %arg15[%c4, %c0_16, %c0_17] : memref<22x16x128xbf16, #tpu.memory_space<vmem>>, vector<16x16x128xbf16>
    %11 = vector.shape_cast %10 : vector<16x16x128xbf16> to vector<256x128xbf16>
    %c1 = arith.constant 1 : index
    %c0_18 = arith.constant 0 : index
    %c0_19 = arith.constant 0 : index
    %12 = vector.load %arg2[%c1, %c0_18, %c0_19] : memref<4x128x128xbf16, #tpu.memory_space<vmem>>, vector<1x128x128xbf16>
    %13 = vector.shape_cast %12 : vector<1x128x128xbf16> to vector<128x128xbf16>
    %cst_20 = arith.constant dense<0.000000e+00> : vector<256x128xf32>
    %14 = tpu.matmul %11, %13, %cst_20 {dimension_numbers = #tpu.dot_dimension_numbers<[1], [0], [0], [1], [0, 0, 1, 1], [], []>} : vector<256x128xbf16>, vector<128x128xbf16>, vector<256x128xf32> -> vector<256x128xf32>
    %15 = arith.addf %9, %14 : vector<256x128xf32>
    %c5 = arith.constant 5 : index
    %c0_21 = arith.constant 0 : index
    %c0_22 = arith.constant 0 : index
    %16 = vector.load %arg15[%c5, %c0_21, %c0_22] : memref<22x16x128xbf16, #tpu.memory_space<vmem>>, vector<16x16x128xbf16>
    %17 = vector.shape_cast %16 : vector<16x16x128xbf16> to vector<256x128xbf16>
    %c2 = arith.constant 2 : index
    %c0_23 = arith.constant 0 : index
    %c0_24 = arith.constant 0 : index
    %18 = vector.load %arg2[%c2, %c0_23, %c0_24] : memref<4x128x128xbf16, #tpu.memory_space<vmem>>, vector<1x128x128xbf16>
    %19 = vector.shape_cast %18 : vector<1x128x128xbf16> to vector<128x128xbf16>
    %cst_25 = arith.constant dense<0.000000e+00> : vector<256x128xf32>
    %20 = tpu.matmul %17, %19, %cst_25 {dimension_numbers = #tpu.dot_dimension_numbers<[1], [0], [0], [1], [0, 0, 1, 1], [], []>} : vector<256x128xbf16>, vector<128x128xbf16>, vector<256x128xf32> -> vector<256x128xf32>
    %21 = arith.addf %15, %20 : vector<256x128xf32>
    %c6_26 = arith.constant 6 : index
    %c0_27 = arith.constant 0 : index
    %c0_28 = arith.constant 0 : index
    %22 = vector.load %arg15[%c6_26, %c0_27, %c0_28] : memref<22x16x128xbf16, #tpu.memory_space<vmem>>, vector<16x16x128xbf16>
    %23 = vector.shape_cast %22 : vector<16x16x128xbf16> to vector<256x128xbf16>
    %c3_29 = arith.constant 3 : index
    %c0_30 = arith.constant 0 : index
    %c0_31 = arith.constant 0 : index
    %24 = vector.load %arg2[%c3_29, %c0_30, %c0_31] : memref<4x128x128xbf16, #tpu.memory_space<vmem>>, vector<1x128x128xbf16>
    %25 = vector.shape_cast %24 : vector<1x128x128xbf16> to vector<128x128xbf16>
    %cst_32 = arith.constant dense<0.000000e+00> : vector<256x128xf32>
    %26 = tpu.matmul %23, %25, %cst_32 {dimension_numbers = #tpu.dot_dimension_numbers<[1], [0], [0], [1], [0, 0, 1, 1], [], []>} : vector<256x128xbf16>, vector<128x128xbf16>, vector<256x128xf32> -> vector<256x128xf32>
    %27 = arith.addf %21, %26 : vector<256x128xf32>
    %c0_33 = arith.constant 0 : index
    %c0_34 = arith.constant 0 : index
    %28 = vector.load %arg3[%c0_33, %c0_34] : memref<1x128xf32, #tpu.memory_space<vmem>>, vector<1x128xf32>
    %29 = vector.broadcast %28 : vector<1x128xf32> to vector<256x128xf32>
    %30 = arith.addf %27, %29 : vector<256x128xf32>
    %cst_35 = arith.constant 0.000000e+00 : f32
    %31 = vector.broadcast %cst_35 : f32 to vector<256x128xf32>
    %32 = arith.maximumf %30, %31 : vector<256x128xf32>
    %33 = vector.shape_cast %32 : vector<256x128xf32> to vector<16x16x128xf32>
    %34 = arith.truncf %33 : vector<16x16x128xf32> to vector<16x16x128xbf16>
    %c6_36 = arith.constant 6 : index
    %c0_37 = arith.constant 0 : index
    %c0_38 = arith.constant 0 : index
    %35 = vector.load %arg16[%c6_36, %c0_37, %c0_38] : memref<22x16x128xbf16, #tpu.memory_space<vmem>>, vector<16x16x128xbf16>
    tpu.vector_store %arg16[%c6_36, %c0_37, %c0_38], %34 {strides = array<i32>} : memref<22x16x128xbf16, #tpu.memory_space<vmem>>, vector<16x16x128xbf16>,
    %c3_39 = arith.constant 3 : index
    %c0_40 = arith.constant 0 : index
    %c0_41 = arith.constant 0 : index
    %36 = vector.load %arg16[%c3_39, %c0_40, %c0_41] : memref<22x16x128xbf16, #tpu.memory_space<vmem>>, vector<16x16x128xbf16>
    %37 = vector.shape_cast %36 : vector<16x16x128xbf16> to vector<256x128xbf16>
    %c0_42 = arith.constant 0 : index
    %c0_43 = arith.constant 0 : index
    %c0_44 = arith.constant 0 : index
    %38 = vector.load %arg4[%c0_42, %c0_43, %c0_44] : memref<4x128x128xbf16, #tpu.memory_space<vmem>>, vector<1x128x128xbf16>
    %39 = vector.shape_cast %38 : vector<1x128x128xbf16> to vector<128x128xbf16>
    %cst_45 = arith.constant dense<0.000000e+00> : vector<256x128xf32>
    %40 = tpu.matmul %37, %39, %cst_45 {dimension_numbers = #tpu.dot_dimension_numbers<[1], [0], [0], [1], [0, 0, 1, 1], [], []>} : vector<256x128xbf16>, vector<128x128xbf16>, vector<256x128xf32> -> vector<256x128xf32>
    %c4_46 = arith.constant 4 : index
    %c0_47 = arith.constant 0 : index
    %c0_48 = arith.constant 0 : index
    %41 = vector.load %arg16[%c4_46, %c0_47, %c0_48] : memref<22x16x128xbf16, #tpu.memory_space<vmem>>, vector<16x16x128xbf16>
    %42 = vector.shape_cast %41 : vector<16x16x128xbf16> to vector<256x128xbf16>
    %c1_49 = arith.constant 1 : index
    %c0_50 = arith.constant 0 : index
    %c0_51 = arith.constant 0 : index
    %43 = vector.load %arg4[%c1_49, %c0_50, %c0_51] : memref<4x128x128xbf16, #tpu.memory_space<vmem>>, vector<1x128x128xbf16>
    %44 = vector.shape_cast %43 : vector<1x128x128xbf16> to vector<128x128xbf16>
    %cst_52 = arith.constant dense<0.000000e+00> : vector<256x128xf32>
    %45 = tpu.matmul %42, %44, %cst_52 {dimension_numbers = #tpu.dot_dimension_numbers<[1], [0], [0], [1], [0, 0, 1, 1], [], []>} : vector<256x128xbf16>, vector<128x128xbf16>, vector<256x128xf32> -> vector<256x128xf32>
    %46 = arith.addf %40, %45 : vector<256x128xf32>
    %c5_53 = arith.constant 5 : index
    %c0_54 = arith.constant 0 : index
    %c0_55 = arith.constant 0 : index
    %47 = vector.load %arg16[%c5_53, %c0_54, %c0_55] : memref<22x16x128xbf16, #tpu.memory_space<vmem>>, vector<16x16x128xbf16>
    %48 = vector.shape_cast %47 : vector<16x16x128xbf16> to vector<256x128xbf16>
    %c2_56 = arith.constant 2 : index
    %c0_57 = arith.constant 0 : index
    %c0_58 = arith.constant 0 : index
    %49 = vector.load %arg4[%c2_56, %c0_57, %c0_58] : memref<4x128x128xbf16, #tpu.memory_space<vmem>>, vector<1x128x128xbf16>
    %50 = vector.shape_cast %49 : vector<1x128x128xbf16> to vector<128x128xbf16>
    %cst_59 = arith.constant dense<0.000000e+00> : vector<256x128xf32>
    %51 = tpu.matmul %48, %50, %cst_59 {dimension_numbers = #tpu.dot_dimension_numbers<[1], [0], [0], [1], [0, 0, 1, 1], [], []>} : vector<256x128xbf16>, vector<128x128xbf16>, vector<256x128xf32> -> vector<256x128xf32>
    %52 = arith.addf %46, %51 : vector<256x128xf32>
    %c6_60 = arith.constant 6 : index
    %c0_61 = arith.constant 0 : index
    %c0_62 = arith.constant 0 : index
    %53 = vector.load %arg16[%c6_60, %c0_61, %c0_62] : memref<22x16x128xbf16, #tpu.memory_space<vmem>>, vector<16x16x128xbf16>
    %54 = vector.shape_cast %53 : vector<16x16x128xbf16> to vector<256x128xbf16>
    %c3_63 = arith.constant 3 : index
    %c0_64 = arith.constant 0 : index
    %c0_65 = arith.constant 0 : index
    %55 = vector.load %arg4[%c3_63, %c0_64, %c0_65] : memref<4x128x128xbf16, #tpu.memory_space<vmem>>, vector<1x128x128xbf16>
    %56 = vector.shape_cast %55 : vector<1x128x128xbf16> to vector<128x128xbf16>
    %cst_66 = arith.constant dense<0.000000e+00> : vector<256x128xf32>
    %57 = tpu.matmul %54, %56, %cst_66 {dimension_numbers = #tpu.dot_dimension_numbers<[1], [0], [0], [1], [0, 0, 1, 1], [], []>} : vector<256x128xbf16>, vector<128x128xbf16>, vector<256x128xf32> -> vector<256x128xf32>
    %58 = arith.addf %52, %57 : vector<256x128xf32>
    %c0_67 = arith.constant 0 : index
    %c0_68 = arith.constant 0 : index
    %59 = vector.load %arg5[%c0_67, %c0_68] : memref<1x128xf32, #tpu.memory_space<vmem>>, vector<1x128xf32>
    %60 = vector.broadcast %59 : vector<1x128xf32> to vector<256x128xf32>
    %61 = arith.addf %58, %60 : vector<256x128xf32>
    %cst_69 = arith.constant 0.000000e+00 : f32
    %62 = vector.broadcast %cst_69 : f32 to vector<256x128xf32>
    %63 = arith.maximumf %61, %62 : vector<256x128xf32>
    %c6_70 = arith.constant 6 : index
    %c0_71 = arith.constant 0 : index
    %c0_72 = arith.constant 0 : index
    %64 = vector.load %arg15[%c6_70, %c0_71, %c0_72] : memref<22x16x128xbf16, #tpu.memory_space<vmem>>, vector<16x16x128xbf16>
    %65 = vector.shape_cast %64 : vector<16x16x128xbf16> to vector<256x128xbf16>
    %c0_73 = arith.constant 0 : index
    %c0_74 = arith.constant 0 : index
    %66 = vector.load %arg6[%c0_73, %c0_74] : memref<128x128xbf16, #tpu.memory_space<vmem>>, vector<128x128xbf16>
    %cst_75 = arith.constant dense<0.000000e+00> : vector<256x128xf32>
    %67 = tpu.matmul %65, %66, %cst_75 {dimension_numbers = #tpu.dot_dimension_numbers<[1], [0], [0], [1], [0, 0, 1, 1], [], []>} : vector<256x128xbf16>, vector<128x128xbf16>, vector<256x128xf32> -> vector<256x128xf32>
    %c0_76 = arith.constant 0 : index
    %c0_77 = arith.constant 0 : index
    %68 = vector.load %arg7[%c0_76, %c0_77] : memref<1x128xf32, #tpu.memory_space<vmem>>, vector<1x128xf32>
    %69 = vector.broadcast %68 : vector<1x128xf32> to vector<256x128xf32>
    %70 = arith.addf %67, %69 : vector<256x128xf32>
    %71 = arith.addf %63, %70 : vector<256x128xf32>
    %cst_78 = arith.constant 0.000000e+00 : f32
    %72 = vector.broadcast %cst_78 : f32 to vector<256x128xf32>
    %73 = arith.maximumf %71, %72 : vector<256x128xf32>
    %74 = vector.shape_cast %73 : vector<256x128xf32> to vector<16x16x128xf32>
    %75 = arith.truncf %74 : vector<16x16x128xf32> to vector<16x16x128xbf16>
    %c6_79 = arith.constant 6 : index
    %c0_80 = arith.constant 0 : index
    %c0_81 = arith.constant 0 : index
    %76 = vector.load %arg15[%c6_79, %c0_80, %c0_81] : memref<22x16x128xbf16, #tpu.memory_space<vmem>>, vector<16x16x128xbf16>
    tpu.vector_store %arg15[%c6_79, %c0_80, %c0_81], %75 {strides = array<i32>} : memref<22x16x128xbf16, #tpu.memory_space<vmem>>, vector<16x16x128xbf16>,
    %c0_82 = arith.constant 0 : index
    %c0_83 = arith.constant 0 : index
    %c0_84 = arith.constant 0 : index
    %77 = vector.load %arg15[%c0_82, %c0_83, %c0_84] : memref<22x16x128xbf16, #tpu.memory_space<vmem>>, vector<16x16x128xbf16>
    %78 = vector.shape_cast %77 : vector<16x16x128xbf16> to vector<256x128xbf16>
    %c0_85 = arith.constant 0 : index
    %c0_86 = arith.constant 0 : index
    %c0_87 = arith.constant 0 : index
    %79 = vector.load %arg8[%c0_85, %c0_86, %c0_87] : memref<4x128x128xbf16, #tpu.memory_space<vmem>>, vector<1x128x128xbf16>
    %80 = vector.shape_cast %79 : vector<1x128x128xbf16> to vector<128x128xbf16>
    %cst_88 = arith.constant dense<0.000000e+00> : vector<256x128xf32>
    %81 = tpu.matmul %78, %80, %cst_88 {dimension_numbers = #tpu.dot_dimension_numbers<[1], [0], [0], [1], [0, 0, 1, 1], [], []>} : vector<256x128xbf16>, vector<128x128xbf16>, vector<256x128xf32> -> vector<256x128xf32>
    %c2_89 = arith.constant 2 : index
    %c0_90 = arith.constant 0 : index
    %c0_91 = arith.constant 0 : index
    %82 = vector.load %arg15[%c2_89, %c0_90, %c0_91] : memref<22x16x128xbf16, #tpu.memory_space<vmem>>, vector<16x16x128xbf16>
    %83 = vector.shape_cast %82 : vector<16x16x128xbf16> to vector<256x128xbf16>
    %c1_92 = arith.constant 1 : index
    %c0_93 = arith.constant 0 : index
    %c0_94 = arith.constant 0 : index
    %84 = vector.load %arg8[%c1_92, %c0_93, %c0_94] : memref<4x128x128xbf16, #tpu.memory_space<vmem>>, vector<1x128x128xbf16>
    %85 = vector.shape_cast %84 : vector<1x128x128xbf16> to vector<128x128xbf16>
    %cst_95 = arith.constant dense<0.000000e+00> : vector<256x128xf32>
    %86 = tpu.matmul %83, %85, %cst_95 {dimension_numbers = #tpu.dot_dimension_numbers<[1], [0], [0], [1], [0, 0, 1, 1], [], []>} : vector<256x128xbf16>, vector<128x128xbf16>, vector<256x128xf32> -> vector<256x128xf32>
    %87 = arith.addf %81, %86 : vector<256x128xf32>
    %c4_96 = arith.constant 4 : index
    %c0_97 = arith.constant 0 : index
    %c0_98 = arith.constant 0 : index
    %88 = vector.load %arg15[%c4_96, %c0_97, %c0_98] : memref<22x16x128xbf16, #tpu.memory_space<vmem>>, vector<16x16x128xbf16>
    %89 = vector.shape_cast %88 : vector<16x16x128xbf16> to vector<256x128xbf16>
    %c2_99 = arith.constant 2 : index
    %c0_100 = arith.constant 0 : index
    %c0_101 = arith.constant 0 : index
    %90 = vector.load %arg8[%c2_99, %c0_100, %c0_101] : memref<4x128x128xbf16, #tpu.memory_space<vmem>>, vector<1x128x128xbf16>
    %91 = vector.shape_cast %90 : vector<1x128x128xbf16> to vector<128x128xbf16>
    %cst_102 = arith.constant dense<0.000000e+00> : vector<256x128xf32>
    %92 = tpu.matmul %89, %91, %cst_102 {dimension_numbers = #tpu.dot_dimension_numbers<[1], [0], [0], [1], [0, 0, 1, 1], [], []>} : vector<256x128xbf16>, vector<128x128xbf16>, vector<256x128xf32> -> vector<256x128xf32>
    %93 = arith.addf %87, %92 : vector<256x128xf32>
    %c6_103 = arith.constant 6 : index
    %c0_104 = arith.constant 0 : index
    %c0_105 = arith.constant 0 : index
    %94 = vector.load %arg15[%c6_103, %c0_104, %c0_105] : memref<22x16x128xbf16, #tpu.memory_space<vmem>>, vector<16x16x128xbf16>
    %95 = vector.shape_cast %94 : vector<16x16x128xbf16> to vector<256x128xbf16>
    %c3_106 = arith.constant 3 : index
    %c0_107 = arith.constant 0 : index
    %c0_108 = arith.constant 0 : index
    %96 = vector.load %arg8[%c3_106, %c0_107, %c0_108] : memref<4x128x128xbf16, #tpu.memory_space<vmem>>, vector<1x128x128xbf16>
    %97 = vector.shape_cast %96 : vector<1x128x128xbf16> to vector<128x128xbf16>
    %cst_109 = arith.constant dense<0.000000e+00> : vector<256x128xf32>
    %98 = tpu.matmul %95, %97, %cst_109 {dimension_numbers = #tpu.dot_dimension_numbers<[1], [0], [0], [1], [0, 0, 1, 1], [], []>} : vector<256x128xbf16>, vector<128x128xbf16>, vector<256x128xf32> -> vector<256x128xf32>
    %99 = arith.addf %93, %98 : vector<256x128xf32>
    %c0_110 = arith.constant 0 : index
    %c0_111 = arith.constant 0 : index
    %100 = vector.load %arg9[%c0_110, %c0_111] : memref<1x128xf32, #tpu.memory_space<vmem>>, vector<1x128xf32>
    %101 = vector.broadcast %100 : vector<1x128xf32> to vector<256x128xf32>
    %102 = arith.addf %99, %101 : vector<256x128xf32>
    %cst_112 = arith.constant 0.000000e+00 : f32
    %103 = vector.broadcast %cst_112 : f32 to vector<256x128xf32>
    %104 = arith.maximumf %102, %103 : vector<256x128xf32>
    %105 = vector.shape_cast %104 : vector<256x128xf32> to vector<16x16x128xf32>
    %106 = arith.truncf %105 : vector<16x16x128xf32> to vector<16x16x128xbf16>
    %c6_113 = arith.constant 6 : index
    %c0_114 = arith.constant 0 : index
    %c0_115 = arith.constant 0 : index
    %107 = vector.load %arg16[%c6_113, %c0_114, %c0_115] : memref<22x16x128xbf16, #tpu.memory_space<vmem>>, vector<16x16x128xbf16>
    tpu.vector_store %arg16[%c6_113, %c0_114, %c0_115], %106 {strides = array<i32>} : memref<22x16x128xbf16, #tpu.memory_space<vmem>>, vector<16x16x128xbf16>,
    %c0_116 = arith.constant 0 : index
    %c0_117 = arith.constant 0 : index
    %c0_118 = arith.constant 0 : index
    %108 = vector.load %arg16[%c0_116, %c0_117, %c0_118] : memref<22x16x128xbf16, #tpu.memory_space<vmem>>, vector<16x16x128xbf16>
    %109 = vector.shape_cast %108 : vector<16x16x128xbf16> to vector<256x128xbf16>
    %c0_119 = arith.constant 0 : index
    %c0_120 = arith.constant 0 : index
    %c0_121 = arith.constant 0 : index
    %110 = vector.load %arg10[%c0_119, %c0_120, %c0_121] : memref<4x128x128xbf16, #tpu.memory_space<vmem>>, vector<1x128x128xbf16>
    %111 = vector.shape_cast %110 : vector<1x128x128xbf16> to vector<128x128xbf16>
    %cst_122 = arith.constant dense<0.000000e+00> : vector<256x128xf32>
    %112 = tpu.matmul %109, %111, %cst_122 {dimension_numbers = #tpu.dot_dimension_numbers<[1], [0], [0], [1], [0, 0, 1, 1], [], []>} : vector<256x128xbf16>, vector<128x128xbf16>, vector<256x128xf32> -> vector<256x128xf32>
    %c2_123 = arith.constant 2 : index
    %c0_124 = arith.constant 0 : index
    %c0_125 = arith.constant 0 : index
    %113 = vector.load %arg16[%c2_123, %c0_124, %c0_125] : memref<22x16x128xbf16, #tpu.memory_space<vmem>>, vector<16x16x128xbf16>
    %114 = vector.shape_cast %113 : vector<16x16x128xbf16> to vector<256x128xbf16>
    %c1_126 = arith.constant 1 : index
    %c0_127 = arith.constant 0 : index
    %c0_128 = arith.constant 0 : index
    %115 = vector.load %arg10[%c1_126, %c0_127, %c0_128] : memref<4x128x128xbf16, #tpu.memory_space<vmem>>, vector<1x128x128xbf16>
    %116 = vector.shape_cast %115 : vector<1x128x128xbf16> to vector<128x128xbf16>
    %cst_129 = arith.constant dense<0.000000e+00> : vector<256x128xf32>
    %117 = tpu.matmul %114, %116, %cst_129 {dimension_numbers = #tpu.dot_dimension_numbers<[1], [0], [0], [1], [0, 0, 1, 1], [], []>} : vector<256x128xbf16>, vector<128x128xbf16>, vector<256x128xf32> -> vector<256x128xf32>
    %118 = arith.addf %112, %117 : vector<256x128xf32>
    %c4_130 = arith.constant 4 : index
    %c0_131 = arith.constant 0 : index
    %c0_132 = arith.constant 0 : index
    %119 = vector.load %arg16[%c4_130, %c0_131, %c0_132] : memref<22x16x128xbf16, #tpu.memory_space<vmem>>, vector<16x16x128xbf16>
    %120 = vector.shape_cast %119 : vector<16x16x128xbf16> to vector<256x128xbf16>
    %c2_133 = arith.constant 2 : index
    %c0_134 = arith.constant 0 : index
    %c0_135 = arith.constant 0 : index
    %121 = vector.load %arg10[%c2_133, %c0_134, %c0_135] : memref<4x128x128xbf16, #tpu.memory_space<vmem>>, vector<1x128x128xbf16>
    %122 = vector.shape_cast %121 : vector<1x128x128xbf16> to vector<128x128xbf16>
    %cst_136 = arith.constant dense<0.000000e+00> : vector<256x128xf32>
    %123 = tpu.matmul %120, %122, %cst_136 {dimension_numbers = #tpu.dot_dimension_numbers<[1], [0], [0], [1], [0, 0, 1, 1], [], []>} : vector<256x128xbf16>, vector<128x128xbf16>, vector<256x128xf32> -> vector<256x128xf32>
    %124 = arith.addf %118, %123 : vector<256x128xf32>
    %c6_137 = arith.constant 6 : index
    %c0_138 = arith.constant 0 : index
    %c0_139 = arith.constant 0 : index
    %125 = vector.load %arg16[%c6_137, %c0_138, %c0_139] : memref<22x16x128xbf16, #tpu.memory_space<vmem>>, vector<16x16x128xbf16>
    %126 = vector.shape_cast %125 : vector<16x16x128xbf16> to vector<256x128xbf16>
    %c3_140 = arith.constant 3 : index
    %c0_141 = arith.constant 0 : index
    %c0_142 = arith.constant 0 : index
    %127 = vector.load %arg10[%c3_140, %c0_141, %c0_142] : memref<4x128x128xbf16, #tpu.memory_space<vmem>>, vector<1x128x128xbf16>
    %128 = vector.shape_cast %127 : vector<1x128x128xbf16> to vector<128x128xbf16>
    %cst_143 = arith.constant dense<0.000000e+00> : vector<256x128xf32>
    %129 = tpu.matmul %126, %128, %cst_143 {dimension_numbers = #tpu.dot_dimension_numbers<[1], [0], [0], [1], [0, 0, 1, 1], [], []>} : vector<256x128xbf16>, vector<128x128xbf16>, vector<256x128xf32> -> vector<256x128xf32>
    %130 = arith.addf %124, %129 : vector<256x128xf32>
    %c0_144 = arith.constant 0 : index
    %c0_145 = arith.constant 0 : index
    %131 = vector.load %arg11[%c0_144, %c0_145] : memref<1x128xf32, #tpu.memory_space<vmem>>, vector<1x128xf32>
    %132 = vector.broadcast %131 : vector<1x128xf32> to vector<256x128xf32>
    %133 = arith.addf %130, %132 : vector<256x128xf32>
    %cst_146 = arith.constant 0.000000e+00 : f32
    %134 = vector.broadcast %cst_146 : f32 to vector<256x128xf32>
    %135 = arith.maximumf %133, %134 : vector<256x128xf32>
    %c6_147 = arith.constant 6 : index
    %c0_148 = arith.constant 0 : index
    %c0_149 = arith.constant 0 : index
    %136 = vector.load %arg15[%c6_147, %c0_148, %c0_149] : memref<22x16x128xbf16, #tpu.memory_space<vmem>>, vector<16x16x128xbf16>
    %137 = vector.shape_cast %136 : vector<16x16x128xbf16> to vector<256x128xbf16>
    %138 = arith.extf %137 : vector<256x128xbf16> to vector<256x128xf32>
    %139 = arith.addf %135, %138 : vector<256x128xf32>
    %cst_150 = arith.constant 0.000000e+00 : f32
    %140 = vector.broadcast %cst_150 : f32 to vector<256x128xf32>
    %141 = arith.maximumf %139, %140 : vector<256x128xf32>
    %142 = vector.shape_cast %141 : vector<256x128xf32> to vector<16x16x128xf32>
    %143 = vector.extract_strided_slice %142 {offsets = [15, 0, 0], sizes = [1, 16, 128], strides = [1, 1, 1]} : vector<16x16x128xf32> to vector<1x16x128xf32>
    %144 = vector.shape_cast %143 : vector<1x16x128xf32> to vector<16x128xf32>
    %145 = arith.truncf %144 : vector<16x128xf32> to vector<16x128xbf16>
    %c0_151 = arith.constant 0 : index
    %c0_152 = arith.constant 0 : index
    %146 = vector.load %arg12[%c0_151, %c0_152] : memref<128x128xbf16, #tpu.memory_space<vmem>>, vector<128x128xbf16>
    %cst_153 = arith.constant dense<0.000000e+00> : vector<16x128xf32>
    %147 = tpu.matmul %145, %146, %cst_153 {dimension_numbers = #tpu.dot_dimension_numbers<[1], [0], [0], [1], [0, 0, 1, 1], [], []>} : vector<16x128xbf16>, vector<128x128xbf16>, vector<16x128xf32> -> vector<16x128xf32>
    %c0_154 = arith.constant 0 : index
    %c0_155 = arith.constant 0 : index
    %148 = vector.load %arg13[%c0_154, %c0_155] : memref<1x128xf32, #tpu.memory_space<vmem>>, vector<1x128xf32>
    %149 = vector.broadcast %148 : vector<1x128xf32> to vector<16x128xf32>
    %150 = arith.addf %147, %149 : vector<16x128xf32>
    %151 = arith.negf %150 : vector<16x128xf32>
    %152 = math.exp %151 : vector<16x128xf32>
    %cst_156 = arith.constant 1.000000e+00 : f32
    %153 = vector.broadcast %cst_156 : f32 to vector<16x128xf32>
    %154 = arith.addf %153, %152 : vector<16x128xf32>
    %155 = arith.divf %153, %154 : vector<16x128xf32>
    %c0_157 = arith.constant 0 : index
    %c0_158 = arith.constant 0 : index
    %156 = vector.load %arg14[%c0_157, %c0_158] : memref<16x128xf32, #tpu.memory_space<vmem>>, vector<16x128xf32>
    tpu.vector_store %arg14[%c0_157, %c0_158], %155 {strides = array<i32>} : memref<16x128xf32, #tpu.memory_space<vmem>>, vector<16x128xf32>,
    return
  }
  func.func @transform_0(%arg0: i32) -> (i32, i32, i32) {
    %c0_i32 = arith.constant 0 : i32
    %c0_i32_0 = arith.constant 0 : i32
    %c0_i32_1 = arith.constant 0 : i32
    return %c0_i32, %arg0, %c0_i32_0 : i32, i32, i32
  }
  func.func @transform_1(%arg0: i32) -> (i32, i32, i32) {
    %c0_i32 = arith.constant 0 : i32
    %c0_i32_0 = arith.constant 0 : i32
    %c0_i32_1 = arith.constant 0 : i32
    %c0_i32_2 = arith.constant 0 : i32
    return %c0_i32, %c0_i32_0, %c0_i32_1 : i32, i32, i32
  }
  func.func @transform_2(%arg0: i32) -> (i32, i32) {
    %c0_i32 = arith.constant 0 : i32
    %c0_i32_0 = arith.constant 0 : i32
    %c0_i32_1 = arith.constant 0 : i32
    return %c0_i32, %c0_i32_0 : i32, i32
  }
  func.func @transform_3(%arg0: i32) -> (i32, i32, i32) {
    %c0_i32 = arith.constant 0 : i32
    %c0_i32_0 = arith.constant 0 : i32
    %c0_i32_1 = arith.constant 0 : i32
    %c0_i32_2 = arith.constant 0 : i32
    return %c0_i32, %c0_i32_0, %c0_i32_1 : i32, i32, i32
  }
  func.func @transform_4(%arg0: i32) -> (i32, i32) {
    %c0_i32 = arith.constant 0 : i32
    %c0_i32_0 = arith.constant 0 : i32
    %c0_i32_1 = arith.constant 0 : i32
    return %c0_i32, %c0_i32_0 : i32, i32
  }
  func.func @transform_5(%arg0: i32) -> (i32, i32) {
    %c0_i32 = arith.constant 0 : i32
    %c0_i32_0 = arith.constant 0 : i32
    %c0_i32_1 = arith.constant 0 : i32
    return %c0_i32, %c0_i32_0 : i32, i32
  }
  func.func @transform_6(%arg0: i32) -> (i32, i32) {
    %c0_i32 = arith.constant 0 : i32
    %c0_i32_0 = arith.constant 0 : i32
    %c0_i32_1 = arith.constant 0 : i32
    return %c0_i32, %c0_i32_0 : i32, i32
  }
  func.func @transform_7(%arg0: i32) -> (i32, i32, i32) {
    %c0_i32 = arith.constant 0 : i32
    %c0_i32_0 = arith.constant 0 : i32
    %c0_i32_1 = arith.constant 0 : i32
    %c0_i32_2 = arith.constant 0 : i32
    return %c0_i32, %c0_i32_0, %c0_i32_1 : i32, i32, i32
  }
  func.func @transform_8(%arg0: i32) -> (i32, i32) {
    %c0_i32 = arith.constant 0 : i32
    %c0_i32_0 = arith.constant 0 : i32
    %c0_i32_1 = arith.constant 0 : i32
    return %c0_i32, %c0_i32_0 : i32, i32
  }
  func.func @transform_9(%arg0: i32) -> (i32, i32, i32) {
    %c0_i32 = arith.constant 0 : i32
    %c0_i32_0 = arith.constant 0 : i32
    %c0_i32_1 = arith.constant 0 : i32
    %c0_i32_2 = arith.constant 0 : i32
    return %c0_i32, %c0_i32_0, %c0_i32_1 : i32, i32, i32
  }
  func.func @transform_10(%arg0: i32) -> (i32, i32) {
    %c0_i32 = arith.constant 0 : i32
    %c0_i32_0 = arith.constant 0 : i32
    %c0_i32_1 = arith.constant 0 : i32
    return %c0_i32, %c0_i32_0 : i32, i32
  }
  func.func @transform_11(%arg0: i32) -> (i32, i32) {
    %c0_i32 = arith.constant 0 : i32
    %c0_i32_0 = arith.constant 0 : i32
    %c0_i32_1 = arith.constant 0 : i32
    return %c0_i32, %c0_i32_0 : i32, i32
  }
  func.func @transform_12(%arg0: i32) -> (i32, i32) {
    %c0_i32 = arith.constant 0 : i32
    %c0_i32_0 = arith.constant 0 : i32
    %c0_i32_1 = arith.constant 0 : i32
    return %c0_i32, %c0_i32_0 : i32, i32
  }
  func.func @transform_13(%arg0: i32) -> (i32, i32) {
    %c0_i32 = arith.constant 0 : i32
    %c0_i32_0 = arith.constant 0 : i32
    return %arg0, %c0_i32 : i32, i32
  }
}

module attributes {stable_mosaic.version = 11 : i64} {
  func.func @_tcn_fused_kernel(%arg0: i32, %arg1: memref<16x16x128xbf16, #tpu.memory_space<vmem>>, %arg2: memref<4x128x128xbf16, #tpu.memory_space<vmem>>, %arg3: memref<1x128xf32, #tpu.memory_space<vmem>>, %arg4: memref<4x128x128xbf16, #tpu.memory_space<vmem>>, %arg5: memref<1x128xf32, #tpu.memory_space<vmem>>, %arg6: memref<128x128xbf16, #tpu.memory_space<vmem>>, %arg7: memref<1x128xf32, #tpu.memory_space<vmem>>, %arg8: memref<4x128x128xbf16, #tpu.memory_space<vmem>>, %arg9: memref<1x128xf32, #tpu.memory_space<vmem>>, %arg10: memref<4x128x128xbf16, #tpu.memory_space<vmem>>, %arg11: memref<1x128xf32, #tpu.memory_space<vmem>>, %arg12: memref<128x128xbf16, #tpu.memory_space<vmem>>, %arg13: memref<1x128xf32, #tpu.memory_space<vmem>>, %arg14: memref<16x128xf32, #tpu.memory_space<vmem>>, %arg15: memref<22x16x128xbf16, #tpu.memory_space<vmem>>, %arg16: memref<22x16x128xbf16, #tpu.memory_space<vmem>>) attributes {dimension_semantics = [#tpu.dimension_semantics<parallel>], iteration_bounds = array<i64: 1>, scalar_prefetch = 0 : i64, scratch_operands = 2 : i64, tpu.core_type = #tpu.core_type<tc>, window_params = [{transform_indices = @transform_0, window_bounds = array<i64: 16, 16, 128>}, {pipeline_mode = #tpu.pipeline_mode<synchronous>, transform_indices = @transform_1, window_bounds = array<i64: 4, 128, 128>}, {pipeline_mode = #tpu.pipeline_mode<synchronous>, transform_indices = @transform_2, window_bounds = array<i64: 1, 128>}, {pipeline_mode = #tpu.pipeline_mode<synchronous>, transform_indices = @transform_3, window_bounds = array<i64: 4, 128, 128>}, {pipeline_mode = #tpu.pipeline_mode<synchronous>, transform_indices = @transform_4, window_bounds = array<i64: 1, 128>}, {pipeline_mode = #tpu.pipeline_mode<synchronous>, transform_indices = @transform_5, window_bounds = array<i64: 128, 128>}, {pipeline_mode = #tpu.pipeline_mode<synchronous>, transform_indices = @transform_6, window_bounds = array<i64: 1, 128>}, {pipeline_mode = #tpu.pipeline_mode<synchronous>, transform_indices = @transform_7, window_bounds = array<i64: 4, 128, 128>}, {pipeline_mode = #tpu.pipeline_mode<synchronous>, transform_indices = @transform_8, window_bounds = array<i64: 1, 128>}, {pipeline_mode = #tpu.pipeline_mode<synchronous>, transform_indices = @transform_9, window_bounds = array<i64: 4, 128, 128>}, {pipeline_mode = #tpu.pipeline_mode<synchronous>, transform_indices = @transform_10, window_bounds = array<i64: 1, 128>}, {pipeline_mode = #tpu.pipeline_mode<synchronous>, transform_indices = @transform_11, window_bounds = array<i64: 128, 128>}, {pipeline_mode = #tpu.pipeline_mode<synchronous>, transform_indices = @transform_12, window_bounds = array<i64: 1, 128>}, {transform_indices = @transform_13, window_bounds = array<i64: 16, 128>}]} {
    %cst = arith.constant 0.000000e+00 : bf16
    %0 = vector.broadcast %cst : bf16 to vector<6x16x128xbf16>
    %c0 = arith.constant 0 : index
    %c0_0 = arith.constant 0 : index
    %c0_1 = arith.constant 0 : index
    %1 = vector.load %arg15[%c0, %c0_0, %c0_1] : memref<22x16x128xbf16, #tpu.memory_space<vmem>>, vector<6x16x128xbf16>
    tpu.vector_store %arg15[%c0, %c0_0, %c0_1], %0 {strides = array<i32>} : memref<22x16x128xbf16, #tpu.memory_space<vmem>>, vector<6x16x128xbf16>,
    %c0_2 = arith.constant 0 : index
    %c0_3 = arith.constant 0 : index
    %c0_4 = arith.constant 0 : index
    %2 = vector.load %arg16[%c0_2, %c0_3, %c0_4] : memref<22x16x128xbf16, #tpu.memory_space<vmem>>, vector<6x16x128xbf16>
    tpu.vector_store %arg16[%c0_2, %c0_3, %c0_4], %0 {strides = array<i32>} : memref<22x16x128xbf16, #tpu.memory_space<vmem>>, vector<6x16x128xbf16>,
    %c0_5 = arith.constant 0 : index
    %c0_6 = arith.constant 0 : index
    %c0_7 = arith.constant 0 : index
    %3 = vector.load %arg1[%c0_5, %c0_6, %c0_7] : memref<16x16x128xbf16, #tpu.memory_space<vmem>>, vector<16x16x128xbf16>
    %c6 = arith.constant 6 : index
    %c0_8 = arith.constant 0 : index
    %c0_9 = arith.constant 0 : index
    %4 = vector.load %arg15[%c6, %c0_8, %c0_9] : memref<22x16x128xbf16, #tpu.memory_space<vmem>>, vector<16x16x128xbf16>
    tpu.vector_store %arg15[%c6, %c0_8, %c0_9], %3 {strides = array<i32>} : memref<22x16x128xbf16, #tpu.memory_space<vmem>>, vector<16x16x128xbf16>,
    %c3 = arith.constant 3 : index
    %c0_10 = arith.constant 0 : index
    %c0_11 = arith.constant 0 : index
    %5 = vector.load %arg15[%c3, %c0_10, %c0_11] : memref<22x16x128xbf16, #tpu.memory_space<vmem>>, vector<16x16x128xbf16>
    %6 = vector.shape_cast %5 : vector<16x16x128xbf16> to vector<256x128xbf16>
    %c0_12 = arith.constant 0 : index
    %c0_13 = arith.constant 0 : index
    %c0_14 = arith.constant 0 : index
    %7 = vector.load %arg2[%c0_12, %c0_13, %c0_14] : memref<4x128x128xbf16, #tpu.memory_space<vmem>>, vector<1x128x128xbf16>
    %8 = vector.shape_cast %7 : vector<1x128x128xbf16> to vector<128x128xbf16>
    %cst_15 = arith.constant dense<0.000000e+00> : vector<256x128xf32>
    %9 = tpu.matmul %6, %8, %cst_15 {dimension_numbers = #tpu.dot_dimension_numbers<[1], [0], [0], [1], [0, 0, 1, 1], [], []>} : vector<256x128xbf16>, vector<128x128xbf16>, vector<256x128xf32> -> vector<256x128xf32>
    %c4 = arith.constant 4 : index
    %c0_16 = arith.constant 0 : index
    %c0_17 = arith.constant 0 : index
    %10 = vector.load %arg15[%c4, %c0_16, %c0_17] : memref<22x16x128xbf16, #tpu.memory_space<vmem>>, vector<16x16x128xbf16>
    %11 = vector.shape_cast %10 : vector<16x16x128xbf16> to vector<256x128xbf16>
    %c1 = arith.constant 1 : index
    %c0_18 = arith.constant 0 : index
    %c0_19 = arith.constant 0 : index
    %12 = vector.load %arg2[%c1, %c0_18, %c0_19] : memref<4x128x128xbf16, #tpu.memory_space<vmem>>, vector<1x128x128xbf16>
    %13 = vector.shape_cast %12 : vector<1x128x128xbf16> to vector<128x128xbf16>
    %cst_20 = arith.constant dense<0.000000e+00> : vector<256x128xf32>
    %14 = tpu.matmul %11, %13, %cst_20 {dimension_numbers = #tpu.dot_dimension_numbers<[1], [0], [0], [1], [0, 0, 1, 1], [], []>} : vector<256x128xbf16>, vector<128x128xbf16>, vector<256x128xf32> -> vector<256x128xf32>
    %15 = arith.addf %9, %14 : vector<256x128xf32>
    %c5 = arith.constant 5 : index
    %c0_21 = arith.constant 0 : index
    %c0_22 = arith.constant 0 : index
    %16 = vector.load %arg15[%c5, %c0_21, %c0_22] : memref<22x16x128xbf16, #tpu.memory_space<vmem>>, vector<16x16x128xbf16>
    %17 = vector.shape_cast %16 : vector<16x16x128xbf16> to vector<256x128xbf16>
    %c2 = arith.constant 2 : index
    %c0_23 = arith.constant 0 : index
    %c0_24 = arith.constant 0 : index
    %18 = vector.load %arg2[%c2, %c0_23, %c0_24] : memref<4x128x128xbf16, #tpu.memory_space<vmem>>, vector<1x128x128xbf16>
    %19 = vector.shape_cast %18 : vector<1x128x128xbf16> to vector<128x128xbf16>
    %cst_25 = arith.constant dense<0.000000e+00> : vector<256x128xf32>
    %20 = tpu.matmul %17, %19, %cst_25 {dimension_numbers = #tpu.dot_dimension_numbers<[1], [0], [0], [1], [0, 0, 1, 1], [], []>} : vector<256x128xbf16>, vector<128x128xbf16>, vector<256x128xf32> -> vector<256x128xf32>
    %21 = arith.addf %15, %20 : vector<256x128xf32>
    %c6_26 = arith.constant 6 : index
    %c0_27 = arith.constant 0 : index
    %c0_28 = arith.constant 0 : index
    %22 = vector.load %arg15[%c6_26, %c0_27, %c0_28] : memref<22x16x128xbf16, #tpu.memory_space<vmem>>, vector<16x16x128xbf16>
    %23 = vector.shape_cast %22 : vector<16x16x128xbf16> to vector<256x128xbf16>
    %c3_29 = arith.constant 3 : index
    %c0_30 = arith.constant 0 : index
    %c0_31 = arith.constant 0 : index
    %24 = vector.load %arg2[%c3_29, %c0_30, %c0_31] : memref<4x128x128xbf16, #tpu.memory_space<vmem>>, vector<1x128x128xbf16>
    %25 = vector.shape_cast %24 : vector<1x128x128xbf16> to vector<128x128xbf16>
    %cst_32 = arith.constant dense<0.000000e+00> : vector<256x128xf32>
    %26 = tpu.matmul %23, %25, %cst_32 {dimension_numbers = #tpu.dot_dimension_numbers<[1], [0], [0], [1], [0, 0, 1, 1], [], []>} : vector<256x128xbf16>, vector<128x128xbf16>, vector<256x128xf32> -> vector<256x128xf32>
    %27 = arith.addf %21, %26 : vector<256x128xf32>
    %c0_33 = arith.constant 0 : index
    %c0_34 = arith.constant 0 : index
    %28 = vector.load %arg3[%c0_33, %c0_34] : memref<1x128xf32, #tpu.memory_space<vmem>>, vector<1x128xf32>
    %29 = vector.broadcast %28 : vector<1x128xf32> to vector<256x128xf32>
    %30 = arith.addf %27, %29 : vector<256x128xf32>
    %cst_35 = arith.constant 0.000000e+00 : f32
    %31 = vector.broadcast %cst_35 : f32 to vector<256x128xf32>
    %32 = arith.maximumf %30, %31 : vector<256x128xf32>
    %33 = vector.shape_cast %32 : vector<256x128xf32> to vector<16x16x128xf32>
    %34 = arith.truncf %33 : vector<16x16x128xf32> to vector<16x16x128xbf16>
    %c6_36 = arith.constant 6 : index
    %c0_37 = arith.constant 0 : index
    %c0_38 = arith.constant 0 : index
    %35 = vector.load %arg16[%c6_36, %c0_37, %c0_38] : memref<22x16x128xbf16, #tpu.memory_space<vmem>>, vector<16x16x128xbf16>
    tpu.vector_store %arg16[%c6_36, %c0_37, %c0_38], %34 {strides = array<i32>} : memref<22x16x128xbf16, #tpu.memory_space<vmem>>, vector<16x16x128xbf16>,
    %c3_39 = arith.constant 3 : index
    %c0_40 = arith.constant 0 : index
    %c0_41 = arith.constant 0 : index
    %36 = vector.load %arg16[%c3_39, %c0_40, %c0_41] : memref<22x16x128xbf16, #tpu.memory_space<vmem>>, vector<16x16x128xbf16>
    %37 = vector.shape_cast %36 : vector<16x16x128xbf16> to vector<256x128xbf16>
    %c0_42 = arith.constant 0 : index
    %c0_43 = arith.constant 0 : index
    %c0_44 = arith.constant 0 : index
    %38 = vector.load %arg4[%c0_42, %c0_43, %c0_44] : memref<4x128x128xbf16, #tpu.memory_space<vmem>>, vector<1x128x128xbf16>
    %39 = vector.shape_cast %38 : vector<1x128x128xbf16> to vector<128x128xbf16>
    %cst_45 = arith.constant dense<0.000000e+00> : vector<256x128xf32>
    %40 = tpu.matmul %37, %39, %cst_45 {dimension_numbers = #tpu.dot_dimension_numbers<[1], [0], [0], [1], [0, 0, 1, 1], [], []>} : vector<256x128xbf16>, vector<128x128xbf16>, vector<256x128xf32> -> vector<256x128xf32>
    %c4_46 = arith.constant 4 : index
    %c0_47 = arith.constant 0 : index
    %c0_48 = arith.constant 0 : index
    %41 = vector.load %arg16[%c4_46, %c0_47, %c0_48] : memref<22x16x128xbf16, #tpu.memory_space<vmem>>, vector<16x16x128xbf16>
    %42 = vector.shape_cast %41 : vector<16x16x128xbf16> to vector<256x128xbf16>
    %c1_49 = arith.constant 1 : index
    %c0_50 = arith.constant 0 : index
    %c0_51 = arith.constant 0 : index
    %43 = vector.load %arg4[%c1_49, %c0_50, %c0_51] : memref<4x128x128xbf16, #tpu.memory_space<vmem>>, vector<1x128x128xbf16>
    %44 = vector.shape_cast %43 : vector<1x128x128xbf16> to vector<128x128xbf16>
    %cst_52 = arith.constant dense<0.000000e+00> : vector<256x128xf32>
    %45 = tpu.matmul %42, %44, %cst_52 {dimension_numbers = #tpu.dot_dimension_numbers<[1], [0], [0], [1], [0, 0, 1, 1], [], []>} : vector<256x128xbf16>, vector<128x128xbf16>, vector<256x128xf32> -> vector<256x128xf32>
    %46 = arith.addf %40, %45 : vector<256x128xf32>
    %c5_53 = arith.constant 5 : index
    %c0_54 = arith.constant 0 : index
    %c0_55 = arith.constant 0 : index
    %47 = vector.load %arg16[%c5_53, %c0_54, %c0_55] : memref<22x16x128xbf16, #tpu.memory_space<vmem>>, vector<16x16x128xbf16>
    %48 = vector.shape_cast %47 : vector<16x16x128xbf16> to vector<256x128xbf16>
    %c2_56 = arith.constant 2 : index
    %c0_57 = arith.constant 0 : index
    %c0_58 = arith.constant 0 : index
    %49 = vector.load %arg4[%c2_56, %c0_57, %c0_58] : memref<4x128x128xbf16, #tpu.memory_space<vmem>>, vector<1x128x128xbf16>
    %50 = vector.shape_cast %49 : vector<1x128x128xbf16> to vector<128x128xbf16>
    %cst_59 = arith.constant dense<0.000000e+00> : vector<256x128xf32>
    %51 = tpu.matmul %48, %50, %cst_59 {dimension_numbers = #tpu.dot_dimension_numbers<[1], [0], [0], [1], [0, 0, 1, 1], [], []>} : vector<256x128xbf16>, vector<128x128xbf16>, vector<256x128xf32> -> vector<256x128xf32>
    %52 = arith.addf %46, %51 : vector<256x128xf32>
    %c6_60 = arith.constant 6 : index
    %c0_61 = arith.constant 0 : index
    %c0_62 = arith.constant 0 : index
    %53 = vector.load %arg16[%c6_60, %c0_61, %c0_62] : memref<22x16x128xbf16, #tpu.memory_space<vmem>>, vector<16x16x128xbf16>
    %54 = vector.shape_cast %53 : vector<16x16x128xbf16> to vector<256x128xbf16>
    %c3_63 = arith.constant 3 : index
    %c0_64 = arith.constant 0 : index
    %c0_65 = arith.constant 0 : index
    %55 = vector.load %arg4[%c3_63, %c0_64, %c0_65] : memref<4x128x128xbf16, #tpu.memory_space<vmem>>, vector<1x128x128xbf16>
    %56 = vector.shape_cast %55 : vector<1x128x128xbf16> to vector<128x128xbf16>
    %cst_66 = arith.constant dense<0.000000e+00> : vector<256x128xf32>
    %57 = tpu.matmul %54, %56, %cst_66 {dimension_numbers = #tpu.dot_dimension_numbers<[1], [0], [0], [1], [0, 0, 1, 1], [], []>} : vector<256x128xbf16>, vector<128x128xbf16>, vector<256x128xf32> -> vector<256x128xf32>
    %58 = arith.addf %52, %57 : vector<256x128xf32>
    %c0_67 = arith.constant 0 : index
    %c0_68 = arith.constant 0 : index
    %59 = vector.load %arg5[%c0_67, %c0_68] : memref<1x128xf32, #tpu.memory_space<vmem>>, vector<1x128xf32>
    %60 = vector.broadcast %59 : vector<1x128xf32> to vector<256x128xf32>
    %61 = arith.addf %58, %60 : vector<256x128xf32>
    %cst_69 = arith.constant 0.000000e+00 : f32
    %62 = vector.broadcast %cst_69 : f32 to vector<256x128xf32>
    %63 = arith.maximumf %61, %62 : vector<256x128xf32>
    %c6_70 = arith.constant 6 : index
    %c0_71 = arith.constant 0 : index
    %c0_72 = arith.constant 0 : index
    %64 = vector.load %arg15[%c6_70, %c0_71, %c0_72] : memref<22x16x128xbf16, #tpu.memory_space<vmem>>, vector<16x16x128xbf16>
    %65 = vector.shape_cast %64 : vector<16x16x128xbf16> to vector<256x128xbf16>
    %c0_73 = arith.constant 0 : index
    %c0_74 = arith.constant 0 : index
    %66 = vector.load %arg6[%c0_73, %c0_74] : memref<128x128xbf16, #tpu.memory_space<vmem>>, vector<128x128xbf16>
    %cst_75 = arith.constant dense<0.000000e+00> : vector<256x128xf32>
    %67 = tpu.matmul %65, %66, %cst_75 {dimension_numbers = #tpu.dot_dimension_numbers<[1], [0], [0], [1], [0, 0, 1, 1], [], []>} : vector<256x128xbf16>, vector<128x128xbf16>, vector<256x128xf32> -> vector<256x128xf32>
    %c0_76 = arith.constant 0 : index
    %c0_77 = arith.constant 0 : index
    %68 = vector.load %arg7[%c0_76, %c0_77] : memref<1x128xf32, #tpu.memory_space<vmem>>, vector<1x128xf32>
    %69 = vector.broadcast %68 : vector<1x128xf32> to vector<256x128xf32>
    %70 = arith.addf %67, %69 : vector<256x128xf32>
    %71 = arith.addf %63, %70 : vector<256x128xf32>
    %cst_78 = arith.constant 0.000000e+00 : f32
    %72 = vector.broadcast %cst_78 : f32 to vector<256x128xf32>
    %73 = arith.maximumf %71, %72 : vector<256x128xf32>
    %74 = vector.shape_cast %73 : vector<256x128xf32> to vector<16x16x128xf32>
    %75 = arith.truncf %74 : vector<16x16x128xf32> to vector<16x16x128xbf16>
    %c6_79 = arith.constant 6 : index
    %c0_80 = arith.constant 0 : index
    %c0_81 = arith.constant 0 : index
    %76 = vector.load %arg15[%c6_79, %c0_80, %c0_81] : memref<22x16x128xbf16, #tpu.memory_space<vmem>>, vector<16x16x128xbf16>
    tpu.vector_store %arg15[%c6_79, %c0_80, %c0_81], %75 {strides = array<i32>} : memref<22x16x128xbf16, #tpu.memory_space<vmem>>, vector<16x16x128xbf16>,
    %c0_82 = arith.constant 0 : index
    %c0_83 = arith.constant 0 : index
    %c0_84 = arith.constant 0 : index
    %77 = vector.load %arg15[%c0_82, %c0_83, %c0_84] : memref<22x16x128xbf16, #tpu.memory_space<vmem>>, vector<16x16x128xbf16>
    %78 = vector.shape_cast %77 : vector<16x16x128xbf16> to vector<256x128xbf16>
    %c0_85 = arith.constant 0 : index
    %c0_86 = arith.constant 0 : index
    %c0_87 = arith.constant 0 : index
    %79 = vector.load %arg8[%c0_85, %c0_86, %c0_87] : memref<4x128x128xbf16, #tpu.memory_space<vmem>>, vector<1x128x128xbf16>
    %80 = vector.shape_cast %79 : vector<1x128x128xbf16> to vector<128x128xbf16>
    %cst_88 = arith.constant dense<0.000000e+00> : vector<256x128xf32>
    %81 = tpu.matmul %78, %80, %cst_88 {dimension_numbers = #tpu.dot_dimension_numbers<[1], [0], [0], [1], [0, 0, 1, 1], [], []>} : vector<256x128xbf16>, vector<128x128xbf16>, vector<256x128xf32> -> vector<256x128xf32>
    %c2_89 = arith.constant 2 : index
    %c0_90 = arith.constant 0 : index
    %c0_91 = arith.constant 0 : index
    %82 = vector.load %arg15[%c2_89, %c0_90, %c0_91] : memref<22x16x128xbf16, #tpu.memory_space<vmem>>, vector<16x16x128xbf16>
    %83 = vector.shape_cast %82 : vector<16x16x128xbf16> to vector<256x128xbf16>
    %c1_92 = arith.constant 1 : index
    %c0_93 = arith.constant 0 : index
    %c0_94 = arith.constant 0 : index
    %84 = vector.load %arg8[%c1_92, %c0_93, %c0_94] : memref<4x128x128xbf16, #tpu.memory_space<vmem>>, vector<1x128x128xbf16>
    %85 = vector.shape_cast %84 : vector<1x128x128xbf16> to vector<128x128xbf16>
    %cst_95 = arith.constant dense<0.000000e+00> : vector<256x128xf32>
    %86 = tpu.matmul %83, %85, %cst_95 {dimension_numbers = #tpu.dot_dimension_numbers<[1], [0], [0], [1], [0, 0, 1, 1], [], []>} : vector<256x128xbf16>, vector<128x128xbf16>, vector<256x128xf32> -> vector<256x128xf32>
    %87 = arith.addf %81, %86 : vector<256x128xf32>
    %c4_96 = arith.constant 4 : index
    %c0_97 = arith.constant 0 : index
    %c0_98 = arith.constant 0 : index
    %88 = vector.load %arg15[%c4_96, %c0_97, %c0_98] : memref<22x16x128xbf16, #tpu.memory_space<vmem>>, vector<16x16x128xbf16>
    %89 = vector.shape_cast %88 : vector<16x16x128xbf16> to vector<256x128xbf16>
    %c2_99 = arith.constant 2 : index
    %c0_100 = arith.constant 0 : index
    %c0_101 = arith.constant 0 : index
    %90 = vector.load %arg8[%c2_99, %c0_100, %c0_101] : memref<4x128x128xbf16, #tpu.memory_space<vmem>>, vector<1x128x128xbf16>
    %91 = vector.shape_cast %90 : vector<1x128x128xbf16> to vector<128x128xbf16>
    %cst_102 = arith.constant dense<0.000000e+00> : vector<256x128xf32>
    %92 = tpu.matmul %89, %91, %cst_102 {dimension_numbers = #tpu.dot_dimension_numbers<[1], [0], [0], [1], [0, 0, 1, 1], [], []>} : vector<256x128xbf16>, vector<128x128xbf16>, vector<256x128xf32> -> vector<256x128xf32>
    %93 = arith.addf %87, %92 : vector<256x128xf32>
    %c6_103 = arith.constant 6 : index
    %c0_104 = arith.constant 0 : index
    %c0_105 = arith.constant 0 : index
    %94 = vector.load %arg15[%c6_103, %c0_104, %c0_105] : memref<22x16x128xbf16, #tpu.memory_space<vmem>>, vector<16x16x128xbf16>
    %95 = vector.shape_cast %94 : vector<16x16x128xbf16> to vector<256x128xbf16>
    %c3_106 = arith.constant 3 : index
    %c0_107 = arith.constant 0 : index
    %c0_108 = arith.constant 0 : index
    %96 = vector.load %arg8[%c3_106, %c0_107, %c0_108] : memref<4x128x128xbf16, #tpu.memory_space<vmem>>, vector<1x128x128xbf16>
    %97 = vector.shape_cast %96 : vector<1x128x128xbf16> to vector<128x128xbf16>
    %cst_109 = arith.constant dense<0.000000e+00> : vector<256x128xf32>
    %98 = tpu.matmul %95, %97, %cst_109 {dimension_numbers = #tpu.dot_dimension_numbers<[1], [0], [0], [1], [0, 0, 1, 1], [], []>} : vector<256x128xbf16>, vector<128x128xbf16>, vector<256x128xf32> -> vector<256x128xf32>
    %99 = arith.addf %93, %98 : vector<256x128xf32>
    %c0_110 = arith.constant 0 : index
    %c0_111 = arith.constant 0 : index
    %100 = vector.load %arg9[%c0_110, %c0_111] : memref<1x128xf32, #tpu.memory_space<vmem>>, vector<1x128xf32>
    %101 = vector.broadcast %100 : vector<1x128xf32> to vector<256x128xf32>
    %102 = arith.addf %99, %101 : vector<256x128xf32>
    %cst_112 = arith.constant 0.000000e+00 : f32
    %103 = vector.broadcast %cst_112 : f32 to vector<256x128xf32>
    %104 = arith.maximumf %102, %103 : vector<256x128xf32>
    %105 = vector.shape_cast %104 : vector<256x128xf32> to vector<16x16x128xf32>
    %106 = arith.truncf %105 : vector<16x16x128xf32> to vector<16x16x128xbf16>
    %c6_113 = arith.constant 6 : index
    %c0_114 = arith.constant 0 : index
    %c0_115 = arith.constant 0 : index
    %107 = vector.load %arg16[%c6_113, %c0_114, %c0_115] : memref<22x16x128xbf16, #tpu.memory_space<vmem>>, vector<16x16x128xbf16>
    tpu.vector_store %arg16[%c6_113, %c0_114, %c0_115], %106 {strides = array<i32>} : memref<22x16x128xbf16, #tpu.memory_space<vmem>>, vector<16x16x128xbf16>,
    %c0_116 = arith.constant 0 : index
    %c0_117 = arith.constant 0 : index
    %c0_118 = arith.constant 0 : index
    %108 = vector.load %arg16[%c0_116, %c0_117, %c0_118] : memref<22x16x128xbf16, #tpu.memory_space<vmem>>, vector<16x16x128xbf16>
    %109 = vector.shape_cast %108 : vector<16x16x128xbf16> to vector<256x128xbf16>
    %c0_119 = arith.constant 0 : index
    %c0_120 = arith.constant 0 : index
    %c0_121 = arith.constant 0 : index
    %110 = vector.load %arg10[%c0_119, %c0_120, %c0_121] : memref<4x128x128xbf16, #tpu.memory_space<vmem>>, vector<1x128x128xbf16>
    %111 = vector.shape_cast %110 : vector<1x128x128xbf16> to vector<128x128xbf16>
    %cst_122 = arith.constant dense<0.000000e+00> : vector<256x128xf32>
    %112 = tpu.matmul %109, %111, %cst_122 {dimension_numbers = #tpu.dot_dimension_numbers<[1], [0], [0], [1], [0, 0, 1, 1], [], []>} : vector<256x128xbf16>, vector<128x128xbf16>, vector<256x128xf32> -> vector<256x128xf32>
    %c2_123 = arith.constant 2 : index
    %c0_124 = arith.constant 0 : index
    %c0_125 = arith.constant 0 : index
    %113 = vector.load %arg16[%c2_123, %c0_124, %c0_125] : memref<22x16x128xbf16, #tpu.memory_space<vmem>>, vector<16x16x128xbf16>
    %114 = vector.shape_cast %113 : vector<16x16x128xbf16> to vector<256x128xbf16>
    %c1_126 = arith.constant 1 : index
    %c0_127 = arith.constant 0 : index
    %c0_128 = arith.constant 0 : index
    %115 = vector.load %arg10[%c1_126, %c0_127, %c0_128] : memref<4x128x128xbf16, #tpu.memory_space<vmem>>, vector<1x128x128xbf16>
    %116 = vector.shape_cast %115 : vector<1x128x128xbf16> to vector<128x128xbf16>
    %cst_129 = arith.constant dense<0.000000e+00> : vector<256x128xf32>
    %117 = tpu.matmul %114, %116, %cst_129 {dimension_numbers = #tpu.dot_dimension_numbers<[1], [0], [0], [1], [0, 0, 1, 1], [], []>} : vector<256x128xbf16>, vector<128x128xbf16>, vector<256x128xf32> -> vector<256x128xf32>
    %118 = arith.addf %112, %117 : vector<256x128xf32>
    %c4_130 = arith.constant 4 : index
    %c0_131 = arith.constant 0 : index
    %c0_132 = arith.constant 0 : index
    %119 = vector.load %arg16[%c4_130, %c0_131, %c0_132] : memref<22x16x128xbf16, #tpu.memory_space<vmem>>, vector<16x16x128xbf16>
    %120 = vector.shape_cast %119 : vector<16x16x128xbf16> to vector<256x128xbf16>
    %c2_133 = arith.constant 2 : index
    %c0_134 = arith.constant 0 : index
    %c0_135 = arith.constant 0 : index
    %121 = vector.load %arg10[%c2_133, %c0_134, %c0_135] : memref<4x128x128xbf16, #tpu.memory_space<vmem>>, vector<1x128x128xbf16>
    %122 = vector.shape_cast %121 : vector<1x128x128xbf16> to vector<128x128xbf16>
    %cst_136 = arith.constant dense<0.000000e+00> : vector<256x128xf32>
    %123 = tpu.matmul %120, %122, %cst_136 {dimension_numbers = #tpu.dot_dimension_numbers<[1], [0], [0], [1], [0, 0, 1, 1], [], []>} : vector<256x128xbf16>, vector<128x128xbf16>, vector<256x128xf32> -> vector<256x128xf32>
    %124 = arith.addf %118, %123 : vector<256x128xf32>
    %c6_137 = arith.constant 6 : index
    %c0_138 = arith.constant 0 : index
    %c0_139 = arith.constant 0 : index
    %125 = vector.load %arg16[%c6_137, %c0_138, %c0_139] : memref<22x16x128xbf16, #tpu.memory_space<vmem>>, vector<16x16x128xbf16>
    %126 = vector.shape_cast %125 : vector<16x16x128xbf16> to vector<256x128xbf16>
    %c3_140 = arith.constant 3 : index
    %c0_141 = arith.constant 0 : index
    %c0_142 = arith.constant 0 : index
    %127 = vector.load %arg10[%c3_140, %c0_141, %c0_142] : memref<4x128x128xbf16, #tpu.memory_space<vmem>>, vector<1x128x128xbf16>
    %128 = vector.shape_cast %127 : vector<1x128x128xbf16> to vector<128x128xbf16>
    %cst_143 = arith.constant dense<0.000000e+00> : vector<256x128xf32>
    %129 = tpu.matmul %126, %128, %cst_143 {dimension_numbers = #tpu.dot_dimension_numbers<[1], [0], [0], [1], [0, 0, 1, 1], [], []>} : vector<256x128xbf16>, vector<128x128xbf16>, vector<256x128xf32> -> vector<256x128xf32>
    %130 = arith.addf %124, %129 : vector<256x128xf32>
    %c0_144 = arith.constant 0 : index
    %c0_145 = arith.constant 0 : index
    %131 = vector.load %arg11[%c0_144, %c0_145] : memref<1x128xf32, #tpu.memory_space<vmem>>, vector<1x128xf32>
    %132 = vector.broadcast %131 : vector<1x128xf32> to vector<256x128xf32>
    %133 = arith.addf %130, %132 : vector<256x128xf32>
    %cst_146 = arith.constant 0.000000e+00 : f32
    %134 = vector.broadcast %cst_146 : f32 to vector<256x128xf32>
    %135 = arith.maximumf %133, %134 : vector<256x128xf32>
    %c6_147 = arith.constant 6 : index
    %c0_148 = arith.constant 0 : index
    %c0_149 = arith.constant 0 : index
    %136 = vector.load %arg15[%c6_147, %c0_148, %c0_149] : memref<22x16x128xbf16, #tpu.memory_space<vmem>>, vector<16x16x128xbf16>
    %137 = vector.shape_cast %136 : vector<16x16x128xbf16> to vector<256x128xbf16>
    %138 = arith.extf %137 : vector<256x128xbf16> to vector<256x128xf32>
    %139 = arith.addf %135, %138 : vector<256x128xf32>
    %cst_150 = arith.constant 0.000000e+00 : f32
    %140 = vector.broadcast %cst_150 : f32 to vector<256x128xf32>
    %141 = arith.maximumf %139, %140 : vector<256x128xf32>
    %142 = vector.shape_cast %141 : vector<256x128xf32> to vector<16x16x128xf32>
    %143 = vector.extract_strided_slice %142 {offsets = [15, 0, 0], sizes = [1, 16, 128], strides = [1, 1, 1]} : vector<16x16x128xf32> to vector<1x16x128xf32>
    %144 = vector.shape_cast %143 : vector<1x16x128xf32> to vector<16x128xf32>
    %145 = arith.truncf %144 : vector<16x128xf32> to vector<16x128xbf16>
    %c0_151 = arith.constant 0 : index
    %c0_152 = arith.constant 0 : index
    %146 = vector.load %arg12[%c0_151, %c0_152] : memref<128x128xbf16, #tpu.memory_space<vmem>>, vector<128x128xbf16>
    %cst_153 = arith.constant dense<0.000000e+00> : vector<16x128xf32>
    %147 = tpu.matmul %145, %146, %cst_153 {dimension_numbers = #tpu.dot_dimension_numbers<[1], [0], [0], [1], [0, 0, 1, 1], [], []>} : vector<16x128xbf16>, vector<128x128xbf16>, vector<16x128xf32> -> vector<16x128xf32>
    %c0_154 = arith.constant 0 : index
    %c0_155 = arith.constant 0 : index
    %148 = vector.load %arg13[%c0_154, %c0_155] : memref<1x128xf32, #tpu.memory_space<vmem>>, vector<1x128xf32>
    %149 = vector.broadcast %148 : vector<1x128xf32> to vector<16x128xf32>
    %150 = arith.addf %147, %149 : vector<16x128xf32>
    %151 = arith.negf %150 : vector<16x128xf32>
    %152 = math.exp %151 : vector<16x128xf32>
    %cst_156 = arith.constant 1.000000e+00 : f32
    %153 = vector.broadcast %cst_156 : f32 to vector<16x128xf32>
    %154 = arith.addf %153, %152 : vector<16x128xf32>
    %155 = arith.divf %153, %154 : vector<16x128xf32>
    %c0_157 = arith.constant 0 : index
    %c0_158 = arith.constant 0 : index
    %156 = vector.load %arg14[%c0_157, %c0_158] : memref<16x128xf32, #tpu.memory_space<vmem>>, vector<16x128xf32>
    tpu.vector_store %arg14[%c0_157, %c0_158], %155 {strides = array<i32>} : memref<16x128xf32, #tpu.memory_space<vmem>>, vector<16x128xf32>,
    return
  }
  func.func @transform_0(%arg0: i32) -> (i32, i32, i32) {
    %c0_i32 = arith.constant 0 : i32
    %c0_i32_0 = arith.constant 0 : i32
    %c0_i32_1 = arith.constant 0 : i32
    return %c0_i32, %arg0, %c0_i32_0 : i32, i32, i32
  }
  func.func @transform_1(%arg0: i32) -> (i32, i32, i32) {
    %c0_i32 = arith.constant 0 : i32
    %c0_i32_0 = arith.constant 0 : i32
    %c0_i32_1 = arith.constant 0 : i32
    %c0_i32_2 = arith.constant 0 : i32
    return %c0_i32, %c0_i32_0, %c0_i32_1 : i32, i32, i32
  }
  func.func @transform_2(%arg0: i32) -> (i32, i32) {
    %c0_i32 = arith.constant 0 : i32
    %c0_i32_0 = arith.constant 0 : i32
    %c0_i32_1 = arith.constant 0 : i32
    return %c0_i32, %c0_i32_0 : i32, i32
  }
  func.func @transform_3(%arg0: i32) -> (i32, i32, i32) {
    %c0_i32 = arith.constant 0 : i32
    %c0_i32_0 = arith.constant 0 : i32
    %c0_i32_1 = arith.constant 0 : i32
    %c0_i32_2 = arith.constant 0 : i32
    return %c0_i32, %c0_i32_0, %c0_i32_1 : i32, i32, i32
  }
  func.func @transform_4(%arg0: i32) -> (i32, i32) {
    %c0_i32 = arith.constant 0 : i32
    %c0_i32_0 = arith.constant 0 : i32
    %c0_i32_1 = arith.constant 0 : i32
    return %c0_i32, %c0_i32_0 : i32, i32
  }
  func.func @transform_5(%arg0: i32) -> (i32, i32) {
    %c0_i32 = arith.constant 0 : i32
    %c0_i32_0 = arith.constant 0 : i32
    %c0_i32_1 = arith.constant 0 : i32
    return %c0_i32, %c0_i32_0 : i32, i32
  }
  func.func @transform_6(%arg0: i32) -> (i32, i32) {
    %c0_i32 = arith.constant 0 : i32
    %c0_i32_0 = arith.constant 0 : i32
    %c0_i32_1 = arith.constant 0 : i32
    return %c0_i32, %c0_i32_0 : i32, i32
  }
  func.func @transform_7(%arg0: i32) -> (i32, i32, i32) {
    %c0_i32 = arith.constant 0 : i32
    %c0_i32_0 = arith.constant 0 : i32
    %c0_i32_1 = arith.constant 0 : i32
    %c0_i32_2 = arith.constant 0 : i32
    return %c0_i32, %c0_i32_0, %c0_i32_1 : i32, i32, i32
  }
  func.func @transform_8(%arg0: i32) -> (i32, i32) {
    %c0_i32 = arith.constant 0 : i32
    %c0_i32_0 = arith.constant 0 : i32
    %c0_i32_1 = arith.constant 0 : i32
    return %c0_i32, %c0_i32_0 : i32, i32
  }
  func.func @transform_9(%arg0: i32) -> (i32, i32, i32) {
    %c0_i32 = arith.constant 0 : i32
    %c0_i32_0 = arith.constant 0 : i32
    %c0_i32_1 = arith.constant 0 : i32
    %c0_i32_2 = arith.constant 0 : i32
    return %c0_i32, %c0_i32_0, %c0_i32_1 : i32, i32, i32
  }
  func.func @transform_10(%arg0: i32) -> (i32, i32) {
    %c0_i32 = arith.constant 0 : i32
    %c0_i32_0 = arith.constant 0 : i32
    %c0_i32_1 = arith.constant 0 : i32
    return %c0_i32, %c0_i32_0 : i32, i32
  }
  func.func @transform_11(%arg0: i32) -> (i32, i32) {
    %c0_i32 = arith.constant 0 : i32
    %c0_i32_0 = arith.constant 0 : i32
    %c0_i32_1 = arith.constant 0 : i32
    return %c0_i32, %c0_i32_0 : i32, i32
  }
  func.func @transform_12(%arg0: i32) -> (i32, i32) {
    %c0_i32 = arith.constant 0 : i32
    %c0_i32_0 = arith.constant 0 : i32
    %c0_i32_1 = arith.constant 0 : i32
    return %c0_i32, %c0_i32_0 : i32, i32
  }
  func.func @transform_13(%arg0: i32) -> (i32, i32) {
    %c0_i32 = arith.constant 0 : i32
    %c0_i32_0 = arith.constant 0 : i32
    return %arg0, %c0_i32 : i32, i32
  }
}

</mosaic_0001>

<llo_original>
// kernel: tpu_custom_call.1
$region0: #{tpu_custom_call.1}
  #allocation0 [shape = 'u32[]', space=smem, size = 0x4, offset = 0x4, fixed_abs, tag = 'smem constant byte address 0x4 - core index']
  #allocation1 [shape = 'u32[72,128]{1,0:T(1,128)}', space=vmem, size = 0x9000, scoped, tag = 'internal scratch']
  #allocation2 [shape = 'bf16[22,16,128]{2,1,0:T(8,128)(2,1)}', space=vmem, size = 0x16000, scoped, tag = 'scratch operand']
  #allocation3 [shape = 'bf16[22,16,128]{2,1,0:T(8,128)(2,1)}', space=vmem, size = 0x16000, scoped, tag = 'scratch operand']
  %s0 = inlined_call_operand.hbm [shape: bf16[16,16,128], index: 0, kind: input, shape index: {}]
  %s1 = inlined_call_operand.hbm [shape: bf16[4,128,128], index: 1, kind: input, shape index: {}]
  %s2 = inlined_call_operand.vmem [shape: f32[1,128], index: 2, kind: input, shape index: {}]
  %s3 = inlined_call_operand.hbm [shape: bf16[4,128,128], index: 3, kind: input, shape index: {}]
  %s4 = inlined_call_operand.vmem [shape: f32[1,128], index: 4, kind: input, shape index: {}]
  %s5 = inlined_call_operand.hbm [shape: bf16[128,128], index: 5, kind: input, shape index: {}]
  %s6 = inlined_call_operand.vmem [shape: f32[1,128], index: 6, kind: input, shape index: {}]
  %s7 = inlined_call_operand.hbm [shape: bf16[4,128,128], index: 7, kind: input, shape index: {}]
  %s8 = inlined_call_operand.vmem [shape: f32[1,128], index: 8, kind: input, shape index: {}]
  %s9 = inlined_call_operand.hbm [shape: bf16[4,128,128], index: 9, kind: input, shape index: {}]
  %s10 = inlined_call_operand.vmem [shape: f32[1,128], index: 10, kind: input, shape index: {}]
  %s11 = inlined_call_operand.hbm [shape: bf16[128,128], index: 11, kind: input, shape index: {}]
  %s12 = inlined_call_operand.vmem [shape: f32[1,128], index: 12, kind: input, shape index: {}]
  %s13 = inlined_call_operand.hbm [shape: f32[16,128], index: 13, kind: output, shape index: {}]
  %s14 = sld [smem:[#allocation0]]
  $region90: #{tpu_custom_call.1} parent=0
    _
  %s16 = ssub.s32 1, %s14
  %s17 = scalar_select 0, %s16, %s14
  $region1: #{tpu_custom_call.1} parent=0
    #allocation4 [shape = 'u8[65536]{0}', space=vmem, size = 0x10000, scoped, tag = 'input window, operand 0, single buffered']
    #allocation5 [shape = 's32[1]{0}', space=sflag, size = 0x4, scoped, tag = 'scoped memory for tpu_custom_call.1']
    #allocation6 [shape = 's32[1]{0}', space=sflag, size = 0x4, scoped, tag = 'scoped memory for tpu_custom_call.1']
    #allocation7 [shape = 'u8[131072]{0}', space=vmem, size = 0x20000, scoped, tag = 'input window, operand 1, single buffered']
    #allocation8 [shape = 's32[1]{0}', space=sflag, size = 0x4, scoped, tag = 'scoped memory for tpu_custom_call.1']
    #allocation9 [shape = 'u8[131072]{0}', space=vmem, size = 0x20000, scoped, tag = 'input window, operand 3, single buffered']
    #allocation10 [shape = 'u8[32768]{0}', space=vmem, size = 0x8000, scoped, tag = 'input window, operand 5, single buffered']
    #allocation11 [shape = 's32[1]{0}', space=sflag, size = 0x4, scoped, tag = 'scoped memory for tpu_custom_call.1']
    #allocation12 [shape = 'u8[131072]{0}', space=vmem, size = 0x20000, scoped, tag = 'input window, operand 7, single buffered']
    #allocation13 [shape = 'u8[131072]{0}', space=vmem, size = 0x20000, scoped, tag = 'input window, operand 9, single buffered']
    #allocation14 [shape = 's32[1]{0}', space=sflag, size = 0x4, scoped, tag = 'scoped memory for tpu_custom_call.1']
    #allocation15 [shape = 'u8[32768]{0}', space=vmem, size = 0x8000, scoped, tag = 'input window, operand 11, single buffered']
    #allocation16 [shape = 'u8[8192]{0}', space=vmem, size = 0x2000, scoped, tag = 'output window, operand 0, single buffered']
    %18 = vsyncpa [#allocation5], 0
    %19 = vsyncpa [#allocation8], 0
    %20 = vsyncpa [#allocation11], 0
    %21 = vsyncpa [#allocation14], 0
    %22 = vsyncpa [#allocation6], 0
    // Predicated region
    $region2: #{tpu_custom_call.1} parent=1 // pred_check
      _
    $region3: #{tpu_custom_call.1} parent=1 // pred_check_branch
      %24 = sbr.rel (0) target = $region5
    $region4: #{tpu_custom_call.1} parent=1 // pred_region
      %26 = vsyncadd [#allocation5], 0
      %s27 = sshll.u32 %s0, 4
      %s28 = int_to_ptr.hbm [resolvable:$true] %s27
      %s29 = sshll.u32 [#allocation4], 4
      %s30 = int_to_ptr.vmem [resolvable:$true] %s29
      %35 = dma.hbm_to_vmem [thread:$0]  %s28, 2048, %s30, [#allocation5], 64, 64, 4
    $region5: #{tpu_custom_call.1} parent=1 // pred_fallthru
      _
    // Predicated region
    $region6: #{tpu_custom_call.1} parent=1 // pred_check
      _
    $region7: #{tpu_custom_call.1} parent=1 // pred_check_branch
      %37 = sbr.rel (0) target = $region9
    $region8: #{tpu_custom_call.1} parent=1 // pred_region
      %39 = vsyncadd [#allocation8], 0
      %s40 = sshll.u32 %s1, 4
      %s41 = int_to_ptr.hbm [resolvable:$true] %s40
      %s42 = sshll.u32 [#allocation7], 4
      %s43 = int_to_ptr.vmem [resolvable:$true] %s42
      %48 = dma.hbm_to_vmem [thread:$0]  %s41, 4096, %s43, [#allocation8], 64, 64, 4
    $region9: #{tpu_custom_call.1} parent=1 // pred_fallthru
      _
    // Predicated region
    $region10: #{tpu_custom_call.1} parent=1 // pred_check
      _
    $region11: #{tpu_custom_call.1} parent=1 // pred_check_branch
      %50 = sbr.rel (0) target = $region13
    $region12: #{tpu_custom_call.1} parent=1 // pred_region
      _
    $region13: #{tpu_custom_call.1} parent=1 // pred_fallthru
      _
    // Predicated region
    $region14: #{tpu_custom_call.1} parent=1 // pred_check
      _
    $region15: #{tpu_custom_call.1} parent=1 // pred_check_branch
      %52 = sbr.rel (0) target = $region17
    $region16: #{tpu_custom_call.1} parent=1 // pred_region
      %54 = vsyncadd [#allocation8], 0
      %s55 = sshll.u32 %s3, 4
      %s56 = int_to_ptr.hbm [resolvable:$true] %s55
      %s57 = sshll.u32 [#allocation9], 4
      %s58 = int_to_ptr.vmem [resolvable:$true] %s57
      %63 = dma.hbm_to_vmem [thread:$0]  %s56, 4096, %s58, [#allocation8], 64, 64, 4
    $region17: #{tpu_custom_call.1} parent=1 // pred_fallthru
      _
    // Predicated region
    $region18: #{tpu_custom_call.1} parent=1 // pred_check
      _
    $region19: #{tpu_custom_call.1} parent=1 // pred_check_branch
      %65 = sbr.rel (0) target = $region21
    $region20: #{tpu_custom_call.1} parent=1 // pred_region
      _
    $region21: #{tpu_custom_call.1} parent=1 // pred_fallthru
      _
    // Predicated region
    $region22: #{tpu_custom_call.1} parent=1 // pred_check
      _
    $region23: #{tpu_custom_call.1} parent=1 // pred_check_branch
      %67 = sbr.rel (0) target = $region25
    $region24: #{tpu_custom_call.1} parent=1 // pred_region
      %69 = vsyncadd [#allocation11], 0
      %s70 = sshll.u32 %s5, 4
      %s71 = int_to_ptr.hbm [resolvable:$true] %s70
      %s72 = sshll.u32 [#allocation10], 4
      %s73 = int_to_ptr.vmem [resolvable:$true] %s72
      %78 = dma.hbm_to_vmem [thread:$0]  %s71, 1024, %s73, [#allocation11], 64, 64, 4
    $region25: #{tpu_custom_call.1} parent=1 // pred_fallthru
      _
    // Predicated region
    $region26: #{tpu_custom_call.1} parent=1 // pred_check
      _
    $region27: #{tpu_custom_call.1} parent=1 // pred_check_branch
      %80 = sbr.rel (0) target = $region29
    $region28: #{tpu_custom_call.1} parent=1 // pred_region
      _
    $region29: #{tpu_custom_call.1} parent=1 // pred_fallthru
      _
    // Predicated region
    $region30: #{tpu_custom_call.1} parent=1 // pred_check
      _
    $region31: #{tpu_custom_call.1} parent=1 // pred_check_branch
      %82 = sbr.rel (0) target = $region33
    $region32: #{tpu_custom_call.1} parent=1 // pred_region
      %84 = vsyncadd [#allocation11], 0
      %s85 = sshll.u32 %s7, 4
      %s86 = int_to_ptr.hbm [resolvable:$true] %s85
      %s87 = sshll.u32 [#allocation12], 4
      %s88 = int_to_ptr.vmem [resolvable:$true] %s87
      %93 = dma.hbm_to_vmem [thread:$0]  %s86, 4096, %s88, [#allocation11], 64, 64, 4
    $region33: #{tpu_custom_call.1} parent=1 // pred_fallthru
      _
    // Predicated region
    $region34: #{tpu_custom_call.1} parent=1 // pred_check
      _
    $region35: #{tpu_custom_call.1} parent=1 // pred_check_branch
      %95 = sbr.rel (0) target = $region37
    $region36: #{tpu_custom_call.1} parent=1 // pred_region
      _
    $region37: #{tpu_custom_call.1} parent=1 // pred_fallthru
      _
    // Predicated region
    $region38: #{tpu_custom_call.1} parent=1 // pred_check
      _
    $region39: #{tpu_custom_call.1} parent=1 // pred_check_branch
      %97 = sbr.rel (0) target = $region41
    $region40: #{tpu_custom_call.1} parent=1 // pred_region
      %99 = vsyncadd [#allocation14], 0
      %s100 = sshll.u32 %s9, 4
      %s101 = int_to_ptr.hbm [resolvable:$true] %s100
      %s102 = sshll.u32 [#allocation13], 4
      %s103 = int_to_ptr.vmem [resolvable:$true] %s102
      %108 = dma.hbm_to_vmem [thread:$0]  %s101, 4096, %s103, [#allocation14], 64, 64, 4
    $region41: #{tpu_custom_call.1} parent=1 // pred_fallthru
      _
    // Predicated region
    $region42: #{tpu_custom_call.1} parent=1 // pred_check
      _
    $region43: #{tpu_custom_call.1} parent=1 // pred_check_branch
      %110 = sbr.rel (0) target = $region45
    $region44: #{tpu_custom_call.1} parent=1 // pred_region
      _
    $region45: #{tpu_custom_call.1} parent=1 // pred_fallthru
      _
    // Predicated region
    $region46: #{tpu_custom_call.1} parent=1 // pred_check
      _
    $region47: #{tpu_custom_call.1} parent=1 // pred_check_branch
      %112 = sbr.rel (0) target = $region49
    $region48: #{tpu_custom_call.1} parent=1 // pred_region
      %114 = vsyncadd [#allocation14], 0
      %s115 = sshll.u32 %s11, 4
      %s116 = int_to_ptr.hbm [resolvable:$true] %s115
      %s117 = sshll.u32 [#allocation15], 4
      %s118 = int_to_ptr.vmem [resolvable:$true] %s117
      %123 = dma.hbm_to_vmem [thread:$0]  %s116, 1024, %s118, [#allocation14], 64, 64, 4
    $region49: #{tpu_custom_call.1} parent=1 // pred_fallthru
      _
    // Predicated region
    $region50: #{tpu_custom_call.1} parent=1 // pred_check
      _
    $region51: #{tpu_custom_call.1} parent=1 // pred_check_branch
      %125 = sbr.rel (0) target = $region53
    $region52: #{tpu_custom_call.1} parent=1 // pred_region
      _
    $region53: #{tpu_custom_call.1} parent=1 // pred_fallthru
      _
    // Predicated region
    $region54: #{tpu_custom_call.1} parent=1 // pred_check
      _
    $region55: #{tpu_custom_call.1} parent=1 // pred_check_branch
      %127 = sbr.rel (0) target = $region57
    $region56: #{tpu_custom_call.1} parent=1 // pred_region
      %129 = dma.done [#allocation5], 2048
    $region57: #{tpu_custom_call.1} parent=1 // pred_fallthru
      _
    // Predicated region
    $region58: #{tpu_custom_call.1} parent=1 // pred_check
      _
    $region59: #{tpu_custom_call.1} parent=1 // pred_check_branch
      %131 = sbr.rel (0) target = $region61
    $region60: #{tpu_custom_call.1} parent=1 // pred_region
      %133 = dma.done [#allocation8], 4096
    $region61: #{tpu_custom_call.1} parent=1 // pred_fallthru
      _
    // Predicated region
    $region62: #{tpu_custom_call.1} parent=1 // pred_check
      _
    $region63: #{tpu_custom_call.1} parent=1 // pred_check_branch
      %135 = sbr.rel (0) target = $region65
    $region64: #{tpu_custom_call.1} parent=1 // pred_region
      %137 = dma.done [#allocation8], 4096
    $region65: #{tpu_custom_call.1} parent=1 // pred_fallthru
      _
    // Predicated region
    $region66: #{tpu_custom_call.1} parent=1 // pred_check
      _
    $region67: #{tpu_custom_call.1} parent=1 // pred_check_branch
      %139 = sbr.rel (0) target = $region69
    $region68: #{tpu_custom_call.1} parent=1 // pred_region
      %141 = dma.done [#allocation11], 1024
    $region69: #{tpu_custom_call.1} parent=1 // pred_fallthru
      _
    // Predicated region
    $region70: #{tpu_custom_call.1} parent=1 // pred_check
      _
    $region71: #{tpu_custom_call.1} parent=1 // pred_check_branch
      %143 = sbr.rel (0) target = $region73
    $region72: #{tpu_custom_call.1} parent=1 // pred_region
      %145 = dma.done [#allocation11], 4096
    $region73: #{tpu_custom_call.1} parent=1 // pred_fallthru
      _
    // Predicated region
    $region74: #{tpu_custom_call.1} parent=1 // pred_check
      _
    $region75: #{tpu_custom_call.1} parent=1 // pred_check_branch
      %147 = sbr.rel (0) target = $region77
    $region76: #{tpu_custom_call.1} parent=1 // pred_region
      %149 = dma.done [#allocation14], 4096
    $region77: #{tpu_custom_call.1} parent=1 // pred_fallthru
      _
    // Predicated region
    $region78: #{tpu_custom_call.1} parent=1 // pred_check
      _
    $region79: #{tpu_custom_call.1} parent=1 // pred_check_branch
      %151 = sbr.rel (0) target = $region81
    $region80: #{tpu_custom_call.1} parent=1 // pred_region
      %153 = dma.done [#allocation14], 1024
    $region81: #{tpu_custom_call.1} parent=1 // pred_fallthru
      _
    %155 = vst [vmem:[#allocation2] sm:$0xf] 0
    %156 = vst [vmem:[#allocation2 + $0x4] sm:$0xf] 0
    %157 = vst [vmem:[#allocation2 + $0x8] sm:$0xf] 0
    %158 = vst [vmem:[#allocation2 + $0xc] sm:$0xf] 0
    %159 = vst [vmem:[#allocation2 + $0x10] sm:$0xf] 0
    %160 = vst [vmem:[#allocation2 + $0x14] sm:$0xf] 0
    %161 = vst [vmem:[#allocation2 + $0x18] sm:$0xf] 0
    %162 = vst [vmem:[#allocation2 + $0x1c] sm:$0xf] 0
    %163 = vst [vmem:[#allocation2 + $0x20] sm:$0xf] 0
    %164 = vst [vmem:[#allocation2 + $0x24] sm:$0xf] 0
    %165 = vst [vmem:[#allocation2 + $0x28] sm:$0xf] 0
    %166 = vst [vmem:[#allocation2 + $0x2c] sm:$0xf] 0
    %167 = vst [vmem:[#allocation3] sm:$0xf] 0
    %168 = vst [vmem:[#allocation3 + $0x4] sm:$0xf] 0
    %169 = vst [vmem:[#allocation3 + $0x8] sm:$0xf] 0
    %170 = vst [vmem:[#allocation3 + $0xc] sm:$0xf] 0
    %171 = vst [vmem:[#allocation3 + $0x10] sm:$0xf] 0
    %172 = vst [vmem:[#allocation3 + $0x14] sm:$0xf] 0
    %173 = vst [vmem:[#allocation3 + $0x18] sm:$0xf] 0
    %174 = vst [vmem:[#allocation3 + $0x1c] sm:$0xf] 0
    %175 = vst [vmem:[#allocation3 + $0x20] sm:$0xf] 0
    %176 = vst [vmem:[#allocation3 + $0x24] sm:$0xf] 0
    %177 = vst [vmem:[#allocation3 + $0x28] sm:$0xf] 0
    %178 = vst [vmem:[#allocation3 + $0x2c] sm:$0xf] 0
    %v179 = vld [vmem:[#allocation4] sm:$0xf]
    %v180 = vld [vmem:[#allocation4 + $0x4] sm:$0xf]
    %v181 = vld [vmem:[#allocation4 + $0x8] sm:$0xf]
    %v182 = vld [vmem:[#allocation4 + $0xc] sm:$0xf]
    %v183 = vld [vmem:[#allocation4 + $0x10] sm:$0xf]
    %v184 = vld [vmem:[#allocation4 + $0x14] sm:$0xf]
    %v185 = vld [vmem:[#allocation4 + $0x18] sm:$0xf]
    %v186 = vld [vmem:[#allocation4 + $0x1c] sm:$0xf]
    %v187 = vld [vmem:[#allocation4 + $0x20] sm:$0xf]
    %v188 = vld [vmem:[#allocation4 + $0x24] sm:$0xf]
    %v189 = vld [vmem:[#allocation4 + $0x28] sm:$0xf]
    %v190 = vld [vmem:[#allocation4 + $0x2c] sm:$0xf]
    %v191 = vld [vmem:[#allocation4 + $0x30] sm:$0xf]
    %v192 = vld [vmem:[#allocation4 + $0x34] sm:$0xf]
    %v193 = vld [vmem:[#allocation4 + $0x38] sm:$0xf]
    %v194 = vld [vmem:[#allocation4 + $0x3c] sm:$0xf]
    %v195 = vld [vmem:[#allocation4 + $0x40] sm:$0xf]
    %v196 = vld [vmem:[#allocation4 + $0x44] sm:$0xf]
    %v197 = vld [vmem:[#allocation4 + $0x48] sm:$0xf]
    %v198 = vld [vmem:[#allocation4 + $0x4c] sm:$0xf]
    %v199 = vld [vmem:[#allocation4 + $0x50] sm:$0xf]
    %v200 = vld [vmem:[#allocation4 + $0x54] sm:$0xf]
    %v201 = vld [vmem:[#allocation4 + $0x58] sm:$0xf]
    %v202 = vld [vmem:[#allocation4 + $0x5c] sm:$0xf]
    %v203 = vld [vmem:[#allocation4 + $0x60] sm:$0xf]
    %v204 = vld [vmem:[#allocation4 + $0x64] sm:$0xf]
    %v205 = vld [vmem:[#allocation4 + $0x68] sm:$0xf]
    %v206 = vld [vmem:[#allocation4 + $0x6c] sm:$0xf]
    %v207 = vld [vmem:[#allocation4 + $0x70] sm:$0xf]
    %v208 = vld [vmem:[#allocation4 + $0x74] sm:$0xf]
    %v209 = vld [vmem:[#allocation4 + $0x78] sm:$0xf]
    %v210 = vld [vmem:[#allocation4 + $0x7c] sm:$0xf]
    %s211 = scalar_lea.vmem [#allocation2], 48
    %212 = vst [vmem:[%s211] sm:$0xf] %v179
    %213 = vst [vmem:[%s211 + $0x4] sm:$0xf] %v180
    %214 = vst [vmem:[%s211 + $0x8] sm:$0xf] %v181
    %215 = vst [vmem:[%s211 + $0xc] sm:$0xf] %v182
    %216 = vst [vmem:[%s211 + $0x10] sm:$0xf] %v183
    %217 = vst [vmem:[%s211 + $0x14] sm:$0xf] %v184
    %218 = vst [vmem:[%s211 + $0x18] sm:$0xf] %v185
    %219 = vst [vmem:[%s211 + $0x1c] sm:$0xf] %v186
    %220 = vst [vmem:[%s211 + $0x20] sm:$0xf] %v187
    %221 = vst [vmem:[%s211 + $0x24] sm:$0xf] %v188
    %222 = vst [vmem:[%s211 + $0x28] sm:$0xf] %v189
    %223 = vst [vmem:[%s211 + $0x2c] sm:$0xf] %v190
    %224 = vst [vmem:[%s211 + $0x30] sm:$0xf] %v191
    %225 = vst [vmem:[%s211 + $0x34] sm:$0xf] %v192
    %226 = vst [vmem:[%s211 + $0x38] sm:$0xf] %v193
    %227 = vst [vmem:[%s211 + $0x3c] sm:$0xf] %v194
    %228 = vst [vmem:[%s211 + $0x40] sm:$0xf] %v195
    %229 = vst [vmem:[%s211 + $0x44] sm:$0xf] %v196
    %230 = vst [vmem:[%s211 + $0x48] sm:$0xf] %v197
    %231 = vst [vmem:[%s211 + $0x4c] sm:$0xf] %v198
    %232 = vst [vmem:[%s211 + $0x50] sm:$0xf] %v199
    %233 = vst [vmem:[%s211 + $0x54] sm:$0xf] %v200
    %234 = vst [vmem:[%s211 + $0x58] sm:$0xf] %v201
    %235 = vst [vmem:[%s211 + $0x5c] sm:$0xf] %v202
    %236 = vst [vmem:[%s211 + $0x60] sm:$0xf] %v203
    %237 = vst [vmem:[%s211 + $0x64] sm:$0xf] %v204
    %238 = vst [vmem:[%s211 + $0x68] sm:$0xf] %v205
    %239 = vst [vmem:[%s211 + $0x6c] sm:$0xf] %v206
    %240 = vst [vmem:[%s211 + $0x70] sm:$0xf] %v207
    %241 = vst [vmem:[%s211 + $0x74] sm:$0xf] %v208
    %242 = vst [vmem:[%s211 + $0x78] sm:$0xf] %v209
    %243 = vst [vmem:[%s211 + $0x7c] sm:$0xf] %v210
    %s244 = scalar_lea.vmem [#allocation2], 24
    %v245 = vld [vmem:[%s244] sm:$0xf]
    %v246 = vld [vmem:[%s244 + $0x4] sm:$0xf]
    %v247 = vld [vmem:[%s244 + $0x8] sm:$0xf]
    %v248 = vld [vmem:[%s244 + $0xc] sm:$0xf]
    %v249 = vld [vmem:[%s244 + $0x10] sm:$0xf]
    %v250 = vld [vmem:[%s244 + $0x14] sm:$0xf]
    %v251 = vld [vmem:[%s244 + $0x18] sm:$0xf]
    %v252 = vld [vmem:[%s244 + $0x1c] sm:$0xf]
    %v253 = vld [vmem:[%s244 + $0x20] sm:$0xf]
    %v254 = vld [vmem:[%s244 + $0x24] sm:$0xf]
    %v255 = vld [vmem:[%s244 + $0x28] sm:$0xf]
    %v256 = vld [vmem:[%s244 + $0x2c] sm:$0xf]
    %v257 = vld [vmem:[%s244 + $0x30] sm:$0xf]
    %v258 = vld [vmem:[%s244 + $0x34] sm:$0xf]
    %v259 = vld [vmem:[%s244 + $0x38] sm:$0xf]
    %v260 = vld [vmem:[%s244 + $0x3c] sm:$0xf]
    %v261 = vld [vmem:[%s244 + $0x40] sm:$0xf]
    %v262 = vld [vmem:[%s244 + $0x44] sm:$0xf]
    %v263 = vld [vmem:[%s244 + $0x48] sm:$0xf]
    %v264 = vld [vmem:[%s244 + $0x4c] sm:$0xf]
    %v265 = vld [vmem:[%s244 + $0x50] sm:$0xf]
    %v266 = vld [vmem:[%s244 + $0x54] sm:$0xf]
    %v267 = vld [vmem:[%s244 + $0x58] sm:$0xf]
    %v268 = vld [vmem:[%s244 + $0x5c] sm:$0xf]
    %v269 = vld [vmem:[%s244 + $0x60] sm:$0xf]
    %v270 = vld [vmem:[%s244 + $0x64] sm:$0xf]
    %v271 = vld [vmem:[%s244 + $0x68] sm:$0xf]
    %v272 = vld [vmem:[%s244 + $0x6c] sm:$0xf]
    %v273 = vld [vmem:[%s244 + $0x70] sm:$0xf]
    %v274 = vld [vmem:[%s244 + $0x74] sm:$0xf]
    %v275 = vld [vmem:[%s244 + $0x78] sm:$0xf]
    %v276 = vld [vmem:[%s244 + $0x7c] sm:$0xf]
    %v277 = vld [vmem:[#allocation7] sm:$0xf]
    %v278 = vld [vmem:[#allocation7 + $0x4] sm:$0xf]
    %v279 = vld [vmem:[#allocation7 + $0x8] sm:$0xf]
    %v280 = vld [vmem:[#allocation7 + $0xc] sm:$0xf]
    %v281 = vld [vmem:[#allocation7 + $0x10] sm:$0xf]
    %v282 = vld [vmem:[#allocation7 + $0x14] sm:$0xf]
    %v283 = vld [vmem:[#allocation7 + $0x18] sm:$0xf]
    %v284 = vld [vmem:[#allocation7 + $0x1c] sm:$0xf]
    %v285 = vld [vmem:[#allocation7 + $0x20] sm:$0xf]
    %v286 = vld [vmem:[#allocation7 + $0x24] sm:$0xf]
    %v287 = vld [vmem:[#allocation7 + $0x28] sm:$0xf]
    %v288 = vld [vmem:[#allocation7 + $0x2c] sm:$0xf]
    %v289 = vld [vmem:[#allocation7 + $0x30] sm:$0xf]
    %v290 = vld [vmem:[#allocation7 + $0x34] sm:$0xf]
    %v291 = vld [vmem:[#allocation7 + $0x38] sm:$0xf]
    %v292 = vld [vmem:[#allocation7 + $0x3c] sm:$0xf]
    %s293 = scalar_lea.vmem [#allocation2], 32
    %v294 = vld [vmem:[%s293] sm:$0xf]
    %v295 = vld [vmem:[%s293 + $0x4] sm:$0xf]
    %v296 = vld [vmem:[%s293 + $0x8] sm:$0xf]
    %v297 = vld [vmem:[%s293 + $0xc] sm:$0xf]
    %v298 = vld [vmem:[%s293 + $0x10] sm:$0xf]
    %v299 = vld [vmem:[%s293 + $0x14] sm:$0xf]
    %v300 = vld [vmem:[%s293 + $0x18] sm:$0xf]
    %v301 = vld [vmem:[%s293 + $0x1c] sm:$0xf]
    %v302 = vld [vmem:[%s293 + $0x20] sm:$0xf]
    %v303 = vld [vmem:[%s293 + $0x24] sm:$0xf]
    %v304 = vld [vmem:[%s293 + $0x28] sm:$0xf]
    %v305 = vld [vmem:[%s293 + $0x2c] sm:$0xf]
    %v306 = vld [vmem:[%s293 + $0x30] sm:$0xf]
    %v307 = vld [vmem:[%s293 + $0x34] sm:$0xf]
    %v308 = vld [vmem:[%s293 + $0x38] sm:$0xf]
    %v309 = vld [vmem:[%s293 + $0x3c] sm:$0xf]
    %v310 = vld [vmem:[%s293 + $0x40] sm:$0xf]
    %v311 = vld [vmem:[%s293 + $0x44] sm:$0xf]
    %v312 = vld [vmem:[%s293 + $0x48] sm:$0xf]
    %v313 = vld [vmem:[%s293 + $0x4c] sm:$0xf]
    %v314 = vld [vmem:[%s293 + $0x50] sm:$0xf]
    %v315 = vld [vmem:[%s293 + $0x54] sm:$0xf]
    %v316 = vld [vmem:[%s293 + $0x58] sm:$0xf]
    %v317 = vld [vmem:[%s293 + $0x5c] sm:$0xf]
    %v318 = vld [vmem:[%s293 + $0x60] sm:$0xf]
    %v319 = vld [vmem:[%s293 + $0x64] sm:$0xf]
    %v320 = vld [vmem:[%s293 + $0x68] sm:$0xf]
    %v321 = vld [vmem:[%s293 + $0x6c] sm:$0xf]
    %v322 = vld [vmem:[%s293 + $0x70] sm:$0xf]
    %v323 = vld [vmem:[%s293 + $0x74] sm:$0xf]
    %v324 = vld [vmem:[%s293 + $0x78] sm:$0xf]
    %v325 = vld [vmem:[%s293 + $0x7c] sm:$0xf]
    %s326 = scalar_lea.vmem [#allocation7], 64
    %v327 = vld [vmem:[%s326] sm:$0xf]
    %v328 = vld [vmem:[%s326 + $0x4] sm:$0xf]
    %v329 = vld [vmem:[%s326 + $0x8] sm:$0xf]
    %v330 = vld [vmem:[%s326 + $0xc] sm:$0xf]
    %v331 = vld [vmem:[%s326 + $0x10] sm:$0xf]
    %v332 = vld [vmem:[%s326 + $0x14] sm:$0xf]
    %v333 = vld [vmem:[%s326 + $0x18] sm:$0xf]
    %v334 = vld [vmem:[%s326 + $0x1c] sm:$0xf]
    %v335 = vld [vmem:[%s326 + $0x20] sm:$0xf]
    %v336 = vld [vmem:[%s326 + $0x24] sm:$0xf]
    %v337 = vld [vmem:[%s326 + $0x28] sm:$0xf]
    %v338 = vld [vmem:[%s326 + $0x2c] sm:$0xf]
    %v339 = vld [vmem:[%s326 + $0x30] sm:$0xf]
    %v340 = vld [vmem:[%s326 + $0x34] sm:$0xf]
    %v341 = vld [vmem:[%s326 + $0x38] sm:$0xf]
    %v342 = vld [vmem:[%s326 + $0x3c] sm:$0xf]
    %v375 = vunpack.c.l.b16 %v294
    %v376 = vunpack.c.l.b16 %v295
    %v377 = vunpack.c.l.b16 %v296
    %v378 = vunpack.c.l.b16 %v297
    %v379 = vunpack.c.l.b16 %v298
    %v380 = vunpack.c.l.b16 %v299
    %v381 = vunpack.c.l.b16 %v300
    %v382 = vunpack.c.l.b16 %v301
    %v383 = vunpack.c.l.b16 %v302
    %v384 = vunpack.c.l.b16 %v303
    %v385 = vunpack.c.l.b16 %v304
    %v386 = vunpack.c.l.b16 %v305
    %v387 = vunpack.c.l.b16 %v306
    %v388 = vunpack.c.l.b16 %v307
    %v389 = vunpack.c.l.b16 %v308
    %v390 = vunpack.c.l.b16 %v309
    %v391 = vunpack.c.l.b16 %v310
    %v392 = vunpack.c.l.b16 %v311
    %v393 = vunpack.c.l.b16 %v312
    %v394 = vunpack.c.l.b16 %v313
    %v395 = vunpack.c.l.b16 %v314
    %v396 = vunpack.c.l.b16 %v315
    %v397 = vunpack.c.l.b16 %v316
    %v398 = vunpack.c.l.b16 %v317
    %v399 = vunpack.c.l.b16 %v318
    %v400 = vunpack.c.l.b16 %v319
    %v401 = vunpack.c.l.b16 %v320
    %v402 = vunpack.c.l.b16 %v321
    %v403 = vunpack.c.l.b16 %v322
    %v404 = vunpack.c.l.b16 %v323
    %v405 = vunpack.c.l.b16 %v324
    %v406 = vunpack.c.l.b16 %v325
    %v407 = vpack.c.b16 %v376, %v375
    %v408 = vpack.c.b16 %v378, %v377
    %v409 = vpack.c.b16 %v380, %v379
    %v410 = vpack.c.b16 %v382, %v381
    %v411 = vpack.c.b16 %v384, %v383
    %v412 = vpack.c.b16 %v386, %v385
    %v413 = vpack.c.b16 %v388, %v387
    %v414 = vpack.c.b16 %v390, %v389
    %v415 = vpack.c.b16 %v392, %v391
    %v416 = vpack.c.b16 %v394, %v393
    %v417 = vpack.c.b16 %v396, %v395
    %v418 = vpack.c.b16 %v398, %v397
    %v419 = vpack.c.b16 %v400, %v399
    %v420 = vpack.c.b16 %v402, %v401
    %v421 = vpack.c.b16 %v404, %v403
    %v422 = vpack.c.b16 %v406, %v405
    %v455 = vunpack.c.l.b16 %v327
    %v456 = vunpack.c.l.b16 %v328
    %v457 = vunpack.c.l.b16 %v329
    %v458 = vunpack.c.l.b16 %v330
    %v459 = vunpack.c.l.b16 %v331
    %v460 = vunpack.c.l.b16 %v332
    %v461 = vunpack.c.l.b16 %v333
    %v462 = vunpack.c.l.b16 %v334
    %v463 = vunpack.c.l.b16 %v335
    %v464 = vunpack.c.l.b16 %v336
    %v465 = vunpack.c.l.b16 %v337
    %v466 = vunpack.c.l.b16 %v338
    %v467 = vunpack.c.l.b16 %v339
    %v468 = vunpack.c.l.b16 %v340
    %v469 = vunpack.c.l.b16 %v341
    %v470 = vunpack.c.l.b16 %v342
    %v471 = vpack.c.b16 %v456, %v455
    %v472 = vpack.c.b16 %v458, %v457
    %v473 = vpack.c.b16 %v460, %v459
    %v474 = vpack.c.b16 %v462, %v461
    %v475 = vpack.c.b16 %v464, %v463
    %v476 = vpack.c.b16 %v466, %v465
    %v477 = vpack.c.b16 %v468, %v467
    %v478 = vpack.c.b16 %v470, %v469
    %487 = vmatpush.bf16.msra.mxu0 %v478
    %488 = vmatpush.bf16.msra.mxu0 %v477
    %489 = vmatpush.bf16.msra.mxu0 %v476
    %490 = vmatpush.bf16.msra.mxu0 %v475
    %491 = vmatpush.bf16.msra.mxu0 %v474
    %492 = vmatpush.bf16.msra.mxu0 %v473
    %493 = vmatpush.bf16.msra.mxu0 %v472
    %494 = vmatpush.bf16.msra.mxu0 %v471
    %495 = vmatmul.bf16.gmra.mxu0 %v407
    %v496 = vpop.f32.mrf.mxu0
    %v497 = vadd.f32 0.0, %v496
    %v498 = vpop.f32.mrf.mxu0
    %v499 = vadd.f32 0.0, %v498
    %500 = vmatmul.bf16.gmra.mxu0 %v408
    %v501 = vpop.f32.mrf.mxu0
    %v502 = vadd.f32 0.0, %v501
    %v503 = vpop.f32.mrf.mxu0
    %v504 = vadd.f32 0.0, %v503
    %505 = vmatmul.bf16.gmra.mxu0 %v409
    %v506 = vpop.f32.mrf.mxu0
    %v507 = vadd.f32 0.0, %v506
    %v508 = vpop.f32.mrf.mxu0
    %v509 = vadd.f32 0.0, %v508
    %510 = vmatmul.bf16.gmra.mxu0 %v410
    %v511 = vpop.f32.mrf.mxu0
    %v512 = vadd.f32 0.0, %v511
    %v513 = vpop.f32.mrf.mxu0
    %v514 = vadd.f32 0.0, %v513
    %515 = vmatmul.bf16.gmra.mxu0 %v411
    %v516 = vpop.f32.mrf.mxu0
    %v517 = vadd.f32 0.0, %v516
    %v518 = vpop.f32.mrf.mxu0
    %v519 = vadd.f32 0.0, %v518
    %520 = vmatmul.bf16.gmra.mxu0 %v412
    %v521 = vpop.f32.mrf.mxu0
    %v522 = vadd.f32 0.0, %v521
    %v523 = vpop.f32.mrf.mxu0
    %v524 = vadd.f32 0.0, %v523
    %525 = vmatmul.bf16.gmra.mxu0 %v413
    %v526 = vpop.f32.mrf.mxu0
    %v527 = vadd.f32 0.0, %v526
    %v528 = vpop.f32.mrf.mxu0
    %v529 = vadd.f32 0.0, %v528
    %530 = vmatmul.bf16.gmra.mxu0 %v414
    %v531 = vpop.f32.mrf.mxu0
    %v532 = vadd.f32 0.0, %v531
    %v533 = vpop.f32.mrf.mxu0
    %v534 = vadd.f32 0.0, %v533
    %535 = vmatmul.bf16.gmra.mxu0 %v415
    %v536 = vpop.f32.mrf.mxu0
    %v537 = vadd.f32 0.0, %v536
    %v538 = vpop.f32.mrf.mxu0
    %v539 = vadd.f32 0.0, %v538
    %540 = vmatmul.bf16.gmra.mxu0 %v416
    %v541 = vpop.f32.mrf.mxu0
    %v542 = vadd.f32 0.0, %v541
    %v543 = vpop.f32.mrf.mxu0
    %v544 = vadd.f32 0.0, %v543
    %545 = vmatmul.bf16.gmra.mxu0 %v417
    %v546 = vpop.f32.mrf.mxu0
    %v547 = vadd.f32 0.0, %v546
    %v548 = vpop.f32.mrf.mxu0
    %v549 = vadd.f32 0.0, %v548
    %550 = vmatmul.bf16.gmra.mxu0 %v418
    %v551 = vpop.f32.mrf.mxu0
    %v552 = vadd.f32 0.0, %v551
    %v553 = vpop.f32.mrf.mxu0
    %v554 = vadd.f32 0.0, %v553
    %555 = vmatmul.bf16.gmra.mxu0 %v419
    %v556 = vpop.f32.mrf.mxu0
    %v557 = vadd.f32 0.0, %v556
    %v558 = vpop.f32.mrf.mxu0
    %v559 = vadd.f32 0.0, %v558
    %560 = vmatmul.bf16.gmra.mxu0 %v420
    %v561 = vpop.f32.mrf.mxu0
    %v562 = vadd.f32 0.0, %v561
    %v563 = vpop.f32.mrf.mxu0
    %v564 = vadd.f32 0.0, %v563
    %565 = vmatmul.bf16.gmra.mxu0 %v421
    %v566 = vpop.f32.mrf.mxu0
    %v567 = vadd.f32 0.0, %v566
    %v568 = vpop.f32.mrf.mxu0
    %v569 = vadd.f32 0.0, %v568
    %570 = vmatmul.bf16.gmra.mxu0 %v422
    %v571 = vpop.f32.mrf.mxu0
    %v572 = vadd.f32 0.0, %v571
    %v573 = vpop.f32.mrf.mxu0
    %v574 = vadd.f32 0.0, %v573
    %575 = vdwg.mxu0
    %v608 = vunpack.c.l.b16 %v245
    %v609 = vunpack.c.l.b16 %v246
    %v610 = vunpack.c.l.b16 %v247
    %v611 = vunpack.c.l.b16 %v248
    %v612 = vunpack.c.l.b16 %v249
    %v613 = vunpack.c.l.b16 %v250
    %v614 = vunpack.c.l.b16 %v251
    %v615 = vunpack.c.l.b16 %v252
    %v616 = vunpack.c.l.b16 %v253
    %v617 = vunpack.c.l.b16 %v254
    %v618 = vunpack.c.l.b16 %v255
    %v619 = vunpack.c.l.b16 %v256
    %v620 = vunpack.c.l.b16 %v257
    %v621 = vunpack.c.l.b16 %v258
    %v622 = vunpack.c.l.b16 %v259
    %v623 = vunpack.c.l.b16 %v260
    %v624 = vunpack.c.l.b16 %v261
    %v625 = vunpack.c.l.b16 %v262
    %v626 = vunpack.c.l.b16 %v263
    %v627 = vunpack.c.l.b16 %v264
    %v628 = vunpack.c.l.b16 %v265
    %v629 = vunpack.c.l.b16 %v266
    %v630 = vunpack.c.l.b16 %v267
    %v631 = vunpack.c.l.b16 %v268
    %v632 = vunpack.c.l.b16 %v269
    %v633 = vunpack.c.l.b16 %v270
    %v634 = vunpack.c.l.b16 %v271
    %v635 = vunpack.c.l.b16 %v272
    %v636 = vunpack.c.l.b16 %v273
    %v637 = vunpack.c.l.b16 %v274
    %v638 = vunpack.c.l.b16 %v275
    %v639 = vunpack.c.l.b16 %v276
    %v640 = vpack.c.b16 %v609, %v608
    %v641 = vpack.c.b16 %v611, %v610
    %v642 = vpack.c.b16 %v613, %v612
    %v643 = vpack.c.b16 %v615, %v614
    %v644 = vpack.c.b16 %v617, %v616
    %v645 = vpack.c.b16 %v619, %v618
    %v646 = vpack.c.b16 %v621, %v620
    %v647 = vpack.c.b16 %v623, %v622
    %v648 = vpack.c.b16 %v625, %v624
    %v649 = vpack.c.b16 %v627, %v626
    %v650 = vpack.c.b16 %v629, %v628
    %v651 = vpack.c.b16 %v631, %v630
    %v652 = vpack.c.b16 %v633, %v632
    %v653 = vpack.c.b16 %v635, %v634
    %v654 = vpack.c.b16 %v637, %v636
    %v655 = vpack.c.b16 %v639, %v638
    %v688 = vunpack.c.l.b16 %v277
    %v689 = vunpack.c.l.b16 %v278
    %v690 = vunpack.c.l.b16 %v279
    %v691 = vunpack.c.l.b16 %v280
    %v692 = vunpack.c.l.b16 %v281
    %v693 = vunpack.c.l.b16 %v282
    %v694 = vunpack.c.l.b16 %v283
    %v695 = vunpack.c.l.b16 %v284
    %v696 = vunpack.c.l.b16 %v285
    %v697 = vunpack.c.l.b16 %v286
    %v698 = vunpack.c.l.b16 %v287
    %v699 = vunpack.c.l.b16 %v288
    %v700 = vunpack.c.l.b16 %v289
    %v701 = vunpack.c.l.b16 %v290
    %v702 = vunpack.c.l.b16 %v291
    %v703 = vunpack.c.l.b16 %v292
    %v704 = vpack.c.b16 %v689, %v688
    %v705 = vpack.c.b16 %v691, %v690
    %v706 = vpack.c.b16 %v693, %v692
    %v707 = vpack.c.b16 %v695, %v694
    %v708 = vpack.c.b16 %v697, %v696
    %v709 = vpack.c.b16 %v699, %v698
    %v710 = vpack.c.b16 %v701, %v700
    %v711 = vpack.c.b16 %v703, %v702
    %720 = vmatpush.bf16.msra.mxu0 %v711
    %721 = vmatpush.bf16.msra.mxu0 %v710
    %722 = vmatpush.bf16.msra.mxu0 %v709
    %723 = vmatpush.bf16.msra.mxu0 %v708
    %724 = vmatpush.bf16.msra.mxu0 %v707
    %725 = vmatpush.bf16.msra.mxu0 %v706
    %726 = vmatpush.bf16.msra.mxu0 %v705
    %727 = vmatpush.bf16.msra.mxu0 %v704
    %728 = vmatmul.bf16.gmra.mxu0 %v640
    %v729 = vpop.f32.mrf.mxu0
    %v730 = vadd.f32 %v497, %v729
    %v731 = vpop.f32.mrf.mxu0
    %v732 = vadd.f32 %v499, %v731
    %733 = vmatmul.bf16.gmra.mxu0 %v641
    %v734 = vpop.f32.mrf.mxu0
    %v735 = vadd.f32 %v502, %v734
    %v736 = vpop.f32.mrf.mxu0
    %v737 = vadd.f32 %v504, %v736
    %738 = vmatmul.bf16.gmra.mxu0 %v642
    %v739 = vpop.f32.mrf.mxu0
    %v740 = vadd.f32 %v507, %v739
    %v741 = vpop.f32.mrf.mxu0
    %v742 = vadd.f32 %v509, %v741
    %743 = vmatmul.bf16.gmra.mxu0 %v643
    %v744 = vpop.f32.mrf.mxu0
    %v745 = vadd.f32 %v512, %v744
    %v746 = vpop.f32.mrf.mxu0
    %v747 = vadd.f32 %v514, %v746
    %748 = vmatmul.bf16.gmra.mxu0 %v644
    %v749 = vpop.f32.mrf.mxu0
    %v750 = vadd.f32 %v517, %v749
    %v751 = vpop.f32.mrf.mxu0
    %v752 = vadd.f32 %v519, %v751
    %753 = vmatmul.bf16.gmra.mxu0 %v645
    %v754 = vpop.f32.mrf.mxu0
    %v755 = vadd.f32 %v522, %v754
    %v756 = vpop.f32.mrf.mxu0
    %v757 = vadd.f32 %v524, %v756
    %758 = vmatmul.bf16.gmra.mxu0 %v646
    %v759 = vpop.f32.mrf.mxu0
    %v760 = vadd.f32 %v527, %v759
    %v761 = vpop.f32.mrf.mxu0
    %v762 = vadd.f32 %v529, %v761
    %763 = vmatmul.bf16.gmra.mxu0 %v647
    %v764 = vpop.f32.mrf.mxu0
    %v765 = vadd.f32 %v532, %v764
    %v766 = vpop.f32.mrf.mxu0
    %v767 = vadd.f32 %v534, %v766
    %768 = vmatmul.bf16.gmra.mxu0 %v648
    %v769 = vpop.f32.mrf.mxu0
    %v770 = vadd.f32 %v537, %v769
    %v771 = vpop.f32.mrf.mxu0
    %v772 = vadd.f32 %v539, %v771
    %773 = vmatmul.bf16.gmra.mxu0 %v649
    %v774 = vpop.f32.mrf.mxu0
    %v775 = vadd.f32 %v542, %v774
    %v776 = vpop.f32.mrf.mxu0
    %v777 = vadd.f32 %v544, %v776
    %778 = vmatmul.bf16.gmra.mxu0 %v650
    %v779 = vpop.f32.mrf.mxu0
    %v780 = vadd.f32 %v547, %v779
    %v781 = vpop.f32.mrf.mxu0
    %v782 = vadd.f32 %v549, %v781
    %783 = vmatmul.bf16.gmra.mxu0 %v651
    %v784 = vpop.f32.mrf.mxu0
    %v785 = vadd.f32 %v552, %v784
    %v786 = vpop.f32.mrf.mxu0
    %v787 = vadd.f32 %v554, %v786
    %788 = vmatmul.bf16.gmra.mxu0 %v652
    %v789 = vpop.f32.mrf.mxu0
    %v790 = vadd.f32 %v557, %v789
    %v791 = vpop.f32.mrf.mxu0
    %v792 = vadd.f32 %v559, %v791
    %793 = vmatmul.bf16.gmra.mxu0 %v653
    %v794 = vpop.f32.mrf.mxu0
    %v795 = vadd.f32 %v562, %v794
    %v796 = vpop.f32.mrf.mxu0
    %v797 = vadd.f32 %v564, %v796
    %798 = vmatmul.bf16.gmra.mxu0 %v654
    %v799 = vpop.f32.mrf.mxu0
    %v800 = vadd.f32 %v567, %v799
    %v801 = vpop.f32.mrf.mxu0
    %v802 = vadd.f32 %v569, %v801
    %803 = vmatmul.bf16.gmra.mxu0 %v655
    %v804 = vpop.f32.mrf.mxu0
    %v805 = vadd.f32 %v572, %v804
    %v806 = vpop.f32.mrf.mxu0
    %v807 = vadd.f32 %v574, %v806
    %808 = vdwg.mxu0
    %s809 = scalar_lea.vmem [#allocation2], 40
    %v810 = vld [vmem:[%s809] sm:$0xf]
    %v811 = vld [vmem:[%s809 + $0x4] sm:$0xf]
    %v812 = vld [vmem:[%s809 + $0x8] sm:$0xf]
    %v813 = vld [vmem:[%s809 + $0xc] sm:$0xf]
    %v814 = vld [vmem:[%s809 + $0x10] sm:$0xf]
    %v815 = vld [vmem:[%s809 + $0x14] sm:$0xf]
    %v816 = vld [vmem:[%s809 + $0x18] sm:$0xf]
    %v817 = vld [vmem:[%s809 + $0x1c] sm:$0xf]
    %v818 = vld [vmem:[%s809 + $0x20] sm:$0xf]
    %v819 = vld [vmem:[%s809 + $0x24] sm:$0xf]
    %v820 = vld [vmem:[%s809 + $0x28] sm:$0xf]
    %v821 = vld [vmem:[%s809 + $0x2c] sm:$0xf]
    %v822 = vld [vmem:[%s809 + $0x30] sm:$0xf]
    %v823 = vld [vmem:[%s809 + $0x34] sm:$0xf]
    %v824 = vld [vmem:[%s809 + $0x38] sm:$0xf]
    %v825 = vld [vmem:[%s809 + $0x3c] sm:$0xf]
    %v826 = vld [vmem:[%s809 + $0x40] sm:$0xf]
    %v827 = vld [vmem:[%s809 + $0x44] sm:$0xf]
    %v828 = vld [vmem:[%s809 + $0x48] sm:$0xf]
    %v829 = vld [vmem:[%s809 + $0x4c] sm:$0xf]
    %v830 = vld [vmem:[%s809 + $0x50] sm:$0xf]
    %v831 = vld [vmem:[%s809 + $0x54] sm:$0xf]
    %v832 = vld [vmem:[%s809 + $0x58] sm:$0xf]
    %v833 = vld [vmem:[%s809 + $0x5c] sm:$0xf]
    %v834 = vld [vmem:[%s809 + $0x60] sm:$0xf]
    %v835 = vld [vmem:[%s809 + $0x64] sm:$0xf]
    %v836 = vld [vmem:[%s809 + $0x68] sm:$0xf]
    %v837 = vld [vmem:[%s809 + $0x6c] sm:$0xf]
    %v838 = vld [vmem:[%s809 + $0x70] sm:$0xf]
    %v839 = vld [vmem:[%s809 + $0x74] sm:$0xf]
    %v840 = vld [vmem:[%s809 + $0x78] sm:$0xf]
    %v841 = vld [vmem:[%s809 + $0x7c] sm:$0xf]
    %s842 = scalar_lea.vmem [#allocation7], 128
    %v843 = vld [vmem:[%s842] sm:$0xf]
    %v844 = vld [vmem:[%s842 + $0x4] sm:$0xf]
    %v845 = vld [vmem:[%s842 + $0x8] sm:$0xf]
    %v846 = vld [vmem:[%s842 + $0xc] sm:$0xf]
    %v847 = vld [vmem:[%s842 + $0x10] sm:$0xf]
    %v848 = vld [vmem:[%s842 + $0x14] sm:$0xf]
    %v849 = vld [vmem:[%s842 + $0x18] sm:$0xf]
    %v850 = vld [vmem:[%s842 + $0x1c] sm:$0xf]
    %v851 = vld [vmem:[%s842 + $0x20] sm:$0xf]
    %v852 = vld [vmem:[%s842 + $0x24] sm:$0xf]
    %v853 = vld [vmem:[%s842 + $0x28] sm:$0xf]
    %v854 = vld [vmem:[%s842 + $0x2c] sm:$0xf]
    %v855 = vld [vmem:[%s842 + $0x30] sm:$0xf]
    %v856 = vld [vmem:[%s842 + $0x34] sm:$0xf]
    %v857 = vld [vmem:[%s842 + $0x38] sm:$0xf]
    %v858 = vld [vmem:[%s842 + $0x3c] sm:$0xf]
    %v891 = vunpack.c.l.b16 %v810
    %v892 = vunpack.c.l.b16 %v811
    %v893 = vunpack.c.l.b16 %v812
    %v894 = vunpack.c.l.b16 %v813
    %v895 = vunpack.c.l.b16 %v814
    %v896 = vunpack.c.l.b16 %v815
    %v897 = vunpack.c.l.b16 %v816
    %v898 = vunpack.c.l.b16 %v817
    %v899 = vunpack.c.l.b16 %v818
    %v900 = vunpack.c.l.b16 %v819
    %v901 = vunpack.c.l.b16 %v820
    %v902 = vunpack.c.l.b16 %v821
    %v903 = vunpack.c.l.b16 %v822
    %v904 = vunpack.c.l.b16 %v823
    %v905 = vunpack.c.l.b16 %v824
    %v906 = vunpack.c.l.b16 %v825
    %v907 = vunpack.c.l.b16 %v826
    %v908 = vunpack.c.l.b16 %v827
    %v909 = vunpack.c.l.b16 %v828
    %v910 = vunpack.c.l.b16 %v829
    %v911 = vunpack.c.l.b16 %v830
    %v912 = vunpack.c.l.b16 %v831
    %v913 = vunpack.c.l.b16 %v832
    %v914 = vunpack.c.l.b16 %v833
    %v915 = vunpack.c.l.b16 %v834
    %v916 = vunpack.c.l.b16 %v835
    %v917 = vunpack.c.l.b16 %v836
    %v918 = vunpack.c.l.b16 %v837
    %v919 = vunpack.c.l.b16 %v838
    %v920 = vunpack.c.l.b16 %v839
    %v921 = vunpack.c.l.b16 %v840
    %v922 = vunpack.c.l.b16 %v841
    %v923 = vpack.c.b16 %v892, %v891
    %v924 = vpack.c.b16 %v894, %v893
    %v925 = vpack.c.b16 %v896, %v895
    %v926 = vpack.c.b16 %v898, %v897
    %v927 = vpack.c.b16 %v900, %v899
    %v928 = vpack.c.b16 %v902, %v901
    %v929 = vpack.c.b16 %v904, %v903
    %v930 = vpack.c.b16 %v906, %v905
    %v931 = vpack.c.b16 %v908, %v907
    %v932 = vpack.c.b16 %v910, %v909
    %v933 = vpack.c.b16 %v912, %v911
    %v934 = vpack.c.b16 %v914, %v913
    %v935 = vpack.c.b16 %v916, %v915
    %v936 = vpack.c.b16 %v918, %v917
    %v937 = vpack.c.b16 %v920, %v919
    %v938 = vpack.c.b16 %v922, %v921
    %v971 = vunpack.c.l.b16 %v843
    %v972 = vunpack.c.l.b16 %v844
    %v973 = vunpack.c.l.b16 %v845
    %v974 = vunpack.c.l.b16 %v846
    %v975 = vunpack.c.l.b16 %v847
    %v976 = vunpack.c.l.b16 %v848
    %v977 = vunpack.c.l.b16 %v849
    %v978 = vunpack.c.l.b16 %v850
    %v979 = vunpack.c.l.b16 %v851
    %v980 = vunpack.c.l.b16 %v852
    %v981 = vunpack.c.l.b16 %v853
    %v982 = vunpack.c.l.b16 %v854
    %v983 = vunpack.c.l.b16 %v855
    %v984 = vunpack.c.l.b16 %v856
    %v985 = vunpack.c.l.b16 %v857
    %v986 = vunpack.c.l.b16 %v858
    %v987 = vpack.c.b16 %v972, %v971
    %v988 = vpack.c.b16 %v974, %v973
    %v989 = vpack.c.b16 %v976, %v975
    %v990 = vpack.c.b16 %v978, %v977
    %v991 = vpack.c.b16 %v980, %v979
    %v992 = vpack.c.b16 %v982, %v981
    %v993 = vpack.c.b16 %v984, %v983
    %v994 = vpack.c.b16 %v986, %v985
    %1003 = vmatpush.bf16.msra.mxu0 %v994
    %1004 = vmatpush.bf16.msra.mxu0 %v993
    %1005 = vmatpush.bf16.msra.mxu0 %v992
    %1006 = vmatpush.bf16.msra.mxu0 %v991
    %1007 = vmatpush.bf16.msra.mxu0 %v990
    %1008 = vmatpush.bf16.msra.mxu0 %v989
    %1009 = vmatpush.bf16.msra.mxu0 %v988
    %1010 = vmatpush.bf16.msra.mxu0 %v987
    %1011 = vmatmul.bf16.gmra.mxu0 %v923
    %v1012 = vpop.f32.mrf.mxu0
    %v1013 = vadd.f32 0.0, %v1012
    %v1014 = vpop.f32.mrf.mxu0
    %v1015 = vadd.f32 0.0, %v1014
    %1016 = vmatmul.bf16.gmra.mxu0 %v924
    %v1017 = vpop.f32.mrf.mxu0
    %v1018 = vadd.f32 0.0, %v1017
    %v1019 = vpop.f32.mrf.mxu0
    %v1020 = vadd.f32 0.0, %v1019
    %1021 = vmatmul.bf16.gmra.mxu0 %v925
    %v1022 = vpop.f32.mrf.mxu0
    %v1023 = vadd.f32 0.0, %v1022
    %v1024 = vpop.f32.mrf.mxu0
    %v1025 = vadd.f32 0.0, %v1024
    %1026 = vmatmul.bf16.gmra.mxu0 %v926
    %v1027 = vpop.f32.mrf.mxu0
    %v1028 = vadd.f32 0.0, %v1027
    %v1029 = vpop.f32.mrf.mxu0
    %v1030 = vadd.f32 0.0, %v1029
    %1031 = vmatmul.bf16.gmra.mxu0 %v927
    %v1032 = vpop.f32.mrf.mxu0
    %v1033 = vadd.f32 0.0, %v1032
    %v1034 = vpop.f32.mrf.mxu0
    %v1035 = vadd.f32 0.0, %v1034
    %1036 = vmatmul.bf16.gmra.mxu0 %v928
    %v1037 = vpop.f32.mrf.mxu0
    %v1038 = vadd.f32 0.0, %v1037
    %v1039 = vpop.f32.mrf.mxu0
    %v1040 = vadd.f32 0.0, %v1039
    %1041 = vmatmul.bf16.gmra.mxu0 %v929
    %v1042 = vpop.f32.mrf.mxu0
    %v1043 = vadd.f32 0.0, %v1042
    %v1044 = vpop.f32.mrf.mxu0
    %v1045 = vadd.f32 0.0, %v1044
    %1046 = vmatmul.bf16.gmra.mxu0 %v930
    %v1047 = vpop.f32.mrf.mxu0
    %v1048 = vadd.f32 0.0, %v1047
    %v1049 = vpop.f32.mrf.mxu0
    %v1050 = vadd.f32 0.0, %v1049
    %1051 = vmatmul.bf16.gmra.mxu0 %v931
    %v1052 = vpop.f32.mrf.mxu0
    %v1053 = vadd.f32 0.0, %v1052
    %v1054 = vpop.f32.mrf.mxu0
    %v1055 = vadd.f32 0.0, %v1054
    %1056 = vmatmul.bf16.gmra.mxu0 %v932
    %v1057 = vpop.f32.mrf.mxu0
    %v1058 = vadd.f32 0.0, %v1057
    %v1059 = vpop.f32.mrf.mxu0
    %v1060 = vadd.f32 0.0, %v1059
    %1061 = vmatmul.bf16.gmra.mxu0 %v933
    %v1062 = vpop.f32.mrf.mxu0
    %v1063 = vadd.f32 0.0, %v1062
    %v1064 = vpop.f32.mrf.mxu0
    %v1065 = vadd.f32 0.0, %v1064
    %1066 = vmatmul.bf16.gmra.mxu0 %v934
    %v1067 = vpop.f32.mrf.mxu0
    %v1068 = vadd.f32 0.0, %v1067
    %v1069 = vpop.f32.mrf.mxu0
    %v1070 = vadd.f32 0.0, %v1069
    %1071 = vmatmul.bf16.gmra.mxu0 %v935
    %v1072 = vpop.f32.mrf.mxu0
    %v1073 = vadd.f32 0.0, %v1072
    %v1074 = vpop.f32.mrf.mxu0
    %v1075 = vadd.f32 0.0, %v1074
    %1076 = vmatmul.bf16.gmra.mxu0 %v936
    %v1077 = vpop.f32.mrf.mxu0
    %v1078 = vadd.f32 0.0, %v1077
    %v1079 = vpop.f32.mrf.mxu0
    %v1080 = vadd.f32 0.0, %v1079
    %1081 = vmatmul.bf16.gmra.mxu0 %v937
    %v1082 = vpop.f32.mrf.mxu0
    %v1083 = vadd.f32 0.0, %v1082
    %v1084 = vpop.f32.mrf.mxu0
    %v1085 = vadd.f32 0.0, %v1084
    %1086 = vmatmul.bf16.gmra.mxu0 %v938
    %v1087 = vpop.f32.mrf.mxu0
    %v1088 = vadd.f32 0.0, %v1087
    %v1089 = vpop.f32.mrf.mxu0
    %v1090 = vadd.f32 0.0, %v1089
    %1091 = vdwg.mxu0
    %v1092 = vadd.f32 %v730, %v1013
    %v1093 = vadd.f32 %v732, %v1015
    %v1094 = vadd.f32 %v735, %v1018
    %v1095 = vadd.f32 %v737, %v1020
    %v1096 = vadd.f32 %v740, %v1023
    %v1097 = vadd.f32 %v742, %v1025
    %v1098 = vadd.f32 %v745, %v1028
    %v1099 = vadd.f32 %v747, %v1030
    %v1100 = vadd.f32 %v750, %v1033
    %v1101 = vadd.f32 %v752, %v1035
    %v1102 = vadd.f32 %v755, %v1038
    %v1103 = vadd.f32 %v757, %v1040
    %v1104 = vadd.f32 %v760, %v1043
    %v1105 = vadd.f32 %v762, %v1045
    %v1106 = vadd.f32 %v765, %v1048
    %v1107 = vadd.f32 %v767, %v1050
    %v1108 = vadd.f32 %v770, %v1053
    %v1109 = vadd.f32 %v772, %v1055
    %v1110 = vadd.f32 %v775, %v1058
    %v1111 = vadd.f32 %v777, %v1060
    %v1112 = vadd.f32 %v780, %v1063
    %v1113 = vadd.f32 %v782, %v1065
    %v1114 = vadd.f32 %v785, %v1068
    %v1115 = vadd.f32 %v787, %v1070
    %v1116 = vadd.f32 %v790, %v1073
    %v1117 = vadd.f32 %v792, %v1075
    %v1118 = vadd.f32 %v795, %v1078
    %v1119 = vadd.f32 %v797, %v1080
    %v1120 = vadd.f32 %v800, %v1083
    %v1121 = vadd.f32 %v802, %v1085
    %v1122 = vadd.f32 %v805, %v1088
    %v1123 = vadd.f32 %v807, %v1090
    %v1124 = vld [vmem:[%s211] sm:$0xf]
    %v1125 = vld [vmem:[%s211 + $0x4] sm:$0xf]
    %v1126 = vld [vmem:[%s211 + $0x8] sm:$0xf]
    %v1127 = vld [vmem:[%s211 + $0xc] sm:$0xf]
    %v1128 = vld [vmem:[%s211 + $0x10] sm:$0xf]
    %v1129 = vld [vmem:[%s211 + $0x14] sm:$0xf]
    %v1130 = vld [vmem:[%s211 + $0x18] sm:$0xf]
    %v1131 = vld [vmem:[%s211 + $0x1c] sm:$0xf]
    %v1132 = vld [vmem:[%s211 + $0x20] sm:$0xf]
    %v1133 = vld [vmem:[%s211 + $0x24] sm:$0xf]
    %v1134 = vld [vmem:[%s211 + $0x28] sm:$0xf]
    %v1135 = vld [vmem:[%s211 + $0x2c] sm:$0xf]
    %v1136 = vld [vmem:[%s211 + $0x30] sm:$0xf]
    %v1137 = vld [vmem:[%s211 + $0x34] sm:$0xf]
    %v1138 = vld [vmem:[%s211 + $0x38] sm:$0xf]
    %v1139 = vld [vmem:[%s211 + $0x3c] sm:$0xf]
    %v1140 = vld [vmem:[%s211 + $0x40] sm:$0xf]
    %v1141 = vld [vmem:[%s211 + $0x44] sm:$0xf]
    %v1142 = vld [vmem:[%s211 + $0x48] sm:$0xf]
    %v1143 = vld [vmem:[%s211 + $0x4c] sm:$0xf]
    %v1144 = vld [vmem:[%s211 + $0x50] sm:$0xf]
    %v1145 = vld [vmem:[%s211 + $0x54] sm:$0xf]
    %v1146 = vld [vmem:[%s211 + $0x58] sm:$0xf]
    %v1147 = vld [vmem:[%s211 + $0x5c] sm:$0xf]
    %v1148 = vld [vmem:[%s211 + $0x60] sm:$0xf]
    %v1149 = vld [vmem:[%s211 + $0x64] sm:$0xf]
    %v1150 = vld [vmem:[%s211 + $0x68] sm:$0xf]
    %v1151 = vld [vmem:[%s211 + $0x6c] sm:$0xf]
    %v1152 = vld [vmem:[%s211 + $0x70] sm:$0xf]
    %v1153 = vld [vmem:[%s211 + $0x74] sm:$0xf]
    %v1154 = vld [vmem:[%s211 + $0x78] sm:$0xf]
    %v1155 = vld [vmem:[%s211 + $0x7c] sm:$0xf]
    %s1156 = scalar_lea.vmem [#allocation7], 192
    %v1157 = vld [vmem:[%s1156] sm:$0xf]
    %v1158 = vld [vmem:[%s1156 + $0x4] sm:$0xf]
    %v1159 = vld [vmem:[%s1156 + $0x8] sm:$0xf]
    %v1160 = vld [vmem:[%s1156 + $0xc] sm:$0xf]
    %v1161 = vld [vmem:[%s1156 + $0x10] sm:$0xf]
    %v1162 = vld [vmem:[%s1156 + $0x14] sm:$0xf]
    %v1163 = vld [vmem:[%s1156 + $0x18] sm:$0xf]
    %v1164 = vld [vmem:[%s1156 + $0x1c] sm:$0xf]
    %v1165 = vld [vmem:[%s1156 + $0x20] sm:$0xf]
    %v1166 = vld [vmem:[%s1156 + $0x24] sm:$0xf]
    %v1167 = vld [vmem:[%s1156 + $0x28] sm:$0xf]
    %v1168 = vld [vmem:[%s1156 + $0x2c] sm:$0xf]
    %v1169 = vld [vmem:[%s1156 + $0x30] sm:$0xf]
    %v1170 = vld [vmem:[%s1156 + $0x34] sm:$0xf]
    %v1171 = vld [vmem:[%s1156 + $0x38] sm:$0xf]
    %v1172 = vld [vmem:[%s1156 + $0x3c] sm:$0xf]
    %v1205 = vunpack.c.l.b16 %v1124
    %v1206 = vunpack.c.l.b16 %v1125
    %v1207 = vunpack.c.l.b16 %v1126
    %v1208 = vunpack.c.l.b16 %v1127
    %v1209 = vunpack.c.l.b16 %v1128
    %v1210 = vunpack.c.l.b16 %v1129
    %v1211 = vunpack.c.l.b16 %v1130
    %v1212 = vunpack.c.l.b16 %v1131
    %v1213 = vunpack.c.l.b16 %v1132
    %v1214 = vunpack.c.l.b16 %v1133
    %v1215 = vunpack.c.l.b16 %v1134
    %v1216 = vunpack.c.l.b16 %v1135
    %v1217 = vunpack.c.l.b16 %v1136
    %v1218 = vunpack.c.l.b16 %v1137
    %v1219 = vunpack.c.l.b16 %v1138
    %v1220 = vunpack.c.l.b16 %v1139
    %v1221 = vunpack.c.l.b16 %v1140
    %v1222 = vunpack.c.l.b16 %v1141
    %v1223 = vunpack.c.l.b16 %v1142
    %v1224 = vunpack.c.l.b16 %v1143
    %v1225 = vunpack.c.l.b16 %v1144
    %v1226 = vunpack.c.l.b16 %v1145
    %v1227 = vunpack.c.l.b16 %v1146
    %v1228 = vunpack.c.l.b16 %v1147
    %v1229 = vunpack.c.l.b16 %v1148
    %v1230 = vunpack.c.l.b16 %v1149
    %v1231 = vunpack.c.l.b16 %v1150
    %v1232 = vunpack.c.l.b16 %v1151
    %v1233 = vunpack.c.l.b16 %v1152
    %v1234 = vunpack.c.l.b16 %v1153
    %v1235 = vunpack.c.l.b16 %v1154
    %v1236 = vunpack.c.l.b16 %v1155
    %v1237 = vpack.c.b16 %v1206, %v1205
    %v1238 = vpack.c.b16 %v1208, %v1207
    %v1239 = vpack.c.b16 %v1210, %v1209
    %v1240 = vpack.c.b16 %v1212, %v1211
    %v1241 = vpack.c.b16 %v1214, %v1213
    %v1242 = vpack.c.b16 %v1216, %v1215
    %v1243 = vpack.c.b16 %v1218, %v1217
    %v1244 = vpack.c.b16 %v1220, %v1219
    %v1245 = vpack.c.b16 %v1222, %v1221
    %v1246 = vpack.c.b16 %v1224, %v1223
    %v1247 = vpack.c.b16 %v1226, %v1225
    %v1248 = vpack.c.b16 %v1228, %v1227
    %v1249 = vpack.c.b16 %v1230, %v1229
    %v1250 = vpack.c.b16 %v1232, %v1231
    %v1251 = vpack.c.b16 %v1234, %v1233
    %v1252 = vpack.c.b16 %v1236, %v1235
    %v1285 = vunpack.c.l.b16 %v1157
    %v1286 = vunpack.c.l.b16 %v1158
    %v1287 = vunpack.c.l.b16 %v1159
    %v1288 = vunpack.c.l.b16 %v1160
    %v1289 = vunpack.c.l.b16 %v1161
    %v1290 = vunpack.c.l.b16 %v1162
    %v1291 = vunpack.c.l.b16 %v1163
    %v1292 = vunpack.c.l.b16 %v1164
    %v1293 = vunpack.c.l.b16 %v1165
    %v1294 = vunpack.c.l.b16 %v1166
    %v1295 = vunpack.c.l.b16 %v1167
    %v1296 = vunpack.c.l.b16 %v1168
    %v1297 = vunpack.c.l.b16 %v1169
    %v1298 = vunpack.c.l.b16 %v1170
    %v1299 = vunpack.c.l.b16 %v1171
    %v1300 = vunpack.c.l.b16 %v1172
    %v1301 = vpack.c.b16 %v1286, %v1285
    %v1302 = vpack.c.b16 %v1288, %v1287
    %v1303 = vpack.c.b16 %v1290, %v1289
    %v1304 = vpack.c.b16 %v1292, %v1291
    %v1305 = vpack.c.b16 %v1294, %v1293
    %v1306 = vpack.c.b16 %v1296, %v1295
    %v1307 = vpack.c.b16 %v1298, %v1297
    %v1308 = vpack.c.b16 %v1300, %v1299
    %1317 = vmatpush.bf16.msra.mxu0 %v1308
    %1318 = vmatpush.bf16.msra.mxu0 %v1307
    %1319 = vmatpush.bf16.msra.mxu0 %v1306
    %1320 = vmatpush.bf16.msra.mxu0 %v1305
    %1321 = vmatpush.bf16.msra.mxu0 %v1304
    %1322 = vmatpush.bf16.msra.mxu0 %v1303
    %1323 = vmatpush.bf16.msra.mxu0 %v1302
    %1324 = vmatpush.bf16.msra.mxu0 %v1301
    %1325 = vmatmul.bf16.gmra.mxu0 %v1237
    %v1326 = vpop.f32.mrf.mxu0
    %v1327 = vadd.f32 0.0, %v1326
    %v1328 = vpop.f32.mrf.mxu0
    %v1329 = vadd.f32 0.0, %v1328
    %1330 = vmatmul.bf16.gmra.mxu0 %v1238
    %v1331 = vpop.f32.mrf.mxu0
    %v1332 = vadd.f32 0.0, %v1331
    %v1333 = vpop.f32.mrf.mxu0
    %v1334 = vadd.f32 0.0, %v1333
    %1335 = vmatmul.bf16.gmra.mxu0 %v1239
    %v1336 = vpop.f32.mrf.mxu0
    %v1337 = vadd.f32 0.0, %v1336
    %v1338 = vpop.f32.mrf.mxu0
    %v1339 = vadd.f32 0.0, %v1338
    %1340 = vmatmul.bf16.gmra.mxu0 %v1240
    %v1341 = vpop.f32.mrf.mxu0
    %v1342 = vadd.f32 0.0, %v1341
    %v1343 = vpop.f32.mrf.mxu0
    %v1344 = vadd.f32 0.0, %v1343
    %1345 = vmatmul.bf16.gmra.mxu0 %v1241
    %v1346 = vpop.f32.mrf.mxu0
    %v1347 = vadd.f32 0.0, %v1346
    %v1348 = vpop.f32.mrf.mxu0
    %v1349 = vadd.f32 0.0, %v1348
    %1350 = vmatmul.bf16.gmra.mxu0 %v1242
    %v1351 = vpop.f32.mrf.mxu0
    %v1352 = vadd.f32 0.0, %v1351
    %v1353 = vpop.f32.mrf.mxu0
    %v1354 = vadd.f32 0.0, %v1353
    %1355 = vmatmul.bf16.gmra.mxu0 %v1243
    %v1356 = vpop.f32.mrf.mxu0
    %v1357 = vadd.f32 0.0, %v1356
    %v1358 = vpop.f32.mrf.mxu0
    %v1359 = vadd.f32 0.0, %v1358
    %1360 = vmatmul.bf16.gmra.mxu0 %v1244
    %v1361 = vpop.f32.mrf.mxu0
    %v1362 = vadd.f32 0.0, %v1361
    %v1363 = vpop.f32.mrf.mxu0
    %v1364 = vadd.f32 0.0, %v1363
    %1365 = vmatmul.bf16.gmra.mxu0 %v1245
    %v1366 = vpop.f32.mrf.mxu0
    %v1367 = vadd.f32 0.0, %v1366
    %v1368 = vpop.f32.mrf.mxu0
    %v1369 = vadd.f32 0.0, %v1368
    %1370 = vmatmul.bf16.gmra.mxu0 %v1246
    %v1371 = vpop.f32.mrf.mxu0
    %v1372 = vadd.f32 0.0, %v1371
    %v1373 = vpop.f32.mrf.mxu0
    %v1374 = vadd.f32 0.0, %v1373
    %1375 = vmatmul.bf16.gmra.mxu0 %v1247
    %v1376 = vpop.f32.mrf.mxu0
    %v1377 = vadd.f32 0.0, %v1376
    %v1378 = vpop.f32.mrf.mxu0
    %v1379 = vadd.f32 0.0, %v1378
    %1380 = vmatmul.bf16.gmra.mxu0 %v1248
    %v1381 = vpop.f32.mrf.mxu0
    %v1382 = vadd.f32 0.0, %v1381
    %v1383 = vpop.f32.mrf.mxu0
    %v1384 = vadd.f32 0.0, %v1383
    %1385 = vmatmul.bf16.gmra.mxu0 %v1249
    %v1386 = vpop.f32.mrf.mxu0
    %v1387 = vadd.f32 0.0, %v1386
    %v1388 = vpop.f32.mrf.mxu0
    %v1389 = vadd.f32 0.0, %v1388
    %1390 = vmatmul.bf16.gmra.mxu0 %v1250
    %v1391 = vpop.f32.mrf.mxu0
    %v1392 = vadd.f32 0.0, %v1391
    %v1393 = vpop.f32.mrf.mxu0
    %v1394 = vadd.f32 0.0, %v1393
    %1395 = vmatmul.bf16.gmra.mxu0 %v1251
    %v1396 = vpop.f32.mrf.mxu0
    %v1397 = vadd.f32 0.0, %v1396
    %v1398 = vpop.f32.mrf.mxu0
    %v1399 = vadd.f32 0.0, %v1398
    %1400 = vmatmul.bf16.gmra.mxu0 %v1252
    %v1401 = vpop.f32.mrf.mxu0
    %v1402 = vadd.f32 0.0, %v1401
    %v1403 = vpop.f32.mrf.mxu0
    %v1404 = vadd.f32 0.0, %v1403
    %1405 = vdwg.mxu0
    %v1406 = vadd.f32 %v1092, %v1327
    %v1407 = vadd.f32 %v1093, %v1329
    %v1408 = vadd.f32 %v1094, %v1332
    %v1409 = vadd.f32 %v1095, %v1334
    %v1410 = vadd.f32 %v1096, %v1337
    %v1411 = vadd.f32 %v1097, %v1339
    %v1412 = vadd.f32 %v1098, %v1342
    %v1413 = vadd.f32 %v1099, %v1344
    %v1414 = vadd.f32 %v1100, %v1347
    %v1415 = vadd.f32 %v1101, %v1349
    %v1416 = vadd.f32 %v1102, %v1352
    %v1417 = vadd.f32 %v1103, %v1354
    %v1418 = vadd.f32 %v1104, %v1357
    %v1419 = vadd.f32 %v1105, %v1359
    %v1420 = vadd.f32 %v1106, %v1362
    %v1421 = vadd.f32 %v1107, %v1364
    %v1422 = vadd.f32 %v1108, %v1367
    %v1423 = vadd.f32 %v1109, %v1369
    %v1424 = vadd.f32 %v1110, %v1372
    %v1425 = vadd.f32 %v1111, %v1374
    %v1426 = vadd.f32 %v1112, %v1377
    %v1427 = vadd.f32 %v1113, %v1379
    %v1428 = vadd.f32 %v1114, %v1382
    %v1429 = vadd.f32 %v1115, %v1384
    %v1430 = vadd.f32 %v1116, %v1387
    %v1431 = vadd.f32 %v1117, %v1389
    %v1432 = vadd.f32 %v1118, %v1392
    %v1433 = vadd.f32 %v1119, %v1394
    %v1434 = vadd.f32 %v1120, %v1397
    %v1435 = vadd.f32 %v1121, %v1399
    %v1436 = vadd.f32 %v1122, %v1402
    %v1437 = vadd.f32 %v1123, %v1404
    %v1438 = vld [vmem:[%s2] sm:$0x1]
    %v1440 = vperm.slane %v1438, 0
    %v1442 = vadd.f32 %v1406, %v1440
    %v1443 = vadd.f32 %v1407, %v1440
    %v1444 = vadd.f32 %v1408, %v1440
    %v1445 = vadd.f32 %v1409, %v1440
    %v1446 = vadd.f32 %v1410, %v1440
    %v1447 = vadd.f32 %v1411, %v1440
    %v1448 = vadd.f32 %v1412, %v1440
    %v1449 = vadd.f32 %v1413, %v1440
    %v1450 = vadd.f32 %v1414, %v1440
    %v1451 = vadd.f32 %v1415, %v1440
    %v1452 = vadd.f32 %v1416, %v1440
    %v1453 = vadd.f32 %v1417, %v1440
    %v1454 = vadd.f32 %v1418, %v1440
    %v1455 = vadd.f32 %v1419, %v1440
    %v1456 = vadd.f32 %v1420, %v1440
    %v1457 = vadd.f32 %v1421, %v1440
    %v1458 = vadd.f32 %v1422, %v1440
    %v1459 = vadd.f32 %v1423, %v1440
    %v1460 = vadd.f32 %v1424, %v1440
    %v1461 = vadd.f32 %v1425, %v1440
    %v1462 = vadd.f32 %v1426, %v1440
    %v1463 = vadd.f32 %v1427, %v1440
    %v1464 = vadd.f32 %v1428, %v1440
    %v1465 = vadd.f32 %v1429, %v1440
    %v1466 = vadd.f32 %v1430, %v1440
    %v1467 = vadd.f32 %v1431, %v1440
    %v1468 = vadd.f32 %v1432, %v1440
    %v1469 = vadd.f32 %v1433, %v1440
    %v1470 = vadd.f32 %v1434, %v1440
    %v1471 = vadd.f32 %v1435, %v1440
    %v1472 = vadd.f32 %v1436, %v1440
    %v1473 = vadd.f32 %v1437, %v1440
    %v1474 = vmax.f32 %v1442, 0.0
    %v1475 = vmax.f32 %v1443, 0.0
    %v1476 = vmax.f32 %v1444, 0.0
    %v1477 = vmax.f32 %v1445, 0.0
    %v1478 = vmax.f32 %v1446, 0.0
    %v1479 = vmax.f32 %v1447, 0.0
    %v1480 = vmax.f32 %v1448, 0.0
    %v1481 = vmax.f32 %v1449, 0.0
    %v1482 = vmax.f32 %v1450, 0.0
    %v1483 = vmax.f32 %v1451, 0.0
    %v1484 = vmax.f32 %v1452, 0.0
    %v1485 = vmax.f32 %v1453, 0.0
    %v1486 = vmax.f32 %v1454, 0.0
    %v1487 = vmax.f32 %v1455, 0.0
    %v1488 = vmax.f32 %v1456, 0.0
    %v1489 = vmax.f32 %v1457, 0.0
    %v1490 = vmax.f32 %v1458, 0.0
    %v1491 = vmax.f32 %v1459, 0.0
    %v1492 = vmax.f32 %v1460, 0.0
    %v1493 = vmax.f32 %v1461, 0.0
    %v1494 = vmax.f32 %v1462, 0.0
    %v1495 = vmax.f32 %v1463, 0.0
    %v1496 = vmax.f32 %v1464, 0.0
    %v1497 = vmax.f32 %v1465, 0.0
    %v1498 = vmax.f32 %v1466, 0.0
    %v1499 = vmax.f32 %v1467, 0.0
    %v1500 = vmax.f32 %v1468, 0.0
    %v1501 = vmax.f32 %v1469, 0.0
    %v1502 = vmax.f32 %v1470, 0.0
    %v1503 = vmax.f32 %v1471, 0.0
    %v1504 = vmax.f32 %v1472, 0.0
    %v1505 = vmax.f32 %v1473, 0.0
    %v1506 = vpack.c.bf16 %v1474, %v1474
    %v1507 = vpack.c.bf16 %v1475, %v1475
    %v1508 = vpack.c.bf16 %v1476, %v1476
    %v1509 = vpack.c.bf16 %v1477, %v1477
    %v1510 = vpack.c.bf16 %v1478, %v1478
    %v1511 = vpack.c.bf16 %v1479, %v1479
    %v1512 = vpack.c.bf16 %v1480, %v1480
    %v1513 = vpack.c.bf16 %v1481, %v1481
    %v1514 = vpack.c.bf16 %v1482, %v1482
    %v1515 = vpack.c.bf16 %v1483, %v1483
    %v1516 = vpack.c.bf16 %v1484, %v1484
    %v1517 = vpack.c.bf16 %v1485, %v1485
    %v1518 = vpack.c.bf16 %v1486, %v1486
    %v1519 = vpack.c.bf16 %v1487, %v1487
    %v1520 = vpack.c.bf16 %v1488, %v1488
    %v1521 = vpack.c.bf16 %v1489, %v1489
    %v1522 = vpack.c.bf16 %v1490, %v1490
    %v1523 = vpack.c.bf16 %v1491, %v1491
    %v1524 = vpack.c.bf16 %v1492, %v1492
    %v1525 = vpack.c.bf16 %v1493, %v1493
    %v1526 = vpack.c.bf16 %v1494, %v1494
    %v1527 = vpack.c.bf16 %v1495, %v1495
    %v1528 = vpack.c.bf16 %v1496, %v1496
    %v1529 = vpack.c.bf16 %v1497, %v1497
    %v1530 = vpack.c.bf16 %v1498, %v1498
    %v1531 = vpack.c.bf16 %v1499, %v1499
    %v1532 = vpack.c.bf16 %v1500, %v1500
    %v1533 = vpack.c.bf16 %v1501, %v1501
    %v1534 = vpack.c.bf16 %v1502, %v1502
    %v1535 = vpack.c.bf16 %v1503, %v1503
    %v1536 = vpack.c.bf16 %v1504, %v1504
    %v1537 = vpack.c.bf16 %v1505, %v1505
    %s1538 = scalar_lea.vmem [#allocation3], 48
    %1539 = vst [vmem:[%s1538] sm:$0xf] %v1506
    %1540 = vst [vmem:[%s1538 + $0x4] sm:$0xf] %v1507
    %1541 = vst [vmem:[%s1538 + $0x8] sm:$0xf] %v1508
    %1542 = vst [vmem:[%s1538 + $0xc] sm:$0xf] %v1509
    %1543 = vst [vmem:[%s1538 + $0x10] sm:$0xf] %v1510
    %1544 = vst [vmem:[%s1538 + $0x14] sm:$0xf] %v1511
    %1545 = vst [vmem:[%s1538 + $0x18] sm:$0xf] %v1512
    %1546 = vst [vmem:[%s1538 + $0x1c] sm:$0xf] %v1513
    %1547 = vst [vmem:[%s1538 + $0x20] sm:$0xf] %v1514
    %1548 = vst [vmem:[%s1538 + $0x24] sm:$0xf] %v1515
    %1549 = vst [vmem:[%s1538 + $0x28] sm:$0xf] %v1516
    %1550 = vst [vmem:[%s1538 + $0x2c] sm:$0xf] %v1517
    %1551 = vst [vmem:[%s1538 + $0x30] sm:$0xf] %v1518
    %1552 = vst [vmem:[%s1538 + $0x34] sm:$0xf] %v1519
    %1553 = vst [vmem:[%s1538 + $0x38] sm:$0xf] %v1520
    %1554 = vst [vmem:[%s1538 + $0x3c] sm:$0xf] %v1521
    %1555 = vst [vmem:[%s1538 + $0x40] sm:$0xf] %v1522
    %1556 = vst [vmem:[%s1538 + $0x44] sm:$0xf] %v1523
    %1557 = vst [vmem:[%s1538 + $0x48] sm:$0xf] %v1524
    %1558 = vst [vmem:[%s1538 + $0x4c] sm:$0xf] %v1525
    %1559 = vst [vmem:[%s1538 + $0x50] sm:$0xf] %v1526
    %1560 = vst [vmem:[%s1538 + $0x54] sm:$0xf] %v1527
    %1561 = vst [vmem:[%s1538 + $0x58] sm:$0xf] %v1528
    %1562 = vst [vmem:[%s1538 + $0x5c] sm:$0xf] %v1529
    %1563 = vst [vmem:[%s1538 + $0x60] sm:$0xf] %v1530
    %1564 = vst [vmem:[%s1538 + $0x64] sm:$0xf] %v1531
    %1565 = vst [vmem:[%s1538 + $0x68] sm:$0xf] %v1532
    %1566 = vst [vmem:[%s1538 + $0x6c] sm:$0xf] %v1533
    %1567 = vst [vmem:[%s1538 + $0x70] sm:$0xf] %v1534
    %1568 = vst [vmem:[%s1538 + $0x74] sm:$0xf] %v1535
    %1569 = vst [vmem:[%s1538 + $0x78] sm:$0xf] %v1536
    %1570 = vst [vmem:[%s1538 + $0x7c] sm:$0xf] %v1537
    %s1571 = scalar_lea.vmem [#allocation3], 24
    %v1572 = vld [vmem:[%s1571] sm:$0xf]
    %v1573 = vld [vmem:[%s1571 + $0x4] sm:$0xf]
    %v1574 = vld [vmem:[%s1571 + $0x8] sm:$0xf]
    %v1575 = vld [vmem:[%s1571 + $0xc] sm:$0xf]
    %v1576 = vld [vmem:[%s1571 + $0x10] sm:$0xf]
    %v1577 = vld [vmem:[%s1571 + $0x14] sm:$0xf]
    %v1578 = vld [vmem:[%s1571 + $0x18] sm:$0xf]
    %v1579 = vld [vmem:[%s1571 + $0x1c] sm:$0xf]
    %v1580 = vld [vmem:[%s1571 + $0x20] sm:$0xf]
    %v1581 = vld [vmem:[%s1571 + $0x24] sm:$0xf]
    %v1582 = vld [vmem:[%s1571 + $0x28] sm:$0xf]
    %v1583 = vld [vmem:[%s1571 + $0x2c] sm:$0xf]
    %v1584 = vld [vmem:[%s1571 + $0x30] sm:$0xf]
    %v1585 = vld [vmem:[%s1571 + $0x34] sm:$0xf]
    %v1586 = vld [vmem:[%s1571 + $0x38] sm:$0xf]
    %v1587 = vld [vmem:[%s1571 + $0x3c] sm:$0xf]
    %v1588 = vld [vmem:[%s1571 + $0x40] sm:$0xf]
    %v1589 = vld [vmem:[%s1571 + $0x44] sm:$0xf]
    %v1590 = vld [vmem:[%s1571 + $0x48] sm:$0xf]
    %v1591 = vld [vmem:[%s1571 + $0x4c] sm:$0xf]
    %v1592 = vld [vmem:[%s1571 + $0x50] sm:$0xf]
    %v1593 = vld [vmem:[%s1571 + $0x54] sm:$0xf]
    %v1594 = vld [vmem:[%s1571 + $0x58] sm:$0xf]
    %v1595 = vld [vmem:[%s1571 + $0x5c] sm:$0xf]
    %v1596 = vld [vmem:[%s1571 + $0x60] sm:$0xf]
    %v1597 = vld [vmem:[%s1571 + $0x64] sm:$0xf]
    %v1598 = vld [vmem:[%s1571 + $0x68] sm:$0xf]
    %v1599 = vld [vmem:[%s1571 + $0x6c] sm:$0xf]
    %v1600 = vld [vmem:[%s1571 + $0x70] sm:$0xf]
    %v1601 = vld [vmem:[%s1571 + $0x74] sm:$0xf]
    %v1602 = vld [vmem:[%s1571 + $0x78] sm:$0xf]
    %v1603 = vld [vmem:[%s1571 + $0x7c] sm:$0xf]
    %v1604 = vld [vmem:[#allocation9] sm:$0xf]
    %v1605 = vld [vmem:[#allocation9 + $0x4] sm:$0xf]
    %v1606 = vld [vmem:[#allocation9 + $0x8] sm:$0xf]
    %v1607 = vld [vmem:[#allocation9 + $0xc] sm:$0xf]
    %v1608 = vld [vmem:[#allocation9 + $0x10] sm:$0xf]
    %v1609 = vld [vmem:[#allocation9 + $0x14] sm:$0xf]
    %v1610 = vld [vmem:[#allocation9 + $0x18] sm:$0xf]
    %v1611 = vld [vmem:[#allocation9 + $0x1c] sm:$0xf]
    %v1612 = vld [vmem:[#allocation9 + $0x20] sm:$0xf]
    %v1613 = vld [vmem:[#allocation9 + $0x24] sm:$0xf]
    %v1614 = vld [vmem:[#allocation9 + $0x28] sm:$0xf]
    %v1615 = vld [vmem:[#allocation9 + $0x2c] sm:$0xf]
    %v1616 = vld [vmem:[#allocation9 + $0x30] sm:$0xf]
    %v1617 = vld [vmem:[#allocation9 + $0x34] sm:$0xf]
    %v1618 = vld [vmem:[#allocation9 + $0x38] sm:$0xf]
    %v1619 = vld [vmem:[#allocation9 + $0x3c] sm:$0xf]
    %s1620 = scalar_lea.vmem [#allocation3], 32
    %v1621 = vld [vmem:[%s1620] sm:$0xf]
    %v1622 = vld [vmem:[%s1620 + $0x4] sm:$0xf]
    %v1623 = vld [vmem:[%s1620 + $0x8] sm:$0xf]
    %v1624 = vld [vmem:[%s1620 + $0xc] sm:$0xf]
    %v1625 = vld [vmem:[%s1620 + $0x10] sm:$0xf]
    %v1626 = vld [vmem:[%s1620 + $0x14] sm:$0xf]
    %v1627 = vld [vmem:[%s1620 + $0x18] sm:$0xf]
    %v1628 = vld [vmem:[%s1620 + $0x1c] sm:$0xf]
    %v1629 = vld [vmem:[%s1620 + $0x20] sm:$0xf]
    %v1630 = vld [vmem:[%s1620 + $0x24] sm:$0xf]
    %v1631 = vld [vmem:[%s1620 + $0x28] sm:$0xf]
    %v1632 = vld [vmem:[%s1620 + $0x2c] sm:$0xf]
    %v1633 = vld [vmem:[%s1620 + $0x30] sm:$0xf]
    %v1634 = vld [vmem:[%s1620 + $0x34] sm:$0xf]
    %v1635 = vld [vmem:[%s1620 + $0x38] sm:$0xf]
    %v1636 = vld [vmem:[%s1620 + $0x3c] sm:$0xf]
    %v1637 = vld [vmem:[%s1620 + $0x40] sm:$0xf]
    %v1638 = vld [vmem:[%s1620 + $0x44] sm:$0xf]
    %v1639 = vld [vmem:[%s1620 + $0x48] sm:$0xf]
    %v1640 = vld [vmem:[%s1620 + $0x4c] sm:$0xf]
    %v1641 = vld [vmem:[%s1620 + $0x50] sm:$0xf]
    %v1642 = vld [vmem:[%s1620 + $0x54] sm:$0xf]
    %v1643 = vld [vmem:[%s1620 + $0x58] sm:$0xf]
    %v1644 = vld [vmem:[%s1620 + $0x5c] sm:$0xf]
    %v1645 = vld [vmem:[%s1620 + $0x60] sm:$0xf]
    %v1646 = vld [vmem:[%s1620 + $0x64] sm:$0xf]
    %v1647 = vld [vmem:[%s1620 + $0x68] sm:$0xf]
    %v1648 = vld [vmem:[%s1620 + $0x6c] sm:$0xf]
    %v1649 = vld [vmem:[%s1620 + $0x70] sm:$0xf]
    %v1650 = vld [vmem:[%s1620 + $0x74] sm:$0xf]
    %v1651 = vld [vmem:[%s1620 + $0x78] sm:$0xf]
    %v1652 = vld [vmem:[%s1620 + $0x7c] sm:$0xf]
    %s1653 = scalar_lea.vmem [#allocation9], 64
    %v1654 = vld [vmem:[%s1653] sm:$0xf]
    %v1655 = vld [vmem:[%s1653 + $0x4] sm:$0xf]
    %v1656 = vld [vmem:[%s1653 + $0x8] sm:$0xf]
    %v1657 = vld [vmem:[%s1653 + $0xc] sm:$0xf]
    %v1658 = vld [vmem:[%s1653 + $0x10] sm:$0xf]
    %v1659 = vld [vmem:[%s1653 + $0x14] sm:$0xf]
    %v1660 = vld [vmem:[%s1653 + $0x18] sm:$0xf]
    %v1661 = vld [vmem:[%s1653 + $0x1c] sm:$0xf]
    %v1662 = vld [vmem:[%s1653 + $0x20] sm:$0xf]
    %v1663 = vld [vmem:[%s1653 + $0x24] sm:$0xf]
    %v1664 = vld [vmem:[%s1653 + $0x28] sm:$0xf]
    %v1665 = vld [vmem:[%s1653 + $0x2c] sm:$0xf]
    %v1666 = vld [vmem:[%s1653 + $0x30] sm:$0xf]
    %v1667 = vld [vmem:[%s1653 + $0x34] sm:$0xf]
    %v1668 = vld [vmem:[%s1653 + $0x38] sm:$0xf]
    %v1669 = vld [vmem:[%s1653 + $0x3c] sm:$0xf]
    %v1702 = vunpack.c.l.b16 %v1621
    %v1703 = vunpack.c.l.b16 %v1622
    %v1704 = vunpack.c.l.b16 %v1623
    %v1705 = vunpack.c.l.b16 %v1624
    %v1706 = vunpack.c.l.b16 %v1625
    %v1707 = vunpack.c.l.b16 %v1626
    %v1708 = vunpack.c.l.b16 %v1627
    %v1709 = vunpack.c.l.b16 %v1628
    %v1710 = vunpack.c.l.b16 %v1629
    %v1711 = vunpack.c.l.b16 %v1630
    %v1712 = vunpack.c.l.b16 %v1631
    %v1713 = vunpack.c.l.b16 %v1632
    %v1714 = vunpack.c.l.b16 %v1633
    %v1715 = vunpack.c.l.b16 %v1634
    %v1716 = vunpack.c.l.b16 %v1635
    %v1717 = vunpack.c.l.b16 %v1636
    %v1718 = vunpack.c.l.b16 %v1637
    %v1719 = vunpack.c.l.b16 %v1638
    %v1720 = vunpack.c.l.b16 %v1639
    %v1721 = vunpack.c.l.b16 %v1640
    %v1722 = vunpack.c.l.b16 %v1641
    %v1723 = vunpack.c.l.b16 %v1642
    %v1724 = vunpack.c.l.b16 %v1643
    %v1725 = vunpack.c.l.b16 %v1644
    %v1726 = vunpack.c.l.b16 %v1645
    %v1727 = vunpack.c.l.b16 %v1646
    %v1728 = vunpack.c.l.b16 %v1647
    %v1729 = vunpack.c.l.b16 %v1648
    %v1730 = vunpack.c.l.b16 %v1649
    %v1731 = vunpack.c.l.b16 %v1650
    %v1732 = vunpack.c.l.b16 %v1651
    %v1733 = vunpack.c.l.b16 %v1652
    %v1734 = vpack.c.b16 %v1703, %v1702
    %v1735 = vpack.c.b16 %v1705, %v1704
    %v1736 = vpack.c.b16 %v1707, %v1706
    %v1737 = vpack.c.b16 %v1709, %v1708
    %v1738 = vpack.c.b16 %v1711, %v1710
    %v1739 = vpack.c.b16 %v1713, %v1712
    %v1740 = vpack.c.b16 %v1715, %v1714
    %v1741 = vpack.c.b16 %v1717, %v1716
    %v1742 = vpack.c.b16 %v1719, %v1718
    %v1743 = vpack.c.b16 %v1721, %v1720
    %v1744 = vpack.c.b16 %v1723, %v1722
    %v1745 = vpack.c.b16 %v1725, %v1724
    %v1746 = vpack.c.b16 %v1727, %v1726
    %v1747 = vpack.c.b16 %v1729, %v1728
    %v1748 = vpack.c.b16 %v1731, %v1730
    %v1749 = vpack.c.b16 %v1733, %v1732
    %v1782 = vunpack.c.l.b16 %v1654
    %v1783 = vunpack.c.l.b16 %v1655
    %v1784 = vunpack.c.l.b16 %v1656
    %v1785 = vunpack.c.l.b16 %v1657
    %v1786 = vunpack.c.l.b16 %v1658
    %v1787 = vunpack.c.l.b16 %v1659
    %v1788 = vunpack.c.l.b16 %v1660
    %v1789 = vunpack.c.l.b16 %v1661
    %v1790 = vunpack.c.l.b16 %v1662
    %v1791 = vunpack.c.l.b16 %v1663
    %v1792 = vunpack.c.l.b16 %v1664
    %v1793 = vunpack.c.l.b16 %v1665
    %v1794 = vunpack.c.l.b16 %v1666
    %v1795 = vunpack.c.l.b16 %v1667
    %v1796 = vunpack.c.l.b16 %v1668
    %v1797 = vunpack.c.l.b16 %v1669
    %v1798 = vpack.c.b16 %v1783, %v1782
    %v1799 = vpack.c.b16 %v1785, %v1784
    %v1800 = vpack.c.b16 %v1787, %v1786
    %v1801 = vpack.c.b16 %v1789, %v1788
    %v1802 = vpack.c.b16 %v1791, %v1790
    %v1803 = vpack.c.b16 %v1793, %v1792
    %v1804 = vpack.c.b16 %v1795, %v1794
    %v1805 = vpack.c.b16 %v1797, %v1796
    %1814 = vmatpush.bf16.msra.mxu0 %v1805
    %1815 = vmatpush.bf16.msra.mxu0 %v1804
    %1816 = vmatpush.bf16.msra.mxu0 %v1803
    %1817 = vmatpush.bf16.msra.mxu0 %v1802
    %1818 = vmatpush.bf16.msra.mxu0 %v1801
    %1819 = vmatpush.bf16.msra.mxu0 %v1800
    %1820 = vmatpush.bf16.msra.mxu0 %v1799
    %1821 = vmatpush.bf16.msra.mxu0 %v1798
    %1822 = vmatmul.bf16.gmra.mxu0 %v1734
    %v1823 = vpop.f32.mrf.mxu0
    %v1824 = vadd.f32 0.0, %v1823
    %v1825 = vpop.f32.mrf.mxu0
    %v1826 = vadd.f32 0.0, %v1825
    %1827 = vmatmul.bf16.gmra.mxu0 %v1735
    %v1828 = vpop.f32.mrf.mxu0
    %v1829 = vadd.f32 0.0, %v1828
    %v1830 = vpop.f32.mrf.mxu0
    %v1831 = vadd.f32 0.0, %v1830
    %1832 = vmatmul.bf16.gmra.mxu0 %v1736
    %v1833 = vpop.f32.mrf.mxu0
    %v1834 = vadd.f32 0.0, %v1833
    %v1835 = vpop.f32.mrf.mxu0
    %v1836 = vadd.f32 0.0, %v1835
    %1837 = vmatmul.bf16.gmra.mxu0 %v1737
    %v1838 = vpop.f32.mrf.mxu0
    %v1839 = vadd.f32 0.0, %v1838
    %v1840 = vpop.f32.mrf.mxu0
    %v1841 = vadd.f32 0.0, %v1840
    %1842 = vmatmul.bf16.gmra.mxu0 %v1738
    %v1843 = vpop.f32.mrf.mxu0
    %v1844 = vadd.f32 0.0, %v1843
    %v1845 = vpop.f32.mrf.mxu0
    %v1846 = vadd.f32 0.0, %v1845
    %1847 = vmatmul.bf16.gmra.mxu0 %v1739
    %v1848 = vpop.f32.mrf.mxu0
    %v1849 = vadd.f32 0.0, %v1848
    %v1850 = vpop.f32.mrf.mxu0
    %v1851 = vadd.f32 0.0, %v1850
    %1852 = vmatmul.bf16.gmra.mxu0 %v1740
    %v1853 = vpop.f32.mrf.mxu0
    %v1854 = vadd.f32 0.0, %v1853
    %v1855 = vpop.f32.mrf.mxu0
    %v1856 = vadd.f32 0.0, %v1855
    %1857 = vmatmul.bf16.gmra.mxu0 %v1741
    %v1858 = vpop.f32.mrf.mxu0
    %v1859 = vadd.f32 0.0, %v1858
    %v1860 = vpop.f32.mrf.mxu0
    %v1861 = vadd.f32 0.0, %v1860
    %1862 = vmatmul.bf16.gmra.mxu0 %v1742
    %v1863 = vpop.f32.mrf.mxu0
    %v1864 = vadd.f32 0.0, %v1863
    %v1865 = vpop.f32.mrf.mxu0
    %v1866 = vadd.f32 0.0, %v1865
    %1867 = vmatmul.bf16.gmra.mxu0 %v1743
    %v1868 = vpop.f32.mrf.mxu0
    %v1869 = vadd.f32 0.0, %v1868
    %v1870 = vpop.f32.mrf.mxu0
    %v1871 = vadd.f32 0.0, %v1870
    %1872 = vmatmul.bf16.gmra.mxu0 %v1744
    %v1873 = vpop.f32.mrf.mxu0
    %v1874 = vadd.f32 0.0, %v1873
    %v1875 = vpop.f32.mrf.mxu0
    %v1876 = vadd.f32 0.0, %v1875
    %1877 = vmatmul.bf16.gmra.mxu0 %v1745
    %v1878 = vpop.f32.mrf.mxu0
    %v1879 = vadd.f32 0.0, %v1878
    %v1880 = vpop.f32.mrf.mxu0
    %v1881 = vadd.f32 0.0, %v1880
    %1882 = vmatmul.bf16.gmra.mxu0 %v1746
    %v1883 = vpop.f32.mrf.mxu0
    %v1884 = vadd.f32 0.0, %v1883
    %v1885 = vpop.f32.mrf.mxu0
    %v1886 = vadd.f32 0.0, %v1885
    %1887 = vmatmul.bf16.gmra.mxu0 %v1747
    %v1888 = vpop.f32.mrf.mxu0
    %v1889 = vadd.f32 0.0, %v1888
    %v1890 = vpop.f32.mrf.mxu0
    %v1891 = vadd.f32 0.0, %v1890
    %1892 = vmatmul.bf16.gmra.mxu0 %v1748
    %v1893 = vpop.f32.mrf.mxu0
    %v1894 = vadd.f32 0.0, %v1893
    %v1895 = vpop.f32.mrf.mxu0
    %v1896 = vadd.f32 0.0, %v1895
    %1897 = vmatmul.bf16.gmra.mxu0 %v1749
    %v1898 = vpop.f32.mrf.mxu0
    %v1899 = vadd.f32 0.0, %v1898
    %v1900 = vpop.f32.mrf.mxu0
    %v1901 = vadd.f32 0.0, %v1900
    %1902 = vdwg.mxu0
    %v1935 = vunpack.c.l.b16 %v1572
    %v1936 = vunpack.c.l.b16 %v1573
    %v1937 = vunpack.c.l.b16 %v1574
    %v1938 = vunpack.c.l.b16 %v1575
    %v1939 = vunpack.c.l.b16 %v1576
    %v1940 = vunpack.c.l.b16 %v1577
    %v1941 = vunpack.c.l.b16 %v1578
    %v1942 = vunpack.c.l.b16 %v1579
    %v1943 = vunpack.c.l.b16 %v1580
    %v1944 = vunpack.c.l.b16 %v1581
    %v1945 = vunpack.c.l.b16 %v1582
    %v1946 = vunpack.c.l.b16 %v1583
    %v1947 = vunpack.c.l.b16 %v1584
    %v1948 = vunpack.c.l.b16 %v1585
    %v1949 = vunpack.c.l.b16 %v1586
    %v1950 = vunpack.c.l.b16 %v1587
    %v1951 = vunpack.c.l.b16 %v1588
    %v1952 = vunpack.c.l.b16 %v1589
    %v1953 = vunpack.c.l.b16 %v1590
    %v1954 = vunpack.c.l.b16 %v1591
    %v1955 = vunpack.c.l.b16 %v1592
    %v1956 = vunpack.c.l.b16 %v1593
    %v1957 = vunpack.c.l.b16 %v1594
    %v1958 = vunpack.c.l.b16 %v1595
    %v1959 = vunpack.c.l.b16 %v1596
    %v1960 = vunpack.c.l.b16 %v1597
    %v1961 = vunpack.c.l.b16 %v1598
    %v1962 = vunpack.c.l.b16 %v1599
    %v1963 = vunpack.c.l.b16 %v1600
    %v1964 = vunpack.c.l.b16 %v1601
    %v1965 = vunpack.c.l.b16 %v1602
    %v1966 = vunpack.c.l.b16 %v1603
    %v1967 = vpack.c.b16 %v1936, %v1935
    %v1968 = vpack.c.b16 %v1938, %v1937
    %v1969 = vpack.c.b16 %v1940, %v1939
    %v1970 = vpack.c.b16 %v1942, %v1941
    %v1971 = vpack.c.b16 %v1944, %v1943
    %v1972 = vpack.c.b16 %v1946, %v1945
    %v1973 = vpack.c.b16 %v1948, %v1947
    %v1974 = vpack.c.b16 %v1950, %v1949
    %v1975 = vpack.c.b16 %v1952, %v1951
    %v1976 = vpack.c.b16 %v1954, %v1953
    %v1977 = vpack.c.b16 %v1956, %v1955
    %v1978 = vpack.c.b16 %v1958, %v1957
    %v1979 = vpack.c.b16 %v1960, %v1959
    %v1980 = vpack.c.b16 %v1962, %v1961
    %v1981 = vpack.c.b16 %v1964, %v1963
    %v1982 = vpack.c.b16 %v1966, %v1965
    %v2015 = vunpack.c.l.b16 %v1604
    %v2016 = vunpack.c.l.b16 %v1605
    %v2017 = vunpack.c.l.b16 %v1606
    %v2018 = vunpack.c.l.b16 %v1607
    %v2019 = vunpack.c.l.b16 %v1608
    %v2020 = vunpack.c.l.b16 %v1609
    %v2021 = vunpack.c.l.b16 %v1610
    %v2022 = vunpack.c.l.b16 %v1611
    %v2023 = vunpack.c.l.b16 %v1612
    %v2024 = vunpack.c.l.b16 %v1613
    %v2025 = vunpack.c.l.b16 %v1614
    %v2026 = vunpack.c.l.b16 %v1615
    %v2027 = vunpack.c.l.b16 %v1616
    %v2028 = vunpack.c.l.b16 %v1617
    %v2029 = vunpack.c.l.b16 %v1618
    %v2030 = vunpack.c.l.b16 %v1619
    %v2031 = vpack.c.b16 %v2016, %v2015
    %v2032 = vpack.c.b16 %v2018, %v2017
    %v2033 = vpack.c.b16 %v2020, %v2019
    %v2034 = vpack.c.b16 %v2022, %v2021
    %v2035 = vpack.c.b16 %v2024, %v2023
    %v2036 = vpack.c.b16 %v2026, %v2025
    %v2037 = vpack.c.b16 %v2028, %v2027
    %v2038 = vpack.c.b16 %v2030, %v2029
    %2047 = vmatpush.bf16.msra.mxu0 %v2038
    %2048 = vmatpush.bf16.msra.mxu0 %v2037
    %2049 = vmatpush.bf16.msra.mxu0 %v2036
    %2050 = vmatpush.bf16.msra.mxu0 %v2035
    %2051 = vmatpush.bf16.msra.mxu0 %v2034
    %2052 = vmatpush.bf16.msra.mxu0 %v2033
    %2053 = vmatpush.bf16.msra.mxu0 %v2032
    %2054 = vmatpush.bf16.msra.mxu0 %v2031
    %2055 = vmatmul.bf16.gmra.mxu0 %v1967
    %v2056 = vpop.f32.mrf.mxu0
    %v2057 = vadd.f32 %v1824, %v2056
    %v2058 = vpop.f32.mrf.mxu0
    %v2059 = vadd.f32 %v1826, %v2058
    %2060 = vmatmul.bf16.gmra.mxu0 %v1968
    %v2061 = vpop.f32.mrf.mxu0
    %v2062 = vadd.f32 %v1829, %v2061
    %v2063 = vpop.f32.mrf.mxu0
    %v2064 = vadd.f32 %v1831, %v2063
    %2065 = vmatmul.bf16.gmra.mxu0 %v1969
    %v2066 = vpop.f32.mrf.mxu0
    %v2067 = vadd.f32 %v1834, %v2066
    %v2068 = vpop.f32.mrf.mxu0
    %v2069 = vadd.f32 %v1836, %v2068
    %2070 = vmatmul.bf16.gmra.mxu0 %v1970
    %v2071 = vpop.f32.mrf.mxu0
    %v2072 = vadd.f32 %v1839, %v2071
    %v2073 = vpop.f32.mrf.mxu0
    %v2074 = vadd.f32 %v1841, %v2073
    %2075 = vmatmul.bf16.gmra.mxu0 %v1971
    %v2076 = vpop.f32.mrf.mxu0
    %v2077 = vadd.f32 %v1844, %v2076
    %v2078 = vpop.f32.mrf.mxu0
    %v2079 = vadd.f32 %v1846, %v2078
    %2080 = vmatmul.bf16.gmra.mxu0 %v1972
    %v2081 = vpop.f32.mrf.mxu0
    %v2082 = vadd.f32 %v1849, %v2081
    %v2083 = vpop.f32.mrf.mxu0
    %v2084 = vadd.f32 %v1851, %v2083
    %2085 = vmatmul.bf16.gmra.mxu0 %v1973
    %v2086 = vpop.f32.mrf.mxu0
    %v2087 = vadd.f32 %v1854, %v2086
    %v2088 = vpop.f32.mrf.mxu0
    %v2089 = vadd.f32 %v1856, %v2088
    %2090 = vmatmul.bf16.gmra.mxu0 %v1974
    %v2091 = vpop.f32.mrf.mxu0
    %v2092 = vadd.f32 %v1859, %v2091
    %v2093 = vpop.f32.mrf.mxu0
    %v2094 = vadd.f32 %v1861, %v2093
    %2095 = vmatmul.bf16.gmra.mxu0 %v1975
    %v2096 = vpop.f32.mrf.mxu0
    %v2097 = vadd.f32 %v1864, %v2096
    %v2098 = vpop.f32.mrf.mxu0
    %v2099 = vadd.f32 %v1866, %v2098
    %2100 = vmatmul.bf16.gmra.mxu0 %v1976
    %v2101 = vpop.f32.mrf.mxu0
    %v2102 = vadd.f32 %v1869, %v2101
    %v2103 = vpop.f32.mrf.mxu0
    %v2104 = vadd.f32 %v1871, %v2103
    %2105 = vmatmul.bf16.gmra.mxu0 %v1977
    %v2106 = vpop.f32.mrf.mxu0
    %v2107 = vadd.f32 %v1874, %v2106
    %v2108 = vpop.f32.mrf.mxu0
    %v2109 = vadd.f32 %v1876, %v2108
    %2110 = vmatmul.bf16.gmra.mxu0 %v1978
    %v2111 = vpop.f32.mrf.mxu0
    %v2112 = vadd.f32 %v1879, %v2111
    %v2113 = vpop.f32.mrf.mxu0
    %v2114 = vadd.f32 %v1881, %v2113
    %2115 = vmatmul.bf16.gmra.mxu0 %v1979
    %v2116 = vpop.f32.mrf.mxu0
    %v2117 = vadd.f32 %v1884, %v2116
    %v2118 = vpop.f32.mrf.mxu0
    %v2119 = vadd.f32 %v1886, %v2118
    %2120 = vmatmul.bf16.gmra.mxu0 %v1980
    %v2121 = vpop.f32.mrf.mxu0
    %v2122 = vadd.f32 %v1889, %v2121
    %v2123 = vpop.f32.mrf.mxu0
    %v2124 = vadd.f32 %v1891, %v2123
    %2125 = vmatmul.bf16.gmra.mxu0 %v1981
    %v2126 = vpop.f32.mrf.mxu0
    %v2127 = vadd.f32 %v1894, %v2126
    %v2128 = vpop.f32.mrf.mxu0
    %v2129 = vadd.f32 %v1896, %v2128
    %2130 = vmatmul.bf16.gmra.mxu0 %v1982
    %v2131 = vpop.f32.mrf.mxu0
    %v2132 = vadd.f32 %v1899, %v2131
    %v2133 = vpop.f32.mrf.mxu0
    %v2134 = vadd.f32 %v1901, %v2133
    %2135 = vdwg.mxu0
    %s2136 = scalar_lea.vmem [#allocation3], 40
    %v2137 = vld [vmem:[%s2136] sm:$0xf]
    %v2138 = vld [vmem:[%s2136 + $0x4] sm:$0xf]
    %v2139 = vld [vmem:[%s2136 + $0x8] sm:$0xf]
    %v2140 = vld [vmem:[%s2136 + $0xc] sm:$0xf]
    %v2141 = vld [vmem:[%s2136 + $0x10] sm:$0xf]
    %v2142 = vld [vmem:[%s2136 + $0x14] sm:$0xf]
    %v2143 = vld [vmem:[%s2136 + $0x18] sm:$0xf]
    %v2144 = vld [vmem:[%s2136 + $0x1c] sm:$0xf]
    %v2145 = vld [vmem:[%s2136 + $0x20] sm:$0xf]
    %v2146 = vld [vmem:[%s2136 + $0x24] sm:$0xf]
    %v2147 = vld [vmem:[%s2136 + $0x28] sm:$0xf]
    %v2148 = vld [vmem:[%s2136 + $0x2c] sm:$0xf]
    %v2149 = vld [vmem:[%s2136 + $0x30] sm:$0xf]
    %v2150 = vld [vmem:[%s2136 + $0x34] sm:$0xf]
    %v2151 = vld [vmem:[%s2136 + $0x38] sm:$0xf]
    %v2152 = vld [vmem:[%s2136 + $0x3c] sm:$0xf]
    %v2153 = vld [vmem:[%s2136 + $0x40] sm:$0xf]
    %v2154 = vld [vmem:[%s2136 + $0x44] sm:$0xf]
    %v2155 = vld [vmem:[%s2136 + $0x48] sm:$0xf]
    %v2156 = vld [vmem:[%s2136 + $0x4c] sm:$0xf]
    %v2157 = vld [vmem:[%s2136 + $0x50] sm:$0xf]
    %v2158 = vld [vmem:[%s2136 + $0x54] sm:$0xf]
    %v2159 = vld [vmem:[%s2136 + $0x58] sm:$0xf]
    %v2160 = vld [vmem:[%s2136 + $0x5c] sm:$0xf]
    %v2161 = vld [vmem:[%s2136 + $0x60] sm:$0xf]
    %v2162 = vld [vmem:[%s2136 + $0x64] sm:$0xf]
    %v2163 = vld [vmem:[%s2136 + $0x68] sm:$0xf]
    %v2164 = vld [vmem:[%s2136 + $0x6c] sm:$0xf]
    %v2165 = vld [vmem:[%s2136 + $0x70] sm:$0xf]
    %v2166 = vld [vmem:[%s2136 + $0x74] sm:$0xf]
    %v2167 = vld [vmem:[%s2136 + $0x78] sm:$0xf]
    %v2168 = vld [vmem:[%s2136 + $0x7c] sm:$0xf]
    %s2169 = scalar_lea.vmem [#allocation9], 128
    %v2170 = vld [vmem:[%s2169] sm:$0xf]
    %v2171 = vld [vmem:[%s2169 + $0x4] sm:$0xf]
    %v2172 = vld [vmem:[%s2169 + $0x8] sm:$0xf]
    %v2173 = vld [vmem:[%s2169 + $0xc] sm:$0xf]
    %v2174 = vld [vmem:[%s2169 + $0x10] sm:$0xf]
    %v2175 = vld [vmem:[%s2169 + $0x14] sm:$0xf]
    %v2176 = vld [vmem:[%s2169 + $0x18] sm:$0xf]
    %v2177 = vld [vmem:[%s2169 + $0x1c] sm:$0xf]
    %v2178 = vld [vmem:[%s2169 + $0x20] sm:$0xf]
    %v2179 = vld [vmem:[%s2169 + $0x24] sm:$0xf]
    %v2180 = vld [vmem:[%s2169 + $0x28] sm:$0xf]
    %v2181 = vld [vmem:[%s2169 + $0x2c] sm:$0xf]
    %v2182 = vld [vmem:[%s2169 + $0x30] sm:$0xf]
    %v2183 = vld [vmem:[%s2169 + $0x34] sm:$0xf]
    %v2184 = vld [vmem:[%s2169 + $0x38] sm:$0xf]
    %v2185 = vld [vmem:[%s2169 + $0x3c] sm:$0xf]
    %v2218 = vunpack.c.l.b16 %v2137
    %v2219 = vunpack.c.l.b16 %v2138
    %v2220 = vunpack.c.l.b16 %v2139
    %v2221 = vunpack.c.l.b16 %v2140
    %v2222 = vunpack.c.l.b16 %v2141
    %v2223 = vunpack.c.l.b16 %v2142
    %v2224 = vunpack.c.l.b16 %v2143
    %v2225 = vunpack.c.l.b16 %v2144
    %v2226 = vunpack.c.l.b16 %v2145
    %v2227 = vunpack.c.l.b16 %v2146
    %v2228 = vunpack.c.l.b16 %v2147
    %v2229 = vunpack.c.l.b16 %v2148
    %v2230 = vunpack.c.l.b16 %v2149
    %v2231 = vunpack.c.l.b16 %v2150
    %v2232 = vunpack.c.l.b16 %v2151
    %v2233 = vunpack.c.l.b16 %v2152
    %v2234 = vunpack.c.l.b16 %v2153
    %v2235 = vunpack.c.l.b16 %v2154
    %v2236 = vunpack.c.l.b16 %v2155
    %v2237 = vunpack.c.l.b16 %v2156
    %v2238 = vunpack.c.l.b16 %v2157
    %v2239 = vunpack.c.l.b16 %v2158
    %v2240 = vunpack.c.l.b16 %v2159
    %v2241 = vunpack.c.l.b16 %v2160
    %v2242 = vunpack.c.l.b16 %v2161
    %v2243 = vunpack.c.l.b16 %v2162
    %v2244 = vunpack.c.l.b16 %v2163
    %v2245 = vunpack.c.l.b16 %v2164
    %v2246 = vunpack.c.l.b16 %v2165
    %v2247 = vunpack.c.l.b16 %v2166
    %v2248 = vunpack.c.l.b16 %v2167
    %v2249 = vunpack.c.l.b16 %v2168
    %v2250 = vpack.c.b16 %v2219, %v2218
    %v2251 = vpack.c.b16 %v2221, %v2220
    %v2252 = vpack.c.b16 %v2223, %v2222
    %v2253 = vpack.c.b16 %v2225, %v2224
    %v2254 = vpack.c.b16 %v2227, %v2226
    %v2255 = vpack.c.b16 %v2229, %v2228
    %v2256 = vpack.c.b16 %v2231, %v2230
    %v2257 = vpack.c.b16 %v2233, %v2232
    %v2258 = vpack.c.b16 %v2235, %v2234
    %v2259 = vpack.c.b16 %v2237, %v2236
    %v2260 = vpack.c.b16 %v2239, %v2238
    %v2261 = vpack.c.b16 %v2241, %v2240
    %v2262 = vpack.c.b16 %v2243, %v2242
    %v2263 = vpack.c.b16 %v2245, %v2244
    %v2264 = vpack.c.b16 %v2247, %v2246
    %v2265 = vpack.c.b16 %v2249, %v2248
    %v2298 = vunpack.c.l.b16 %v2170
    %v2299 = vunpack.c.l.b16 %v2171
    %v2300 = vunpack.c.l.b16 %v2172
    %v2301 = vunpack.c.l.b16 %v2173
    %v2302 = vunpack.c.l.b16 %v2174
    %v2303 = vunpack.c.l.b16 %v2175
    %v2304 = vunpack.c.l.b16 %v2176
    %v2305 = vunpack.c.l.b16 %v2177
    %v2306 = vunpack.c.l.b16 %v2178
    %v2307 = vunpack.c.l.b16 %v2179
    %v2308 = vunpack.c.l.b16 %v2180
    %v2309 = vunpack.c.l.b16 %v2181
    %v2310 = vunpack.c.l.b16 %v2182
    %v2311 = vunpack.c.l.b16 %v2183
    %v2312 = vunpack.c.l.b16 %v2184
    %v2313 = vunpack.c.l.b16 %v2185
    %v2314 = vpack.c.b16 %v2299, %v2298
    %v2315 = vpack.c.b16 %v2301, %v2300
    %v2316 = vpack.c.b16 %v2303, %v2302
    %v2317 = vpack.c.b16 %v2305, %v2304
    %v2318 = vpack.c.b16 %v2307, %v2306
    %v2319 = vpack.c.b16 %v2309, %v2308
    %v2320 = vpack.c.b16 %v2311, %v2310
    %v2321 = vpack.c.b16 %v2313, %v2312
    %2330 = vmatpush.bf16.msra.mxu0 %v2321
    %2331 = vmatpush.bf16.msra.mxu0 %v2320
    %2332 = vmatpush.bf16.msra.mxu0 %v2319
    %2333 = vmatpush.bf16.msra.mxu0 %v2318
    %2334 = vmatpush.bf16.msra.mxu0 %v2317
    %2335 = vmatpush.bf16.msra.mxu0 %v2316
    %2336 = vmatpush.bf16.msra.mxu0 %v2315
    %2337 = vmatpush.bf16.msra.mxu0 %v2314
    %2338 = vmatmul.bf16.gmra.mxu0 %v2250
    %v2339 = vpop.f32.mrf.mxu0
    %v2340 = vadd.f32 0.0, %v2339
    %v2341 = vpop.f32.mrf.mxu0
    %v2342 = vadd.f32 0.0, %v2341
    %2343 = vmatmul.bf16.gmra.mxu0 %v2251
    %v2344 = vpop.f32.mrf.mxu0
    %v2345 = vadd.f32 0.0, %v2344
    %v2346 = vpop.f32.mrf.mxu0
    %v2347 = vadd.f32 0.0, %v2346
    %2348 = vmatmul.bf16.gmra.mxu0 %v2252
    %v2349 = vpop.f32.mrf.mxu0
    %v2350 = vadd.f32 0.0, %v2349
    %v2351 = vpop.f32.mrf.mxu0
    %v2352 = vadd.f32 0.0, %v2351
    %2353 = vmatmul.bf16.gmra.mxu0 %v2253
    %v2354 = vpop.f32.mrf.mxu0
    %v2355 = vadd.f32 0.0, %v2354
    %v2356 = vpop.f32.mrf.mxu0
    %v2357 = vadd.f32 0.0, %v2356
    %2358 = vmatmul.bf16.gmra.mxu0 %v2254
    %v2359 = vpop.f32.mrf.mxu0
    %v2360 = vadd.f32 0.0, %v2359
    %v2361 = vpop.f32.mrf.mxu0
    %v2362 = vadd.f32 0.0, %v2361
    %2363 = vmatmul.bf16.gmra.mxu0 %v2255
    %v2364 = vpop.f32.mrf.mxu0
    %v2365 = vadd.f32 0.0, %v2364
    %v2366 = vpop.f32.mrf.mxu0
    %v2367 = vadd.f32 0.0, %v2366
    %2368 = vmatmul.bf16.gmra.mxu0 %v2256
    %v2369 = vpop.f32.mrf.mxu0
    %v2370 = vadd.f32 0.0, %v2369
    %v2371 = vpop.f32.mrf.mxu0
    %v2372 = vadd.f32 0.0, %v2371
    %2373 = vmatmul.bf16.gmra.mxu0 %v2257
    %v2374 = vpop.f32.mrf.mxu0
    %v2375 = vadd.f32 0.0, %v2374
    %v2376 = vpop.f32.mrf.mxu0
    %v2377 = vadd.f32 0.0, %v2376
    %2378 = vmatmul.bf16.gmra.mxu0 %v2258
    %v2379 = vpop.f32.mrf.mxu0
    %v2380 = vadd.f32 0.0, %v2379
    %v2381 = vpop.f32.mrf.mxu0
    %v2382 = vadd.f32 0.0, %v2381
    %2383 = vmatmul.bf16.gmra.mxu0 %v2259
    %v2384 = vpop.f32.mrf.mxu0
    %v2385 = vadd.f32 0.0, %v2384
    %v2386 = vpop.f32.mrf.mxu0
    %v2387 = vadd.f32 0.0, %v2386
    %2388 = vmatmul.bf16.gmra.mxu0 %v2260
    %v2389 = vpop.f32.mrf.mxu0
    %v2390 = vadd.f32 0.0, %v2389
    %v2391 = vpop.f32.mrf.mxu0
    %v2392 = vadd.f32 0.0, %v2391
    %2393 = vmatmul.bf16.gmra.mxu0 %v2261
    %v2394 = vpop.f32.mrf.mxu0
    %v2395 = vadd.f32 0.0, %v2394
    %v2396 = vpop.f32.mrf.mxu0
    %v2397 = vadd.f32 0.0, %v2396
    %2398 = vmatmul.bf16.gmra.mxu0 %v2262
    %v2399 = vpop.f32.mrf.mxu0
    %v2400 = vadd.f32 0.0, %v2399
    %v2401 = vpop.f32.mrf.mxu0
    %v2402 = vadd.f32 0.0, %v2401
    %2403 = vmatmul.bf16.gmra.mxu0 %v2263
    %v2404 = vpop.f32.mrf.mxu0
    %v2405 = vadd.f32 0.0, %v2404
    %v2406 = vpop.f32.mrf.mxu0
    %v2407 = vadd.f32 0.0, %v2406
    %2408 = vmatmul.bf16.gmra.mxu0 %v2264
    %v2409 = vpop.f32.mrf.mxu0
    %v2410 = vadd.f32 0.0, %v2409
    %v2411 = vpop.f32.mrf.mxu0
    %v2412 = vadd.f32 0.0, %v2411
    %2413 = vmatmul.bf16.gmra.mxu0 %v2265
    %v2414 = vpop.f32.mrf.mxu0
    %v2415 = vadd.f32 0.0, %v2414
    %v2416 = vpop.f32.mrf.mxu0
    %v2417 = vadd.f32 0.0, %v2416
    %2418 = vdwg.mxu0
    %v2419 = vadd.f32 %v2057, %v2340
    %v2420 = vadd.f32 %v2059, %v2342
    %v2421 = vadd.f32 %v2062, %v2345
    %v2422 = vadd.f32 %v2064, %v2347
    %v2423 = vadd.f32 %v2067, %v2350
    %v2424 = vadd.f32 %v2069, %v2352
    %v2425 = vadd.f32 %v2072, %v2355
    %v2426 = vadd.f32 %v2074, %v2357
    %v2427 = vadd.f32 %v2077, %v2360
    %v2428 = vadd.f32 %v2079, %v2362
    %v2429 = vadd.f32 %v2082, %v2365
    %v2430 = vadd.f32 %v2084, %v2367
    %v2431 = vadd.f32 %v2087, %v2370
    %v2432 = vadd.f32 %v2089, %v2372
    %v2433 = vadd.f32 %v2092, %v2375
    %v2434 = vadd.f32 %v2094, %v2377
    %v2435 = vadd.f32 %v2097, %v2380
    %v2436 = vadd.f32 %v2099, %v2382
    %v2437 = vadd.f32 %v2102, %v2385
    %v2438 = vadd.f32 %v2104, %v2387
    %v2439 = vadd.f32 %v2107, %v2390
    %v2440 = vadd.f32 %v2109, %v2392
    %v2441 = vadd.f32 %v2112, %v2395
    %v2442 = vadd.f32 %v2114, %v2397
    %v2443 = vadd.f32 %v2117, %v2400
    %v2444 = vadd.f32 %v2119, %v2402
    %v2445 = vadd.f32 %v2122, %v2405
    %v2446 = vadd.f32 %v2124, %v2407
    %v2447 = vadd.f32 %v2127, %v2410
    %v2448 = vadd.f32 %v2129, %v2412
    %v2449 = vadd.f32 %v2132, %v2415
    %v2450 = vadd.f32 %v2134, %v2417
    %v2451 = vld [vmem:[%s1538] sm:$0xf]
    %v2452 = vld [vmem:[%s1538 + $0x4] sm:$0xf]
    %v2453 = vld [vmem:[%s1538 + $0x8] sm:$0xf]
    %v2454 = vld [vmem:[%s1538 + $0xc] sm:$0xf]
    %v2455 = vld [vmem:[%s1538 + $0x10] sm:$0xf]
    %v2456 = vld [vmem:[%s1538 + $0x14] sm:$0xf]
    %v2457 = vld [vmem:[%s1538 + $0x18] sm:$0xf]
    %v2458 = vld [vmem:[%s1538 + $0x1c] sm:$0xf]
    %v2459 = vld [vmem:[%s1538 + $0x20] sm:$0xf]
    %v2460 = vld [vmem:[%s1538 + $0x24] sm:$0xf]
    %v2461 = vld [vmem:[%s1538 + $0x28] sm:$0xf]
    %v2462 = vld [vmem:[%s1538 + $0x2c] sm:$0xf]
    %v2463 = vld [vmem:[%s1538 + $0x30] sm:$0xf]
    %v2464 = vld [vmem:[%s1538 + $0x34] sm:$0xf]
    %v2465 = vld [vmem:[%s1538 + $0x38] sm:$0xf]
    %v2466 = vld [vmem:[%s1538 + $0x3c] sm:$0xf]
    %v2467 = vld [vmem:[%s1538 + $0x40] sm:$0xf]
    %v2468 = vld [vmem:[%s1538 + $0x44] sm:$0xf]
    %v2469 = vld [vmem:[%s1538 + $0x48] sm:$0xf]
    %v2470 = vld [vmem:[%s1538 + $0x4c] sm:$0xf]
    %v2471 = vld [vmem:[%s1538 + $0x50] sm:$0xf]
    %v2472 = vld [vmem:[%s1538 + $0x54] sm:$0xf]
    %v2473 = vld [vmem:[%s1538 + $0x58] sm:$0xf]
    %v2474 = vld [vmem:[%s1538 + $0x5c] sm:$0xf]
    %v2475 = vld [vmem:[%s1538 + $0x60] sm:$0xf]
    %v2476 = vld [vmem:[%s1538 + $0x64] sm:$0xf]
    %v2477 = vld [vmem:[%s1538 + $0x68] sm:$0xf]
    %v2478 = vld [vmem:[%s1538 + $0x6c] sm:$0xf]
    %v2479 = vld [vmem:[%s1538 + $0x70] sm:$0xf]
    %v2480 = vld [vmem:[%s1538 + $0x74] sm:$0xf]
    %v2481 = vld [vmem:[%s1538 + $0x78] sm:$0xf]
    %v2482 = vld [vmem:[%s1538 + $0x7c] sm:$0xf]
    %s2483 = scalar_lea.vmem [#allocation9], 192
    %v2484 = vld [vmem:[%s2483] sm:$0xf]
    %v2485 = vld [vmem:[%s2483 + $0x4] sm:$0xf]
    %v2486 = vld [vmem:[%s2483 + $0x8] sm:$0xf]
    %v2487 = vld [vmem:[%s2483 + $0xc] sm:$0xf]
    %v2488 = vld [vmem:[%s2483 + $0x10] sm:$0xf]
    %v2489 = vld [vmem:[%s2483 + $0x14] sm:$0xf]
    %v2490 = vld [vmem:[%s2483 + $0x18] sm:$0xf]
    %v2491 = vld [vmem:[%s2483 + $0x1c] sm:$0xf]
    %v2492 = vld [vmem:[%s2483 + $0x20] sm:$0xf]
    %v2493 = vld [vmem:[%s2483 + $0x24] sm:$0xf]
    %v2494 = vld [vmem:[%s2483 + $0x28] sm:$0xf]
    %v2495 = vld [vmem:[%s2483 + $0x2c] sm:$0xf]
    %v2496 = vld [vmem:[%s2483 + $0x30] sm:$0xf]
    %v2497 = vld [vmem:[%s2483 + $0x34] sm:$0xf]
    %v2498 = vld [vmem:[%s2483 + $0x38] sm:$0xf]
    %v2499 = vld [vmem:[%s2483 + $0x3c] sm:$0xf]
    %v2532 = vunpack.c.l.b16 %v2451
    %v2533 = vunpack.c.l.b16 %v2452
    %v2534 = vunpack.c.l.b16 %v2453
    %v2535 = vunpack.c.l.b16 %v2454
    %v2536 = vunpack.c.l.b16 %v2455
    %v2537 = vunpack.c.l.b16 %v2456
    %v2538 = vunpack.c.l.b16 %v2457
    %v2539 = vunpack.c.l.b16 %v2458
    %v2540 = vunpack.c.l.b16 %v2459
    %v2541 = vunpack.c.l.b16 %v2460
    %v2542 = vunpack.c.l.b16 %v2461
    %v2543 = vunpack.c.l.b16 %v2462
    %v2544 = vunpack.c.l.b16 %v2463
    %v2545 = vunpack.c.l.b16 %v2464
    %v2546 = vunpack.c.l.b16 %v2465
    %v2547 = vunpack.c.l.b16 %v2466
    %v2548 = vunpack.c.l.b16 %v2467
    %v2549 = vunpack.c.l.b16 %v2468
    %v2550 = vunpack.c.l.b16 %v2469
    %v2551 = vunpack.c.l.b16 %v2470
    %v2552 = vunpack.c.l.b16 %v2471
    %v2553 = vunpack.c.l.b16 %v2472
    %v2554 = vunpack.c.l.b16 %v2473
    %v2555 = vunpack.c.l.b16 %v2474
    %v2556 = vunpack.c.l.b16 %v2475
    %v2557 = vunpack.c.l.b16 %v2476
    %v2558 = vunpack.c.l.b16 %v2477
    %v2559 = vunpack.c.l.b16 %v2478
    %v2560 = vunpack.c.l.b16 %v2479
    %v2561 = vunpack.c.l.b16 %v2480
    %v2562 = vunpack.c.l.b16 %v2481
    %v2563 = vunpack.c.l.b16 %v2482
    %v2564 = vpack.c.b16 %v2533, %v2532
    %v2565 = vpack.c.b16 %v2535, %v2534
    %v2566 = vpack.c.b16 %v2537, %v2536
    %v2567 = vpack.c.b16 %v2539, %v2538
    %v2568 = vpack.c.b16 %v2541, %v2540
    %v2569 = vpack.c.b16 %v2543, %v2542
    %v2570 = vpack.c.b16 %v2545, %v2544
    %v2571 = vpack.c.b16 %v2547, %v2546
    %v2572 = vpack.c.b16 %v2549, %v2548
    %v2573 = vpack.c.b16 %v2551, %v2550
    %v2574 = vpack.c.b16 %v2553, %v2552
    %v2575 = vpack.c.b16 %v2555, %v2554
    %v2576 = vpack.c.b16 %v2557, %v2556
    %v2577 = vpack.c.b16 %v2559, %v2558
    %v2578 = vpack.c.b16 %v2561, %v2560
    %v2579 = vpack.c.b16 %v2563, %v2562
    %v2612 = vunpack.c.l.b16 %v2484
    %v2613 = vunpack.c.l.b16 %v2485
    %v2614 = vunpack.c.l.b16 %v2486
    %v2615 = vunpack.c.l.b16 %v2487
    %v2616 = vunpack.c.l.b16 %v2488
    %v2617 = vunpack.c.l.b16 %v2489
    %v2618 = vunpack.c.l.b16 %v2490
    %v2619 = vunpack.c.l.b16 %v2491
    %v2620 = vunpack.c.l.b16 %v2492
    %v2621 = vunpack.c.l.b16 %v2493
    %v2622 = vunpack.c.l.b16 %v2494
    %v2623 = vunpack.c.l.b16 %v2495
    %v2624 = vunpack.c.l.b16 %v2496
    %v2625 = vunpack.c.l.b16 %v2497
    %v2626 = vunpack.c.l.b16 %v2498
    %v2627 = vunpack.c.l.b16 %v2499
    %v2628 = vpack.c.b16 %v2613, %v2612
    %v2629 = vpack.c.b16 %v2615, %v2614
    %v2630 = vpack.c.b16 %v2617, %v2616
    %v2631 = vpack.c.b16 %v2619, %v2618
    %v2632 = vpack.c.b16 %v2621, %v2620
    %v2633 = vpack.c.b16 %v2623, %v2622
    %v2634 = vpack.c.b16 %v2625, %v2624
    %v2635 = vpack.c.b16 %v2627, %v2626
    %2644 = vmatpush.bf16.msra.mxu0 %v2635
    %2645 = vmatpush.bf16.msra.mxu0 %v2634
    %2646 = vmatpush.bf16.msra.mxu0 %v2633
    %2647 = vmatpush.bf16.msra.mxu0 %v2632
    %2648 = vmatpush.bf16.msra.mxu0 %v2631
    %2649 = vmatpush.bf16.msra.mxu0 %v2630
    %2650 = vmatpush.bf16.msra.mxu0 %v2629
    %2651 = vmatpush.bf16.msra.mxu0 %v2628
    %2652 = vmatmul.bf16.gmra.mxu0 %v2564
    %v2653 = vpop.f32.mrf.mxu0
    %v2654 = vadd.f32 0.0, %v2653
    %v2655 = vpop.f32.mrf.mxu0
    %v2656 = vadd.f32 0.0, %v2655
    %2657 = vmatmul.bf16.gmra.mxu0 %v2565
    %v2658 = vpop.f32.mrf.mxu0
    %v2659 = vadd.f32 0.0, %v2658
    %v2660 = vpop.f32.mrf.mxu0
    %v2661 = vadd.f32 0.0, %v2660
    %2662 = vmatmul.bf16.gmra.mxu0 %v2566
    %v2663 = vpop.f32.mrf.mxu0
    %v2664 = vadd.f32 0.0, %v2663
    %v2665 = vpop.f32.mrf.mxu0
    %v2666 = vadd.f32 0.0, %v2665
    %2667 = vmatmul.bf16.gmra.mxu0 %v2567
    %v2668 = vpop.f32.mrf.mxu0
    %v2669 = vadd.f32 0.0, %v2668
    %v2670 = vpop.f32.mrf.mxu0
    %v2671 = vadd.f32 0.0, %v2670
    %2672 = vmatmul.bf16.gmra.mxu0 %v2568
    %v2673 = vpop.f32.mrf.mxu0
    %v2674 = vadd.f32 0.0, %v2673
    %v2675 = vpop.f32.mrf.mxu0
    %v2676 = vadd.f32 0.0, %v2675
    %2677 = vmatmul.bf16.gmra.mxu0 %v2569
    %v2678 = vpop.f32.mrf.mxu0
    %v2679 = vadd.f32 0.0, %v2678
    %v2680 = vpop.f32.mrf.mxu0
    %v2681 = vadd.f32 0.0, %v2680
    %2682 = vmatmul.bf16.gmra.mxu0 %v2570
    %v2683 = vpop.f32.mrf.mxu0
    %v2684 = vadd.f32 0.0, %v2683
    %v2685 = vpop.f32.mrf.mxu0
    %v2686 = vadd.f32 0.0, %v2685
    %2687 = vmatmul.bf16.gmra.mxu0 %v2571
    %v2688 = vpop.f32.mrf.mxu0
    %v2689 = vadd.f32 0.0, %v2688
    %v2690 = vpop.f32.mrf.mxu0
    %v2691 = vadd.f32 0.0, %v2690
    %2692 = vmatmul.bf16.gmra.mxu0 %v2572
    %v2693 = vpop.f32.mrf.mxu0
    %v2694 = vadd.f32 0.0, %v2693
    %v2695 = vpop.f32.mrf.mxu0
    %v2696 = vadd.f32 0.0, %v2695
    %2697 = vmatmul.bf16.gmra.mxu0 %v2573
    %v2698 = vpop.f32.mrf.mxu0
    %v2699 = vadd.f32 0.0, %v2698
    %v2700 = vpop.f32.mrf.mxu0
    %v2701 = vadd.f32 0.0, %v2700
    %2702 = vmatmul.bf16.gmra.mxu0 %v2574
    %v2703 = vpop.f32.mrf.mxu0
    %v2704 = vadd.f32 0.0, %v2703
    %v2705 = vpop.f32.mrf.mxu0
    %v2706 = vadd.f32 0.0, %v2705
    %2707 = vmatmul.bf16.gmra.mxu0 %v2575
    %v2708 = vpop.f32.mrf.mxu0
    %v2709 = vadd.f32 0.0, %v2708
    %v2710 = vpop.f32.mrf.mxu0
    %v2711 = vadd.f32 0.0, %v2710
    %2712 = vmatmul.bf16.gmra.mxu0 %v2576
    %v2713 = vpop.f32.mrf.mxu0
    %v2714 = vadd.f32 0.0, %v2713
    %v2715 = vpop.f32.mrf.mxu0
    %v2716 = vadd.f32 0.0, %v2715
    %2717 = vmatmul.bf16.gmra.mxu0 %v2577
    %v2718 = vpop.f32.mrf.mxu0
    %v2719 = vadd.f32 0.0, %v2718
    %v2720 = vpop.f32.mrf.mxu0
    %v2721 = vadd.f32 0.0, %v2720
    %2722 = vmatmul.bf16.gmra.mxu0 %v2578
    %v2723 = vpop.f32.mrf.mxu0
    %v2724 = vadd.f32 0.0, %v2723
    %v2725 = vpop.f32.mrf.mxu0
    %v2726 = vadd.f32 0.0, %v2725
    %2727 = vmatmul.bf16.gmra.mxu0 %v2579
    %v2728 = vpop.f32.mrf.mxu0
    %v2729 = vadd.f32 0.0, %v2728
    %v2730 = vpop.f32.mrf.mxu0
    %v2731 = vadd.f32 0.0, %v2730
    %2732 = vdwg.mxu0
    %v2733 = vadd.f32 %v2419, %v2654
    %v2734 = vadd.f32 %v2420, %v2656
    %v2735 = vadd.f32 %v2421, %v2659
    %v2736 = vadd.f32 %v2422, %v2661
    %v2737 = vadd.f32 %v2423, %v2664
    %v2738 = vadd.f32 %v2424, %v2666
    %v2739 = vadd.f32 %v2425, %v2669
    %v2740 = vadd.f32 %v2426, %v2671
    %v2741 = vadd.f32 %v2427, %v2674
    %v2742 = vadd.f32 %v2428, %v2676
    %v2743 = vadd.f32 %v2429, %v2679
    %v2744 = vadd.f32 %v2430, %v2681
    %v2745 = vadd.f32 %v2431, %v2684
    %v2746 = vadd.f32 %v2432, %v2686
    %v2747 = vadd.f32 %v2433, %v2689
    %v2748 = vadd.f32 %v2434, %v2691
    %v2749 = vadd.f32 %v2435, %v2694
    %v2750 = vadd.f32 %v2436, %v2696
    %v2751 = vadd.f32 %v2437, %v2699
    %v2752 = vadd.f32 %v2438, %v2701
    %v2753 = vadd.f32 %v2439, %v2704
    %v2754 = vadd.f32 %v2440, %v2706
    %v2755 = vadd.f32 %v2441, %v2709
    %v2756 = vadd.f32 %v2442, %v2711
    %v2757 = vadd.f32 %v2443, %v2714
    %v2758 = vadd.f32 %v2444, %v2716
    %v2759 = vadd.f32 %v2445, %v2719
    %v2760 = vadd.f32 %v2446, %v2721
    %v2761 = vadd.f32 %v2447, %v2724
    %v2762 = vadd.f32 %v2448, %v2726
    %v2763 = vadd.f32 %v2449, %v2729
    %v2764 = vadd.f32 %v2450, %v2731
    %v2765 = vld [vmem:[%s4] sm:$0x1]
    %v2767 = vperm.slane %v2765, 0
    %v2769 = vadd.f32 %v2733, %v2767
    %v2770 = vadd.f32 %v2734, %v2767
    %v2771 = vadd.f32 %v2735, %v2767
    %v2772 = vadd.f32 %v2736, %v2767
    %v2773 = vadd.f32 %v2737, %v2767
    %v2774 = vadd.f32 %v2738, %v2767
    %v2775 = vadd.f32 %v2739, %v2767
    %v2776 = vadd.f32 %v2740, %v2767
    %v2777 = vadd.f32 %v2741, %v2767
    %v2778 = vadd.f32 %v2742, %v2767
    %v2779 = vadd.f32 %v2743, %v2767
    %v2780 = vadd.f32 %v2744, %v2767
    %v2781 = vadd.f32 %v2745, %v2767
    %v2782 = vadd.f32 %v2746, %v2767
    %v2783 = vadd.f32 %v2747, %v2767
    %v2784 = vadd.f32 %v2748, %v2767
    %v2785 = vadd.f32 %v2749, %v2767
    %v2786 = vadd.f32 %v2750, %v2767
    %v2787 = vadd.f32 %v2751, %v2767
    %v2788 = vadd.f32 %v2752, %v2767
    %v2789 = vadd.f32 %v2753, %v2767
    %v2790 = vadd.f32 %v2754, %v2767
    %v2791 = vadd.f32 %v2755, %v2767
    %v2792 = vadd.f32 %v2756, %v2767
    %v2793 = vadd.f32 %v2757, %v2767
    %v2794 = vadd.f32 %v2758, %v2767
    %v2795 = vadd.f32 %v2759, %v2767
    %v2796 = vadd.f32 %v2760, %v2767
    %v2797 = vadd.f32 %v2761, %v2767
    %v2798 = vadd.f32 %v2762, %v2767
    %v2799 = vadd.f32 %v2763, %v2767
    %v2800 = vadd.f32 %v2764, %v2767
    %v2801 = vmax.f32 %v2769, 0.0
    %v2802 = vmax.f32 %v2770, 0.0
    %v2803 = vmax.f32 %v2771, 0.0
    %v2804 = vmax.f32 %v2772, 0.0
    %v2805 = vmax.f32 %v2773, 0.0
    %v2806 = vmax.f32 %v2774, 0.0
    %v2807 = vmax.f32 %v2775, 0.0
    %v2808 = vmax.f32 %v2776, 0.0
    %v2809 = vmax.f32 %v2777, 0.0
    %v2810 = vmax.f32 %v2778, 0.0
    %v2811 = vmax.f32 %v2779, 0.0
    %v2812 = vmax.f32 %v2780, 0.0
    %v2813 = vmax.f32 %v2781, 0.0
    %v2814 = vmax.f32 %v2782, 0.0
    %v2815 = vmax.f32 %v2783, 0.0
    %v2816 = vmax.f32 %v2784, 0.0
    %v2817 = vmax.f32 %v2785, 0.0
    %v2818 = vmax.f32 %v2786, 0.0
    %v2819 = vmax.f32 %v2787, 0.0
    %v2820 = vmax.f32 %v2788, 0.0
    %v2821 = vmax.f32 %v2789, 0.0
    %v2822 = vmax.f32 %v2790, 0.0
    %v2823 = vmax.f32 %v2791, 0.0
    %v2824 = vmax.f32 %v2792, 0.0
    %v2825 = vmax.f32 %v2793, 0.0
    %v2826 = vmax.f32 %v2794, 0.0
    %v2827 = vmax.f32 %v2795, 0.0
    %v2828 = vmax.f32 %v2796, 0.0
    %v2829 = vmax.f32 %v2797, 0.0
    %v2830 = vmax.f32 %v2798, 0.0
    %v2831 = vmax.f32 %v2799, 0.0
    %v2832 = vmax.f32 %v2800, 0.0
    %v2833 = vld [vmem:[%s211] sm:$0xf]
    %v2834 = vld [vmem:[%s211 + $0x4] sm:$0xf]
    %v2835 = vld [vmem:[%s211 + $0x8] sm:$0xf]
    %v2836 = vld [vmem:[%s211 + $0xc] sm:$0xf]
    %v2837 = vld [vmem:[%s211 + $0x10] sm:$0xf]
    %v2838 = vld [vmem:[%s211 + $0x14] sm:$0xf]
    %v2839 = vld [vmem:[%s211 + $0x18] sm:$0xf]
    %v2840 = vld [vmem:[%s211 + $0x1c] sm:$0xf]
    %v2841 = vld [vmem:[%s211 + $0x20] sm:$0xf]
    %v2842 = vld [vmem:[%s211 + $0x24] sm:$0xf]
    %v2843 = vld [vmem:[%s211 + $0x28] sm:$0xf]
    %v2844 = vld [vmem:[%s211 + $0x2c] sm:$0xf]
    %v2845 = vld [vmem:[%s211 + $0x30] sm:$0xf]
    %v2846 = vld [vmem:[%s211 + $0x34] sm:$0xf]
    %v2847 = vld [vmem:[%s211 + $0x38] sm:$0xf]
    %v2848 = vld [vmem:[%s211 + $0x3c] sm:$0xf]
    %v2849 = vld [vmem:[%s211 + $0x40] sm:$0xf]
    %v2850 = vld [vmem:[%s211 + $0x44] sm:$0xf]
    %v2851 = vld [vmem:[%s211 + $0x48] sm:$0xf]
    %v2852 = vld [vmem:[%s211 + $0x4c] sm:$0xf]
    %v2853 = vld [vmem:[%s211 + $0x50] sm:$0xf]
    %v2854 = vld [vmem:[%s211 + $0x54] sm:$0xf]
    %v2855 = vld [vmem:[%s211 + $0x58] sm:$0xf]
    %v2856 = vld [vmem:[%s211 + $0x5c] sm:$0xf]
    %v2857 = vld [vmem:[%s211 + $0x60] sm:$0xf]
    %v2858 = vld [vmem:[%s211 + $0x64] sm:$0xf]
    %v2859 = vld [vmem:[%s211 + $0x68] sm:$0xf]
    %v2860 = vld [vmem:[%s211 + $0x6c] sm:$0xf]
    %v2861 = vld [vmem:[%s211 + $0x70] sm:$0xf]
    %v2862 = vld [vmem:[%s211 + $0x74] sm:$0xf]
    %v2863 = vld [vmem:[%s211 + $0x78] sm:$0xf]
    %v2864 = vld [vmem:[%s211 + $0x7c] sm:$0xf]
    %v2865 = vld [vmem:[#allocation10] sm:$0xf]
    %v2866 = vld [vmem:[#allocation10 + $0x4] sm:$0xf]
    %v2867 = vld [vmem:[#allocation10 + $0x8] sm:$0xf]
    %v2868 = vld [vmem:[#allocation10 + $0xc] sm:$0xf]
    %v2869 = vld [vmem:[#allocation10 + $0x10] sm:$0xf]
    %v2870 = vld [vmem:[#allocation10 + $0x14] sm:$0xf]
    %v2871 = vld [vmem:[#allocation10 + $0x18] sm:$0xf]
    %v2872 = vld [vmem:[#allocation10 + $0x1c] sm:$0xf]
    %v2873 = vld [vmem:[#allocation10 + $0x20] sm:$0xf]
    %v2874 = vld [vmem:[#allocation10 + $0x24] sm:$0xf]
    %v2875 = vld [vmem:[#allocation10 + $0x28] sm:$0xf]
    %v2876 = vld [vmem:[#allocation10 + $0x2c] sm:$0xf]
    %v2877 = vld [vmem:[#allocation10 + $0x30] sm:$0xf]
    %v2878 = vld [vmem:[#allocation10 + $0x34] sm:$0xf]
    %v2879 = vld [vmem:[#allocation10 + $0x38] sm:$0xf]
    %v2880 = vld [vmem:[#allocation10 + $0x3c] sm:$0xf]
    %v2881 = vld [vmem:[%s6] sm:$0x1]
    %v2883 = vperm.slane %v2881, 0
    %v2917 = vunpack.c.l.b16 %v2833
    %v2918 = vunpack.c.l.b16 %v2834
    %v2919 = vunpack.c.l.b16 %v2835
    %v2920 = vunpack.c.l.b16 %v2836
    %v2921 = vunpack.c.l.b16 %v2837
    %v2922 = vunpack.c.l.b16 %v2838
    %v2923 = vunpack.c.l.b16 %v2839
    %v2924 = vunpack.c.l.b16 %v2840
    %v2925 = vunpack.c.l.b16 %v2841
    %v2926 = vunpack.c.l.b16 %v2842
    %v2927 = vunpack.c.l.b16 %v2843
    %v2928 = vunpack.c.l.b16 %v2844
    %v2929 = vunpack.c.l.b16 %v2845
    %v2930 = vunpack.c.l.b16 %v2846
    %v2931 = vunpack.c.l.b16 %v2847
    %v2932 = vunpack.c.l.b16 %v2848
    %v2933 = vunpack.c.l.b16 %v2849
    %v2934 = vunpack.c.l.b16 %v2850
    %v2935 = vunpack.c.l.b16 %v2851
    %v2936 = vunpack.c.l.b16 %v2852
    %v2937 = vunpack.c.l.b16 %v2853
    %v2938 = vunpack.c.l.b16 %v2854
    %v2939 = vunpack.c.l.b16 %v2855
    %v2940 = vunpack.c.l.b16 %v2856
    %v2941 = vunpack.c.l.b16 %v2857
    %v2942 = vunpack.c.l.b16 %v2858
    %v2943 = vunpack.c.l.b16 %v2859
    %v2944 = vunpack.c.l.b16 %v2860
    %v2945 = vunpack.c.l.b16 %v2861
    %v2946 = vunpack.c.l.b16 %v2862
    %v2947 = vunpack.c.l.b16 %v2863
    %v2948 = vunpack.c.l.b16 %v2864
    %v2949 = vpack.c.b16 %v2918, %v2917
    %v2950 = vpack.c.b16 %v2920, %v2919
    %v2951 = vpack.c.b16 %v2922, %v2921
    %v2952 = vpack.c.b16 %v2924, %v2923
    %v2953 = vpack.c.b16 %v2926, %v2925
    %v2954 = vpack.c.b16 %v2928, %v2927
    %v2955 = vpack.c.b16 %v2930, %v2929
    %v2956 = vpack.c.b16 %v2932, %v2931
    %v2957 = vpack.c.b16 %v2934, %v2933
    %v2958 = vpack.c.b16 %v2936, %v2935
    %v2959 = vpack.c.b16 %v2938, %v2937
    %v2960 = vpack.c.b16 %v2940, %v2939
    %v2961 = vpack.c.b16 %v2942, %v2941
    %v2962 = vpack.c.b16 %v2944, %v2943
    %v2963 = vpack.c.b16 %v2946, %v2945
    %v2964 = vpack.c.b16 %v2948, %v2947
    %v2997 = vunpack.c.l.b16 %v2865
    %v2998 = vunpack.c.l.b16 %v2866
    %v2999 = vunpack.c.l.b16 %v2867
    %v3000 = vunpack.c.l.b16 %v2868
    %v3001 = vunpack.c.l.b16 %v2869
    %v3002 = vunpack.c.l.b16 %v2870
    %v3003 = vunpack.c.l.b16 %v2871
    %v3004 = vunpack.c.l.b16 %v2872
    %v3005 = vunpack.c.l.b16 %v2873
    %v3006 = vunpack.c.l.b16 %v2874
    %v3007 = vunpack.c.l.b16 %v2875
    %v3008 = vunpack.c.l.b16 %v2876
    %v3009 = vunpack.c.l.b16 %v2877
    %v3010 = vunpack.c.l.b16 %v2878
    %v3011 = vunpack.c.l.b16 %v2879
    %v3012 = vunpack.c.l.b16 %v2880
    %v3013 = vpack.c.b16 %v2998, %v2997
    %v3014 = vpack.c.b16 %v3000, %v2999
    %v3015 = vpack.c.b16 %v3002, %v3001
    %v3016 = vpack.c.b16 %v3004, %v3003
    %v3017 = vpack.c.b16 %v3006, %v3005
    %v3018 = vpack.c.b16 %v3008, %v3007
    %v3019 = vpack.c.b16 %v3010, %v3009
    %v3020 = vpack.c.b16 %v3012, %v3011
    %3029 = vmatpush.bf16.msra.mxu0 %v3020
    %3030 = vmatpush.bf16.msra.mxu0 %v3019
    %3031 = vmatpush.bf16.msra.mxu0 %v3018
    %3032 = vmatpush.bf16.msra.mxu0 %v3017
    %3033 = vmatpush.bf16.msra.mxu0 %v3016
    %3034 = vmatpush.bf16.msra.mxu0 %v3015
    %3035 = vmatpush.bf16.msra.mxu0 %v3014
    %3036 = vmatpush.bf16.msra.mxu0 %v3013
    %3037 = vmatmul.bf16.gmra.mxu0 %v2949
    %v3038 = vpop.f32.mrf.mxu0
    %v3039 = vadd.f32 %v2883, %v3038
    %v3040 = vpop.f32.mrf.mxu0
    %v3041 = vadd.f32 %v2883, %v3040
    %3042 = vmatmul.bf16.gmra.mxu0 %v2950
    %v3043 = vpop.f32.mrf.mxu0
    %v3044 = vadd.f32 %v2883, %v3043
    %v3045 = vpop.f32.mrf.mxu0
    %v3046 = vadd.f32 %v2883, %v3045
    %3047 = vmatmul.bf16.gmra.mxu0 %v2951
    %v3048 = vpop.f32.mrf.mxu0
    %v3049 = vadd.f32 %v2883, %v3048
    %v3050 = vpop.f32.mrf.mxu0
    %v3051 = vadd.f32 %v2883, %v3050
    %3052 = vmatmul.bf16.gmra.mxu0 %v2952
    %v3053 = vpop.f32.mrf.mxu0
    %v3054 = vadd.f32 %v2883, %v3053
    %v3055 = vpop.f32.mrf.mxu0
    %v3056 = vadd.f32 %v2883, %v3055
    %3057 = vmatmul.bf16.gmra.mxu0 %v2953
    %v3058 = vpop.f32.mrf.mxu0
    %v3059 = vadd.f32 %v2883, %v3058
    %v3060 = vpop.f32.mrf.mxu0
    %v3061 = vadd.f32 %v2883, %v3060
    %3062 = vmatmul.bf16.gmra.mxu0 %v2954
    %v3063 = vpop.f32.mrf.mxu0
    %v3064 = vadd.f32 %v2883, %v3063
    %v3065 = vpop.f32.mrf.mxu0
    %v3066 = vadd.f32 %v2883, %v3065
    %3067 = vmatmul.bf16.gmra.mxu0 %v2955
    %v3068 = vpop.f32.mrf.mxu0
    %v3069 = vadd.f32 %v2883, %v3068
    %v3070 = vpop.f32.mrf.mxu0
    %v3071 = vadd.f32 %v2883, %v3070
    %3072 = vmatmul.bf16.gmra.mxu0 %v2956
    %v3073 = vpop.f32.mrf.mxu0
    %v3074 = vadd.f32 %v2883, %v3073
    %v3075 = vpop.f32.mrf.mxu0
    %v3076 = vadd.f32 %v2883, %v3075
    %3077 = vmatmul.bf16.gmra.mxu0 %v2957
    %v3078 = vpop.f32.mrf.mxu0
    %v3079 = vadd.f32 %v2883, %v3078
    %v3080 = vpop.f32.mrf.mxu0
    %v3081 = vadd.f32 %v2883, %v3080
    %3082 = vmatmul.bf16.gmra.mxu0 %v2958
    %v3083 = vpop.f32.mrf.mxu0
    %v3084 = vadd.f32 %v2883, %v3083
    %v3085 = vpop.f32.mrf.mxu0
    %v3086 = vadd.f32 %v2883, %v3085
    %3087 = vmatmul.bf16.gmra.mxu0 %v2959
    %v3088 = vpop.f32.mrf.mxu0
    %v3089 = vadd.f32 %v2883, %v3088
    %v3090 = vpop.f32.mrf.mxu0
    %v3091 = vadd.f32 %v2883, %v3090
    %3092 = vmatmul.bf16.gmra.mxu0 %v2960
    %v3093 = vpop.f32.mrf.mxu0
    %v3094 = vadd.f32 %v2883, %v3093
    %v3095 = vpop.f32.mrf.mxu0
    %v3096 = vadd.f32 %v2883, %v3095
    %3097 = vmatmul.bf16.gmra.mxu0 %v2961
    %v3098 = vpop.f32.mrf.mxu0
    %v3099 = vadd.f32 %v2883, %v3098
    %v3100 = vpop.f32.mrf.mxu0
    %v3101 = vadd.f32 %v2883, %v3100
    %3102 = vmatmul.bf16.gmra.mxu0 %v2962
    %v3103 = vpop.f32.mrf.mxu0
    %v3104 = vadd.f32 %v2883, %v3103
    %v3105 = vpop.f32.mrf.mxu0
    %v3106 = vadd.f32 %v2883, %v3105
    %3107 = vmatmul.bf16.gmra.mxu0 %v2963
    %v3108 = vpop.f32.mrf.mxu0
    %v3109 = vadd.f32 %v2883, %v3108
    %v3110 = vpop.f32.mrf.mxu0
    %v3111 = vadd.f32 %v2883, %v3110
    %3112 = vmatmul.bf16.gmra.mxu0 %v2964
    %v3113 = vpop.f32.mrf.mxu0
    %v3114 = vadd.f32 %v2883, %v3113
    %v3115 = vpop.f32.mrf.mxu0
    %v3116 = vadd.f32 %v2883, %v3115
    %3117 = vdwg.mxu0
    %v3118 = vadd.f32 %v2801, %v3039
    %v3119 = vadd.f32 %v2802, %v3041
    %v3120 = vadd.f32 %v2803, %v3044
    %v3121 = vadd.f32 %v2804, %v3046
    %v3122 = vadd.f32 %v2805, %v3049
    %v3123 = vadd.f32 %v2806, %v3051
    %v3124 = vadd.f32 %v2807, %v3054
    %v3125 = vadd.f32 %v2808, %v3056
    %v3126 = vadd.f32 %v2809, %v3059
    %v3127 = vadd.f32 %v2810, %v3061
    %v3128 = vadd.f32 %v2811, %v3064
    %v3129 = vadd.f32 %v2812, %v3066
    %v3130 = vadd.f32 %v2813, %v3069
    %v3131 = vadd.f32 %v2814, %v3071
    %v3132 = vadd.f32 %v2815, %v3074
    %v3133 = vadd.f32 %v2816, %v3076
    %v3134 = vadd.f32 %v2817, %v3079
    %v3135 = vadd.f32 %v2818, %v3081
    %v3136 = vadd.f32 %v2819, %v3084
    %v3137 = vadd.f32 %v2820, %v3086
    %v3138 = vadd.f32 %v2821, %v3089
    %v3139 = vadd.f32 %v2822, %v3091
    %v3140 = vadd.f32 %v2823, %v3094
    %v3141 = vadd.f32 %v2824, %v3096
    %v3142 = vadd.f32 %v2825, %v3099
    %v3143 = vadd.f32 %v2826, %v3101
    %v3144 = vadd.f32 %v2827, %v3104
    %v3145 = vadd.f32 %v2828, %v3106
    %v3146 = vadd.f32 %v2829, %v3109
    %v3147 = vadd.f32 %v2830, %v3111
    %v3148 = vadd.f32 %v2831, %v3114
    %v3149 = vadd.f32 %v2832, %v3116
    %v3150 = vmax.f32 %v3118, 0.0
    %v3151 = vmax.f32 %v3119, 0.0
    %v3152 = vmax.f32 %v3120, 0.0
    %v3153 = vmax.f32 %v3121, 0.0
    %v3154 = vmax.f32 %v3122, 0.0
    %v3155 = vmax.f32 %v3123, 0.0
    %v3156 = vmax.f32 %v3124, 0.0
    %v3157 = vmax.f32 %v3125, 0.0
    %v3158 = vmax.f32 %v3126, 0.0
    %v3159 = vmax.f32 %v3127, 0.0
    %v3160 = vmax.f32 %v3128, 0.0
    %v3161 = vmax.f32 %v3129, 0.0
    %v3162 = vmax.f32 %v3130, 0.0
    %v3163 = vmax.f32 %v3131, 0.0
    %v3164 = vmax.f32 %v3132, 0.0
    %v3165 = vmax.f32 %v3133, 0.0
    %v3166 = vmax.f32 %v3134, 0.0
    %v3167 = vmax.f32 %v3135, 0.0
    %v3168 = vmax.f32 %v3136, 0.0
    %v3169 = vmax.f32 %v3137, 0.0
    %v3170 = vmax.f32 %v3138, 0.0
    %v3171 = vmax.f32 %v3139, 0.0
    %v3172 = vmax.f32 %v3140, 0.0
    %v3173 = vmax.f32 %v3141, 0.0
    %v3174 = vmax.f32 %v3142, 0.0
    %v3175 = vmax.f32 %v3143, 0.0
    %v3176 = vmax.f32 %v3144, 0.0
    %v3177 = vmax.f32 %v3145, 0.0
    %v3178 = vmax.f32 %v3146, 0.0
    %v3179 = vmax.f32 %v3147, 0.0
    %v3180 = vmax.f32 %v3148, 0.0
    %v3181 = vmax.f32 %v3149, 0.0
    %v3182 = vpack.c.bf16 %v3150, %v3150
    %v3183 = vpack.c.bf16 %v3151, %v3151
    %v3184 = vpack.c.bf16 %v3152, %v3152
    %v3185 = vpack.c.bf16 %v3153, %v3153
    %v3186 = vpack.c.bf16 %v3154, %v3154
    %v3187 = vpack.c.bf16 %v3155, %v3155
    %v3188 = vpack.c.bf16 %v3156, %v3156
    %v3189 = vpack.c.bf16 %v3157, %v3157
    %v3190 = vpack.c.bf16 %v3158, %v3158
    %v3191 = vpack.c.bf16 %v3159, %v3159
    %v3192 = vpack.c.bf16 %v3160, %v3160
    %v3193 = vpack.c.bf16 %v3161, %v3161
    %v3194 = vpack.c.bf16 %v3162, %v3162
    %v3195 = vpack.c.bf16 %v3163, %v3163
    %v3196 = vpack.c.bf16 %v3164, %v3164
    %v3197 = vpack.c.bf16 %v3165, %v3165
    %v3198 = vpack.c.bf16 %v3166, %v3166
    %v3199 = vpack.c.bf16 %v3167, %v3167
    %v3200 = vpack.c.bf16 %v3168, %v3168
    %v3201 = vpack.c.bf16 %v3169, %v3169
    %v3202 = vpack.c.bf16 %v3170, %v3170
    %v3203 = vpack.c.bf16 %v3171, %v3171
    %v3204 = vpack.c.bf16 %v3172, %v3172
    %v3205 = vpack.c.bf16 %v3173, %v3173
    %v3206 = vpack.c.bf16 %v3174, %v3174
    %v3207 = vpack.c.bf16 %v3175, %v3175
    %v3208 = vpack.c.bf16 %v3176, %v3176
    %v3209 = vpack.c.bf16 %v3177, %v3177
    %v3210 = vpack.c.bf16 %v3178, %v3178
    %v3211 = vpack.c.bf16 %v3179, %v3179
    %v3212 = vpack.c.bf16 %v3180, %v3180
    %v3213 = vpack.c.bf16 %v3181, %v3181
    %3214 = vst [vmem:[%s211] sm:$0xf] %v3182
    %3215 = vst [vmem:[%s211 + $0x4] sm:$0xf] %v3183
    %3216 = vst [vmem:[%s211 + $0x8] sm:$0xf] %v3184
    %3217 = vst [vmem:[%s211 + $0xc] sm:$0xf] %v3185
    %3218 = vst [vmem:[%s211 + $0x10] sm:$0xf] %v3186
    %3219 = vst [vmem:[%s211 + $0x14] sm:$0xf] %v3187
    %3220 = vst [vmem:[%s211 + $0x18] sm:$0xf] %v3188
    %3221 = vst [vmem:[%s211 + $0x1c] sm:$0xf] %v3189
    %3222 = vst [vmem:[%s211 + $0x20] sm:$0xf] %v3190
    %3223 = vst [vmem:[%s211 + $0x24] sm:$0xf] %v3191
    %3224 = vst [vmem:[%s211 + $0x28] sm:$0xf] %v3192
    %3225 = vst [vmem:[%s211 + $0x2c] sm:$0xf] %v3193
    %3226 = vst [vmem:[%s211 + $0x30] sm:$0xf] %v3194
    %3227 = vst [vmem:[%s211 + $0x34] sm:$0xf] %v3195
    %3228 = vst [vmem:[%s211 + $0x38] sm:$0xf] %v3196
    %3229 = vst [vmem:[%s211 + $0x3c] sm:$0xf] %v3197
    %3230 = vst [vmem:[%s211 + $0x40] sm:$0xf] %v3198
    %3231 = vst [vmem:[%s211 + $0x44] sm:$0xf] %v3199
    %3232 = vst [vmem:[%s211 + $0x48] sm:$0xf] %v3200
    %3233 = vst [vmem:[%s211 + $0x4c] sm:$0xf] %v3201
    %3234 = vst [vmem:[%s211 + $0x50] sm:$0xf] %v3202
    %3235 = vst [vmem:[%s211 + $0x54] sm:$0xf] %v3203
    %3236 = vst [vmem:[%s211 + $0x58] sm:$0xf] %v3204
    %3237 = vst [vmem:[%s211 + $0x5c] sm:$0xf] %v3205
    %3238 = vst [vmem:[%s211 + $0x60] sm:$0xf] %v3206
    %3239 = vst [vmem:[%s211 + $0x64] sm:$0xf] %v3207
    %3240 = vst [vmem:[%s211 + $0x68] sm:$0xf] %v3208
    %3241 = vst [vmem:[%s211 + $0x6c] sm:$0xf] %v3209
    %3242 = vst [vmem:[%s211 + $0x70] sm:$0xf] %v3210
    %3243 = vst [vmem:[%s211 + $0x74] sm:$0xf] %v3211
    %3244 = vst [vmem:[%s211 + $0x78] sm:$0xf] %v3212
    %3245 = vst [vmem:[%s211 + $0x7c] sm:$0xf] %v3213
    %v3246 = vld [vmem:[#allocation2] sm:$0xf]
    %v3247 = vld [vmem:[#allocation2 + $0x4] sm:$0xf]
    %v3248 = vld [vmem:[#allocation2 + $0x8] sm:$0xf]
    %v3249 = vld [vmem:[#allocation2 + $0xc] sm:$0xf]
    %v3250 = vld [vmem:[#allocation2 + $0x10] sm:$0xf]
    %v3251 = vld [vmem:[#allocation2 + $0x14] sm:$0xf]
    %v3252 = vld [vmem:[#allocation2 + $0x18] sm:$0xf]
    %v3253 = vld [vmem:[#allocation2 + $0x1c] sm:$0xf]
    %v3254 = vld [vmem:[#allocation2 + $0x20] sm:$0xf]
    %v3255 = vld [vmem:[#allocation2 + $0x24] sm:$0xf]
    %v3256 = vld [vmem:[#allocation2 + $0x28] sm:$0xf]
    %v3257 = vld [vmem:[#allocation2 + $0x2c] sm:$0xf]
    %v3258 = vld [vmem:[#allocation2 + $0x30] sm:$0xf]
    %v3259 = vld [vmem:[#allocation2 + $0x34] sm:$0xf]
    %v3260 = vld [vmem:[#allocation2 + $0x38] sm:$0xf]
    %v3261 = vld [vmem:[#allocation2 + $0x3c] sm:$0xf]
    %v3262 = vld [vmem:[#allocation2 + $0x40] sm:$0xf]
    %v3263 = vld [vmem:[#allocation2 + $0x44] sm:$0xf]
    %v3264 = vld [vmem:[#allocation2 + $0x48] sm:$0xf]
    %v3265 = vld [vmem:[#allocation2 + $0x4c] sm:$0xf]
    %v3266 = vld [vmem:[#allocation2 + $0x50] sm:$0xf]
    %v3267 = vld [vmem:[#allocation2 + $0x54] sm:$0xf]
    %v3268 = vld [vmem:[#allocation2 + $0x58] sm:$0xf]
    %v3269 = vld [vmem:[#allocation2 + $0x5c] sm:$0xf]
    %v3270 = vld [vmem:[#allocation2 + $0x60] sm:$0xf]
    %v3271 = vld [vmem:[#allocation2 + $0x64] sm:$0xf]
    %v3272 = vld [vmem:[#allocation2 + $0x68] sm:$0xf]
    %v3273 = vld [vmem:[#allocation2 + $0x6c] sm:$0xf]
    %v3274 = vld [vmem:[#allocation2 + $0x70] sm:$0xf]
    %v3275 = vld [vmem:[#allocation2 + $0x74] sm:$0xf]
    %v3276 = vld [vmem:[#allocation2 + $0x78] sm:$0xf]
    %v3277 = vld [vmem:[#allocation2 + $0x7c] sm:$0xf]
    %v3278 = vld [vmem:[#allocation12] sm:$0xf]
    %v3279 = vld [vmem:[#allocation12 + $0x4] sm:$0xf]
    %v3280 = vld [vmem:[#allocation12 + $0x8] sm:$0xf]
    %v3281 = vld [vmem:[#allocation12 + $0xc] sm:$0xf]
    %v3282 = vld [vmem:[#allocation12 + $0x10] sm:$0xf]
    %v3283 = vld [vmem:[#allocation12 + $0x14] sm:$0xf]
    %v3284 = vld [vmem:[#allocation12 + $0x18] sm:$0xf]
    %v3285 = vld [vmem:[#allocation12 + $0x1c] sm:$0xf]
    %v3286 = vld [vmem:[#allocation12 + $0x20] sm:$0xf]
    %v3287 = vld [vmem:[#allocation12 + $0x24] sm:$0xf]
    %v3288 = vld [vmem:[#allocation12 + $0x28] sm:$0xf]
    %v3289 = vld [vmem:[#allocation12 + $0x2c] sm:$0xf]
    %v3290 = vld [vmem:[#allocation12 + $0x30] sm:$0xf]
    %v3291 = vld [vmem:[#allocation12 + $0x34] sm:$0xf]
    %v3292 = vld [vmem:[#allocation12 + $0x38] sm:$0xf]
    %v3293 = vld [vmem:[#allocation12 + $0x3c] sm:$0xf]
    %s3294 = scalar_lea.vmem [#allocation2], 16
    %v3295 = vld [vmem:[%s3294] sm:$0xf]
    %v3296 = vld [vmem:[%s3294 + $0x4] sm:$0xf]
    %v3297 = vld [vmem:[%s3294 + $0x8] sm:$0xf]
    %v3298 = vld [vmem:[%s3294 + $0xc] sm:$0xf]
    %v3299 = vld [vmem:[%s3294 + $0x10] sm:$0xf]
    %v3300 = vld [vmem:[%s3294 + $0x14] sm:$0xf]
    %v3301 = vld [vmem:[%s3294 + $0x18] sm:$0xf]
    %v3302 = vld [vmem:[%s3294 + $0x1c] sm:$0xf]
    %v3303 = vld [vmem:[%s3294 + $0x20] sm:$0xf]
    %v3304 = vld [vmem:[%s3294 + $0x24] sm:$0xf]
    %v3305 = vld [vmem:[%s3294 + $0x28] sm:$0xf]
    %v3306 = vld [vmem:[%s3294 + $0x2c] sm:$0xf]
    %v3307 = vld [vmem:[%s3294 + $0x30] sm:$0xf]
    %v3308 = vld [vmem:[%s3294 + $0x34] sm:$0xf]
    %v3309 = vld [vmem:[%s3294 + $0x38] sm:$0xf]
    %v3310 = vld [vmem:[%s3294 + $0x3c] sm:$0xf]
    %v3311 = vld [vmem:[%s3294 + $0x40] sm:$0xf]
    %v3312 = vld [vmem:[%s3294 + $0x44] sm:$0xf]
    %v3313 = vld [vmem:[%s3294 + $0x48] sm:$0xf]
    %v3314 = vld [vmem:[%s3294 + $0x4c] sm:$0xf]
    %v3315 = vld [vmem:[%s3294 + $0x50] sm:$0xf]
    %v3316 = vld [vmem:[%s3294 + $0x54] sm:$0xf]
    %v3317 = vld [vmem:[%s3294 + $0x58] sm:$0xf]
    %v3318 = vld [vmem:[%s3294 + $0x5c] sm:$0xf]
    %v3319 = vld [vmem:[%s3294 + $0x60] sm:$0xf]
    %v3320 = vld [vmem:[%s3294 + $0x64] sm:$0xf]
    %v3321 = vld [vmem:[%s3294 + $0x68] sm:$0xf]
    %v3322 = vld [vmem:[%s3294 + $0x6c] sm:$0xf]
    %v3323 = vld [vmem:[%s3294 + $0x70] sm:$0xf]
    %v3324 = vld [vmem:[%s3294 + $0x74] sm:$0xf]
    %v3325 = vld [vmem:[%s3294 + $0x78] sm:$0xf]
    %v3326 = vld [vmem:[%s3294 + $0x7c] sm:$0xf]
    %s3327 = scalar_lea.vmem [#allocation12], 64
    %v3328 = vld [vmem:[%s3327] sm:$0xf]
    %v3329 = vld [vmem:[%s3327 + $0x4] sm:$0xf]
    %v3330 = vld [vmem:[%s3327 + $0x8] sm:$0xf]
    %v3331 = vld [vmem:[%s3327 + $0xc] sm:$0xf]
    %v3332 = vld [vmem:[%s3327 + $0x10] sm:$0xf]
    %v3333 = vld [vmem:[%s3327 + $0x14] sm:$0xf]
    %v3334 = vld [vmem:[%s3327 + $0x18] sm:$0xf]
    %v3335 = vld [vmem:[%s3327 + $0x1c] sm:$0xf]
    %v3336 = vld [vmem:[%s3327 + $0x20] sm:$0xf]
    %v3337 = vld [vmem:[%s3327 + $0x24] sm:$0xf]
    %v3338 = vld [vmem:[%s3327 + $0x28] sm:$0xf]
    %v3339 = vld [vmem:[%s3327 + $0x2c] sm:$0xf]
    %v3340 = vld [vmem:[%s3327 + $0x30] sm:$0xf]
    %v3341 = vld [vmem:[%s3327 + $0x34] sm:$0xf]
    %v3342 = vld [vmem:[%s3327 + $0x38] sm:$0xf]
    %v3343 = vld [vmem:[%s3327 + $0x3c] sm:$0xf]
    %v3376 = vunpack.c.l.b16 %v3295
    %v3377 = vunpack.c.l.b16 %v3296
    %v3378 = vunpack.c.l.b16 %v3297
    %v3379 = vunpack.c.l.b16 %v3298
    %v3380 = vunpack.c.l.b16 %v3299
    %v3381 = vunpack.c.l.b16 %v3300
    %v3382 = vunpack.c.l.b16 %v3301
    %v3383 = vunpack.c.l.b16 %v3302
    %v3384 = vunpack.c.l.b16 %v3303
    %v3385 = vunpack.c.l.b16 %v3304
    %v3386 = vunpack.c.l.b16 %v3305
    %v3387 = vunpack.c.l.b16 %v3306
    %v3388 = vunpack.c.l.b16 %v3307
    %v3389 = vunpack.c.l.b16 %v3308
    %v3390 = vunpack.c.l.b16 %v3309
    %v3391 = vunpack.c.l.b16 %v3310
    %v3392 = vunpack.c.l.b16 %v3311
    %v3393 = vunpack.c.l.b16 %v3312
    %v3394 = vunpack.c.l.b16 %v3313
    %v3395 = vunpack.c.l.b16 %v3314
    %v3396 = vunpack.c.l.b16 %v3315
    %v3397 = vunpack.c.l.b16 %v3316
    %v3398 = vunpack.c.l.b16 %v3317
    %v3399 = vunpack.c.l.b16 %v3318
    %v3400 = vunpack.c.l.b16 %v3319
    %v3401 = vunpack.c.l.b16 %v3320
    %v3402 = vunpack.c.l.b16 %v3321
    %v3403 = vunpack.c.l.b16 %v3322
    %v3404 = vunpack.c.l.b16 %v3323
    %v3405 = vunpack.c.l.b16 %v3324
    %v3406 = vunpack.c.l.b16 %v3325
    %v3407 = vunpack.c.l.b16 %v3326
    %v3408 = vpack.c.b16 %v3377, %v3376
    %v3409 = vpack.c.b16 %v3379, %v3378
    %v3410 = vpack.c.b16 %v3381, %v3380
    %v3411 = vpack.c.b16 %v3383, %v3382
    %v3412 = vpack.c.b16 %v3385, %v3384
    %v3413 = vpack.c.b16 %v3387, %v3386
    %v3414 = vpack.c.b16 %v3389, %v3388
    %v3415 = vpack.c.b16 %v3391, %v3390
    %v3416 = vpack.c.b16 %v3393, %v3392
    %v3417 = vpack.c.b16 %v3395, %v3394
    %v3418 = vpack.c.b16 %v3397, %v3396
    %v3419 = vpack.c.b16 %v3399, %v3398
    %v3420 = vpack.c.b16 %v3401, %v3400
    %v3421 = vpack.c.b16 %v3403, %v3402
    %v3422 = vpack.c.b16 %v3405, %v3404
    %v3423 = vpack.c.b16 %v3407, %v3406
    %v3456 = vunpack.c.l.b16 %v3328
    %v3457 = vunpack.c.l.b16 %v3329
    %v3458 = vunpack.c.l.b16 %v3330
    %v3459 = vunpack.c.l.b16 %v3331
    %v3460 = vunpack.c.l.b16 %v3332
    %v3461 = vunpack.c.l.b16 %v3333
    %v3462 = vunpack.c.l.b16 %v3334
    %v3463 = vunpack.c.l.b16 %v3335
    %v3464 = vunpack.c.l.b16 %v3336
    %v3465 = vunpack.c.l.b16 %v3337
    %v3466 = vunpack.c.l.b16 %v3338
    %v3467 = vunpack.c.l.b16 %v3339
    %v3468 = vunpack.c.l.b16 %v3340
    %v3469 = vunpack.c.l.b16 %v3341
    %v3470 = vunpack.c.l.b16 %v3342
    %v3471 = vunpack.c.l.b16 %v3343
    %v3472 = vpack.c.b16 %v3457, %v3456
    %v3473 = vpack.c.b16 %v3459, %v3458
    %v3474 = vpack.c.b16 %v3461, %v3460
    %v3475 = vpack.c.b16 %v3463, %v3462
    %v3476 = vpack.c.b16 %v3465, %v3464
    %v3477 = vpack.c.b16 %v3467, %v3466
    %v3478 = vpack.c.b16 %v3469, %v3468
    %v3479 = vpack.c.b16 %v3471, %v3470
    %3488 = vmatpush.bf16.msra.mxu0 %v3479
    %3489 = vmatpush.bf16.msra.mxu0 %v3478
    %3490 = vmatpush.bf16.msra.mxu0 %v3477
    %3491 = vmatpush.bf16.msra.mxu0 %v3476
    %3492 = vmatpush.bf16.msra.mxu0 %v3475
    %3493 = vmatpush.bf16.msra.mxu0 %v3474
    %3494 = vmatpush.bf16.msra.mxu0 %v3473
    %3495 = vmatpush.bf16.msra.mxu0 %v3472
    %3496 = vmatmul.bf16.gmra.mxu0 %v3408
    %v3497 = vpop.f32.mrf.mxu0
    %v3498 = vadd.f32 0.0, %v3497
    %v3499 = vpop.f32.mrf.mxu0
    %v3500 = vadd.f32 0.0, %v3499
    %3501 = vmatmul.bf16.gmra.mxu0 %v3409
    %v3502 = vpop.f32.mrf.mxu0
    %v3503 = vadd.f32 0.0, %v3502
    %v3504 = vpop.f32.mrf.mxu0
    %v3505 = vadd.f32 0.0, %v3504
    %3506 = vmatmul.bf16.gmra.mxu0 %v3410
    %v3507 = vpop.f32.mrf.mxu0
    %v3508 = vadd.f32 0.0, %v3507
    %v3509 = vpop.f32.mrf.mxu0
    %v3510 = vadd.f32 0.0, %v3509
    %3511 = vmatmul.bf16.gmra.mxu0 %v3411
    %v3512 = vpop.f32.mrf.mxu0
    %v3513 = vadd.f32 0.0, %v3512
    %v3514 = vpop.f32.mrf.mxu0
    %v3515 = vadd.f32 0.0, %v3514
    %3516 = vmatmul.bf16.gmra.mxu0 %v3412
    %v3517 = vpop.f32.mrf.mxu0
    %v3518 = vadd.f32 0.0, %v3517
    %v3519 = vpop.f32.mrf.mxu0
    %v3520 = vadd.f32 0.0, %v3519
    %3521 = vmatmul.bf16.gmra.mxu0 %v3413
    %v3522 = vpop.f32.mrf.mxu0
    %v3523 = vadd.f32 0.0, %v3522
    %v3524 = vpop.f32.mrf.mxu0
    %v3525 = vadd.f32 0.0, %v3524
    %3526 = vmatmul.bf16.gmra.mxu0 %v3414
    %v3527 = vpop.f32.mrf.mxu0
    %v3528 = vadd.f32 0.0, %v3527
    %v3529 = vpop.f32.mrf.mxu0
    %v3530 = vadd.f32 0.0, %v3529
    %3531 = vmatmul.bf16.gmra.mxu0 %v3415
    %v3532 = vpop.f32.mrf.mxu0
    %v3533 = vadd.f32 0.0, %v3532
    %v3534 = vpop.f32.mrf.mxu0
    %v3535 = vadd.f32 0.0, %v3534
    %3536 = vmatmul.bf16.gmra.mxu0 %v3416
    %v3537 = vpop.f32.mrf.mxu0
    %v3538 = vadd.f32 0.0, %v3537
    %v3539 = vpop.f32.mrf.mxu0
    %v3540 = vadd.f32 0.0, %v3539
    %3541 = vmatmul.bf16.gmra.mxu0 %v3417
    %v3542 = vpop.f32.mrf.mxu0
    %v3543 = vadd.f32 0.0, %v3542
    %v3544 = vpop.f32.mrf.mxu0
    %v3545 = vadd.f32 0.0, %v3544
    %3546 = vmatmul.bf16.gmra.mxu0 %v3418
    %v3547 = vpop.f32.mrf.mxu0
    %v3548 = vadd.f32 0.0, %v3547
    %v3549 = vpop.f32.mrf.mxu0
    %v3550 = vadd.f32 0.0, %v3549
    %3551 = vmatmul.bf16.gmra.mxu0 %v3419
    %v3552 = vpop.f32.mrf.mxu0
    %v3553 = vadd.f32 0.0, %v3552
    %v3554 = vpop.f32.mrf.mxu0
    %v3555 = vadd.f32 0.0, %v3554
    %3556 = vmatmul.bf16.gmra.mxu0 %v3420
    %v3557 = vpop.f32.mrf.mxu0
    %v3558 = vadd.f32 0.0, %v3557
    %v3559 = vpop.f32.mrf.mxu0
    %v3560 = vadd.f32 0.0, %v3559
    %3561 = vmatmul.bf16.gmra.mxu0 %v3421
    %v3562 = vpop.f32.mrf.mxu0
    %v3563 = vadd.f32 0.0, %v3562
    %v3564 = vpop.f32.mrf.mxu0
    %v3565 = vadd.f32 0.0, %v3564
    %3566 = vmatmul.bf16.gmra.mxu0 %v3422
    %v3567 = vpop.f32.mrf.mxu0
    %v3568 = vadd.f32 0.0, %v3567
    %v3569 = vpop.f32.mrf.mxu0
    %v3570 = vadd.f32 0.0, %v3569
    %3571 = vmatmul.bf16.gmra.mxu0 %v3423
    %v3572 = vpop.f32.mrf.mxu0
    %v3573 = vadd.f32 0.0, %v3572
    %v3574 = vpop.f32.mrf.mxu0
    %v3575 = vadd.f32 0.0, %v3574
    %3576 = vdwg.mxu0
    %v3609 = vunpack.c.l.b16 %v3246
    %v3610 = vunpack.c.l.b16 %v3247
    %v3611 = vunpack.c.l.b16 %v3248
    %v3612 = vunpack.c.l.b16 %v3249
    %v3613 = vunpack.c.l.b16 %v3250
    %v3614 = vunpack.c.l.b16 %v3251
    %v3615 = vunpack.c.l.b16 %v3252
    %v3616 = vunpack.c.l.b16 %v3253
    %v3617 = vunpack.c.l.b16 %v3254
    %v3618 = vunpack.c.l.b16 %v3255
    %v3619 = vunpack.c.l.b16 %v3256
    %v3620 = vunpack.c.l.b16 %v3257
    %v3621 = vunpack.c.l.b16 %v3258
    %v3622 = vunpack.c.l.b16 %v3259
    %v3623 = vunpack.c.l.b16 %v3260
    %v3624 = vunpack.c.l.b16 %v3261
    %v3625 = vunpack.c.l.b16 %v3262
    %v3626 = vunpack.c.l.b16 %v3263
    %v3627 = vunpack.c.l.b16 %v3264
    %v3628 = vunpack.c.l.b16 %v3265
    %v3629 = vunpack.c.l.b16 %v3266
    %v3630 = vunpack.c.l.b16 %v3267
    %v3631 = vunpack.c.l.b16 %v3268
    %v3632 = vunpack.c.l.b16 %v3269
    %v3633 = vunpack.c.l.b16 %v3270
    %v3634 = vunpack.c.l.b16 %v3271
    %v3635 = vunpack.c.l.b16 %v3272
    %v3636 = vunpack.c.l.b16 %v3273
    %v3637 = vunpack.c.l.b16 %v3274
    %v3638 = vunpack.c.l.b16 %v3275
    %v3639 = vunpack.c.l.b16 %v3276
    %v3640 = vunpack.c.l.b16 %v3277
    %v3641 = vpack.c.b16 %v3610, %v3609
    %v3642 = vpack.c.b16 %v3612, %v3611
    %v3643 = vpack.c.b16 %v3614, %v3613
    %v3644 = vpack.c.b16 %v3616, %v3615
    %v3645 = vpack.c.b16 %v3618, %v3617
    %v3646 = vpack.c.b16 %v3620, %v3619
    %v3647 = vpack.c.b16 %v3622, %v3621
    %v3648 = vpack.c.b16 %v3624, %v3623
    %v3649 = vpack.c.b16 %v3626, %v3625
    %v3650 = vpack.c.b16 %v3628, %v3627
    %v3651 = vpack.c.b16 %v3630, %v3629
    %v3652 = vpack.c.b16 %v3632, %v3631
    %v3653 = vpack.c.b16 %v3634, %v3633
    %v3654 = vpack.c.b16 %v3636, %v3635
    %v3655 = vpack.c.b16 %v3638, %v3637
    %v3656 = vpack.c.b16 %v3640, %v3639
    %v3689 = vunpack.c.l.b16 %v3278
    %v3690 = vunpack.c.l.b16 %v3279
    %v3691 = vunpack.c.l.b16 %v3280
    %v3692 = vunpack.c.l.b16 %v3281
    %v3693 = vunpack.c.l.b16 %v3282
    %v3694 = vunpack.c.l.b16 %v3283
    %v3695 = vunpack.c.l.b16 %v3284
    %v3696 = vunpack.c.l.b16 %v3285
    %v3697 = vunpack.c.l.b16 %v3286
    %v3698 = vunpack.c.l.b16 %v3287
    %v3699 = vunpack.c.l.b16 %v3288
    %v3700 = vunpack.c.l.b16 %v3289
    %v3701 = vunpack.c.l.b16 %v3290
    %v3702 = vunpack.c.l.b16 %v3291
    %v3703 = vunpack.c.l.b16 %v3292
    %v3704 = vunpack.c.l.b16 %v3293
    %v3705 = vpack.c.b16 %v3690, %v3689
    %v3706 = vpack.c.b16 %v3692, %v3691
    %v3707 = vpack.c.b16 %v3694, %v3693
    %v3708 = vpack.c.b16 %v3696, %v3695
    %v3709 = vpack.c.b16 %v3698, %v3697
    %v3710 = vpack.c.b16 %v3700, %v3699
    %v3711 = vpack.c.b16 %v3702, %v3701
    %v3712 = vpack.c.b16 %v3704, %v3703
    %3721 = vmatpush.bf16.msra.mxu0 %v3712
    %3722 = vmatpush.bf16.msra.mxu0 %v3711
    %3723 = vmatpush.bf16.msra.mxu0 %v3710
    %3724 = vmatpush.bf16.msra.mxu0 %v3709
    %3725 = vmatpush.bf16.msra.mxu0 %v3708
    %3726 = vmatpush.bf16.msra.mxu0 %v3707
    %3727 = vmatpush.bf16.msra.mxu0 %v3706
    %3728 = vmatpush.bf16.msra.mxu0 %v3705
    %3729 = vmatmul.bf16.gmra.mxu0 %v3641
    %v3730 = vpop.f32.mrf.mxu0
    %v3731 = vadd.f32 %v3498, %v3730
    %v3732 = vpop.f32.mrf.mxu0
    %v3733 = vadd.f32 %v3500, %v3732
    %3734 = vmatmul.bf16.gmra.mxu0 %v3642
    %v3735 = vpop.f32.mrf.mxu0
    %v3736 = vadd.f32 %v3503, %v3735
    %v3737 = vpop.f32.mrf.mxu0
    %v3738 = vadd.f32 %v3505, %v3737
    %3739 = vmatmul.bf16.gmra.mxu0 %v3643
    %v3740 = vpop.f32.mrf.mxu0
    %v3741 = vadd.f32 %v3508, %v3740
    %v3742 = vpop.f32.mrf.mxu0
    %v3743 = vadd.f32 %v3510, %v3742
    %3744 = vmatmul.bf16.gmra.mxu0 %v3644
    %v3745 = vpop.f32.mrf.mxu0
    %v3746 = vadd.f32 %v3513, %v3745
    %v3747 = vpop.f32.mrf.mxu0
    %v3748 = vadd.f32 %v3515, %v3747
    %3749 = vmatmul.bf16.gmra.mxu0 %v3645
    %v3750 = vpop.f32.mrf.mxu0
    %v3751 = vadd.f32 %v3518, %v3750
    %v3752 = vpop.f32.mrf.mxu0
    %v3753 = vadd.f32 %v3520, %v3752
    %3754 = vmatmul.bf16.gmra.mxu0 %v3646
    %v3755 = vpop.f32.mrf.mxu0
    %v3756 = vadd.f32 %v3523, %v3755
    %v3757 = vpop.f32.mrf.mxu0
    %v3758 = vadd.f32 %v3525, %v3757
    %3759 = vmatmul.bf16.gmra.mxu0 %v3647
    %v3760 = vpop.f32.mrf.mxu0
    %v3761 = vadd.f32 %v3528, %v3760
    %v3762 = vpop.f32.mrf.mxu0
    %v3763 = vadd.f32 %v3530, %v3762
    %3764 = vmatmul.bf16.gmra.mxu0 %v3648
    %v3765 = vpop.f32.mrf.mxu0
    %v3766 = vadd.f32 %v3533, %v3765
    %v3767 = vpop.f32.mrf.mxu0
    %v3768 = vadd.f32 %v3535, %v3767
    %3769 = vmatmul.bf16.gmra.mxu0 %v3649
    %v3770 = vpop.f32.mrf.mxu0
    %v3771 = vadd.f32 %v3538, %v3770
    %v3772 = vpop.f32.mrf.mxu0
    %v3773 = vadd.f32 %v3540, %v3772
    %3774 = vmatmul.bf16.gmra.mxu0 %v3650
    %v3775 = vpop.f32.mrf.mxu0
    %v3776 = vadd.f32 %v3543, %v3775
    %v3777 = vpop.f32.mrf.mxu0
    %v3778 = vadd.f32 %v3545, %v3777
    %3779 = vmatmul.bf16.gmra.mxu0 %v3651
    %v3780 = vpop.f32.mrf.mxu0
    %v3781 = vadd.f32 %v3548, %v3780
    %v3782 = vpop.f32.mrf.mxu0
    %v3783 = vadd.f32 %v3550, %v3782
    %3784 = vmatmul.bf16.gmra.mxu0 %v3652
    %v3785 = vpop.f32.mrf.mxu0
    %v3786 = vadd.f32 %v3553, %v3785
    %v3787 = vpop.f32.mrf.mxu0
    %v3788 = vadd.f32 %v3555, %v3787
    %3789 = vmatmul.bf16.gmra.mxu0 %v3653
    %v3790 = vpop.f32.mrf.mxu0
    %v3791 = vadd.f32 %v3558, %v3790
    %v3792 = vpop.f32.mrf.mxu0
    %v3793 = vadd.f32 %v3560, %v3792
    %3794 = vmatmul.bf16.gmra.mxu0 %v3654
    %v3795 = vpop.f32.mrf.mxu0
    %v3796 = vadd.f32 %v3563, %v3795
    %v3797 = vpop.f32.mrf.mxu0
    %v3798 = vadd.f32 %v3565, %v3797
    %3799 = vmatmul.bf16.gmra.mxu0 %v3655
    %v3800 = vpop.f32.mrf.mxu0
    %v3801 = vadd.f32 %v3568, %v3800
    %v3802 = vpop.f32.mrf.mxu0
    %v3803 = vadd.f32 %v3570, %v3802
    %3804 = vmatmul.bf16.gmra.mxu0 %v3656
    %v3805 = vpop.f32.mrf.mxu0
    %v3806 = vadd.f32 %v3573, %v3805
    %v3807 = vpop.f32.mrf.mxu0
    %v3808 = vadd.f32 %v3575, %v3807
    %3809 = vdwg.mxu0
    %v3810 = vld [vmem:[%s293] sm:$0xf]
    %v3811 = vld [vmem:[%s293 + $0x4] sm:$0xf]
    %v3812 = vld [vmem:[%s293 + $0x8] sm:$0xf]
    %v3813 = vld [vmem:[%s293 + $0xc] sm:$0xf]
    %v3814 = vld [vmem:[%s293 + $0x10] sm:$0xf]
    %v3815 = vld [vmem:[%s293 + $0x14] sm:$0xf]
    %v3816 = vld [vmem:[%s293 + $0x18] sm:$0xf]
    %v3817 = vld [vmem:[%s293 + $0x1c] sm:$0xf]
    %v3818 = vld [vmem:[%s293 + $0x20] sm:$0xf]
    %v3819 = vld [vmem:[%s293 + $0x24] sm:$0xf]
    %v3820 = vld [vmem:[%s293 + $0x28] sm:$0xf]
    %v3821 = vld [vmem:[%s293 + $0x2c] sm:$0xf]
    %v3822 = vld [vmem:[%s293 + $0x30] sm:$0xf]
    %v3823 = vld [vmem:[%s293 + $0x34] sm:$0xf]
    %v3824 = vld [vmem:[%s293 + $0x38] sm:$0xf]
    %v3825 = vld [vmem:[%s293 + $0x3c] sm:$0xf]
    %v3826 = vld [vmem:[%s293 + $0x40] sm:$0xf]
    %v3827 = vld [vmem:[%s293 + $0x44] sm:$0xf]
    %v3828 = vld [vmem:[%s293 + $0x48] sm:$0xf]
    %v3829 = vld [vmem:[%s293 + $0x4c] sm:$0xf]
    %v3830 = vld [vmem:[%s293 + $0x50] sm:$0xf]
    %v3831 = vld [vmem:[%s293 + $0x54] sm:$0xf]
    %v3832 = vld [vmem:[%s293 + $0x58] sm:$0xf]
    %v3833 = vld [vmem:[%s293 + $0x5c] sm:$0xf]
    %v3834 = vld [vmem:[%s293 + $0x60] sm:$0xf]
    %v3835 = vld [vmem:[%s293 + $0x64] sm:$0xf]
    %v3836 = vld [vmem:[%s293 + $0x68] sm:$0xf]
    %v3837 = vld [vmem:[%s293 + $0x6c] sm:$0xf]
    %v3838 = vld [vmem:[%s293 + $0x70] sm:$0xf]
    %v3839 = vld [vmem:[%s293 + $0x74] sm:$0xf]
    %v3840 = vld [vmem:[%s293 + $0x78] sm:$0xf]
    %v3841 = vld [vmem:[%s293 + $0x7c] sm:$0xf]
    %s3842 = scalar_lea.vmem [#allocation12], 128
    %v3843 = vld [vmem:[%s3842] sm:$0xf]
    %v3844 = vld [vmem:[%s3842 + $0x4] sm:$0xf]
    %v3845 = vld [vmem:[%s3842 + $0x8] sm:$0xf]
    %v3846 = vld [vmem:[%s3842 + $0xc] sm:$0xf]
    %v3847 = vld [vmem:[%s3842 + $0x10] sm:$0xf]
    %v3848 = vld [vmem:[%s3842 + $0x14] sm:$0xf]
    %v3849 = vld [vmem:[%s3842 + $0x18] sm:$0xf]
    %v3850 = vld [vmem:[%s3842 + $0x1c] sm:$0xf]
    %v3851 = vld [vmem:[%s3842 + $0x20] sm:$0xf]
    %v3852 = vld [vmem:[%s3842 + $0x24] sm:$0xf]
    %v3853 = vld [vmem:[%s3842 + $0x28] sm:$0xf]
    %v3854 = vld [vmem:[%s3842 + $0x2c] sm:$0xf]
    %v3855 = vld [vmem:[%s3842 + $0x30] sm:$0xf]
    %v3856 = vld [vmem:[%s3842 + $0x34] sm:$0xf]
    %v3857 = vld [vmem:[%s3842 + $0x38] sm:$0xf]
    %v3858 = vld [vmem:[%s3842 + $0x3c] sm:$0xf]
    %v3891 = vunpack.c.l.b16 %v3810
    %v3892 = vunpack.c.l.b16 %v3811
    %v3893 = vunpack.c.l.b16 %v3812
    %v3894 = vunpack.c.l.b16 %v3813
    %v3895 = vunpack.c.l.b16 %v3814
    %v3896 = vunpack.c.l.b16 %v3815
    %v3897 = vunpack.c.l.b16 %v3816
    %v3898 = vunpack.c.l.b16 %v3817
    %v3899 = vunpack.c.l.b16 %v3818
    %v3900 = vunpack.c.l.b16 %v3819
    %v3901 = vunpack.c.l.b16 %v3820
    %v3902 = vunpack.c.l.b16 %v3821
    %v3903 = vunpack.c.l.b16 %v3822
    %v3904 = vunpack.c.l.b16 %v3823
    %v3905 = vunpack.c.l.b16 %v3824
    %v3906 = vunpack.c.l.b16 %v3825
    %v3907 = vunpack.c.l.b16 %v3826
    %v3908 = vunpack.c.l.b16 %v3827
    %v3909 = vunpack.c.l.b16 %v3828
    %v3910 = vunpack.c.l.b16 %v3829
    %v3911 = vunpack.c.l.b16 %v3830
    %v3912 = vunpack.c.l.b16 %v3831
    %v3913 = vunpack.c.l.b16 %v3832
    %v3914 = vunpack.c.l.b16 %v3833
    %v3915 = vunpack.c.l.b16 %v3834
    %v3916 = vunpack.c.l.b16 %v3835
    %v3917 = vunpack.c.l.b16 %v3836
    %v3918 = vunpack.c.l.b16 %v3837
    %v3919 = vunpack.c.l.b16 %v3838
    %v3920 = vunpack.c.l.b16 %v3839
    %v3921 = vunpack.c.l.b16 %v3840
    %v3922 = vunpack.c.l.b16 %v3841
    %v3923 = vpack.c.b16 %v3892, %v3891
    %v3924 = vpack.c.b16 %v3894, %v3893
    %v3925 = vpack.c.b16 %v3896, %v3895
    %v3926 = vpack.c.b16 %v3898, %v3897
    %v3927 = vpack.c.b16 %v3900, %v3899
    %v3928 = vpack.c.b16 %v3902, %v3901
    %v3929 = vpack.c.b16 %v3904, %v3903
    %v3930 = vpack.c.b16 %v3906, %v3905
    %v3931 = vpack.c.b16 %v3908, %v3907
    %v3932 = vpack.c.b16 %v3910, %v3909
    %v3933 = vpack.c.b16 %v3912, %v3911
    %v3934 = vpack.c.b16 %v3914, %v3913
    %v3935 = vpack.c.b16 %v3916, %v3915
    %v3936 = vpack.c.b16 %v3918, %v3917
    %v3937 = vpack.c.b16 %v3920, %v3919
    %v3938 = vpack.c.b16 %v3922, %v3921
    %v3971 = vunpack.c.l.b16 %v3843
    %v3972 = vunpack.c.l.b16 %v3844
    %v3973 = vunpack.c.l.b16 %v3845
    %v3974 = vunpack.c.l.b16 %v3846
    %v3975 = vunpack.c.l.b16 %v3847
    %v3976 = vunpack.c.l.b16 %v3848
    %v3977 = vunpack.c.l.b16 %v3849
    %v3978 = vunpack.c.l.b16 %v3850
    %v3979 = vunpack.c.l.b16 %v3851
    %v3980 = vunpack.c.l.b16 %v3852
    %v3981 = vunpack.c.l.b16 %v3853
    %v3982 = vunpack.c.l.b16 %v3854
    %v3983 = vunpack.c.l.b16 %v3855
    %v3984 = vunpack.c.l.b16 %v3856
    %v3985 = vunpack.c.l.b16 %v3857
    %v3986 = vunpack.c.l.b16 %v3858
    %v3987 = vpack.c.b16 %v3972, %v3971
    %v3988 = vpack.c.b16 %v3974, %v3973
    %v3989 = vpack.c.b16 %v3976, %v3975
    %v3990 = vpack.c.b16 %v3978, %v3977
    %v3991 = vpack.c.b16 %v3980, %v3979
    %v3992 = vpack.c.b16 %v3982, %v3981
    %v3993 = vpack.c.b16 %v3984, %v3983
    %v3994 = vpack.c.b16 %v3986, %v3985
    %4003 = vmatpush.bf16.msra.mxu0 %v3994
    %4004 = vmatpush.bf16.msra.mxu0 %v3993
    %4005 = vmatpush.bf16.msra.mxu0 %v3992
    %4006 = vmatpush.bf16.msra.mxu0 %v3991
    %4007 = vmatpush.bf16.msra.mxu0 %v3990
    %4008 = vmatpush.bf16.msra.mxu0 %v3989
    %4009 = vmatpush.bf16.msra.mxu0 %v3988
    %4010 = vmatpush.bf16.msra.mxu0 %v3987
    %4011 = vmatmul.bf16.gmra.mxu0 %v3923
    %v4012 = vpop.f32.mrf.mxu0
    %v4013 = vadd.f32 0.0, %v4012
    %v4014 = vpop.f32.mrf.mxu0
    %v4015 = vadd.f32 0.0, %v4014
    %4016 = vmatmul.bf16.gmra.mxu0 %v3924
    %v4017 = vpop.f32.mrf.mxu0
    %v4018 = vadd.f32 0.0, %v4017
    %v4019 = vpop.f32.mrf.mxu0
    %v4020 = vadd.f32 0.0, %v4019
    %4021 = vmatmul.bf16.gmra.mxu0 %v3925
    %v4022 = vpop.f32.mrf.mxu0
    %v4023 = vadd.f32 0.0, %v4022
    %v4024 = vpop.f32.mrf.mxu0
    %v4025 = vadd.f32 0.0, %v4024
    %4026 = vmatmul.bf16.gmra.mxu0 %v3926
    %v4027 = vpop.f32.mrf.mxu0
    %v4028 = vadd.f32 0.0, %v4027
    %v4029 = vpop.f32.mrf.mxu0
    %v4030 = vadd.f32 0.0, %v4029
    %4031 = vmatmul.bf16.gmra.mxu0 %v3927
    %v4032 = vpop.f32.mrf.mxu0
    %v4033 = vadd.f32 0.0, %v4032
    %v4034 = vpop.f32.mrf.mxu0
    %v4035 = vadd.f32 0.0, %v4034
    %4036 = vmatmul.bf16.gmra.mxu0 %v3928
    %v4037 = vpop.f32.mrf.mxu0
    %v4038 = vadd.f32 0.0, %v4037
    %v4039 = vpop.f32.mrf.mxu0
    %v4040 = vadd.f32 0.0, %v4039
    %4041 = vmatmul.bf16.gmra.mxu0 %v3929
    %v4042 = vpop.f32.mrf.mxu0
    %v4043 = vadd.f32 0.0, %v4042
    %v4044 = vpop.f32.mrf.mxu0
    %v4045 = vadd.f32 0.0, %v4044
    %4046 = vmatmul.bf16.gmra.mxu0 %v3930
    %v4047 = vpop.f32.mrf.mxu0
    %v4048 = vadd.f32 0.0, %v4047
    %v4049 = vpop.f32.mrf.mxu0
    %v4050 = vadd.f32 0.0, %v4049
    %4051 = vmatmul.bf16.gmra.mxu0 %v3931
    %v4052 = vpop.f32.mrf.mxu0
    %v4053 = vadd.f32 0.0, %v4052
    %v4054 = vpop.f32.mrf.mxu0
    %v4055 = vadd.f32 0.0, %v4054
    %4056 = vmatmul.bf16.gmra.mxu0 %v3932
    %v4057 = vpop.f32.mrf.mxu0
    %v4058 = vadd.f32 0.0, %v4057
    %v4059 = vpop.f32.mrf.mxu0
    %v4060 = vadd.f32 0.0, %v4059
    %4061 = vmatmul.bf16.gmra.mxu0 %v3933
    %v4062 = vpop.f32.mrf.mxu0
    %v4063 = vadd.f32 0.0, %v4062
    %v4064 = vpop.f32.mrf.mxu0
    %v4065 = vadd.f32 0.0, %v4064
    %4066 = vmatmul.bf16.gmra.mxu0 %v3934
    %v4067 = vpop.f32.mrf.mxu0
    %v4068 = vadd.f32 0.0, %v4067
    %v4069 = vpop.f32.mrf.mxu0
    %v4070 = vadd.f32 0.0, %v4069
    %4071 = vmatmul.bf16.gmra.mxu0 %v3935
    %v4072 = vpop.f32.mrf.mxu0
    %v4073 = vadd.f32 0.0, %v4072
    %v4074 = vpop.f32.mrf.mxu0
    %v4075 = vadd.f32 0.0, %v4074
    %4076 = vmatmul.bf16.gmra.mxu0 %v3936
    %v4077 = vpop.f32.mrf.mxu0
    %v4078 = vadd.f32 0.0, %v4077
    %v4079 = vpop.f32.mrf.mxu0
    %v4080 = vadd.f32 0.0, %v4079
    %4081 = vmatmul.bf16.gmra.mxu0 %v3937
    %v4082 = vpop.f32.mrf.mxu0
    %v4083 = vadd.f32 0.0, %v4082
    %v4084 = vpop.f32.mrf.mxu0
    %v4085 = vadd.f32 0.0, %v4084
    %4086 = vmatmul.bf16.gmra.mxu0 %v3938
    %v4087 = vpop.f32.mrf.mxu0
    %v4088 = vadd.f32 0.0, %v4087
    %v4089 = vpop.f32.mrf.mxu0
    %v4090 = vadd.f32 0.0, %v4089
    %4091 = vdwg.mxu0
    %v4092 = vadd.f32 %v3731, %v4013
    %v4093 = vadd.f32 %v3733, %v4015
    %v4094 = vadd.f32 %v3736, %v4018
    %v4095 = vadd.f32 %v3738, %v4020
    %v4096 = vadd.f32 %v3741, %v4023
    %v4097 = vadd.f32 %v3743, %v4025
    %v4098 = vadd.f32 %v3746, %v4028
    %v4099 = vadd.f32 %v3748, %v4030
    %v4100 = vadd.f32 %v3751, %v4033
    %v4101 = vadd.f32 %v3753, %v4035
    %v4102 = vadd.f32 %v3756, %v4038
    %v4103 = vadd.f32 %v3758, %v4040
    %v4104 = vadd.f32 %v3761, %v4043
    %v4105 = vadd.f32 %v3763, %v4045
    %v4106 = vadd.f32 %v3766, %v4048
    %v4107 = vadd.f32 %v3768, %v4050
    %v4108 = vadd.f32 %v3771, %v4053
    %v4109 = vadd.f32 %v3773, %v4055
    %v4110 = vadd.f32 %v3776, %v4058
    %v4111 = vadd.f32 %v3778, %v4060
    %v4112 = vadd.f32 %v3781, %v4063
    %v4113 = vadd.f32 %v3783, %v4065
    %v4114 = vadd.f32 %v3786, %v4068
    %v4115 = vadd.f32 %v3788, %v4070
    %v4116 = vadd.f32 %v3791, %v4073
    %v4117 = vadd.f32 %v3793, %v4075
    %v4118 = vadd.f32 %v3796, %v4078
    %v4119 = vadd.f32 %v3798, %v4080
    %v4120 = vadd.f32 %v3801, %v4083
    %v4121 = vadd.f32 %v3803, %v4085
    %v4122 = vadd.f32 %v3806, %v4088
    %v4123 = vadd.f32 %v3808, %v4090
    %v4124 = vld [vmem:[%s211] sm:$0xf]
    %v4125 = vld [vmem:[%s211 + $0x4] sm:$0xf]
    %v4126 = vld [vmem:[%s211 + $0x8] sm:$0xf]
    %v4127 = vld [vmem:[%s211 + $0xc] sm:$0xf]
    %v4128 = vld [vmem:[%s211 + $0x10] sm:$0xf]
    %v4129 = vld [vmem:[%s211 + $0x14] sm:$0xf]
    %v4130 = vld [vmem:[%s211 + $0x18] sm:$0xf]
    %v4131 = vld [vmem:[%s211 + $0x1c] sm:$0xf]
    %v4132 = vld [vmem:[%s211 + $0x20] sm:$0xf]
    %v4133 = vld [vmem:[%s211 + $0x24] sm:$0xf]
    %v4134 = vld [vmem:[%s211 + $0x28] sm:$0xf]
    %v4135 = vld [vmem:[%s211 + $0x2c] sm:$0xf]
    %v4136 = vld [vmem:[%s211 + $0x30] sm:$0xf]
    %v4137 = vld [vmem:[%s211 + $0x34] sm:$0xf]
    %v4138 = vld [vmem:[%s211 + $0x38] sm:$0xf]
    %v4139 = vld [vmem:[%s211 + $0x3c] sm:$0xf]
    %v4140 = vld [vmem:[%s211 + $0x40] sm:$0xf]
    %v4141 = vld [vmem:[%s211 + $0x44] sm:$0xf]
    %v4142 = vld [vmem:[%s211 + $0x48] sm:$0xf]
    %v4143 = vld [vmem:[%s211 + $0x4c] sm:$0xf]
    %v4144 = vld [vmem:[%s211 + $0x50] sm:$0xf]
    %v4145 = vld [vmem:[%s211 + $0x54] sm:$0xf]
    %v4146 = vld [vmem:[%s211 + $0x58] sm:$0xf]
    %v4147 = vld [vmem:[%s211 + $0x5c] sm:$0xf]
    %v4148 = vld [vmem:[%s211 + $0x60] sm:$0xf]
    %v4149 = vld [vmem:[%s211 + $0x64] sm:$0xf]
    %v4150 = vld [vmem:[%s211 + $0x68] sm:$0xf]
    %v4151 = vld [vmem:[%s211 + $0x6c] sm:$0xf]
    %v4152 = vld [vmem:[%s211 + $0x70] sm:$0xf]
    %v4153 = vld [vmem:[%s211 + $0x74] sm:$0xf]
    %v4154 = vld [vmem:[%s211 + $0x78] sm:$0xf]
    %v4155 = vld [vmem:[%s211 + $0x7c] sm:$0xf]
    %s4156 = scalar_lea.vmem [#allocation12], 192
    %v4157 = vld [vmem:[%s4156] sm:$0xf]
    %v4158 = vld [vmem:[%s4156 + $0x4] sm:$0xf]
    %v4159 = vld [vmem:[%s4156 + $0x8] sm:$0xf]
    %v4160 = vld [vmem:[%s4156 + $0xc] sm:$0xf]
    %v4161 = vld [vmem:[%s4156 + $0x10] sm:$0xf]
    %v4162 = vld [vmem:[%s4156 + $0x14] sm:$0xf]
    %v4163 = vld [vmem:[%s4156 + $0x18] sm:$0xf]
    %v4164 = vld [vmem:[%s4156 + $0x1c] sm:$0xf]
    %v4165 = vld [vmem:[%s4156 + $0x20] sm:$0xf]
    %v4166 = vld [vmem:[%s4156 + $0x24] sm:$0xf]
    %v4167 = vld [vmem:[%s4156 + $0x28] sm:$0xf]
    %v4168 = vld [vmem:[%s4156 + $0x2c] sm:$0xf]
    %v4169 = vld [vmem:[%s4156 + $0x30] sm:$0xf]
    %v4170 = vld [vmem:[%s4156 + $0x34] sm:$0xf]
    %v4171 = vld [vmem:[%s4156 + $0x38] sm:$0xf]
    %v4172 = vld [vmem:[%s4156 + $0x3c] sm:$0xf]
    %v4205 = vunpack.c.l.b16 %v4124
    %v4206 = vunpack.c.l.b16 %v4125
    %v4207 = vunpack.c.l.b16 %v4126
    %v4208 = vunpack.c.l.b16 %v4127
    %v4209 = vunpack.c.l.b16 %v4128
    %v4210 = vunpack.c.l.b16 %v4129
    %v4211 = vunpack.c.l.b16 %v4130
    %v4212 = vunpack.c.l.b16 %v4131
    %v4213 = vunpack.c.l.b16 %v4132
    %v4214 = vunpack.c.l.b16 %v4133
    %v4215 = vunpack.c.l.b16 %v4134
    %v4216 = vunpack.c.l.b16 %v4135
    %v4217 = vunpack.c.l.b16 %v4136
    %v4218 = vunpack.c.l.b16 %v4137
    %v4219 = vunpack.c.l.b16 %v4138
    %v4220 = vunpack.c.l.b16 %v4139
    %v4221 = vunpack.c.l.b16 %v4140
    %v4222 = vunpack.c.l.b16 %v4141
    %v4223 = vunpack.c.l.b16 %v4142
    %v4224 = vunpack.c.l.b16 %v4143
    %v4225 = vunpack.c.l.b16 %v4144
    %v4226 = vunpack.c.l.b16 %v4145
    %v4227 = vunpack.c.l.b16 %v4146
    %v4228 = vunpack.c.l.b16 %v4147
    %v4229 = vunpack.c.l.b16 %v4148
    %v4230 = vunpack.c.l.b16 %v4149
    %v4231 = vunpack.c.l.b16 %v4150
    %v4232 = vunpack.c.l.b16 %v4151
    %v4233 = vunpack.c.l.b16 %v4152
    %v4234 = vunpack.c.l.b16 %v4153
    %v4235 = vunpack.c.l.b16 %v4154
    %v4236 = vunpack.c.l.b16 %v4155
    %v4237 = vpack.c.b16 %v4206, %v4205
    %v4238 = vpack.c.b16 %v4208, %v4207
    %v4239 = vpack.c.b16 %v4210, %v4209
    %v4240 = vpack.c.b16 %v4212, %v4211
    %v4241 = vpack.c.b16 %v4214, %v4213
    %v4242 = vpack.c.b16 %v4216, %v4215
    %v4243 = vpack.c.b16 %v4218, %v4217
    %v4244 = vpack.c.b16 %v4220, %v4219
    %v4245 = vpack.c.b16 %v4222, %v4221
    %v4246 = vpack.c.b16 %v4224, %v4223
    %v4247 = vpack.c.b16 %v4226, %v4225
    %v4248 = vpack.c.b16 %v4228, %v4227
    %v4249 = vpack.c.b16 %v4230, %v4229
    %v4250 = vpack.c.b16 %v4232, %v4231
    %v4251 = vpack.c.b16 %v4234, %v4233
    %v4252 = vpack.c.b16 %v4236, %v4235
    %v4285 = vunpack.c.l.b16 %v4157
    %v4286 = vunpack.c.l.b16 %v4158
    %v4287 = vunpack.c.l.b16 %v4159
    %v4288 = vunpack.c.l.b16 %v4160
    %v4289 = vunpack.c.l.b16 %v4161
    %v4290 = vunpack.c.l.b16 %v4162
    %v4291 = vunpack.c.l.b16 %v4163
    %v4292 = vunpack.c.l.b16 %v4164
    %v4293 = vunpack.c.l.b16 %v4165
    %v4294 = vunpack.c.l.b16 %v4166
    %v4295 = vunpack.c.l.b16 %v4167
    %v4296 = vunpack.c.l.b16 %v4168
    %v4297 = vunpack.c.l.b16 %v4169
    %v4298 = vunpack.c.l.b16 %v4170
    %v4299 = vunpack.c.l.b16 %v4171
    %v4300 = vunpack.c.l.b16 %v4172
    %v4301 = vpack.c.b16 %v4286, %v4285
    %v4302 = vpack.c.b16 %v4288, %v4287
    %v4303 = vpack.c.b16 %v4290, %v4289
    %v4304 = vpack.c.b16 %v4292, %v4291
    %v4305 = vpack.c.b16 %v4294, %v4293
    %v4306 = vpack.c.b16 %v4296, %v4295
    %v4307 = vpack.c.b16 %v4298, %v4297
    %v4308 = vpack.c.b16 %v4300, %v4299
    %4317 = vmatpush.bf16.msra.mxu0 %v4308
    %4318 = vmatpush.bf16.msra.mxu0 %v4307
    %4319 = vmatpush.bf16.msra.mxu0 %v4306
    %4320 = vmatpush.bf16.msra.mxu0 %v4305
    %4321 = vmatpush.bf16.msra.mxu0 %v4304
    %4322 = vmatpush.bf16.msra.mxu0 %v4303
    %4323 = vmatpush.bf16.msra.mxu0 %v4302
    %4324 = vmatpush.bf16.msra.mxu0 %v4301
    %4325 = vmatmul.bf16.gmra.mxu0 %v4237
    %v4326 = vpop.f32.mrf.mxu0
    %v4327 = vadd.f32 0.0, %v4326
    %v4328 = vpop.f32.mrf.mxu0
    %v4329 = vadd.f32 0.0, %v4328
    %4330 = vmatmul.bf16.gmra.mxu0 %v4238
    %v4331 = vpop.f32.mrf.mxu0
    %v4332 = vadd.f32 0.0, %v4331
    %v4333 = vpop.f32.mrf.mxu0
    %v4334 = vadd.f32 0.0, %v4333
    %4335 = vmatmul.bf16.gmra.mxu0 %v4239
    %v4336 = vpop.f32.mrf.mxu0
    %v4337 = vadd.f32 0.0, %v4336
    %v4338 = vpop.f32.mrf.mxu0
    %v4339 = vadd.f32 0.0, %v4338
    %4340 = vmatmul.bf16.gmra.mxu0 %v4240
    %v4341 = vpop.f32.mrf.mxu0
    %v4342 = vadd.f32 0.0, %v4341
    %v4343 = vpop.f32.mrf.mxu0
    %v4344 = vadd.f32 0.0, %v4343
    %4345 = vmatmul.bf16.gmra.mxu0 %v4241
    %v4346 = vpop.f32.mrf.mxu0
    %v4347 = vadd.f32 0.0, %v4346
    %v4348 = vpop.f32.mrf.mxu0
    %v4349 = vadd.f32 0.0, %v4348
    %4350 = vmatmul.bf16.gmra.mxu0 %v4242
    %v4351 = vpop.f32.mrf.mxu0
    %v4352 = vadd.f32 0.0, %v4351
    %v4353 = vpop.f32.mrf.mxu0
    %v4354 = vadd.f32 0.0, %v4353
    %4355 = vmatmul.bf16.gmra.mxu0 %v4243
    %v4356 = vpop.f32.mrf.mxu0
    %v4357 = vadd.f32 0.0, %v4356
    %v4358 = vpop.f32.mrf.mxu0
    %v4359 = vadd.f32 0.0, %v4358
    %4360 = vmatmul.bf16.gmra.mxu0 %v4244
    %v4361 = vpop.f32.mrf.mxu0
    %v4362 = vadd.f32 0.0, %v4361
    %v4363 = vpop.f32.mrf.mxu0
    %v4364 = vadd.f32 0.0, %v4363
    %4365 = vmatmul.bf16.gmra.mxu0 %v4245
    %v4366 = vpop.f32.mrf.mxu0
    %v4367 = vadd.f32 0.0, %v4366
    %v4368 = vpop.f32.mrf.mxu0
    %v4369 = vadd.f32 0.0, %v4368
    %4370 = vmatmul.bf16.gmra.mxu0 %v4246
    %v4371 = vpop.f32.mrf.mxu0
    %v4372 = vadd.f32 0.0, %v4371
    %v4373 = vpop.f32.mrf.mxu0
    %v4374 = vadd.f32 0.0, %v4373
    %4375 = vmatmul.bf16.gmra.mxu0 %v4247
    %v4376 = vpop.f32.mrf.mxu0
    %v4377 = vadd.f32 0.0, %v4376
    %v4378 = vpop.f32.mrf.mxu0
    %v4379 = vadd.f32 0.0, %v4378
    %4380 = vmatmul.bf16.gmra.mxu0 %v4248
    %v4381 = vpop.f32.mrf.mxu0
    %v4382 = vadd.f32 0.0, %v4381
    %v4383 = vpop.f32.mrf.mxu0
    %v4384 = vadd.f32 0.0, %v4383
    %4385 = vmatmul.bf16.gmra.mxu0 %v4249
    %v4386 = vpop.f32.mrf.mxu0
    %v4387 = vadd.f32 0.0, %v4386
    %v4388 = vpop.f32.mrf.mxu0
    %v4389 = vadd.f32 0.0, %v4388
    %4390 = vmatmul.bf16.gmra.mxu0 %v4250
    %v4391 = vpop.f32.mrf.mxu0
    %v4392 = vadd.f32 0.0, %v4391
    %v4393 = vpop.f32.mrf.mxu0
    %v4394 = vadd.f32 0.0, %v4393
    %4395 = vmatmul.bf16.gmra.mxu0 %v4251
    %v4396 = vpop.f32.mrf.mxu0
    %v4397 = vadd.f32 0.0, %v4396
    %v4398 = vpop.f32.mrf.mxu0
    %v4399 = vadd.f32 0.0, %v4398
    %4400 = vmatmul.bf16.gmra.mxu0 %v4252
    %v4401 = vpop.f32.mrf.mxu0
    %v4402 = vadd.f32 0.0, %v4401
    %v4403 = vpop.f32.mrf.mxu0
    %v4404 = vadd.f32 0.0, %v4403
    %4405 = vdwg.mxu0
    %v4406 = vadd.f32 %v4092, %v4327
    %v4407 = vadd.f32 %v4093, %v4329
    %v4408 = vadd.f32 %v4094, %v4332
    %v4409 = vadd.f32 %v4095, %v4334
    %v4410 = vadd.f32 %v4096, %v4337
    %v4411 = vadd.f32 %v4097, %v4339
    %v4412 = vadd.f32 %v4098, %v4342
    %v4413 = vadd.f32 %v4099, %v4344
    %v4414 = vadd.f32 %v4100, %v4347
    %v4415 = vadd.f32 %v4101, %v4349
    %v4416 = vadd.f32 %v4102, %v4352
    %v4417 = vadd.f32 %v4103, %v4354
    %v4418 = vadd.f32 %v4104, %v4357
    %v4419 = vadd.f32 %v4105, %v4359
    %v4420 = vadd.f32 %v4106, %v4362
    %v4421 = vadd.f32 %v4107, %v4364
    %v4422 = vadd.f32 %v4108, %v4367
    %v4423 = vadd.f32 %v4109, %v4369
    %v4424 = vadd.f32 %v4110, %v4372
    %v4425 = vadd.f32 %v4111, %v4374
    %v4426 = vadd.f32 %v4112, %v4377
    %v4427 = vadd.f32 %v4113, %v4379
    %v4428 = vadd.f32 %v4114, %v4382
    %v4429 = vadd.f32 %v4115, %v4384
    %v4430 = vadd.f32 %v4116, %v4387
    %v4431 = vadd.f32 %v4117, %v4389
    %v4432 = vadd.f32 %v4118, %v4392
    %v4433 = vadd.f32 %v4119, %v4394
    %v4434 = vadd.f32 %v4120, %v4397
    %v4435 = vadd.f32 %v4121, %v4399
    %v4436 = vadd.f32 %v4122, %v4402
    %v4437 = vadd.f32 %v4123, %v4404
    %v4438 = vld [vmem:[%s8] sm:$0x1]
    %v4440 = vperm.slane %v4438, 0
    %v4442 = vadd.f32 %v4406, %v4440
    %v4443 = vadd.f32 %v4407, %v4440
    %v4444 = vadd.f32 %v4408, %v4440
    %v4445 = vadd.f32 %v4409, %v4440
    %v4446 = vadd.f32 %v4410, %v4440
    %v4447 = vadd.f32 %v4411, %v4440
    %v4448 = vadd.f32 %v4412, %v4440
    %v4449 = vadd.f32 %v4413, %v4440
    %v4450 = vadd.f32 %v4414, %v4440
    %v4451 = vadd.f32 %v4415, %v4440
    %v4452 = vadd.f32 %v4416, %v4440
    %v4453 = vadd.f32 %v4417, %v4440
    %v4454 = vadd.f32 %v4418, %v4440
    %v4455 = vadd.f32 %v4419, %v4440
    %v4456 = vadd.f32 %v4420, %v4440
    %v4457 = vadd.f32 %v4421, %v4440
    %v4458 = vadd.f32 %v4422, %v4440
    %v4459 = vadd.f32 %v4423, %v4440
    %v4460 = vadd.f32 %v4424, %v4440
    %v4461 = vadd.f32 %v4425, %v4440
    %v4462 = vadd.f32 %v4426, %v4440
    %v4463 = vadd.f32 %v4427, %v4440
    %v4464 = vadd.f32 %v4428, %v4440
    %v4465 = vadd.f32 %v4429, %v4440
    %v4466 = vadd.f32 %v4430, %v4440
    %v4467 = vadd.f32 %v4431, %v4440
    %v4468 = vadd.f32 %v4432, %v4440
    %v4469 = vadd.f32 %v4433, %v4440
    %v4470 = vadd.f32 %v4434, %v4440
    %v4471 = vadd.f32 %v4435, %v4440
    %v4472 = vadd.f32 %v4436, %v4440
    %v4473 = vadd.f32 %v4437, %v4440
    %v4474 = vmax.f32 %v4442, 0.0
    %v4475 = vmax.f32 %v4443, 0.0
    %v4476 = vmax.f32 %v4444, 0.0
    %v4477 = vmax.f32 %v4445, 0.0
    %v4478 = vmax.f32 %v4446, 0.0
    %v4479 = vmax.f32 %v4447, 0.0
    %v4480 = vmax.f32 %v4448, 0.0
    %v4481 = vmax.f32 %v4449, 0.0
    %v4482 = vmax.f32 %v4450, 0.0
    %v4483 = vmax.f32 %v4451, 0.0
    %v4484 = vmax.f32 %v4452, 0.0
    %v4485 = vmax.f32 %v4453, 0.0
    %v4486 = vmax.f32 %v4454, 0.0
    %v4487 = vmax.f32 %v4455, 0.0
    %v4488 = vmax.f32 %v4456, 0.0
    %v4489 = vmax.f32 %v4457, 0.0
    %v4490 = vmax.f32 %v4458, 0.0
    %v4491 = vmax.f32 %v4459, 0.0
    %v4492 = vmax.f32 %v4460, 0.0
    %v4493 = vmax.f32 %v4461, 0.0
    %v4494 = vmax.f32 %v4462, 0.0
    %v4495 = vmax.f32 %v4463, 0.0
    %v4496 = vmax.f32 %v4464, 0.0
    %v4497 = vmax.f32 %v4465, 0.0
    %v4498 = vmax.f32 %v4466, 0.0
    %v4499 = vmax.f32 %v4467, 0.0
    %v4500 = vmax.f32 %v4468, 0.0
    %v4501 = vmax.f32 %v4469, 0.0
    %v4502 = vmax.f32 %v4470, 0.0
    %v4503 = vmax.f32 %v4471, 0.0
    %v4504 = vmax.f32 %v4472, 0.0
    %v4505 = vmax.f32 %v4473, 0.0
    %v4506 = vpack.c.bf16 %v4474, %v4474
    %v4507 = vpack.c.bf16 %v4475, %v4475
    %v4508 = vpack.c.bf16 %v4476, %v4476
    %v4509 = vpack.c.bf16 %v4477, %v4477
    %v4510 = vpack.c.bf16 %v4478, %v4478
    %v4511 = vpack.c.bf16 %v4479, %v4479
    %v4512 = vpack.c.bf16 %v4480, %v4480
    %v4513 = vpack.c.bf16 %v4481, %v4481
    %v4514 = vpack.c.bf16 %v4482, %v4482
    %v4515 = vpack.c.bf16 %v4483, %v4483
    %v4516 = vpack.c.bf16 %v4484, %v4484
    %v4517 = vpack.c.bf16 %v4485, %v4485
    %v4518 = vpack.c.bf16 %v4486, %v4486
    %v4519 = vpack.c.bf16 %v4487, %v4487
    %v4520 = vpack.c.bf16 %v4488, %v4488
    %v4521 = vpack.c.bf16 %v4489, %v4489
    %v4522 = vpack.c.bf16 %v4490, %v4490
    %v4523 = vpack.c.bf16 %v4491, %v4491
    %v4524 = vpack.c.bf16 %v4492, %v4492
    %v4525 = vpack.c.bf16 %v4493, %v4493
    %v4526 = vpack.c.bf16 %v4494, %v4494
    %v4527 = vpack.c.bf16 %v4495, %v4495
    %v4528 = vpack.c.bf16 %v4496, %v4496
    %v4529 = vpack.c.bf16 %v4497, %v4497
    %v4530 = vpack.c.bf16 %v4498, %v4498
    %v4531 = vpack.c.bf16 %v4499, %v4499
    %v4532 = vpack.c.bf16 %v4500, %v4500
    %v4533 = vpack.c.bf16 %v4501, %v4501
    %v4534 = vpack.c.bf16 %v4502, %v4502
    %v4535 = vpack.c.bf16 %v4503, %v4503
    %v4536 = vpack.c.bf16 %v4504, %v4504
    %v4537 = vpack.c.bf16 %v4505, %v4505
    %4538 = vst [vmem:[%s1538] sm:$0xf] %v4506
    %4539 = vst [vmem:[%s1538 + $0x4] sm:$0xf] %v4507
    %4540 = vst [vmem:[%s1538 + $0x8] sm:$0xf] %v4508
    %4541 = vst [vmem:[%s1538 + $0xc] sm:$0xf] %v4509
    %4542 = vst [vmem:[%s1538 + $0x10] sm:$0xf] %v4510
    %4543 = vst [vmem:[%s1538 + $0x14] sm:$0xf] %v4511
    %4544 = vst [vmem:[%s1538 + $0x18] sm:$0xf] %v4512
    %4545 = vst [vmem:[%s1538 + $0x1c] sm:$0xf] %v4513
    %4546 = vst [vmem:[%s1538 + $0x20] sm:$0xf] %v4514
    %4547 = vst [vmem:[%s1538 + $0x24] sm:$0xf] %v4515
    %4548 = vst [vmem:[%s1538 + $0x28] sm:$0xf] %v4516
    %4549 = vst [vmem:[%s1538 + $0x2c] sm:$0xf] %v4517
    %4550 = vst [vmem:[%s1538 + $0x30] sm:$0xf] %v4518
    %4551 = vst [vmem:[%s1538 + $0x34] sm:$0xf] %v4519
    %4552 = vst [vmem:[%s1538 + $0x38] sm:$0xf] %v4520
    %4553 = vst [vmem:[%s1538 + $0x3c] sm:$0xf] %v4521
    %4554 = vst [vmem:[%s1538 + $0x40] sm:$0xf] %v4522
    %4555 = vst [vmem:[%s1538 + $0x44] sm:$0xf] %v4523
    %4556 = vst [vmem:[%s1538 + $0x48] sm:$0xf] %v4524
    %4557 = vst [vmem:[%s1538 + $0x4c] sm:$0xf] %v4525
    %4558 = vst [vmem:[%s1538 + $0x50] sm:$0xf] %v4526
    %4559 = vst [vmem:[%s1538 + $0x54] sm:$0xf] %v4527
    %4560 = vst [vmem:[%s1538 + $0x58] sm:$0xf] %v4528
    %4561 = vst [vmem:[%s1538 + $0x5c] sm:$0xf] %v4529
    %4562 = vst [vmem:[%s1538 + $0x60] sm:$0xf] %v4530
    %4563 = vst [vmem:[%s1538 + $0x64] sm:$0xf] %v4531
    %4564 = vst [vmem:[%s1538 + $0x68] sm:$0xf] %v4532
    %4565 = vst [vmem:[%s1538 + $0x6c] sm:$0xf] %v4533
    %4566 = vst [vmem:[%s1538 + $0x70] sm:$0xf] %v4534
    %4567 = vst [vmem:[%s1538 + $0x74] sm:$0xf] %v4535
    %4568 = vst [vmem:[%s1538 + $0x78] sm:$0xf] %v4536
    %4569 = vst [vmem:[%s1538 + $0x7c] sm:$0xf] %v4537
    %v4570 = vld [vmem:[#allocation3] sm:$0xf]
    %v4571 = vld [vmem:[#allocation3 + $0x4] sm:$0xf]
    %v4572 = vld [vmem:[#allocation3 + $0x8] sm:$0xf]
    %v4573 = vld [vmem:[#allocation3 + $0xc] sm:$0xf]
    %v4574 = vld [vmem:[#allocation3 + $0x10] sm:$0xf]
    %v4575 = vld [vmem:[#allocation3 + $0x14] sm:$0xf]
    %v4576 = vld [vmem:[#allocation3 + $0x18] sm:$0xf]
    %v4577 = vld [vmem:[#allocation3 + $0x1c] sm:$0xf]
    %v4578 = vld [vmem:[#allocation3 + $0x20] sm:$0xf]
    %v4579 = vld [vmem:[#allocation3 + $0x24] sm:$0xf]
    %v4580 = vld [vmem:[#allocation3 + $0x28] sm:$0xf]
    %v4581 = vld [vmem:[#allocation3 + $0x2c] sm:$0xf]
    %v4582 = vld [vmem:[#allocation3 + $0x30] sm:$0xf]
    %v4583 = vld [vmem:[#allocation3 + $0x34] sm:$0xf]
    %v4584 = vld [vmem:[#allocation3 + $0x38] sm:$0xf]
    %v4585 = vld [vmem:[#allocation3 + $0x3c] sm:$0xf]
    %v4586 = vld [vmem:[#allocation3 + $0x40] sm:$0xf]
    %v4587 = vld [vmem:[#allocation3 + $0x44] sm:$0xf]
    %v4588 = vld [vmem:[#allocation3 + $0x48] sm:$0xf]
    %v4589 = vld [vmem:[#allocation3 + $0x4c] sm:$0xf]
    %v4590 = vld [vmem:[#allocation3 + $0x50] sm:$0xf]
    %v4591 = vld [vmem:[#allocation3 + $0x54] sm:$0xf]
    %v4592 = vld [vmem:[#allocation3 + $0x58] sm:$0xf]
    %v4593 = vld [vmem:[#allocation3 + $0x5c] sm:$0xf]
    %v4594 = vld [vmem:[#allocation3 + $0x60] sm:$0xf]
    %v4595 = vld [vmem:[#allocation3 + $0x64] sm:$0xf]
    %v4596 = vld [vmem:[#allocation3 + $0x68] sm:$0xf]
    %v4597 = vld [vmem:[#allocation3 + $0x6c] sm:$0xf]
    %v4598 = vld [vmem:[#allocation3 + $0x70] sm:$0xf]
    %v4599 = vld [vmem:[#allocation3 + $0x74] sm:$0xf]
    %v4600 = vld [vmem:[#allocation3 + $0x78] sm:$0xf]
    %v4601 = vld [vmem:[#allocation3 + $0x7c] sm:$0xf]
    %v4602 = vld [vmem:[#allocation13] sm:$0xf]
    %v4603 = vld [vmem:[#allocation13 + $0x4] sm:$0xf]
    %v4604 = vld [vmem:[#allocation13 + $0x8] sm:$0xf]
    %v4605 = vld [vmem:[#allocation13 + $0xc] sm:$0xf]
    %v4606 = vld [vmem:[#allocation13 + $0x10] sm:$0xf]
    %v4607 = vld [vmem:[#allocation13 + $0x14] sm:$0xf]
    %v4608 = vld [vmem:[#allocation13 + $0x18] sm:$0xf]
    %v4609 = vld [vmem:[#allocation13 + $0x1c] sm:$0xf]
    %v4610 = vld [vmem:[#allocation13 + $0x20] sm:$0xf]
    %v4611 = vld [vmem:[#allocation13 + $0x24] sm:$0xf]
    %v4612 = vld [vmem:[#allocation13 + $0x28] sm:$0xf]
    %v4613 = vld [vmem:[#allocation13 + $0x2c] sm:$0xf]
    %v4614 = vld [vmem:[#allocation13 + $0x30] sm:$0xf]
    %v4615 = vld [vmem:[#allocation13 + $0x34] sm:$0xf]
    %v4616 = vld [vmem:[#allocation13 + $0x38] sm:$0xf]
    %v4617 = vld [vmem:[#allocation13 + $0x3c] sm:$0xf]
    %s4618 = scalar_lea.vmem [#allocation3], 16
    %v4619 = vld [vmem:[%s4618] sm:$0xf]
    %v4620 = vld [vmem:[%s4618 + $0x4] sm:$0xf]
    %v4621 = vld [vmem:[%s4618 + $0x8] sm:$0xf]
    %v4622 = vld [vmem:[%s4618 + $0xc] sm:$0xf]
    %v4623 = vld [vmem:[%s4618 + $0x10] sm:$0xf]
    %v4624 = vld [vmem:[%s4618 + $0x14] sm:$0xf]
    %v4625 = vld [vmem:[%s4618 + $0x18] sm:$0xf]
    %v4626 = vld [vmem:[%s4618 + $0x1c] sm:$0xf]
    %v4627 = vld [vmem:[%s4618 + $0x20] sm:$0xf]
    %v4628 = vld [vmem:[%s4618 + $0x24] sm:$0xf]
    %v4629 = vld [vmem:[%s4618 + $0x28] sm:$0xf]
    %v4630 = vld [vmem:[%s4618 + $0x2c] sm:$0xf]
    %v4631 = vld [vmem:[%s4618 + $0x30] sm:$0xf]
    %v4632 = vld [vmem:[%s4618 + $0x34] sm:$0xf]
    %v4633 = vld [vmem:[%s4618 + $0x38] sm:$0xf]
    %v4634 = vld [vmem:[%s4618 + $0x3c] sm:$0xf]
    %v4635 = vld [vmem:[%s4618 + $0x40] sm:$0xf]
    %v4636 = vld [vmem:[%s4618 + $0x44] sm:$0xf]
    %v4637 = vld [vmem:[%s4618 + $0x48] sm:$0xf]
    %v4638 = vld [vmem:[%s4618 + $0x4c] sm:$0xf]
    %v4639 = vld [vmem:[%s4618 + $0x50] sm:$0xf]
    %v4640 = vld [vmem:[%s4618 + $0x54] sm:$0xf]
    %v4641 = vld [vmem:[%s4618 + $0x58] sm:$0xf]
    %v4642 = vld [vmem:[%s4618 + $0x5c] sm:$0xf]
    %v4643 = vld [vmem:[%s4618 + $0x60] sm:$0xf]
    %v4644 = vld [vmem:[%s4618 + $0x64] sm:$0xf]
    %v4645 = vld [vmem:[%s4618 + $0x68] sm:$0xf]
    %v4646 = vld [vmem:[%s4618 + $0x6c] sm:$0xf]
    %v4647 = vld [vmem:[%s4618 + $0x70] sm:$0xf]
    %v4648 = vld [vmem:[%s4618 + $0x74] sm:$0xf]
    %v4649 = vld [vmem:[%s4618 + $0x78] sm:$0xf]
    %v4650 = vld [vmem:[%s4618 + $0x7c] sm:$0xf]
    %s4651 = scalar_lea.vmem [#allocation13], 64
    %v4652 = vld [vmem:[%s4651] sm:$0xf]
    %v4653 = vld [vmem:[%s4651 + $0x4] sm:$0xf]
    %v4654 = vld [vmem:[%s4651 + $0x8] sm:$0xf]
    %v4655 = vld [vmem:[%s4651 + $0xc] sm:$0xf]
    %v4656 = vld [vmem:[%s4651 + $0x10] sm:$0xf]
    %v4657 = vld [vmem:[%s4651 + $0x14] sm:$0xf]
    %v4658 = vld [vmem:[%s4651 + $0x18] sm:$0xf]
    %v4659 = vld [vmem:[%s4651 + $0x1c] sm:$0xf]
    %v4660 = vld [vmem:[%s4651 + $0x20] sm:$0xf]
    %v4661 = vld [vmem:[%s4651 + $0x24] sm:$0xf]
    %v4662 = vld [vmem:[%s4651 + $0x28] sm:$0xf]
    %v4663 = vld [vmem:[%s4651 + $0x2c] sm:$0xf]
    %v4664 = vld [vmem:[%s4651 + $0x30] sm:$0xf]
    %v4665 = vld [vmem:[%s4651 + $0x34] sm:$0xf]
    %v4666 = vld [vmem:[%s4651 + $0x38] sm:$0xf]
    %v4667 = vld [vmem:[%s4651 + $0x3c] sm:$0xf]
    %v4700 = vunpack.c.l.b16 %v4619
    %v4701 = vunpack.c.l.b16 %v4620
    %v4702 = vunpack.c.l.b16 %v4621
    %v4703 = vunpack.c.l.b16 %v4622
    %v4704 = vunpack.c.l.b16 %v4623
    %v4705 = vunpack.c.l.b16 %v4624
    %v4706 = vunpack.c.l.b16 %v4625
    %v4707 = vunpack.c.l.b16 %v4626
    %v4708 = vunpack.c.l.b16 %v4627
    %v4709 = vunpack.c.l.b16 %v4628
    %v4710 = vunpack.c.l.b16 %v4629
    %v4711 = vunpack.c.l.b16 %v4630
    %v4712 = vunpack.c.l.b16 %v4631
    %v4713 = vunpack.c.l.b16 %v4632
    %v4714 = vunpack.c.l.b16 %v4633
    %v4715 = vunpack.c.l.b16 %v4634
    %v4716 = vunpack.c.l.b16 %v4635
    %v4717 = vunpack.c.l.b16 %v4636
    %v4718 = vunpack.c.l.b16 %v4637
    %v4719 = vunpack.c.l.b16 %v4638
    %v4720 = vunpack.c.l.b16 %v4639
    %v4721 = vunpack.c.l.b16 %v4640
    %v4722 = vunpack.c.l.b16 %v4641
    %v4723 = vunpack.c.l.b16 %v4642
    %v4724 = vunpack.c.l.b16 %v4643
    %v4725 = vunpack.c.l.b16 %v4644
    %v4726 = vunpack.c.l.b16 %v4645
    %v4727 = vunpack.c.l.b16 %v4646
    %v4728 = vunpack.c.l.b16 %v4647
    %v4729 = vunpack.c.l.b16 %v4648
    %v4730 = vunpack.c.l.b16 %v4649
    %v4731 = vunpack.c.l.b16 %v4650
    %v4732 = vpack.c.b16 %v4701, %v4700
    %v4733 = vpack.c.b16 %v4703, %v4702
    %v4734 = vpack.c.b16 %v4705, %v4704
    %v4735 = vpack.c.b16 %v4707, %v4706
    %v4736 = vpack.c.b16 %v4709, %v4708
    %v4737 = vpack.c.b16 %v4711, %v4710
    %v4738 = vpack.c.b16 %v4713, %v4712
    %v4739 = vpack.c.b16 %v4715, %v4714
    %v4740 = vpack.c.b16 %v4717, %v4716
    %v4741 = vpack.c.b16 %v4719, %v4718
    %v4742 = vpack.c.b16 %v4721, %v4720
    %v4743 = vpack.c.b16 %v4723, %v4722
    %v4744 = vpack.c.b16 %v4725, %v4724
    %v4745 = vpack.c.b16 %v4727, %v4726
    %v4746 = vpack.c.b16 %v4729, %v4728
    %v4747 = vpack.c.b16 %v4731, %v4730
    %v4780 = vunpack.c.l.b16 %v4652
    %v4781 = vunpack.c.l.b16 %v4653
    %v4782 = vunpack.c.l.b16 %v4654
    %v4783 = vunpack.c.l.b16 %v4655
    %v4784 = vunpack.c.l.b16 %v4656
    %v4785 = vunpack.c.l.b16 %v4657
    %v4786 = vunpack.c.l.b16 %v4658
    %v4787 = vunpack.c.l.b16 %v4659
    %v4788 = vunpack.c.l.b16 %v4660
    %v4789 = vunpack.c.l.b16 %v4661
    %v4790 = vunpack.c.l.b16 %v4662
    %v4791 = vunpack.c.l.b16 %v4663
    %v4792 = vunpack.c.l.b16 %v4664
    %v4793 = vunpack.c.l.b16 %v4665
    %v4794 = vunpack.c.l.b16 %v4666
    %v4795 = vunpack.c.l.b16 %v4667
    %v4796 = vpack.c.b16 %v4781, %v4780
    %v4797 = vpack.c.b16 %v4783, %v4782
    %v4798 = vpack.c.b16 %v4785, %v4784
    %v4799 = vpack.c.b16 %v4787, %v4786
    %v4800 = vpack.c.b16 %v4789, %v4788
    %v4801 = vpack.c.b16 %v4791, %v4790
    %v4802 = vpack.c.b16 %v4793, %v4792
    %v4803 = vpack.c.b16 %v4795, %v4794
    %4812 = vmatpush.bf16.msra.mxu0 %v4803
    %4813 = vmatpush.bf16.msra.mxu0 %v4802
    %4814 = vmatpush.bf16.msra.mxu0 %v4801
    %4815 = vmatpush.bf16.msra.mxu0 %v4800
    %4816 = vmatpush.bf16.msra.mxu0 %v4799
    %4817 = vmatpush.bf16.msra.mxu0 %v4798
    %4818 = vmatpush.bf16.msra.mxu0 %v4797
    %4819 = vmatpush.bf16.msra.mxu0 %v4796
    %4820 = vmatmul.bf16.gmra.mxu0 %v4732
    %v4821 = vpop.f32.mrf.mxu0
    %v4822 = vpop.f32.mrf.mxu0
    %4823 = vmatmul.bf16.gmra.mxu0 %v4733
    %v4824 = vpop.f32.mrf.mxu0
    %v4825 = vpop.f32.mrf.mxu0
    %4826 = vmatmul.bf16.gmra.mxu0 %v4734
    %v4827 = vpop.f32.mrf.mxu0
    %v4828 = vpop.f32.mrf.mxu0
    %4829 = vmatmul.bf16.gmra.mxu0 %v4735
    %v4830 = vpop.f32.mrf.mxu0
    %v4831 = vpop.f32.mrf.mxu0
    %4832 = vmatmul.bf16.gmra.mxu0 %v4736
    %v4833 = vpop.f32.mrf.mxu0
    %v4834 = vpop.f32.mrf.mxu0
    %4835 = vmatmul.bf16.gmra.mxu0 %v4737
    %v4836 = vpop.f32.mrf.mxu0
    %v4837 = vpop.f32.mrf.mxu0
    %4838 = vmatmul.bf16.gmra.mxu0 %v4738
    %v4839 = vpop.f32.mrf.mxu0
    %v4840 = vpop.f32.mrf.mxu0
    %4841 = vmatmul.bf16.gmra.mxu0 %v4739
    %v4842 = vpop.f32.mrf.mxu0
    %v4843 = vpop.f32.mrf.mxu0
    %4844 = vmatmul.bf16.gmra.mxu0 %v4740
    %v4845 = vpop.f32.mrf.mxu0
    %v4846 = vpop.f32.mrf.mxu0
    %4847 = vmatmul.bf16.gmra.mxu0 %v4741
    %v4848 = vpop.f32.mrf.mxu0
    %v4849 = vpop.f32.mrf.mxu0
    %4850 = vmatmul.bf16.gmra.mxu0 %v4742
    %v4851 = vpop.f32.mrf.mxu0
    %v4852 = vpop.f32.mrf.mxu0
    %4853 = vmatmul.bf16.gmra.mxu0 %v4743
    %v4854 = vpop.f32.mrf.mxu0
    %v4855 = vpop.f32.mrf.mxu0
    %4856 = vmatmul.bf16.gmra.mxu0 %v4744
    %v4857 = vpop.f32.mrf.mxu0
    %v4858 = vpop.f32.mrf.mxu0
    %4859 = vmatmul.bf16.gmra.mxu0 %v4745
    %v4860 = vpop.f32.mrf.mxu0
    %v4861 = vpop.f32.mrf.mxu0
    %4862 = vmatmul.bf16.gmra.mxu0 %v4746
    %v4863 = vpop.f32.mrf.mxu0
    %v4864 = vpop.f32.mrf.mxu0
    %4865 = vmatmul.bf16.gmra.mxu0 %v4747
    %v4866 = vpop.f32.mrf.mxu0
    %v4867 = vadd.f32 0.0, %v4866
    %v4868 = vpop.f32.mrf.mxu0
    %v4869 = vadd.f32 0.0, %v4868
    %4870 = vdwg.mxu0
    %v4903 = vunpack.c.l.b16 %v4570
    %v4904 = vunpack.c.l.b16 %v4571
    %v4905 = vunpack.c.l.b16 %v4572
    %v4906 = vunpack.c.l.b16 %v4573
    %v4907 = vunpack.c.l.b16 %v4574
    %v4908 = vunpack.c.l.b16 %v4575
    %v4909 = vunpack.c.l.b16 %v4576
    %v4910 = vunpack.c.l.b16 %v4577
    %v4911 = vunpack.c.l.b16 %v4578
    %v4912 = vunpack.c.l.b16 %v4579
    %v4913 = vunpack.c.l.b16 %v4580
    %v4914 = vunpack.c.l.b16 %v4581
    %v4915 = vunpack.c.l.b16 %v4582
    %v4916 = vunpack.c.l.b16 %v4583
    %v4917 = vunpack.c.l.b16 %v4584
    %v4918 = vunpack.c.l.b16 %v4585
    %v4919 = vunpack.c.l.b16 %v4586
    %v4920 = vunpack.c.l.b16 %v4587
    %v4921 = vunpack.c.l.b16 %v4588
    %v4922 = vunpack.c.l.b16 %v4589
    %v4923 = vunpack.c.l.b16 %v4590
    %v4924 = vunpack.c.l.b16 %v4591
    %v4925 = vunpack.c.l.b16 %v4592
    %v4926 = vunpack.c.l.b16 %v4593
    %v4927 = vunpack.c.l.b16 %v4594
    %v4928 = vunpack.c.l.b16 %v4595
    %v4929 = vunpack.c.l.b16 %v4596
    %v4930 = vunpack.c.l.b16 %v4597
    %v4931 = vunpack.c.l.b16 %v4598
    %v4932 = vunpack.c.l.b16 %v4599
    %v4933 = vunpack.c.l.b16 %v4600
    %v4934 = vunpack.c.l.b16 %v4601
    %v4935 = vpack.c.b16 %v4904, %v4903
    %v4936 = vpack.c.b16 %v4906, %v4905
    %v4937 = vpack.c.b16 %v4908, %v4907
    %v4938 = vpack.c.b16 %v4910, %v4909
    %v4939 = vpack.c.b16 %v4912, %v4911
    %v4940 = vpack.c.b16 %v4914, %v4913
    %v4941 = vpack.c.b16 %v4916, %v4915
    %v4942 = vpack.c.b16 %v4918, %v4917
    %v4943 = vpack.c.b16 %v4920, %v4919
    %v4944 = vpack.c.b16 %v4922, %v4921
    %v4945 = vpack.c.b16 %v4924, %v4923
    %v4946 = vpack.c.b16 %v4926, %v4925
    %v4947 = vpack.c.b16 %v4928, %v4927
    %v4948 = vpack.c.b16 %v4930, %v4929
    %v4949 = vpack.c.b16 %v4932, %v4931
    %v4950 = vpack.c.b16 %v4934, %v4933
    %v4983 = vunpack.c.l.b16 %v4602
    %v4984 = vunpack.c.l.b16 %v4603
    %v4985 = vunpack.c.l.b16 %v4604
    %v4986 = vunpack.c.l.b16 %v4605
    %v4987 = vunpack.c.l.b16 %v4606
    %v4988 = vunpack.c.l.b16 %v4607
    %v4989 = vunpack.c.l.b16 %v4608
    %v4990 = vunpack.c.l.b16 %v4609
    %v4991 = vunpack.c.l.b16 %v4610
    %v4992 = vunpack.c.l.b16 %v4611
    %v4993 = vunpack.c.l.b16 %v4612
    %v4994 = vunpack.c.l.b16 %v4613
    %v4995 = vunpack.c.l.b16 %v4614
    %v4996 = vunpack.c.l.b16 %v4615
    %v4997 = vunpack.c.l.b16 %v4616
    %v4998 = vunpack.c.l.b16 %v4617
    %v4999 = vpack.c.b16 %v4984, %v4983
    %v5000 = vpack.c.b16 %v4986, %v4985
    %v5001 = vpack.c.b16 %v4988, %v4987
    %v5002 = vpack.c.b16 %v4990, %v4989
    %v5003 = vpack.c.b16 %v4992, %v4991
    %v5004 = vpack.c.b16 %v4994, %v4993
    %v5005 = vpack.c.b16 %v4996, %v4995
    %v5006 = vpack.c.b16 %v4998, %v4997
    %5015 = vmatpush.bf16.msra.mxu0 %v5006
    %5016 = vmatpush.bf16.msra.mxu0 %v5005
    %5017 = vmatpush.bf16.msra.mxu0 %v5004
    %5018 = vmatpush.bf16.msra.mxu0 %v5003
    %5019 = vmatpush.bf16.msra.mxu0 %v5002
    %5020 = vmatpush.bf16.msra.mxu0 %v5001
    %5021 = vmatpush.bf16.msra.mxu0 %v5000
    %5022 = vmatpush.bf16.msra.mxu0 %v4999
    %5023 = vmatmul.bf16.gmra.mxu0 %v4935
    %v5024 = vpop.f32.mrf.mxu0
    %v5025 = vpop.f32.mrf.mxu0
    %5026 = vmatmul.bf16.gmra.mxu0 %v4936
    %v5027 = vpop.f32.mrf.mxu0
    %v5028 = vpop.f32.mrf.mxu0
    %5029 = vmatmul.bf16.gmra.mxu0 %v4937
    %v5030 = vpop.f32.mrf.mxu0
    %v5031 = vpop.f32.mrf.mxu0
    %5032 = vmatmul.bf16.gmra.mxu0 %v4938
    %v5033 = vpop.f32.mrf.mxu0
    %v5034 = vpop.f32.mrf.mxu0
    %5035 = vmatmul.bf16.gmra.mxu0 %v4939
    %v5036 = vpop.f32.mrf.mxu0
    %v5037 = vpop.f32.mrf.mxu0
    %5038 = vmatmul.bf16.gmra.mxu0 %v4940
    %v5039 = vpop.f32.mrf.mxu0
    %v5040 = vpop.f32.mrf.mxu0
    %5041 = vmatmul.bf16.gmra.mxu0 %v4941
    %v5042 = vpop.f32.mrf.mxu0
    %v5043 = vpop.f32.mrf.mxu0
    %5044 = vmatmul.bf16.gmra.mxu0 %v4942
    %v5045 = vpop.f32.mrf.mxu0
    %v5046 = vpop.f32.mrf.mxu0
    %5047 = vmatmul.bf16.gmra.mxu0 %v4943
    %v5048 = vpop.f32.mrf.mxu0
    %v5049 = vpop.f32.mrf.mxu0
    %5050 = vmatmul.bf16.gmra.mxu0 %v4944
    %v5051 = vpop.f32.mrf.mxu0
    %v5052 = vpop.f32.mrf.mxu0
    %5053 = vmatmul.bf16.gmra.mxu0 %v4945
    %v5054 = vpop.f32.mrf.mxu0
    %v5055 = vpop.f32.mrf.mxu0
    %5056 = vmatmul.bf16.gmra.mxu0 %v4946
    %v5057 = vpop.f32.mrf.mxu0
    %v5058 = vpop.f32.mrf.mxu0
    %5059 = vmatmul.bf16.gmra.mxu0 %v4947
    %v5060 = vpop.f32.mrf.mxu0
    %v5061 = vpop.f32.mrf.mxu0
    %5062 = vmatmul.bf16.gmra.mxu0 %v4948
    %v5063 = vpop.f32.mrf.mxu0
    %v5064 = vpop.f32.mrf.mxu0
    %5065 = vmatmul.bf16.gmra.mxu0 %v4949
    %v5066 = vpop.f32.mrf.mxu0
    %v5067 = vpop.f32.mrf.mxu0
    %5068 = vmatmul.bf16.gmra.mxu0 %v4950
    %v5069 = vpop.f32.mrf.mxu0
    %v5070 = vadd.f32 %v4867, %v5069
    %v5071 = vpop.f32.mrf.mxu0
    %v5072 = vadd.f32 %v4869, %v5071
    %5073 = vdwg.mxu0
    %v5074 = vld [vmem:[%s1620] sm:$0xf]
    %v5075 = vld [vmem:[%s1620 + $0x4] sm:$0xf]
    %v5076 = vld [vmem:[%s1620 + $0x8] sm:$0xf]
    %v5077 = vld [vmem:[%s1620 + $0xc] sm:$0xf]
    %v5078 = vld [vmem:[%s1620 + $0x10] sm:$0xf]
    %v5079 = vld [vmem:[%s1620 + $0x14] sm:$0xf]
    %v5080 = vld [vmem:[%s1620 + $0x18] sm:$0xf]
    %v5081 = vld [vmem:[%s1620 + $0x1c] sm:$0xf]
    %v5082 = vld [vmem:[%s1620 + $0x20] sm:$0xf]
    %v5083 = vld [vmem:[%s1620 + $0x24] sm:$0xf]
    %v5084 = vld [vmem:[%s1620 + $0x28] sm:$0xf]
    %v5085 = vld [vmem:[%s1620 + $0x2c] sm:$0xf]
    %v5086 = vld [vmem:[%s1620 + $0x30] sm:$0xf]
    %v5087 = vld [vmem:[%s1620 + $0x34] sm:$0xf]
    %v5088 = vld [vmem:[%s1620 + $0x38] sm:$0xf]
    %v5089 = vld [vmem:[%s1620 + $0x3c] sm:$0xf]
    %v5090 = vld [vmem:[%s1620 + $0x40] sm:$0xf]
    %v5091 = vld [vmem:[%s1620 + $0x44] sm:$0xf]
    %v5092 = vld [vmem:[%s1620 + $0x48] sm:$0xf]
    %v5093 = vld [vmem:[%s1620 + $0x4c] sm:$0xf]
    %v5094 = vld [vmem:[%s1620 + $0x50] sm:$0xf]
    %v5095 = vld [vmem:[%s1620 + $0x54] sm:$0xf]
    %v5096 = vld [vmem:[%s1620 + $0x58] sm:$0xf]
    %v5097 = vld [vmem:[%s1620 + $0x5c] sm:$0xf]
    %v5098 = vld [vmem:[%s1620 + $0x60] sm:$0xf]
    %v5099 = vld [vmem:[%s1620 + $0x64] sm:$0xf]
    %v5100 = vld [vmem:[%s1620 + $0x68] sm:$0xf]
    %v5101 = vld [vmem:[%s1620 + $0x6c] sm:$0xf]
    %v5102 = vld [vmem:[%s1620 + $0x70] sm:$0xf]
    %v5103 = vld [vmem:[%s1620 + $0x74] sm:$0xf]
    %v5104 = vld [vmem:[%s1620 + $0x78] sm:$0xf]
    %v5105 = vld [vmem:[%s1620 + $0x7c] sm:$0xf]
    %s5106 = scalar_lea.vmem [#allocation13], 128
    %v5107 = vld [vmem:[%s5106] sm:$0xf]
    %v5108 = vld [vmem:[%s5106 + $0x4] sm:$0xf]
    %v5109 = vld [vmem:[%s5106 + $0x8] sm:$0xf]
    %v5110 = vld [vmem:[%s5106 + $0xc] sm:$0xf]
    %v5111 = vld [vmem:[%s5106 + $0x10] sm:$0xf]
    %v5112 = vld [vmem:[%s5106 + $0x14] sm:$0xf]
    %v5113 = vld [vmem:[%s5106 + $0x18] sm:$0xf]
    %v5114 = vld [vmem:[%s5106 + $0x1c] sm:$0xf]
    %v5115 = vld [vmem:[%s5106 + $0x20] sm:$0xf]
    %v5116 = vld [vmem:[%s5106 + $0x24] sm:$0xf]
    %v5117 = vld [vmem:[%s5106 + $0x28] sm:$0xf]
    %v5118 = vld [vmem:[%s5106 + $0x2c] sm:$0xf]
    %v5119 = vld [vmem:[%s5106 + $0x30] sm:$0xf]
    %v5120 = vld [vmem:[%s5106 + $0x34] sm:$0xf]
    %v5121 = vld [vmem:[%s5106 + $0x38] sm:$0xf]
    %v5122 = vld [vmem:[%s5106 + $0x3c] sm:$0xf]
    %v5155 = vunpack.c.l.b16 %v5074
    %v5156 = vunpack.c.l.b16 %v5075
    %v5157 = vunpack.c.l.b16 %v5076
    %v5158 = vunpack.c.l.b16 %v5077
    %v5159 = vunpack.c.l.b16 %v5078
    %v5160 = vunpack.c.l.b16 %v5079
    %v5161 = vunpack.c.l.b16 %v5080
    %v5162 = vunpack.c.l.b16 %v5081
    %v5163 = vunpack.c.l.b16 %v5082
    %v5164 = vunpack.c.l.b16 %v5083
    %v5165 = vunpack.c.l.b16 %v5084
    %v5166 = vunpack.c.l.b16 %v5085
    %v5167 = vunpack.c.l.b16 %v5086
    %v5168 = vunpack.c.l.b16 %v5087
    %v5169 = vunpack.c.l.b16 %v5088
    %v5170 = vunpack.c.l.b16 %v5089
    %v5171 = vunpack.c.l.b16 %v5090
    %v5172 = vunpack.c.l.b16 %v5091
    %v5173 = vunpack.c.l.b16 %v5092
    %v5174 = vunpack.c.l.b16 %v5093
    %v5175 = vunpack.c.l.b16 %v5094
    %v5176 = vunpack.c.l.b16 %v5095
    %v5177 = vunpack.c.l.b16 %v5096
    %v5178 = vunpack.c.l.b16 %v5097
    %v5179 = vunpack.c.l.b16 %v5098
    %v5180 = vunpack.c.l.b16 %v5099
    %v5181 = vunpack.c.l.b16 %v5100
    %v5182 = vunpack.c.l.b16 %v5101
    %v5183 = vunpack.c.l.b16 %v5102
    %v5184 = vunpack.c.l.b16 %v5103
    %v5185 = vunpack.c.l.b16 %v5104
    %v5186 = vunpack.c.l.b16 %v5105
    %v5187 = vpack.c.b16 %v5156, %v5155
    %v5188 = vpack.c.b16 %v5158, %v5157
    %v5189 = vpack.c.b16 %v5160, %v5159
    %v5190 = vpack.c.b16 %v5162, %v5161
    %v5191 = vpack.c.b16 %v5164, %v5163
    %v5192 = vpack.c.b16 %v5166, %v5165
    %v5193 = vpack.c.b16 %v5168, %v5167
    %v5194 = vpack.c.b16 %v5170, %v5169
    %v5195 = vpack.c.b16 %v5172, %v5171
    %v5196 = vpack.c.b16 %v5174, %v5173
    %v5197 = vpack.c.b16 %v5176, %v5175
    %v5198 = vpack.c.b16 %v5178, %v5177
    %v5199 = vpack.c.b16 %v5180, %v5179
    %v5200 = vpack.c.b16 %v5182, %v5181
    %v5201 = vpack.c.b16 %v5184, %v5183
    %v5202 = vpack.c.b16 %v5186, %v5185
    %v5235 = vunpack.c.l.b16 %v5107
    %v5236 = vunpack.c.l.b16 %v5108
    %v5237 = vunpack.c.l.b16 %v5109
    %v5238 = vunpack.c.l.b16 %v5110
    %v5239 = vunpack.c.l.b16 %v5111
    %v5240 = vunpack.c.l.b16 %v5112
    %v5241 = vunpack.c.l.b16 %v5113
    %v5242 = vunpack.c.l.b16 %v5114
    %v5243 = vunpack.c.l.b16 %v5115
    %v5244 = vunpack.c.l.b16 %v5116
    %v5245 = vunpack.c.l.b16 %v5117
    %v5246 = vunpack.c.l.b16 %v5118
    %v5247 = vunpack.c.l.b16 %v5119
    %v5248 = vunpack.c.l.b16 %v5120
    %v5249 = vunpack.c.l.b16 %v5121
    %v5250 = vunpack.c.l.b16 %v5122
    %v5251 = vpack.c.b16 %v5236, %v5235
    %v5252 = vpack.c.b16 %v5238, %v5237
    %v5253 = vpack.c.b16 %v5240, %v5239
    %v5254 = vpack.c.b16 %v5242, %v5241
    %v5255 = vpack.c.b16 %v5244, %v5243
    %v5256 = vpack.c.b16 %v5246, %v5245
    %v5257 = vpack.c.b16 %v5248, %v5247
    %v5258 = vpack.c.b16 %v5250, %v5249
    %5267 = vmatpush.bf16.msra.mxu0 %v5258
    %5268 = vmatpush.bf16.msra.mxu0 %v5257
    %5269 = vmatpush.bf16.msra.mxu0 %v5256
    %5270 = vmatpush.bf16.msra.mxu0 %v5255
    %5271 = vmatpush.bf16.msra.mxu0 %v5254
    %5272 = vmatpush.bf16.msra.mxu0 %v5253
    %5273 = vmatpush.bf16.msra.mxu0 %v5252
    %5274 = vmatpush.bf16.msra.mxu0 %v5251
    %5275 = vmatmul.bf16.gmra.mxu0 %v5187
    %v5276 = vpop.f32.mrf.mxu0
    %v5277 = vpop.f32.mrf.mxu0
    %5278 = vmatmul.bf16.gmra.mxu0 %v5188
    %v5279 = vpop.f32.mrf.mxu0
    %v5280 = vpop.f32.mrf.mxu0
    %5281 = vmatmul.bf16.gmra.mxu0 %v5189
    %v5282 = vpop.f32.mrf.mxu0
    %v5283 = vpop.f32.mrf.mxu0
    %5284 = vmatmul.bf16.gmra.mxu0 %v5190
    %v5285 = vpop.f32.mrf.mxu0
    %v5286 = vpop.f32.mrf.mxu0
    %5287 = vmatmul.bf16.gmra.mxu0 %v5191
    %v5288 = vpop.f32.mrf.mxu0
    %v5289 = vpop.f32.mrf.mxu0
    %5290 = vmatmul.bf16.gmra.mxu0 %v5192
    %v5291 = vpop.f32.mrf.mxu0
    %v5292 = vpop.f32.mrf.mxu0
    %5293 = vmatmul.bf16.gmra.mxu0 %v5193
    %v5294 = vpop.f32.mrf.mxu0
    %v5295 = vpop.f32.mrf.mxu0
    %5296 = vmatmul.bf16.gmra.mxu0 %v5194
    %v5297 = vpop.f32.mrf.mxu0
    %v5298 = vpop.f32.mrf.mxu0
    %5299 = vmatmul.bf16.gmra.mxu0 %v5195
    %v5300 = vpop.f32.mrf.mxu0
    %v5301 = vpop.f32.mrf.mxu0
    %5302 = vmatmul.bf16.gmra.mxu0 %v5196
    %v5303 = vpop.f32.mrf.mxu0
    %v5304 = vpop.f32.mrf.mxu0
    %5305 = vmatmul.bf16.gmra.mxu0 %v5197
    %v5306 = vpop.f32.mrf.mxu0
    %v5307 = vpop.f32.mrf.mxu0
    %5308 = vmatmul.bf16.gmra.mxu0 %v5198
    %v5309 = vpop.f32.mrf.mxu0
    %v5310 = vpop.f32.mrf.mxu0
    %5311 = vmatmul.bf16.gmra.mxu0 %v5199
    %v5312 = vpop.f32.mrf.mxu0
    %v5313 = vpop.f32.mrf.mxu0
    %5314 = vmatmul.bf16.gmra.mxu0 %v5200
    %v5315 = vpop.f32.mrf.mxu0
    %v5316 = vpop.f32.mrf.mxu0
    %5317 = vmatmul.bf16.gmra.mxu0 %v5201
    %v5318 = vpop.f32.mrf.mxu0
    %v5319 = vpop.f32.mrf.mxu0
    %5320 = vmatmul.bf16.gmra.mxu0 %v5202
    %v5321 = vpop.f32.mrf.mxu0
    %v5322 = vadd.f32 0.0, %v5321
    %v5323 = vpop.f32.mrf.mxu0
    %v5324 = vadd.f32 0.0, %v5323
    %5325 = vdwg.mxu0
    %v5326 = vadd.f32 %v5070, %v5322
    %v5327 = vadd.f32 %v5072, %v5324
    %v5328 = vld [vmem:[%s1538] sm:$0xf]
    %v5329 = vld [vmem:[%s1538 + $0x4] sm:$0xf]
    %v5330 = vld [vmem:[%s1538 + $0x8] sm:$0xf]
    %v5331 = vld [vmem:[%s1538 + $0xc] sm:$0xf]
    %v5332 = vld [vmem:[%s1538 + $0x10] sm:$0xf]
    %v5333 = vld [vmem:[%s1538 + $0x14] sm:$0xf]
    %v5334 = vld [vmem:[%s1538 + $0x18] sm:$0xf]
    %v5335 = vld [vmem:[%s1538 + $0x1c] sm:$0xf]
    %v5336 = vld [vmem:[%s1538 + $0x20] sm:$0xf]
    %v5337 = vld [vmem:[%s1538 + $0x24] sm:$0xf]
    %v5338 = vld [vmem:[%s1538 + $0x28] sm:$0xf]
    %v5339 = vld [vmem:[%s1538 + $0x2c] sm:$0xf]
    %v5340 = vld [vmem:[%s1538 + $0x30] sm:$0xf]
    %v5341 = vld [vmem:[%s1538 + $0x34] sm:$0xf]
    %v5342 = vld [vmem:[%s1538 + $0x38] sm:$0xf]
    %v5343 = vld [vmem:[%s1538 + $0x3c] sm:$0xf]
    %v5344 = vld [vmem:[%s1538 + $0x40] sm:$0xf]
    %v5345 = vld [vmem:[%s1538 + $0x44] sm:$0xf]
    %v5346 = vld [vmem:[%s1538 + $0x48] sm:$0xf]
    %v5347 = vld [vmem:[%s1538 + $0x4c] sm:$0xf]
    %v5348 = vld [vmem:[%s1538 + $0x50] sm:$0xf]
    %v5349 = vld [vmem:[%s1538 + $0x54] sm:$0xf]
    %v5350 = vld [vmem:[%s1538 + $0x58] sm:$0xf]
    %v5351 = vld [vmem:[%s1538 + $0x5c] sm:$0xf]
    %v5352 = vld [vmem:[%s1538 + $0x60] sm:$0xf]
    %v5353 = vld [vmem:[%s1538 + $0x64] sm:$0xf]
    %v5354 = vld [vmem:[%s1538 + $0x68] sm:$0xf]
    %v5355 = vld [vmem:[%s1538 + $0x6c] sm:$0xf]
    %v5356 = vld [vmem:[%s1538 + $0x70] sm:$0xf]
    %v5357 = vld [vmem:[%s1538 + $0x74] sm:$0xf]
    %v5358 = vld [vmem:[%s1538 + $0x78] sm:$0xf]
    %v5359 = vld [vmem:[%s1538 + $0x7c] sm:$0xf]
    %s5360 = scalar_lea.vmem [#allocation13], 192
    %v5361 = vld [vmem:[%s5360] sm:$0xf]
    %v5362 = vld [vmem:[%s5360 + $0x4] sm:$0xf]
    %v5363 = vld [vmem:[%s5360 + $0x8] sm:$0xf]
    %v5364 = vld [vmem:[%s5360 + $0xc] sm:$0xf]
    %v5365 = vld [vmem:[%s5360 + $0x10] sm:$0xf]
    %v5366 = vld [vmem:[%s5360 + $0x14] sm:$0xf]
    %v5367 = vld [vmem:[%s5360 + $0x18] sm:$0xf]
    %v5368 = vld [vmem:[%s5360 + $0x1c] sm:$0xf]
    %v5369 = vld [vmem:[%s5360 + $0x20] sm:$0xf]
    %v5370 = vld [vmem:[%s5360 + $0x24] sm:$0xf]
    %v5371 = vld [vmem:[%s5360 + $0x28] sm:$0xf]
    %v5372 = vld [vmem:[%s5360 + $0x2c] sm:$0xf]
    %v5373 = vld [vmem:[%s5360 + $0x30] sm:$0xf]
    %v5374 = vld [vmem:[%s5360 + $0x34] sm:$0xf]
    %v5375 = vld [vmem:[%s5360 + $0x38] sm:$0xf]
    %v5376 = vld [vmem:[%s5360 + $0x3c] sm:$0xf]
    %v5409 = vunpack.c.l.b16 %v5328
    %v5410 = vunpack.c.l.b16 %v5329
    %v5411 = vunpack.c.l.b16 %v5330
    %v5412 = vunpack.c.l.b16 %v5331
    %v5413 = vunpack.c.l.b16 %v5332
    %v5414 = vunpack.c.l.b16 %v5333
    %v5415 = vunpack.c.l.b16 %v5334
    %v5416 = vunpack.c.l.b16 %v5335
    %v5417 = vunpack.c.l.b16 %v5336
    %v5418 = vunpack.c.l.b16 %v5337
    %v5419 = vunpack.c.l.b16 %v5338
    %v5420 = vunpack.c.l.b16 %v5339
    %v5421 = vunpack.c.l.b16 %v5340
    %v5422 = vunpack.c.l.b16 %v5341
    %v5423 = vunpack.c.l.b16 %v5342
    %v5424 = vunpack.c.l.b16 %v5343
    %v5425 = vunpack.c.l.b16 %v5344
    %v5426 = vunpack.c.l.b16 %v5345
    %v5427 = vunpack.c.l.b16 %v5346
    %v5428 = vunpack.c.l.b16 %v5347
    %v5429 = vunpack.c.l.b16 %v5348
    %v5430 = vunpack.c.l.b16 %v5349
    %v5431 = vunpack.c.l.b16 %v5350
    %v5432 = vunpack.c.l.b16 %v5351
    %v5433 = vunpack.c.l.b16 %v5352
    %v5434 = vunpack.c.l.b16 %v5353
    %v5435 = vunpack.c.l.b16 %v5354
    %v5436 = vunpack.c.l.b16 %v5355
    %v5437 = vunpack.c.l.b16 %v5356
    %v5438 = vunpack.c.l.b16 %v5357
    %v5439 = vunpack.c.l.b16 %v5358
    %v5440 = vunpack.c.l.b16 %v5359
    %v5441 = vpack.c.b16 %v5410, %v5409
    %v5442 = vpack.c.b16 %v5412, %v5411
    %v5443 = vpack.c.b16 %v5414, %v5413
    %v5444 = vpack.c.b16 %v5416, %v5415
    %v5445 = vpack.c.b16 %v5418, %v5417
    %v5446 = vpack.c.b16 %v5420, %v5419
    %v5447 = vpack.c.b16 %v5422, %v5421
    %v5448 = vpack.c.b16 %v5424, %v5423
    %v5449 = vpack.c.b16 %v5426, %v5425
    %v5450 = vpack.c.b16 %v5428, %v5427
    %v5451 = vpack.c.b16 %v5430, %v5429
    %v5452 = vpack.c.b16 %v5432, %v5431
    %v5453 = vpack.c.b16 %v5434, %v5433
    %v5454 = vpack.c.b16 %v5436, %v5435
    %v5455 = vpack.c.b16 %v5438, %v5437
    %v5456 = vpack.c.b16 %v5440, %v5439
    %v5489 = vunpack.c.l.b16 %v5361
    %v5490 = vunpack.c.l.b16 %v5362
    %v5491 = vunpack.c.l.b16 %v5363
    %v5492 = vunpack.c.l.b16 %v5364
    %v5493 = vunpack.c.l.b16 %v5365
    %v5494 = vunpack.c.l.b16 %v5366
    %v5495 = vunpack.c.l.b16 %v5367
    %v5496 = vunpack.c.l.b16 %v5368
    %v5497 = vunpack.c.l.b16 %v5369
    %v5498 = vunpack.c.l.b16 %v5370
    %v5499 = vunpack.c.l.b16 %v5371
    %v5500 = vunpack.c.l.b16 %v5372
    %v5501 = vunpack.c.l.b16 %v5373
    %v5502 = vunpack.c.l.b16 %v5374
    %v5503 = vunpack.c.l.b16 %v5375
    %v5504 = vunpack.c.l.b16 %v5376
    %v5505 = vpack.c.b16 %v5490, %v5489
    %v5506 = vpack.c.b16 %v5492, %v5491
    %v5507 = vpack.c.b16 %v5494, %v5493
    %v5508 = vpack.c.b16 %v5496, %v5495
    %v5509 = vpack.c.b16 %v5498, %v5497
    %v5510 = vpack.c.b16 %v5500, %v5499
    %v5511 = vpack.c.b16 %v5502, %v5501
    %v5512 = vpack.c.b16 %v5504, %v5503
    %5521 = vmatpush.bf16.msra.mxu0 %v5512
    %5522 = vmatpush.bf16.msra.mxu0 %v5511
    %5523 = vmatpush.bf16.msra.mxu0 %v5510
    %5524 = vmatpush.bf16.msra.mxu0 %v5509
    %5525 = vmatpush.bf16.msra.mxu0 %v5508
    %5526 = vmatpush.bf16.msra.mxu0 %v5507
    %5527 = vmatpush.bf16.msra.mxu0 %v5506
    %5528 = vmatpush.bf16.msra.mxu0 %v5505
    %5529 = vmatmul.bf16.gmra.mxu0 %v5441
    %v5530 = vpop.f32.mrf.mxu0
    %v5531 = vpop.f32.mrf.mxu0
    %5532 = vmatmul.bf16.gmra.mxu0 %v5442
    %v5533 = vpop.f32.mrf.mxu0
    %v5534 = vpop.f32.mrf.mxu0
    %5535 = vmatmul.bf16.gmra.mxu0 %v5443
    %v5536 = vpop.f32.mrf.mxu0
    %v5537 = vpop.f32.mrf.mxu0
    %5538 = vmatmul.bf16.gmra.mxu0 %v5444
    %v5539 = vpop.f32.mrf.mxu0
    %v5540 = vpop.f32.mrf.mxu0
    %5541 = vmatmul.bf16.gmra.mxu0 %v5445
    %v5542 = vpop.f32.mrf.mxu0
    %v5543 = vpop.f32.mrf.mxu0
    %5544 = vmatmul.bf16.gmra.mxu0 %v5446
    %v5545 = vpop.f32.mrf.mxu0
    %v5546 = vpop.f32.mrf.mxu0
    %5547 = vmatmul.bf16.gmra.mxu0 %v5447
    %v5548 = vpop.f32.mrf.mxu0
    %v5549 = vpop.f32.mrf.mxu0
    %5550 = vmatmul.bf16.gmra.mxu0 %v5448
    %v5551 = vpop.f32.mrf.mxu0
    %v5552 = vpop.f32.mrf.mxu0
    %5553 = vmatmul.bf16.gmra.mxu0 %v5449
    %v5554 = vpop.f32.mrf.mxu0
    %v5555 = vpop.f32.mrf.mxu0
    %5556 = vmatmul.bf16.gmra.mxu0 %v5450
    %v5557 = vpop.f32.mrf.mxu0
    %v5558 = vpop.f32.mrf.mxu0
    %5559 = vmatmul.bf16.gmra.mxu0 %v5451
    %v5560 = vpop.f32.mrf.mxu0
    %v5561 = vpop.f32.mrf.mxu0
    %5562 = vmatmul.bf16.gmra.mxu0 %v5452
    %v5563 = vpop.f32.mrf.mxu0
    %v5564 = vpop.f32.mrf.mxu0
    %5565 = vmatmul.bf16.gmra.mxu0 %v5453
    %v5566 = vpop.f32.mrf.mxu0
    %v5567 = vpop.f32.mrf.mxu0
    %5568 = vmatmul.bf16.gmra.mxu0 %v5454
    %v5569 = vpop.f32.mrf.mxu0
    %v5570 = vpop.f32.mrf.mxu0
    %5571 = vmatmul.bf16.gmra.mxu0 %v5455
    %v5572 = vpop.f32.mrf.mxu0
    %v5573 = vpop.f32.mrf.mxu0
    %5574 = vmatmul.bf16.gmra.mxu0 %v5456
    %v5575 = vpop.f32.mrf.mxu0
    %v5576 = vadd.f32 0.0, %v5575
    %v5577 = vpop.f32.mrf.mxu0
    %v5578 = vadd.f32 0.0, %v5577
    %5579 = vdwg.mxu0
    %v5580 = vadd.f32 %v5326, %v5576
    %v5581 = vadd.f32 %v5327, %v5578
    %v5582 = vld [vmem:[%s10] sm:$0x1]
    %v5584 = vperm.slane %v5582, 0
    %v5586 = vadd.f32 %v5580, %v5584
    %v5587 = vadd.f32 %v5581, %v5584
    %v5588 = vmax.f32 %v5586, 0.0
    %v5589 = vmax.f32 %v5587, 0.0
    %v5590 = vld [vmem:[%s211 + $0x78] sm:$0xf]
    %v5591 = vld [vmem:[%s211 + $0x7c] sm:$0xf]
    %v5592 = vunpack.c.l.bf16 %v5590
    %v5593 = vunpack.c.l.bf16 %v5591
    %v5594 = vadd.f32 %v5588, %v5592
    %v5595 = vadd.f32 %v5589, %v5593
    %v5596 = vmax.f32 %v5594, 0.0
    %v5597 = vmax.f32 %v5595, 0.0
    %v5598 = vpack.c.bf16 %v5597, %v5596
    %v5599 = vld [vmem:[#allocation15] sm:$0xf]
    %v5600 = vld [vmem:[#allocation15 + $0x4] sm:$0xf]
    %v5601 = vld [vmem:[#allocation15 + $0x8] sm:$0xf]
    %v5602 = vld [vmem:[#allocation15 + $0xc] sm:$0xf]
    %v5603 = vld [vmem:[#allocation15 + $0x10] sm:$0xf]
    %v5604 = vld [vmem:[#allocation15 + $0x14] sm:$0xf]
    %v5605 = vld [vmem:[#allocation15 + $0x18] sm:$0xf]
    %v5606 = vld [vmem:[#allocation15 + $0x1c] sm:$0xf]
    %v5607 = vld [vmem:[#allocation15 + $0x20] sm:$0xf]
    %v5608 = vld [vmem:[#allocation15 + $0x24] sm:$0xf]
    %v5609 = vld [vmem:[#allocation15 + $0x28] sm:$0xf]
    %v5610 = vld [vmem:[#allocation15 + $0x2c] sm:$0xf]
    %v5611 = vld [vmem:[#allocation15 + $0x30] sm:$0xf]
    %v5612 = vld [vmem:[#allocation15 + $0x34] sm:$0xf]
    %v5613 = vld [vmem:[#allocation15 + $0x38] sm:$0xf]
    %v5614 = vld [vmem:[#allocation15 + $0x3c] sm:$0xf]
    %v5615 = vld [vmem:[%s12] sm:$0x1]
    %v5617 = vperm.slane %v5615, 0
    %v5635 = vunpack.c.l.b16 %v5599
    %v5636 = vunpack.c.l.b16 %v5600
    %v5637 = vunpack.c.l.b16 %v5601
    %v5638 = vunpack.c.l.b16 %v5602
    %v5639 = vunpack.c.l.b16 %v5603
    %v5640 = vunpack.c.l.b16 %v5604
    %v5641 = vunpack.c.l.b16 %v5605
    %v5642 = vunpack.c.l.b16 %v5606
    %v5643 = vunpack.c.l.b16 %v5607
    %v5644 = vunpack.c.l.b16 %v5608
    %v5645 = vunpack.c.l.b16 %v5609
    %v5646 = vunpack.c.l.b16 %v5610
    %v5647 = vunpack.c.l.b16 %v5611
    %v5648 = vunpack.c.l.b16 %v5612
    %v5649 = vunpack.c.l.b16 %v5613
    %v5650 = vunpack.c.l.b16 %v5614
    %v5651 = vpack.c.b16 %v5636, %v5635
    %v5652 = vpack.c.b16 %v5638, %v5637
    %v5653 = vpack.c.b16 %v5640, %v5639
    %v5654 = vpack.c.b16 %v5642, %v5641
    %v5655 = vpack.c.b16 %v5644, %v5643
    %v5656 = vpack.c.b16 %v5646, %v5645
    %v5657 = vpack.c.b16 %v5648, %v5647
    %v5658 = vpack.c.b16 %v5650, %v5649
    %5667 = vmatpush.bf16.msra.mxu0 %v5658
    %5668 = vmatpush.bf16.msra.mxu0 %v5657
    %5669 = vmatpush.bf16.msra.mxu0 %v5656
    %5670 = vmatpush.bf16.msra.mxu0 %v5655
    %5671 = vmatpush.bf16.msra.mxu0 %v5654
    %5672 = vmatpush.bf16.msra.mxu0 %v5653
    %5673 = vmatpush.bf16.msra.mxu0 %v5652
    %5674 = vmatpush.bf16.msra.mxu0 %v5651
    %5675 = vmatmul.bf16.gmra.mxu0 %v5598
    %v5676 = vpop.f32.mrf.mxu0
    %v5677 = vadd.f32 %v5617, %v5676
    %v5678 = vpop.f32.mrf.mxu0
    %v5679 = vadd.f32 %v5617, %v5678
    %5680 = vdwg.mxu0
    %v5681 = vxor.u32 %v5677, 2147483648
    %v5682 = vxor.u32 %v5679, 2147483648
    %v5683 = vmul.f32 %v5681, 1.442695
    %v5684 = vpow.pop %v5683
    %v5685 = vmul.f32 %v5682, 1.442695
    %v5686 = vpow.pop %v5685
    %v5687 = vadd.f32 %v5684, 1.0
    %v5688 = vadd.f32 %v5686, 1.0
    %v5689 = vrcp.pop %v5687
    %v5690 = vmul.f32 %v5687, %v5689
    %v5691 = vsub.f32 1.0, %v5690
    %v5692 = vmul.f32 %v5689, %v5691
    %v5693 = vadd.f32 %v5689, %v5692
    %vm5694 = vweird.f32 %v5687
    %vm5695 = vweird.f32 %v5689
    %vm5696 = vmor %vm5694, %vm5695
    %v5697 = vsel %vm5696, %v5689, %v5693
    %v5698 = vand.u32 2147483647, %v5687
    %vm5699 = vcmp.eq.f32.partialorder %v5698, 8.507059e+37
    %v5700 = vand.u32 %v5687, 2147483648
    %v5701 = vor.u32 1.1754944e-38, %v5700
    %v5702 = vsel %vm5699, %v5701, %v5697
    %v5703 = vmul.f32 1.0, %v5702
    %v5704 = vrcp.pop %v5688
    %v5705 = vmul.f32 %v5688, %v5704
    %v5706 = vsub.f32 1.0, %v5705
    %v5707 = vmul.f32 %v5704, %v5706
    %v5708 = vadd.f32 %v5704, %v5707
    %vm5709 = vweird.f32 %v5688
    %vm5710 = vweird.f32 %v5704
    %vm5711 = vmor %vm5709, %vm5710
    %v5712 = vsel %vm5711, %v5704, %v5708
    %v5713 = vand.u32 2147483647, %v5688
    %vm5714 = vcmp.eq.f32.partialorder %v5713, 8.507059e+37
    %v5715 = vand.u32 %v5688, 2147483648
    %v5716 = vor.u32 1.1754944e-38, %v5715
    %v5717 = vsel %vm5714, %v5716, %v5712
    %v5718 = vmul.f32 1.0, %v5717
    %5719 = vst [vmem:[#allocation16] sm:$0xff] %v5703
    %5720 = vst [vmem:[#allocation16 + $0x8] sm:$0xff] %v5718
    // Predicated region
    $region82: #{tpu_custom_call.1} parent=1 // pred_check
      _
    $region83: #{tpu_custom_call.1} parent=1 // pred_check_branch
      %5722 = sbr.rel (0) target = $region85
    $region84: #{tpu_custom_call.1} parent=1 // pred_region
      %5724 = vsyncadd [#allocation6], 0
      %s5725 = sshll.u32 [#allocation16], 4
      %s5726 = int_to_ptr.vmem [resolvable:$true] %s5725
      %s5727 = sshll.u32 %s13, 4
      %s5728 = int_to_ptr.hbm [resolvable:$true] %s5727
      %5733 = dma.vmem_to_hbm [thread:$0]  %s5726, 256, %s5728, [#allocation6], 128, 128, 8
    $region85: #{tpu_custom_call.1} parent=1 // pred_fallthru
      _
    // Predicated region
    $region86: #{tpu_custom_call.1} parent=1 // pred_check
      _
    $region87: #{tpu_custom_call.1} parent=1 // pred_check_branch
      %5735 = sbr.rel (0) target = $region89
    $region88: #{tpu_custom_call.1} parent=1 // pred_region
      %5737 = dma.done [#allocation6], 256
    $region89: #{tpu_custom_call.1} parent=1 // pred_fallthru
      _
    %5738 = vsyncpa [#allocation5], 1
    %5739 = vsyncpa [#allocation8], 1
    %5740 = vsyncpa [#allocation11], 1
    %5741 = vsyncpa [#allocation14], 1
    %5742 = vsyncpa [#allocation6], 1

// kernel: tpu_custom_call.1
$region0: #{tpu_custom_call.1}
  #allocation0 [shape = 'u32[]', space=smem, size = 0x4, offset = 0x4, fixed_abs, tag = 'smem constant byte address 0x4 - core index']
  #allocation1 [shape = 'u32[72,128]{1,0:T(1,128)}', space=vmem, size = 0x9000, scoped, tag = 'internal scratch']
  #allocation2 [shape = 'bf16[22,16,128]{2,1,0:T(8,128)(2,1)}', space=vmem, size = 0x16000, scoped, tag = 'scratch operand']
  #allocation3 [shape = 'bf16[22,16,128]{2,1,0:T(8,128)(2,1)}', space=vmem, size = 0x16000, scoped, tag = 'scratch operand']
  %s0 = inlined_call_operand.hbm [shape: bf16[16,16,128], index: 0, kind: input, shape index: {}]
  %s1 = inlined_call_operand.hbm [shape: bf16[4,128,128], index: 1, kind: input, shape index: {}]
  %s2 = inlined_call_operand.vmem [shape: f32[1,128], index: 2, kind: input, shape index: {}]
  %s3 = inlined_call_operand.hbm [shape: bf16[4,128,128], index: 3, kind: input, shape index: {}]
  %s4 = inlined_call_operand.vmem [shape: f32[1,128], index: 4, kind: input, shape index: {}]
  %s5 = inlined_call_operand.hbm [shape: bf16[128,128], index: 5, kind: input, shape index: {}]
  %s6 = inlined_call_operand.vmem [shape: f32[1,128], index: 6, kind: input, shape index: {}]
  %s7 = inlined_call_operand.hbm [shape: bf16[4,128,128], index: 7, kind: input, shape index: {}]
  %s8 = inlined_call_operand.vmem [shape: f32[1,128], index: 8, kind: input, shape index: {}]
  %s9 = inlined_call_operand.hbm [shape: bf16[4,128,128], index: 9, kind: input, shape index: {}]
  %s10 = inlined_call_operand.vmem [shape: f32[1,128], index: 10, kind: input, shape index: {}]
  %s11 = inlined_call_operand.hbm [shape: bf16[128,128], index: 11, kind: input, shape index: {}]
  %s12 = inlined_call_operand.vmem [shape: f32[1,128], index: 12, kind: input, shape index: {}]
  %s13 = inlined_call_operand.hbm [shape: f32[16,128], index: 13, kind: output, shape index: {}]
  %s14 = sld [smem:[#allocation0]]
  $region90: #{tpu_custom_call.1} parent=0
    _
  %s16 = ssub.s32 1, %s14
  %s17 = scalar_select 0, %s16, %s14
  $region1: #{tpu_custom_call.1} parent=0
    #allocation4 [shape = 'u8[65536]{0}', space=vmem, size = 0x10000, scoped, tag = 'input window, operand 0, single buffered']
    #allocation5 [shape = 's32[1]{0}', space=sflag, size = 0x4, scoped, tag = 'scoped memory for tpu_custom_call.1']
    #allocation6 [shape = 's32[1]{0}', space=sflag, size = 0x4, scoped, tag = 'scoped memory for tpu_custom_call.1']
    #allocation7 [shape = 'u8[131072]{0}', space=vmem, size = 0x20000, scoped, tag = 'input window, operand 1, single buffered']
    #allocation8 [shape = 's32[1]{0}', space=sflag, size = 0x4, scoped, tag = 'scoped memory for tpu_custom_call.1']
    #allocation9 [shape = 'u8[131072]{0}', space=vmem, size = 0x20000, scoped, tag = 'input window, operand 3, single buffered']
    #allocation10 [shape = 'u8[32768]{0}', space=vmem, size = 0x8000, scoped, tag = 'input window, operand 5, single buffered']
    #allocation11 [shape = 's32[1]{0}', space=sflag, size = 0x4, scoped, tag = 'scoped memory for tpu_custom_call.1']
    #allocation12 [shape = 'u8[131072]{0}', space=vmem, size = 0x20000, scoped, tag = 'input window, operand 7, single buffered']
    #allocation13 [shape = 'u8[131072]{0}', space=vmem, size = 0x20000, scoped, tag = 'input window, operand 9, single buffered']
    #allocation14 [shape = 's32[1]{0}', space=sflag, size = 0x4, scoped, tag = 'scoped memory for tpu_custom_call.1']
    #allocation15 [shape = 'u8[32768]{0}', space=vmem, size = 0x8000, scoped, tag = 'input window, operand 11, single buffered']
    #allocation16 [shape = 'u8[8192]{0}', space=vmem, size = 0x2000, scoped, tag = 'output window, operand 0, single buffered']
    %18 = vsyncpa [#allocation5], 0
    %19 = vsyncpa [#allocation8], 0
    %20 = vsyncpa [#allocation11], 0
    %21 = vsyncpa [#allocation14], 0
    %22 = vsyncpa [#allocation6], 0
    // Predicated region
    $region2: #{tpu_custom_call.1} parent=1 // pred_check
      _
    $region3: #{tpu_custom_call.1} parent=1 // pred_check_branch
      %24 = sbr.rel (0) target = $region5
    $region4: #{tpu_custom_call.1} parent=1 // pred_region
      %26 = vsyncadd [#allocation5], 0
      %s27 = sshll.u32 %s0, 4
      %s28 = int_to_ptr.hbm [resolvable:$true] %s27
      %s29 = sshll.u32 [#allocation4], 4
      %s30 = int_to_ptr.vmem [resolvable:$true] %s29
      %35 = dma.hbm_to_vmem [thread:$0]  %s28, 2048, %s30, [#allocation5], 64, 64, 4
    $region5: #{tpu_custom_call.1} parent=1 // pred_fallthru
      _
    // Predicated region
    $region6: #{tpu_custom_call.1} parent=1 // pred_check
      _
    $region7: #{tpu_custom_call.1} parent=1 // pred_check_branch
      %37 = sbr.rel (0) target = $region9
    $region8: #{tpu_custom_call.1} parent=1 // pred_region
      %39 = vsyncadd [#allocation8], 0
      %s40 = sshll.u32 %s1, 4
      %s41 = int_to_ptr.hbm [resolvable:$true] %s40
      %s42 = sshll.u32 [#allocation7], 4
      %s43 = int_to_ptr.vmem [resolvable:$true] %s42
      %48 = dma.hbm_to_vmem [thread:$0]  %s41, 4096, %s43, [#allocation8], 64, 64, 4
    $region9: #{tpu_custom_call.1} parent=1 // pred_fallthru
      _
    // Predicated region
    $region10: #{tpu_custom_call.1} parent=1 // pred_check
      _
    $region11: #{tpu_custom_call.1} parent=1 // pred_check_branch
      %50 = sbr.rel (0) target = $region13
    $region12: #{tpu_custom_call.1} parent=1 // pred_region
      _
    $region13: #{tpu_custom_call.1} parent=1 // pred_fallthru
      _
    // Predicated region
    $region14: #{tpu_custom_call.1} parent=1 // pred_check
      _
    $region15: #{tpu_custom_call.1} parent=1 // pred_check_branch
      %52 = sbr.rel (0) target = $region17
    $region16: #{tpu_custom_call.1} parent=1 // pred_region
      %54 = vsyncadd [#allocation8], 0
      %s55 = sshll.u32 %s3, 4
      %s56 = int_to_ptr.hbm [resolvable:$true] %s55
      %s57 = sshll.u32 [#allocation9], 4
      %s58 = int_to_ptr.vmem [resolvable:$true] %s57
      %63 = dma.hbm_to_vmem [thread:$0]  %s56, 4096, %s58, [#allocation8], 64, 64, 4
    $region17: #{tpu_custom_call.1} parent=1 // pred_fallthru
      _
    // Predicated region
    $region18: #{tpu_custom_call.1} parent=1 // pred_check
      _
    $region19: #{tpu_custom_call.1} parent=1 // pred_check_branch
      %65 = sbr.rel (0) target = $region21
    $region20: #{tpu_custom_call.1} parent=1 // pred_region
      _
    $region21: #{tpu_custom_call.1} parent=1 // pred_fallthru
      _
    // Predicated region
    $region22: #{tpu_custom_call.1} parent=1 // pred_check
      _
    $region23: #{tpu_custom_call.1} parent=1 // pred_check_branch
      %67 = sbr.rel (0) target = $region25
    $region24: #{tpu_custom_call.1} parent=1 // pred_region
      %69 = vsyncadd [#allocation11], 0
      %s70 = sshll.u32 %s5, 4
      %s71 = int_to_ptr.hbm [resolvable:$true] %s70
      %s72 = sshll.u32 [#allocation10], 4
      %s73 = int_to_ptr.vmem [resolvable:$true] %s72
      %78 = dma.hbm_to_vmem [thread:$0]  %s71, 1024, %s73, [#allocation11], 64, 64, 4
    $region25: #{tpu_custom_call.1} parent=1 // pred_fallthru
      _
    // Predicated region
    $region26: #{tpu_custom_call.1} parent=1 // pred_check
      _
    $region27: #{tpu_custom_call.1} parent=1 // pred_check_branch
      %80 = sbr.rel (0) target = $region29
    $region28: #{tpu_custom_call.1} parent=1 // pred_region
      _
    $region29: #{tpu_custom_call.1} parent=1 // pred_fallthru
      _
    // Predicated region
    $region30: #{tpu_custom_call.1} parent=1 // pred_check
      _
    $region31: #{tpu_custom_call.1} parent=1 // pred_check_branch
      %82 = sbr.rel (0) target = $region33
    $region32: #{tpu_custom_call.1} parent=1 // pred_region
      %84 = vsyncadd [#allocation11], 0
      %s85 = sshll.u32 %s7, 4
      %s86 = int_to_ptr.hbm [resolvable:$true] %s85
      %s87 = sshll.u32 [#allocation12], 4
      %s88 = int_to_ptr.vmem [resolvable:$true] %s87
      %93 = dma.hbm_to_vmem [thread:$0]  %s86, 4096, %s88, [#allocation11], 64, 64, 4
    $region33: #{tpu_custom_call.1} parent=1 // pred_fallthru
      _
    // Predicated region
    $region34: #{tpu_custom_call.1} parent=1 // pred_check
      _
    $region35: #{tpu_custom_call.1} parent=1 // pred_check_branch
      %95 = sbr.rel (0) target = $region37
    $region36: #{tpu_custom_call.1} parent=1 // pred_region
      _
    $region37: #{tpu_custom_call.1} parent=1 // pred_fallthru
      _
    // Predicated region
    $region38: #{tpu_custom_call.1} parent=1 // pred_check
      _
    $region39: #{tpu_custom_call.1} parent=1 // pred_check_branch
      %97 = sbr.rel (0) target = $region41
    $region40: #{tpu_custom_call.1} parent=1 // pred_region
      %99 = vsyncadd [#allocation14], 0
      %s100 = sshll.u32 %s9, 4
      %s101 = int_to_ptr.hbm [resolvable:$true] %s100
      %s102 = sshll.u32 [#allocation13], 4
      %s103 = int_to_ptr.vmem [resolvable:$true] %s102
      %108 = dma.hbm_to_vmem [thread:$0]  %s101, 4096, %s103, [#allocation14], 64, 64, 4
    $region41: #{tpu_custom_call.1} parent=1 // pred_fallthru
      _
    // Predicated region
    $region42: #{tpu_custom_call.1} parent=1 // pred_check
      _
    $region43: #{tpu_custom_call.1} parent=1 // pred_check_branch
      %110 = sbr.rel (0) target = $region45
    $region44: #{tpu_custom_call.1} parent=1 // pred_region
      _
    $region45: #{tpu_custom_call.1} parent=1 // pred_fallthru
      _
    // Predicated region
    $region46: #{tpu_custom_call.1} parent=1 // pred_check
      _
    $region47: #{tpu_custom_call.1} parent=1 // pred_check_branch
      %112 = sbr.rel (0) target = $region49
    $region48: #{tpu_custom_call.1} parent=1 // pred_region
      %114 = vsyncadd [#allocation14], 0
      %s115 = sshll.u32 %s11, 4
      %s116 = int_to_ptr.hbm [resolvable:$true] %s115
      %s117 = sshll.u32 [#allocation15], 4
      %s118 = int_to_ptr.vmem [resolvable:$true] %s117
      %123 = dma.hbm_to_vmem [thread:$0]  %s116, 1024, %s118, [#allocation14], 64, 64, 4
    $region49: #{tpu_custom_call.1} parent=1 // pred_fallthru
      _
    // Predicated region
    $region50: #{tpu_custom_call.1} parent=1 // pred_check
      _
    $region51: #{tpu_custom_call.1} parent=1 // pred_check_branch
      %125 = sbr.rel (0) target = $region53
    $region52: #{tpu_custom_call.1} parent=1 // pred_region
      _
    $region53: #{tpu_custom_call.1} parent=1 // pred_fallthru
      _
    // Predicated region
    $region54: #{tpu_custom_call.1} parent=1 // pred_check
      _
    $region55: #{tpu_custom_call.1} parent=1 // pred_check_branch
      %127 = sbr.rel (0) target = $region57
    $region56: #{tpu_custom_call.1} parent=1 // pred_region
      %129 = dma.done [#allocation5], 2048
    $region57: #{tpu_custom_call.1} parent=1 // pred_fallthru
      _
    // Predicated region
    $region58: #{tpu_custom_call.1} parent=1 // pred_check
      _
    $region59: #{tpu_custom_call.1} parent=1 // pred_check_branch
      %131 = sbr.rel (0) target = $region61
    $region60: #{tpu_custom_call.1} parent=1 // pred_region
      %133 = dma.done [#allocation8], 4096
    $region61: #{tpu_custom_call.1} parent=1 // pred_fallthru
      _
    // Predicated region
    $region62: #{tpu_custom_call.1} parent=1 // pred_check
      _
    $region63: #{tpu_custom_call.1} parent=1 // pred_check_branch
      %135 = sbr.rel (0) target = $region65
    $region64: #{tpu_custom_call.1} parent=1 // pred_region
      %137 = dma.done [#allocation8], 4096
    $region65: #{tpu_custom_call.1} parent=1 // pred_fallthru
      _
    // Predicated region
    $region66: #{tpu_custom_call.1} parent=1 // pred_check
      _
    $region67: #{tpu_custom_call.1} parent=1 // pred_check_branch
      %139 = sbr.rel (0) target = $region69
    $region68: #{tpu_custom_call.1} parent=1 // pred_region
      %141 = dma.done [#allocation11], 1024
    $region69: #{tpu_custom_call.1} parent=1 // pred_fallthru
      _
    // Predicated region
    $region70: #{tpu_custom_call.1} parent=1 // pred_check
      _
    $region71: #{tpu_custom_call.1} parent=1 // pred_check_branch
      %143 = sbr.rel (0) target = $region73
    $region72: #{tpu_custom_call.1} parent=1 // pred_region
      %145 = dma.done [#allocation11], 4096
    $region73: #{tpu_custom_call.1} parent=1 // pred_fallthru
      _
    // Predicated region
    $region74: #{tpu_custom_call.1} parent=1 // pred_check
      _
    $region75: #{tpu_custom_call.1} parent=1 // pred_check_branch
      %147 = sbr.rel (0) target = $region77
    $region76: #{tpu_custom_call.1} parent=1 // pred_region
      %149 = dma.done [#allocation14], 4096
    $region77: #{tpu_custom_call.1} parent=1 // pred_fallthru
      _
    // Predicated region
    $region78: #{tpu_custom_call.1} parent=1 // pred_check
      _
    $region79: #{tpu_custom_call.1} parent=1 // pred_check_branch
      %151 = sbr.rel (0) target = $region81
    $region80: #{tpu_custom_call.1} parent=1 // pred_region
      %153 = dma.done [#allocation14], 1024
    $region81: #{tpu_custom_call.1} parent=1 // pred_fallthru
      _
    %155 = vst [vmem:[#allocation2] sm:$0xf] 0
    %156 = vst [vmem:[#allocation2 + $0x4] sm:$0xf] 0
    %157 = vst [vmem:[#allocation2 + $0x8] sm:$0xf] 0
    %158 = vst [vmem:[#allocation2 + $0xc] sm:$0xf] 0
    %159 = vst [vmem:[#allocation2 + $0x10] sm:$0xf] 0
    %160 = vst [vmem:[#allocation2 + $0x14] sm:$0xf] 0
    %161 = vst [vmem:[#allocation2 + $0x18] sm:$0xf] 0
    %162 = vst [vmem:[#allocation2 + $0x1c] sm:$0xf] 0
    %163 = vst [vmem:[#allocation2 + $0x20] sm:$0xf] 0
    %164 = vst [vmem:[#allocation2 + $0x24] sm:$0xf] 0
    %165 = vst [vmem:[#allocation2 + $0x28] sm:$0xf] 0
    %166 = vst [vmem:[#allocation2 + $0x2c] sm:$0xf] 0
    %167 = vst [vmem:[#allocation3] sm:$0xf] 0
    %168 = vst [vmem:[#allocation3 + $0x4] sm:$0xf] 0
    %169 = vst [vmem:[#allocation3 + $0x8] sm:$0xf] 0
    %170 = vst [vmem:[#allocation3 + $0xc] sm:$0xf] 0
    %171 = vst [vmem:[#allocation3 + $0x10] sm:$0xf] 0
    %172 = vst [vmem:[#allocation3 + $0x14] sm:$0xf] 0
    %173 = vst [vmem:[#allocation3 + $0x18] sm:$0xf] 0
    %174 = vst [vmem:[#allocation3 + $0x1c] sm:$0xf] 0
    %175 = vst [vmem:[#allocation3 + $0x20] sm:$0xf] 0
    %176 = vst [vmem:[#allocation3 + $0x24] sm:$0xf] 0
    %177 = vst [vmem:[#allocation3 + $0x28] sm:$0xf] 0
    %178 = vst [vmem:[#allocation3 + $0x2c] sm:$0xf] 0
    %v179 = vld [vmem:[#allocation4] sm:$0xf]
    %v180 = vld [vmem:[#allocation4 + $0x4] sm:$0xf]
    %v181 = vld [vmem:[#allocation4 + $0x8] sm:$0xf]
    %v182 = vld [vmem:[#allocation4 + $0xc] sm:$0xf]
    %v183 = vld [vmem:[#allocation4 + $0x10] sm:$0xf]
    %v184 = vld [vmem:[#allocation4 + $0x14] sm:$0xf]
    %v185 = vld [vmem:[#allocation4 + $0x18] sm:$0xf]
    %v186 = vld [vmem:[#allocation4 + $0x1c] sm:$0xf]
    %v187 = vld [vmem:[#allocation4 + $0x20] sm:$0xf]
    %v188 = vld [vmem:[#allocation4 + $0x24] sm:$0xf]
    %v189 = vld [vmem:[#allocation4 + $0x28] sm:$0xf]
    %v190 = vld [vmem:[#allocation4 + $0x2c] sm:$0xf]
    %v191 = vld [vmem:[#allocation4 + $0x30] sm:$0xf]
    %v192 = vld [vmem:[#allocation4 + $0x34] sm:$0xf]
    %v193 = vld [vmem:[#allocation4 + $0x38] sm:$0xf]
    %v194 = vld [vmem:[#allocation4 + $0x3c] sm:$0xf]
    %v195 = vld [vmem:[#allocation4 + $0x40] sm:$0xf]
    %v196 = vld [vmem:[#allocation4 + $0x44] sm:$0xf]
    %v197 = vld [vmem:[#allocation4 + $0x48] sm:$0xf]
    %v198 = vld [vmem:[#allocation4 + $0x4c] sm:$0xf]
    %v199 = vld [vmem:[#allocation4 + $0x50] sm:$0xf]
    %v200 = vld [vmem:[#allocation4 + $0x54] sm:$0xf]
    %v201 = vld [vmem:[#allocation4 + $0x58] sm:$0xf]
    %v202 = vld [vmem:[#allocation4 + $0x5c] sm:$0xf]
    %v203 = vld [vmem:[#allocation4 + $0x60] sm:$0xf]
    %v204 = vld [vmem:[#allocation4 + $0x64] sm:$0xf]
    %v205 = vld [vmem:[#allocation4 + $0x68] sm:$0xf]
    %v206 = vld [vmem:[#allocation4 + $0x6c] sm:$0xf]
    %v207 = vld [vmem:[#allocation4 + $0x70] sm:$0xf]
    %v208 = vld [vmem:[#allocation4 + $0x74] sm:$0xf]
    %v209 = vld [vmem:[#allocation4 + $0x78] sm:$0xf]
    %v210 = vld [vmem:[#allocation4 + $0x7c] sm:$0xf]
    %s211 = scalar_lea.vmem [#allocation2], 48
    %212 = vst [vmem:[%s211] sm:$0xf] %v179
    %213 = vst [vmem:[%s211 + $0x4] sm:$0xf] %v180
    %214 = vst [vmem:[%s211 + $0x8] sm:$0xf] %v181
    %215 = vst [vmem:[%s211 + $0xc] sm:$0xf] %v182
    %216 = vst [vmem:[%s211 + $0x10] sm:$0xf] %v183
    %217 = vst [vmem:[%s211 + $0x14] sm:$0xf] %v184
    %218 = vst [vmem:[%s211 + $0x18] sm:$0xf] %v185
    %219 = vst [vmem:[%s211 + $0x1c] sm:$0xf] %v186
    %220 = vst [vmem:[%s211 + $0x20] sm:$0xf] %v187
    %221 = vst [vmem:[%s211 + $0x24] sm:$0xf] %v188
    %222 = vst [vmem:[%s211 + $0x28] sm:$0xf] %v189
    %223 = vst [vmem:[%s211 + $0x2c] sm:$0xf] %v190
    %224 = vst [vmem:[%s211 + $0x30] sm:$0xf] %v191
    %225 = vst [vmem:[%s211 + $0x34] sm:$0xf] %v192
    %226 = vst [vmem:[%s211 + $0x38] sm:$0xf] %v193
    %227 = vst [vmem:[%s211 + $0x3c] sm:$0xf] %v194
    %228 = vst [vmem:[%s211 + $0x40] sm:$0xf] %v195
    %229 = vst [vmem:[%s211 + $0x44] sm:$0xf] %v196
    %230 = vst [vmem:[%s211 + $0x48] sm:$0xf] %v197
    %231 = vst [vmem:[%s211 + $0x4c] sm:$0xf] %v198
    %232 = vst [vmem:[%s211 + $0x50] sm:$0xf] %v199
    %233 = vst [vmem:[%s211 + $0x54] sm:$0xf] %v200
    %234 = vst [vmem:[%s211 + $0x58] sm:$0xf] %v201
    %235 = vst [vmem:[%s211 + $0x5c] sm:$0xf] %v202
    %236 = vst [vmem:[%s211 + $0x60] sm:$0xf] %v203
    %237 = vst [vmem:[%s211 + $0x64] sm:$0xf] %v204
    %238 = vst [vmem:[%s211 + $0x68] sm:$0xf] %v205
    %239 = vst [vmem:[%s211 + $0x6c] sm:$0xf] %v206
    %240 = vst [vmem:[%s211 + $0x70] sm:$0xf] %v207
    %241 = vst [vmem:[%s211 + $0x74] sm:$0xf] %v208
    %242 = vst [vmem:[%s211 + $0x78] sm:$0xf] %v209
    %243 = vst [vmem:[%s211 + $0x7c] sm:$0xf] %v210
    %s244 = scalar_lea.vmem [#allocation2], 24
    %v245 = vld [vmem:[%s244] sm:$0xf]
    %v246 = vld [vmem:[%s244 + $0x4] sm:$0xf]
    %v247 = vld [vmem:[%s244 + $0x8] sm:$0xf]
    %v248 = vld [vmem:[%s244 + $0xc] sm:$0xf]
    %v249 = vld [vmem:[%s244 + $0x10] sm:$0xf]
    %v250 = vld [vmem:[%s244 + $0x14] sm:$0xf]
    %v251 = vld [vmem:[%s244 + $0x18] sm:$0xf]
    %v252 = vld [vmem:[%s244 + $0x1c] sm:$0xf]
    %v253 = vld [vmem:[%s244 + $0x20] sm:$0xf]
    %v254 = vld [vmem:[%s244 + $0x24] sm:$0xf]
    %v255 = vld [vmem:[%s244 + $0x28] sm:$0xf]
    %v256 = vld [vmem:[%s244 + $0x2c] sm:$0xf]
    %v257 = vld [vmem:[%s244 + $0x30] sm:$0xf]
    %v258 = vld [vmem:[%s244 + $0x34] sm:$0xf]
    %v259 = vld [vmem:[%s244 + $0x38] sm:$0xf]
    %v260 = vld [vmem:[%s244 + $0x3c] sm:$0xf]
    %v261 = vld [vmem:[%s244 + $0x40] sm:$0xf]
    %v262 = vld [vmem:[%s244 + $0x44] sm:$0xf]
    %v263 = vld [vmem:[%s244 + $0x48] sm:$0xf]
    %v264 = vld [vmem:[%s244 + $0x4c] sm:$0xf]
    %v265 = vld [vmem:[%s244 + $0x50] sm:$0xf]
    %v266 = vld [vmem:[%s244 + $0x54] sm:$0xf]
    %v267 = vld [vmem:[%s244 + $0x58] sm:$0xf]
    %v268 = vld [vmem:[%s244 + $0x5c] sm:$0xf]
    %v269 = vld [vmem:[%s244 + $0x60] sm:$0xf]
    %v270 = vld [vmem:[%s244 + $0x64] sm:$0xf]
    %v271 = vld [vmem:[%s244 + $0x68] sm:$0xf]
    %v272 = vld [vmem:[%s244 + $0x6c] sm:$0xf]
    %v273 = vld [vmem:[%s244 + $0x70] sm:$0xf]
    %v274 = vld [vmem:[%s244 + $0x74] sm:$0xf]
    %v275 = vld [vmem:[%s244 + $0x78] sm:$0xf]
    %v276 = vld [vmem:[%s244 + $0x7c] sm:$0xf]
    %v277 = vld [vmem:[#allocation7] sm:$0xf]
    %v278 = vld [vmem:[#allocation7 + $0x4] sm:$0xf]
    %v279 = vld [vmem:[#allocation7 + $0x8] sm:$0xf]
    %v280 = vld [vmem:[#allocation7 + $0xc] sm:$0xf]
    %v281 = vld [vmem:[#allocation7 + $0x10] sm:$0xf]
    %v282 = vld [vmem:[#allocation7 + $0x14] sm:$0xf]
    %v283 = vld [vmem:[#allocation7 + $0x18] sm:$0xf]
    %v284 = vld [vmem:[#allocation7 + $0x1c] sm:$0xf]
    %v285 = vld [vmem:[#allocation7 + $0x20] sm:$0xf]
    %v286 = vld [vmem:[#allocation7 + $0x24] sm:$0xf]
    %v287 = vld [vmem:[#allocation7 + $0x28] sm:$0xf]
    %v288 = vld [vmem:[#allocation7 + $0x2c] sm:$0xf]
    %v289 = vld [vmem:[#allocation7 + $0x30] sm:$0xf]
    %v290 = vld [vmem:[#allocation7 + $0x34] sm:$0xf]
    %v291 = vld [vmem:[#allocation7 + $0x38] sm:$0xf]
    %v292 = vld [vmem:[#allocation7 + $0x3c] sm:$0xf]
    %s293 = scalar_lea.vmem [#allocation2], 32
    %v294 = vld [vmem:[%s293] sm:$0xf]
    %v295 = vld [vmem:[%s293 + $0x4] sm:$0xf]
    %v296 = vld [vmem:[%s293 + $0x8] sm:$0xf]
    %v297 = vld [vmem:[%s293 + $0xc] sm:$0xf]
    %v298 = vld [vmem:[%s293 + $0x10] sm:$0xf]
    %v299 = vld [vmem:[%s293 + $0x14] sm:$0xf]
    %v300 = vld [vmem:[%s293 + $0x18] sm:$0xf]
    %v301 = vld [vmem:[%s293 + $0x1c] sm:$0xf]
    %v302 = vld [vmem:[%s293 + $0x20] sm:$0xf]
    %v303 = vld [vmem:[%s293 + $0x24] sm:$0xf]
    %v304 = vld [vmem:[%s293 + $0x28] sm:$0xf]
    %v305 = vld [vmem:[%s293 + $0x2c] sm:$0xf]
    %v306 = vld [vmem:[%s293 + $0x30] sm:$0xf]
    %v307 = vld [vmem:[%s293 + $0x34] sm:$0xf]
    %v308 = vld [vmem:[%s293 + $0x38] sm:$0xf]
    %v309 = vld [vmem:[%s293 + $0x3c] sm:$0xf]
    %v310 = vld [vmem:[%s293 + $0x40] sm:$0xf]
    %v311 = vld [vmem:[%s293 + $0x44] sm:$0xf]
    %v312 = vld [vmem:[%s293 + $0x48] sm:$0xf]
    %v313 = vld [vmem:[%s293 + $0x4c] sm:$0xf]
    %v314 = vld [vmem:[%s293 + $0x50] sm:$0xf]
    %v315 = vld [vmem:[%s293 + $0x54] sm:$0xf]
    %v316 = vld [vmem:[%s293 + $0x58] sm:$0xf]
    %v317 = vld [vmem:[%s293 + $0x5c] sm:$0xf]
    %v318 = vld [vmem:[%s293 + $0x60] sm:$0xf]
    %v319 = vld [vmem:[%s293 + $0x64] sm:$0xf]
    %v320 = vld [vmem:[%s293 + $0x68] sm:$0xf]
    %v321 = vld [vmem:[%s293 + $0x6c] sm:$0xf]
    %v322 = vld [vmem:[%s293 + $0x70] sm:$0xf]
    %v323 = vld [vmem:[%s293 + $0x74] sm:$0xf]
    %v324 = vld [vmem:[%s293 + $0x78] sm:$0xf]
    %v325 = vld [vmem:[%s293 + $0x7c] sm:$0xf]
    %s326 = scalar_lea.vmem [#allocation7], 64
    %v327 = vld [vmem:[%s326] sm:$0xf]
    %v328 = vld [vmem:[%s326 + $0x4] sm:$0xf]
    %v329 = vld [vmem:[%s326 + $0x8] sm:$0xf]
    %v330 = vld [vmem:[%s326 + $0xc] sm:$0xf]
    %v331 = vld [vmem:[%s326 + $0x10] sm:$0xf]
    %v332 = vld [vmem:[%s326 + $0x14] sm:$0xf]
    %v333 = vld [vmem:[%s326 + $0x18] sm:$0xf]
    %v334 = vld [vmem:[%s326 + $0x1c] sm:$0xf]
    %v335 = vld [vmem:[%s326 + $0x20] sm:$0xf]
    %v336 = vld [vmem:[%s326 + $0x24] sm:$0xf]
    %v337 = vld [vmem:[%s326 + $0x28] sm:$0xf]
    %v338 = vld [vmem:[%s326 + $0x2c] sm:$0xf]
    %v339 = vld [vmem:[%s326 + $0x30] sm:$0xf]
    %v340 = vld [vmem:[%s326 + $0x34] sm:$0xf]
    %v341 = vld [vmem:[%s326 + $0x38] sm:$0xf]
    %v342 = vld [vmem:[%s326 + $0x3c] sm:$0xf]
    %v375 = vunpack.c.l.b16 %v294
    %v376 = vunpack.c.l.b16 %v295
    %v377 = vunpack.c.l.b16 %v296
    %v378 = vunpack.c.l.b16 %v297
    %v379 = vunpack.c.l.b16 %v298
    %v380 = vunpack.c.l.b16 %v299
    %v381 = vunpack.c.l.b16 %v300
    %v382 = vunpack.c.l.b16 %v301
    %v383 = vunpack.c.l.b16 %v302
    %v384 = vunpack.c.l.b16 %v303
    %v385 = vunpack.c.l.b16 %v304
    %v386 = vunpack.c.l.b16 %v305
    %v387 = vunpack.c.l.b16 %v306
    %v388 = vunpack.c.l.b16 %v307
    %v389 = vunpack.c.l.b16 %v308
    %v390 = vunpack.c.l.b16 %v309
    %v391 = vunpack.c.l.b16 %v310
    %v392 = vunpack.c.l.b16 %v311
    %v393 = vunpack.c.l.b16 %v312
    %v394 = vunpack.c.l.b16 %v313
    %v395 = vunpack.c.l.b16 %v314
    %v396 = vunpack.c.l.b16 %v315
    %v397 = vunpack.c.l.b16 %v316
    %v398 = vunpack.c.l.b16 %v317
    %v399 = vunpack.c.l.b16 %v318
    %v400 = vunpack.c.l.b16 %v319
    %v401 = vunpack.c.l.b16 %v320
    %v402 = vunpack.c.l.b16 %v321
    %v403 = vunpack.c.l.b16 %v322
    %v404 = vunpack.c.l.b16 %v323
    %v405 = vunpack.c.l.b16 %v324
    %v406 = vunpack.c.l.b16 %v325
    %v407 = vpack.c.b16 %v376, %v375
    %v408 = vpack.c.b16 %v378, %v377
    %v409 = vpack.c.b16 %v380, %v379
    %v410 = vpack.c.b16 %v382, %v381
    %v411 = vpack.c.b16 %v384, %v383
    %v412 = vpack.c.b16 %v386, %v385
    %v413 = vpack.c.b16 %v388, %v387
    %v414 = vpack.c.b16 %v390, %v389
    %v415 = vpack.c.b16 %v392, %v391
    %v416 = vpack.c.b16 %v394, %v393
    %v417 = vpack.c.b16 %v396, %v395
    %v418 = vpack.c.b16 %v398, %v397
    %v419 = vpack.c.b16 %v400, %v399
    %v420 = vpack.c.b16 %v402, %v401
    %v421 = vpack.c.b16 %v404, %v403
    %v422 = vpack.c.b16 %v406, %v405
    %v455 = vunpack.c.l.b16 %v327
    %v456 = vunpack.c.l.b16 %v328
    %v457 = vunpack.c.l.b16 %v329
    %v458 = vunpack.c.l.b16 %v330
    %v459 = vunpack.c.l.b16 %v331
    %v460 = vunpack.c.l.b16 %v332
    %v461 = vunpack.c.l.b16 %v333
    %v462 = vunpack.c.l.b16 %v334
    %v463 = vunpack.c.l.b16 %v335
    %v464 = vunpack.c.l.b16 %v336
    %v465 = vunpack.c.l.b16 %v337
    %v466 = vunpack.c.l.b16 %v338
    %v467 = vunpack.c.l.b16 %v339
    %v468 = vunpack.c.l.b16 %v340
    %v469 = vunpack.c.l.b16 %v341
    %v470 = vunpack.c.l.b16 %v342
    %v471 = vpack.c.b16 %v456, %v455
    %v472 = vpack.c.b16 %v458, %v457
    %v473 = vpack.c.b16 %v460, %v459
    %v474 = vpack.c.b16 %v462, %v461
    %v475 = vpack.c.b16 %v464, %v463
    %v476 = vpack.c.b16 %v466, %v465
    %v477 = vpack.c.b16 %v468, %v467
    %v478 = vpack.c.b16 %v470, %v469
    %487 = vmatpush.bf16.msra.mxu0 %v478
    %488 = vmatpush.bf16.msra.mxu0 %v477
    %489 = vmatpush.bf16.msra.mxu0 %v476
    %490 = vmatpush.bf16.msra.mxu0 %v475
    %491 = vmatpush.bf16.msra.mxu0 %v474
    %492 = vmatpush.bf16.msra.mxu0 %v473
    %493 = vmatpush.bf16.msra.mxu0 %v472
    %494 = vmatpush.bf16.msra.mxu0 %v471
    %495 = vmatmul.bf16.gmra.mxu0 %v407
    %v496 = vpop.f32.mrf.mxu0
    %v497 = vadd.f32 0.0, %v496
    %v498 = vpop.f32.mrf.mxu0
    %v499 = vadd.f32 0.0, %v498
    %500 = vmatmul.bf16.gmra.mxu0 %v408
    %v501 = vpop.f32.mrf.mxu0
    %v502 = vadd.f32 0.0, %v501
    %v503 = vpop.f32.mrf.mxu0
    %v504 = vadd.f32 0.0, %v503
    %505 = vmatmul.bf16.gmra.mxu0 %v409
    %v506 = vpop.f32.mrf.mxu0
    %v507 = vadd.f32 0.0, %v506
    %v508 = vpop.f32.mrf.mxu0
    %v509 = vadd.f32 0.0, %v508
    %510 = vmatmul.bf16.gmra.mxu0 %v410
    %v511 = vpop.f32.mrf.mxu0
    %v512 = vadd.f32 0.0, %v511
    %v513 = vpop.f32.mrf.mxu0
    %v514 = vadd.f32 0.0, %v513
    %515 = vmatmul.bf16.gmra.mxu0 %v411
    %v516 = vpop.f32.mrf.mxu0
    %v517 = vadd.f32 0.0, %v516
    %v518 = vpop.f32.mrf.mxu0
    %v519 = vadd.f32 0.0, %v518
    %520 = vmatmul.bf16.gmra.mxu0 %v412
    %v521 = vpop.f32.mrf.mxu0
    %v522 = vadd.f32 0.0, %v521
    %v523 = vpop.f32.mrf.mxu0
    %v524 = vadd.f32 0.0, %v523
    %525 = vmatmul.bf16.gmra.mxu0 %v413
    %v526 = vpop.f32.mrf.mxu0
    %v527 = vadd.f32 0.0, %v526
    %v528 = vpop.f32.mrf.mxu0
    %v529 = vadd.f32 0.0, %v528
    %530 = vmatmul.bf16.gmra.mxu0 %v414
    %v531 = vpop.f32.mrf.mxu0
    %v532 = vadd.f32 0.0, %v531
    %v533 = vpop.f32.mrf.mxu0
    %v534 = vadd.f32 0.0, %v533
    %535 = vmatmul.bf16.gmra.mxu0 %v415
    %v536 = vpop.f32.mrf.mxu0
    %v537 = vadd.f32 0.0, %v536
    %v538 = vpop.f32.mrf.mxu0
    %v539 = vadd.f32 0.0, %v538
    %540 = vmatmul.bf16.gmra.mxu0 %v416
    %v541 = vpop.f32.mrf.mxu0
    %v542 = vadd.f32 0.0, %v541
    %v543 = vpop.f32.mrf.mxu0
    %v544 = vadd.f32 0.0, %v543
    %545 = vmatmul.bf16.gmra.mxu0 %v417
    %v546 = vpop.f32.mrf.mxu0
    %v547 = vadd.f32 0.0, %v546
    %v548 = vpop.f32.mrf.mxu0
    %v549 = vadd.f32 0.0, %v548
    %550 = vmatmul.bf16.gmra.mxu0 %v418
    %v551 = vpop.f32.mrf.mxu0
    %v552 = vadd.f32 0.0, %v551
    %v553 = vpop.f32.mrf.mxu0
    %v554 = vadd.f32 0.0, %v553
    %555 = vmatmul.bf16.gmra.mxu0 %v419
    %v556 = vpop.f32.mrf.mxu0
    %v557 = vadd.f32 0.0, %v556
    %v558 = vpop.f32.mrf.mxu0
    %v559 = vadd.f32 0.0, %v558
    %560 = vmatmul.bf16.gmra.mxu0 %v420
    %v561 = vpop.f32.mrf.mxu0
    %v562 = vadd.f32 0.0, %v561
    %v563 = vpop.f32.mrf.mxu0
    %v564 = vadd.f32 0.0, %v563
    %565 = vmatmul.bf16.gmra.mxu0 %v421
    %v566 = vpop.f32.mrf.mxu0
    %v567 = vadd.f32 0.0, %v566
    %v568 = vpop.f32.mrf.mxu0
    %v569 = vadd.f32 0.0, %v568
    %570 = vmatmul.bf16.gmra.mxu0 %v422
    %v571 = vpop.f32.mrf.mxu0
    %v572 = vadd.f32 0.0, %v571
    %v573 = vpop.f32.mrf.mxu0
    %v574 = vadd.f32 0.0, %v573
    %575 = vdwg.mxu0
    %v608 = vunpack.c.l.b16 %v245
    %v609 = vunpack.c.l.b16 %v246
    %v610 = vunpack.c.l.b16 %v247
    %v611 = vunpack.c.l.b16 %v248
    %v612 = vunpack.c.l.b16 %v249
    %v613 = vunpack.c.l.b16 %v250
    %v614 = vunpack.c.l.b16 %v251
    %v615 = vunpack.c.l.b16 %v252
    %v616 = vunpack.c.l.b16 %v253
    %v617 = vunpack.c.l.b16 %v254
    %v618 = vunpack.c.l.b16 %v255
    %v619 = vunpack.c.l.b16 %v256
    %v620 = vunpack.c.l.b16 %v257
    %v621 = vunpack.c.l.b16 %v258
    %v622 = vunpack.c.l.b16 %v259
    %v623 = vunpack.c.l.b16 %v260
    %v624 = vunpack.c.l.b16 %v261
    %v625 = vunpack.c.l.b16 %v262
    %v626 = vunpack.c.l.b16 %v263
    %v627 = vunpack.c.l.b16 %v264
    %v628 = vunpack.c.l.b16 %v265
    %v629 = vunpack.c.l.b16 %v266
    %v630 = vunpack.c.l.b16 %v267
    %v631 = vunpack.c.l.b16 %v268
    %v632 = vunpack.c.l.b16 %v269
    %v633 = vunpack.c.l.b16 %v270
    %v634 = vunpack.c.l.b16 %v271
    %v635 = vunpack.c.l.b16 %v272
    %v636 = vunpack.c.l.b16 %v273
    %v637 = vunpack.c.l.b16 %v274
    %v638 = vunpack.c.l.b16 %v275
    %v639 = vunpack.c.l.b16 %v276
    %v640 = vpack.c.b16 %v609, %v608
    %v641 = vpack.c.b16 %v611, %v610
    %v642 = vpack.c.b16 %v613, %v612
    %v643 = vpack.c.b16 %v615, %v614
    %v644 = vpack.c.b16 %v617, %v616
    %v645 = vpack.c.b16 %v619, %v618
    %v646 = vpack.c.b16 %v621, %v620
    %v647 = vpack.c.b16 %v623, %v622
    %v648 = vpack.c.b16 %v625, %v624
    %v649 = vpack.c.b16 %v627, %v626
    %v650 = vpack.c.b16 %v629, %v628
    %v651 = vpack.c.b16 %v631, %v630
    %v652 = vpack.c.b16 %v633, %v632
    %v653 = vpack.c.b16 %v635, %v634
    %v654 = vpack.c.b16 %v637, %v636
    %v655 = vpack.c.b16 %v639, %v638
    %v688 = vunpack.c.l.b16 %v277
    %v689 = vunpack.c.l.b16 %v278
    %v690 = vunpack.c.l.b16 %v279
    %v691 = vunpack.c.l.b16 %v280
    %v692 = vunpack.c.l.b16 %v281
    %v693 = vunpack.c.l.b16 %v282
    %v694 = vunpack.c.l.b16 %v283
    %v695 = vunpack.c.l.b16 %v284
    %v696 = vunpack.c.l.b16 %v285
    %v697 = vunpack.c.l.b16 %v286
    %v698 = vunpack.c.l.b16 %v287
    %v699 = vunpack.c.l.b16 %v288
    %v700 = vunpack.c.l.b16 %v289
    %v701 = vunpack.c.l.b16 %v290
    %v702 = vunpack.c.l.b16 %v291
    %v703 = vunpack.c.l.b16 %v292
    %v704 = vpack.c.b16 %v689, %v688
    %v705 = vpack.c.b16 %v691, %v690
    %v706 = vpack.c.b16 %v693, %v692
    %v707 = vpack.c.b16 %v695, %v694
    %v708 = vpack.c.b16 %v697, %v696
    %v709 = vpack.c.b16 %v699, %v698
    %v710 = vpack.c.b16 %v701, %v700
    %v711 = vpack.c.b16 %v703, %v702
    %720 = vmatpush.bf16.msra.mxu0 %v711
    %721 = vmatpush.bf16.msra.mxu0 %v710
    %722 = vmatpush.bf16.msra.mxu0 %v709
    %723 = vmatpush.bf16.msra.mxu0 %v708
    %724 = vmatpush.bf16.msra.mxu0 %v707
    %725 = vmatpush.bf16.msra.mxu0 %v706
    %726 = vmatpush.bf16.msra.mxu0 %v705
    %727 = vmatpush.bf16.msra.mxu0 %v704
    %728 = vmatmul.bf16.gmra.mxu0 %v640
    %v729 = vpop.f32.mrf.mxu0
    %v730 = vadd.f32 %v497, %v729
    %v731 = vpop.f32.mrf.mxu0
    %v732 = vadd.f32 %v499, %v731
    %733 = vmatmul.bf16.gmra.mxu0 %v641
    %v734 = vpop.f32.mrf.mxu0
    %v735 = vadd.f32 %v502, %v734
    %v736 = vpop.f32.mrf.mxu0
    %v737 = vadd.f32 %v504, %v736
    %738 = vmatmul.bf16.gmra.mxu0 %v642
    %v739 = vpop.f32.mrf.mxu0
    %v740 = vadd.f32 %v507, %v739
    %v741 = vpop.f32.mrf.mxu0
    %v742 = vadd.f32 %v509, %v741
    %743 = vmatmul.bf16.gmra.mxu0 %v643
    %v744 = vpop.f32.mrf.mxu0
    %v745 = vadd.f32 %v512, %v744
    %v746 = vpop.f32.mrf.mxu0
    %v747 = vadd.f32 %v514, %v746
    %748 = vmatmul.bf16.gmra.mxu0 %v644
    %v749 = vpop.f32.mrf.mxu0
    %v750 = vadd.f32 %v517, %v749
    %v751 = vpop.f32.mrf.mxu0
    %v752 = vadd.f32 %v519, %v751
    %753 = vmatmul.bf16.gmra.mxu0 %v645
    %v754 = vpop.f32.mrf.mxu0
    %v755 = vadd.f32 %v522, %v754
    %v756 = vpop.f32.mrf.mxu0
    %v757 = vadd.f32 %v524, %v756
    %758 = vmatmul.bf16.gmra.mxu0 %v646
    %v759 = vpop.f32.mrf.mxu0
    %v760 = vadd.f32 %v527, %v759
    %v761 = vpop.f32.mrf.mxu0
    %v762 = vadd.f32 %v529, %v761
    %763 = vmatmul.bf16.gmra.mxu0 %v647
    %v764 = vpop.f32.mrf.mxu0
    %v765 = vadd.f32 %v532, %v764
    %v766 = vpop.f32.mrf.mxu0
    %v767 = vadd.f32 %v534, %v766
    %768 = vmatmul.bf16.gmra.mxu0 %v648
    %v769 = vpop.f32.mrf.mxu0
    %v770 = vadd.f32 %v537, %v769
    %v771 = vpop.f32.mrf.mxu0
    %v772 = vadd.f32 %v539, %v771
    %773 = vmatmul.bf16.gmra.mxu0 %v649
    %v774 = vpop.f32.mrf.mxu0
    %v775 = vadd.f32 %v542, %v774
    %v776 = vpop.f32.mrf.mxu0
    %v777 = vadd.f32 %v544, %v776
    %778 = vmatmul.bf16.gmra.mxu0 %v650
    %v779 = vpop.f32.mrf.mxu0
    %v780 = vadd.f32 %v547, %v779
    %v781 = vpop.f32.mrf.mxu0
    %v782 = vadd.f32 %v549, %v781
    %783 = vmatmul.bf16.gmra.mxu0 %v651
    %v784 = vpop.f32.mrf.mxu0
    %v785 = vadd.f32 %v552, %v784
    %v786 = vpop.f32.mrf.mxu0
    %v787 = vadd.f32 %v554, %v786
    %788 = vmatmul.bf16.gmra.mxu0 %v652
    %v789 = vpop.f32.mrf.mxu0
    %v790 = vadd.f32 %v557, %v789
    %v791 = vpop.f32.mrf.mxu0
    %v792 = vadd.f32 %v559, %v791
    %793 = vmatmul.bf16.gmra.mxu0 %v653
    %v794 = vpop.f32.mrf.mxu0
    %v795 = vadd.f32 %v562, %v794
    %v796 = vpop.f32.mrf.mxu0
    %v797 = vadd.f32 %v564, %v796
    %798 = vmatmul.bf16.gmra.mxu0 %v654
    %v799 = vpop.f32.mrf.mxu0
    %v800 = vadd.f32 %v567, %v799
    %v801 = vpop.f32.mrf.mxu0
    %v802 = vadd.f32 %v569, %v801
    %803 = vmatmul.bf16.gmra.mxu0 %v655
    %v804 = vpop.f32.mrf.mxu0
    %v805 = vadd.f32 %v572, %v804
    %v806 = vpop.f32.mrf.mxu0
    %v807 = vadd.f32 %v574, %v806
    %808 = vdwg.mxu0
    %s809 = scalar_lea.vmem [#allocation2], 40
    %v810 = vld [vmem:[%s809] sm:$0xf]
    %v811 = vld [vmem:[%s809 + $0x4] sm:$0xf]
    %v812 = vld [vmem:[%s809 + $0x8] sm:$0xf]
    %v813 = vld [vmem:[%s809 + $0xc] sm:$0xf]
    %v814 = vld [vmem:[%s809 + $0x10] sm:$0xf]
    %v815 = vld [vmem:[%s809 + $0x14] sm:$0xf]
    %v816 = vld [vmem:[%s809 + $0x18] sm:$0xf]
    %v817 = vld [vmem:[%s809 + $0x1c] sm:$0xf]
    %v818 = vld [vmem:[%s809 + $0x20] sm:$0xf]
    %v819 = vld [vmem:[%s809 + $0x24] sm:$0xf]
    %v820 = vld [vmem:[%s809 + $0x28] sm:$0xf]
    %v821 = vld [vmem:[%s809 + $0x2c] sm:$0xf]
    %v822 = vld [vmem:[%s809 + $0x30] sm:$0xf]
    %v823 = vld [vmem:[%s809 + $0x34] sm:$0xf]
    %v824 = vld [vmem:[%s809 + $0x38] sm:$0xf]
    %v825 = vld [vmem:[%s809 + $0x3c] sm:$0xf]
    %v826 = vld [vmem:[%s809 + $0x40] sm:$0xf]
    %v827 = vld [vmem:[%s809 + $0x44] sm:$0xf]
    %v828 = vld [vmem:[%s809 + $0x48] sm:$0xf]
    %v829 = vld [vmem:[%s809 + $0x4c] sm:$0xf]
    %v830 = vld [vmem:[%s809 + $0x50] sm:$0xf]
    %v831 = vld [vmem:[%s809 + $0x54] sm:$0xf]
    %v832 = vld [vmem:[%s809 + $0x58] sm:$0xf]
    %v833 = vld [vmem:[%s809 + $0x5c] sm:$0xf]
    %v834 = vld [vmem:[%s809 + $0x60] sm:$0xf]
    %v835 = vld [vmem:[%s809 + $0x64] sm:$0xf]
    %v836 = vld [vmem:[%s809 + $0x68] sm:$0xf]
    %v837 = vld [vmem:[%s809 + $0x6c] sm:$0xf]
    %v838 = vld [vmem:[%s809 + $0x70] sm:$0xf]
    %v839 = vld [vmem:[%s809 + $0x74] sm:$0xf]
    %v840 = vld [vmem:[%s809 + $0x78] sm:$0xf]
    %v841 = vld [vmem:[%s809 + $0x7c] sm:$0xf]
    %s842 = scalar_lea.vmem [#allocation7], 128
    %v843 = vld [vmem:[%s842] sm:$0xf]
    %v844 = vld [vmem:[%s842 + $0x4] sm:$0xf]
    %v845 = vld [vmem:[%s842 + $0x8] sm:$0xf]
    %v846 = vld [vmem:[%s842 + $0xc] sm:$0xf]
    %v847 = vld [vmem:[%s842 + $0x10] sm:$0xf]
    %v848 = vld [vmem:[%s842 + $0x14] sm:$0xf]
    %v849 = vld [vmem:[%s842 + $0x18] sm:$0xf]
    %v850 = vld [vmem:[%s842 + $0x1c] sm:$0xf]
    %v851 = vld [vmem:[%s842 + $0x20] sm:$0xf]
    %v852 = vld [vmem:[%s842 + $0x24] sm:$0xf]
    %v853 = vld [vmem:[%s842 + $0x28] sm:$0xf]
    %v854 = vld [vmem:[%s842 + $0x2c] sm:$0xf]
    %v855 = vld [vmem:[%s842 + $0x30] sm:$0xf]
    %v856 = vld [vmem:[%s842 + $0x34] sm:$0xf]
    %v857 = vld [vmem:[%s842 + $0x38] sm:$0xf]
    %v858 = vld [vmem:[%s842 + $0x3c] sm:$0xf]
    %v891 = vunpack.c.l.b16 %v810
    %v892 = vunpack.c.l.b16 %v811
    %v893 = vunpack.c.l.b16 %v812
    %v894 = vunpack.c.l.b16 %v813
    %v895 = vunpack.c.l.b16 %v814
    %v896 = vunpack.c.l.b16 %v815
    %v897 = vunpack.c.l.b16 %v816
    %v898 = vunpack.c.l.b16 %v817
    %v899 = vunpack.c.l.b16 %v818
    %v900 = vunpack.c.l.b16 %v819
    %v901 = vunpack.c.l.b16 %v820
    %v902 = vunpack.c.l.b16 %v821
    %v903 = vunpack.c.l.b16 %v822
    %v904 = vunpack.c.l.b16 %v823
    %v905 = vunpack.c.l.b16 %v824
    %v906 = vunpack.c.l.b16 %v825
    %v907 = vunpack.c.l.b16 %v826
    %v908 = vunpack.c.l.b16 %v827
    %v909 = vunpack.c.l.b16 %v828
    %v910 = vunpack.c.l.b16 %v829
    %v911 = vunpack.c.l.b16 %v830
    %v912 = vunpack.c.l.b16 %v831
    %v913 = vunpack.c.l.b16 %v832
    %v914 = vunpack.c.l.b16 %v833
    %v915 = vunpack.c.l.b16 %v834
    %v916 = vunpack.c.l.b16 %v835
    %v917 = vunpack.c.l.b16 %v836
    %v918 = vunpack.c.l.b16 %v837
    %v919 = vunpack.c.l.b16 %v838
    %v920 = vunpack.c.l.b16 %v839
    %v921 = vunpack.c.l.b16 %v840
    %v922 = vunpack.c.l.b16 %v841
    %v923 = vpack.c.b16 %v892, %v891
    %v924 = vpack.c.b16 %v894, %v893
    %v925 = vpack.c.b16 %v896, %v895
    %v926 = vpack.c.b16 %v898, %v897
    %v927 = vpack.c.b16 %v900, %v899
    %v928 = vpack.c.b16 %v902, %v901
    %v929 = vpack.c.b16 %v904, %v903
    %v930 = vpack.c.b16 %v906, %v905
    %v931 = vpack.c.b16 %v908, %v907
    %v932 = vpack.c.b16 %v910, %v909
    %v933 = vpack.c.b16 %v912, %v911
    %v934 = vpack.c.b16 %v914, %v913
    %v935 = vpack.c.b16 %v916, %v915
    %v936 = vpack.c.b16 %v918, %v917
    %v937 = vpack.c.b16 %v920, %v919
    %v938 = vpack.c.b16 %v922, %v921
    %v971 = vunpack.c.l.b16 %v843
    %v972 = vunpack.c.l.b16 %v844
    %v973 = vunpack.c.l.b16 %v845
    %v974 = vunpack.c.l.b16 %v846
    %v975 = vunpack.c.l.b16 %v847
    %v976 = vunpack.c.l.b16 %v848
    %v977 = vunpack.c.l.b16 %v849
    %v978 = vunpack.c.l.b16 %v850
    %v979 = vunpack.c.l.b16 %v851
    %v980 = vunpack.c.l.b16 %v852
    %v981 = vunpack.c.l.b16 %v853
    %v982 = vunpack.c.l.b16 %v854
    %v983 = vunpack.c.l.b16 %v855
    %v984 = vunpack.c.l.b16 %v856
    %v985 = vunpack.c.l.b16 %v857
    %v986 = vunpack.c.l.b16 %v858
    %v987 = vpack.c.b16 %v972, %v971
    %v988 = vpack.c.b16 %v974, %v973
    %v989 = vpack.c.b16 %v976, %v975
    %v990 = vpack.c.b16 %v978, %v977
    %v991 = vpack.c.b16 %v980, %v979
    %v992 = vpack.c.b16 %v982, %v981
    %v993 = vpack.c.b16 %v984, %v983
    %v994 = vpack.c.b16 %v986, %v985
    %1003 = vmatpush.bf16.msra.mxu0 %v994
    %1004 = vmatpush.bf16.msra.mxu0 %v993
    %1005 = vmatpush.bf16.msra.mxu0 %v992
    %1006 = vmatpush.bf16.msra.mxu0 %v991
    %1007 = vmatpush.bf16.msra.mxu0 %v990
    %1008 = vmatpush.bf16.msra.mxu0 %v989
    %1009 = vmatpush.bf16.msra.mxu0 %v988
    %1010 = vmatpush.bf16.msra.mxu0 %v987
    %1011 = vmatmul.bf16.gmra.mxu0 %v923
    %v1012 = vpop.f32.mrf.mxu0
    %v1013 = vadd.f32 0.0, %v1012
    %v1014 = vpop.f32.mrf.mxu0
    %v1015 = vadd.f32 0.0, %v1014
    %1016 = vmatmul.bf16.gmra.mxu0 %v924
    %v1017 = vpop.f32.mrf.mxu0
    %v1018 = vadd.f32 0.0, %v1017
    %v1019 = vpop.f32.mrf.mxu0
    %v1020 = vadd.f32 0.0, %v1019
    %1021 = vmatmul.bf16.gmra.mxu0 %v925
    %v1022 = vpop.f32.mrf.mxu0
    %v1023 = vadd.f32 0.0, %v1022
    %v1024 = vpop.f32.mrf.mxu0
    %v1025 = vadd.f32 0.0, %v1024
    %1026 = vmatmul.bf16.gmra.mxu0 %v926
    %v1027 = vpop.f32.mrf.mxu0
    %v1028 = vadd.f32 0.0, %v1027
    %v1029 = vpop.f32.mrf.mxu0
    %v1030 = vadd.f32 0.0, %v1029
    %1031 = vmatmul.bf16.gmra.mxu0 %v927
    %v1032 = vpop.f32.mrf.mxu0
    %v1033 = vadd.f32 0.0, %v1032
    %v1034 = vpop.f32.mrf.mxu0
    %v1035 = vadd.f32 0.0, %v1034
    %1036 = vmatmul.bf16.gmra.mxu0 %v928
    %v1037 = vpop.f32.mrf.mxu0
    %v1038 = vadd.f32 0.0, %v1037
    %v1039 = vpop.f32.mrf.mxu0
    %v1040 = vadd.f32 0.0, %v1039
    %1041 = vmatmul.bf16.gmra.mxu0 %v929
    %v1042 = vpop.f32.mrf.mxu0
    %v1043 = vadd.f32 0.0, %v1042
    %v1044 = vpop.f32.mrf.mxu0
    %v1045 = vadd.f32 0.0, %v1044
    %1046 = vmatmul.bf16.gmra.mxu0 %v930
    %v1047 = vpop.f32.mrf.mxu0
    %v1048 = vadd.f32 0.0, %v1047
    %v1049 = vpop.f32.mrf.mxu0
    %v1050 = vadd.f32 0.0, %v1049
    %1051 = vmatmul.bf16.gmra.mxu0 %v931
    %v1052 = vpop.f32.mrf.mxu0
    %v1053 = vadd.f32 0.0, %v1052
    %v1054 = vpop.f32.mrf.mxu0
    %v1055 = vadd.f32 0.0, %v1054
    %1056 = vmatmul.bf16.gmra.mxu0 %v932
    %v1057 = vpop.f32.mrf.mxu0
    %v1058 = vadd.f32 0.0, %v1057
    %v1059 = vpop.f32.mrf.mxu0
    %v1060 = vadd.f32 0.0, %v1059
    %1061 = vmatmul.bf16.gmra.mxu0 %v933
    %v1062 = vpop.f32.mrf.mxu0
    %v1063 = vadd.f32 0.0, %v1062
    %v1064 = vpop.f32.mrf.mxu0
    %v1065 = vadd.f32 0.0, %v1064
    %1066 = vmatmul.bf16.gmra.mxu0 %v934
    %v1067 = vpop.f32.mrf.mxu0
    %v1068 = vadd.f32 0.0, %v1067
    %v1069 = vpop.f32.mrf.mxu0
    %v1070 = vadd.f32 0.0, %v1069
    %1071 = vmatmul.bf16.gmra.mxu0 %v935
    %v1072 = vpop.f32.mrf.mxu0
    %v1073 = vadd.f32 0.0, %v1072
    %v1074 = vpop.f32.mrf.mxu0
    %v1075 = vadd.f32 0.0, %v1074
    %1076 = vmatmul.bf16.gmra.mxu0 %v936
    %v1077 = vpop.f32.mrf.mxu0
    %v1078 = vadd.f32 0.0, %v1077
    %v1079 = vpop.f32.mrf.mxu0
    %v1080 = vadd.f32 0.0, %v1079
    %1081 = vmatmul.bf16.gmra.mxu0 %v937
    %v1082 = vpop.f32.mrf.mxu0
    %v1083 = vadd.f32 0.0, %v1082
    %v1084 = vpop.f32.mrf.mxu0
    %v1085 = vadd.f32 0.0, %v1084
    %1086 = vmatmul.bf16.gmra.mxu0 %v938
    %v1087 = vpop.f32.mrf.mxu0
    %v1088 = vadd.f32 0.0, %v1087
    %v1089 = vpop.f32.mrf.mxu0
    %v1090 = vadd.f32 0.0, %v1089
    %1091 = vdwg.mxu0
    %v1092 = vadd.f32 %v730, %v1013
    %v1093 = vadd.f32 %v732, %v1015
    %v1094 = vadd.f32 %v735, %v1018
    %v1095 = vadd.f32 %v737, %v1020
    %v1096 = vadd.f32 %v740, %v1023
    %v1097 = vadd.f32 %v742, %v1025
    %v1098 = vadd.f32 %v745, %v1028
    %v1099 = vadd.f32 %v747, %v1030
    %v1100 = vadd.f32 %v750, %v1033
    %v1101 = vadd.f32 %v752, %v1035
    %v1102 = vadd.f32 %v755, %v1038
    %v1103 = vadd.f32 %v757, %v1040
    %v1104 = vadd.f32 %v760, %v1043
    %v1105 = vadd.f32 %v762, %v1045
    %v1106 = vadd.f32 %v765, %v1048
    %v1107 = vadd.f32 %v767, %v1050
    %v1108 = vadd.f32 %v770, %v1053
    %v1109 = vadd.f32 %v772, %v1055
    %v1110 = vadd.f32 %v775, %v1058
    %v1111 = vadd.f32 %v777, %v1060
    %v1112 = vadd.f32 %v780, %v1063
    %v1113 = vadd.f32 %v782, %v1065
    %v1114 = vadd.f32 %v785, %v1068
    %v1115 = vadd.f32 %v787, %v1070
    %v1116 = vadd.f32 %v790, %v1073
    %v1117 = vadd.f32 %v792, %v1075
    %v1118 = vadd.f32 %v795, %v1078
    %v1119 = vadd.f32 %v797, %v1080
    %v1120 = vadd.f32 %v800, %v1083
    %v1121 = vadd.f32 %v802, %v1085
    %v1122 = vadd.f32 %v805, %v1088
    %v1123 = vadd.f32 %v807, %v1090
    %v1124 = vld [vmem:[%s211] sm:$0xf]
    %v1125 = vld [vmem:[%s211 + $0x4] sm:$0xf]
    %v1126 = vld [vmem:[%s211 + $0x8] sm:$0xf]
    %v1127 = vld [vmem:[%s211 + $0xc] sm:$0xf]
    %v1128 = vld [vmem:[%s211 + $0x10] sm:$0xf]
    %v1129 = vld [vmem:[%s211 + $0x14] sm:$0xf]
    %v1130 = vld [vmem:[%s211 + $0x18] sm:$0xf]
    %v1131 = vld [vmem:[%s211 + $0x1c] sm:$0xf]
    %v1132 = vld [vmem:[%s211 + $0x20] sm:$0xf]
    %v1133 = vld [vmem:[%s211 + $0x24] sm:$0xf]
    %v1134 = vld [vmem:[%s211 + $0x28] sm:$0xf]
    %v1135 = vld [vmem:[%s211 + $0x2c] sm:$0xf]
    %v1136 = vld [vmem:[%s211 + $0x30] sm:$0xf]
    %v1137 = vld [vmem:[%s211 + $0x34] sm:$0xf]
    %v1138 = vld [vmem:[%s211 + $0x38] sm:$0xf]
    %v1139 = vld [vmem:[%s211 + $0x3c] sm:$0xf]
    %v1140 = vld [vmem:[%s211 + $0x40] sm:$0xf]
    %v1141 = vld [vmem:[%s211 + $0x44] sm:$0xf]
    %v1142 = vld [vmem:[%s211 + $0x48] sm:$0xf]
    %v1143 = vld [vmem:[%s211 + $0x4c] sm:$0xf]
    %v1144 = vld [vmem:[%s211 + $0x50] sm:$0xf]
    %v1145 = vld [vmem:[%s211 + $0x54] sm:$0xf]
    %v1146 = vld [vmem:[%s211 + $0x58] sm:$0xf]
    %v1147 = vld [vmem:[%s211 + $0x5c] sm:$0xf]
    %v1148 = vld [vmem:[%s211 + $0x60] sm:$0xf]
    %v1149 = vld [vmem:[%s211 + $0x64] sm:$0xf]
    %v1150 = vld [vmem:[%s211 + $0x68] sm:$0xf]
    %v1151 = vld [vmem:[%s211 + $0x6c] sm:$0xf]
    %v1152 = vld [vmem:[%s211 + $0x70] sm:$0xf]
    %v1153 = vld [vmem:[%s211 + $0x74] sm:$0xf]
    %v1154 = vld [vmem:[%s211 + $0x78] sm:$0xf]
    %v1155 = vld [vmem:[%s211 + $0x7c] sm:$0xf]
    %s1156 = scalar_lea.vmem [#allocation7], 192
    %v1157 = vld [vmem:[%s1156] sm:$0xf]
    %v1158 = vld [vmem:[%s1156 + $0x4] sm:$0xf]
    %v1159 = vld [vmem:[%s1156 + $0x8] sm:$0xf]
    %v1160 = vld [vmem:[%s1156 + $0xc] sm:$0xf]
    %v1161 = vld [vmem:[%s1156 + $0x10] sm:$0xf]
    %v1162 = vld [vmem:[%s1156 + $0x14] sm:$0xf]
    %v1163 = vld [vmem:[%s1156 + $0x18] sm:$0xf]
    %v1164 = vld [vmem:[%s1156 + $0x1c] sm:$0xf]
    %v1165 = vld [vmem:[%s1156 + $0x20] sm:$0xf]
    %v1166 = vld [vmem:[%s1156 + $0x24] sm:$0xf]
    %v1167 = vld [vmem:[%s1156 + $0x28] sm:$0xf]
    %v1168 = vld [vmem:[%s1156 + $0x2c] sm:$0xf]
    %v1169 = vld [vmem:[%s1156 + $0x30] sm:$0xf]
    %v1170 = vld [vmem:[%s1156 + $0x34] sm:$0xf]
    %v1171 = vld [vmem:[%s1156 + $0x38] sm:$0xf]
    %v1172 = vld [vmem:[%s1156 + $0x3c] sm:$0xf]
    %v1205 = vunpack.c.l.b16 %v1124
    %v1206 = vunpack.c.l.b16 %v1125
    %v1207 = vunpack.c.l.b16 %v1126
    %v1208 = vunpack.c.l.b16 %v1127
    %v1209 = vunpack.c.l.b16 %v1128
    %v1210 = vunpack.c.l.b16 %v1129
    %v1211 = vunpack.c.l.b16 %v1130
    %v1212 = vunpack.c.l.b16 %v1131
    %v1213 = vunpack.c.l.b16 %v1132
    %v1214 = vunpack.c.l.b16 %v1133
    %v1215 = vunpack.c.l.b16 %v1134
    %v1216 = vunpack.c.l.b16 %v1135
    %v1217 = vunpack.c.l.b16 %v1136
    %v1218 = vunpack.c.l.b16 %v1137
    %v1219 = vunpack.c.l.b16 %v1138
    %v1220 = vunpack.c.l.b16 %v1139
    %v1221 = vunpack.c.l.b16 %v1140
    %v1222 = vunpack.c.l.b16 %v1141
    %v1223 = vunpack.c.l.b16 %v1142
    %v1224 = vunpack.c.l.b16 %v1143
    %v1225 = vunpack.c.l.b16 %v1144
    %v1226 = vunpack.c.l.b16 %v1145
    %v1227 = vunpack.c.l.b16 %v1146
    %v1228 = vunpack.c.l.b16 %v1147
    %v1229 = vunpack.c.l.b16 %v1148
    %v1230 = vunpack.c.l.b16 %v1149
    %v1231 = vunpack.c.l.b16 %v1150
    %v1232 = vunpack.c.l.b16 %v1151
    %v1233 = vunpack.c.l.b16 %v1152
    %v1234 = vunpack.c.l.b16 %v1153
    %v1235 = vunpack.c.l.b16 %v1154
    %v1236 = vunpack.c.l.b16 %v1155
    %v1237 = vpack.c.b16 %v1206, %v1205
    %v1238 = vpack.c.b16 %v1208, %v1207
    %v1239 = vpack.c.b16 %v1210, %v1209
    %v1240 = vpack.c.b16 %v1212, %v1211
    %v1241 = vpack.c.b16 %v1214, %v1213
    %v1242 = vpack.c.b16 %v1216, %v1215
    %v1243 = vpack.c.b16 %v1218, %v1217
    %v1244 = vpack.c.b16 %v1220, %v1219
    %v1245 = vpack.c.b16 %v1222, %v1221
    %v1246 = vpack.c.b16 %v1224, %v1223
    %v1247 = vpack.c.b16 %v1226, %v1225
    %v1248 = vpack.c.b16 %v1228, %v1227
    %v1249 = vpack.c.b16 %v1230, %v1229
    %v1250 = vpack.c.b16 %v1232, %v1231
    %v1251 = vpack.c.b16 %v1234, %v1233
    %v1252 = vpack.c.b16 %v1236, %v1235
    %v1285 = vunpack.c.l.b16 %v1157
    %v1286 = vunpack.c.l.b16 %v1158
    %v1287 = vunpack.c.l.b16 %v1159
    %v1288 = vunpack.c.l.b16 %v1160
    %v1289 = vunpack.c.l.b16 %v1161
    %v1290 = vunpack.c.l.b16 %v1162
    %v1291 = vunpack.c.l.b16 %v1163
    %v1292 = vunpack.c.l.b16 %v1164
    %v1293 = vunpack.c.l.b16 %v1165
    %v1294 = vunpack.c.l.b16 %v1166
    %v1295 = vunpack.c.l.b16 %v1167
    %v1296 = vunpack.c.l.b16 %v1168
    %v1297 = vunpack.c.l.b16 %v1169
    %v1298 = vunpack.c.l.b16 %v1170
    %v1299 = vunpack.c.l.b16 %v1171
    %v1300 = vunpack.c.l.b16 %v1172
    %v1301 = vpack.c.b16 %v1286, %v1285
    %v1302 = vpack.c.b16 %v1288, %v1287
    %v1303 = vpack.c.b16 %v1290, %v1289
    %v1304 = vpack.c.b16 %v1292, %v1291
    %v1305 = vpack.c.b16 %v1294, %v1293
    %v1306 = vpack.c.b16 %v1296, %v1295
    %v1307 = vpack.c.b16 %v1298, %v1297
    %v1308 = vpack.c.b16 %v1300, %v1299
    %1317 = vmatpush.bf16.msra.mxu0 %v1308
    %1318 = vmatpush.bf16.msra.mxu0 %v1307
    %1319 = vmatpush.bf16.msra.mxu0 %v1306
    %1320 = vmatpush.bf16.msra.mxu0 %v1305
    %1321 = vmatpush.bf16.msra.mxu0 %v1304
    %1322 = vmatpush.bf16.msra.mxu0 %v1303
    %1323 = vmatpush.bf16.msra.mxu0 %v1302
    %1324 = vmatpush.bf16.msra.mxu0 %v1301
    %1325 = vmatmul.bf16.gmra.mxu0 %v1237
    %v1326 = vpop.f32.mrf.mxu0
    %v1327 = vadd.f32 0.0, %v1326
    %v1328 = vpop.f32.mrf.mxu0
    %v1329 = vadd.f32 0.0, %v1328
    %1330 = vmatmul.bf16.gmra.mxu0 %v1238
    %v1331 = vpop.f32.mrf.mxu0
    %v1332 = vadd.f32 0.0, %v1331
    %v1333 = vpop.f32.mrf.mxu0
    %v1334 = vadd.f32 0.0, %v1333
    %1335 = vmatmul.bf16.gmra.mxu0 %v1239
    %v1336 = vpop.f32.mrf.mxu0
    %v1337 = vadd.f32 0.0, %v1336
    %v1338 = vpop.f32.mrf.mxu0
    %v1339 = vadd.f32 0.0, %v1338
    %1340 = vmatmul.bf16.gmra.mxu0 %v1240
    %v1341 = vpop.f32.mrf.mxu0
    %v1342 = vadd.f32 0.0, %v1341
    %v1343 = vpop.f32.mrf.mxu0
    %v1344 = vadd.f32 0.0, %v1343
    %1345 = vmatmul.bf16.gmra.mxu0 %v1241
    %v1346 = vpop.f32.mrf.mxu0
    %v1347 = vadd.f32 0.0, %v1346
    %v1348 = vpop.f32.mrf.mxu0
    %v1349 = vadd.f32 0.0, %v1348
    %1350 = vmatmul.bf16.gmra.mxu0 %v1242
    %v1351 = vpop.f32.mrf.mxu0
    %v1352 = vadd.f32 0.0, %v1351
    %v1353 = vpop.f32.mrf.mxu0
    %v1354 = vadd.f32 0.0, %v1353
    %1355 = vmatmul.bf16.gmra.mxu0 %v1243
    %v1356 = vpop.f32.mrf.mxu0
    %v1357 = vadd.f32 0.0, %v1356
    %v1358 = vpop.f32.mrf.mxu0
    %v1359 = vadd.f32 0.0, %v1358
    %1360 = vmatmul.bf16.gmra.mxu0 %v1244
    %v1361 = vpop.f32.mrf.mxu0
    %v1362 = vadd.f32 0.0, %v1361
    %v1363 = vpop.f32.mrf.mxu0
    %v1364 = vadd.f32 0.0, %v1363
    %1365 = vmatmul.bf16.gmra.mxu0 %v1245
    %v1366 = vpop.f32.mrf.mxu0
    %v1367 = vadd.f32 0.0, %v1366
    %v1368 = vpop.f32.mrf.mxu0
    %v1369 = vadd.f32 0.0, %v1368
    %1370 = vmatmul.bf16.gmra.mxu0 %v1246
    %v1371 = vpop.f32.mrf.mxu0
    %v1372 = vadd.f32 0.0, %v1371
    %v1373 = vpop.f32.mrf.mxu0
    %v1374 = vadd.f32 0.0, %v1373
    %1375 = vmatmul.bf16.gmra.mxu0 %v1247
    %v1376 = vpop.f32.mrf.mxu0
    %v1377 = vadd.f32 0.0, %v1376
    %v1378 = vpop.f32.mrf.mxu0
    %v1379 = vadd.f32 0.0, %v1378
    %1380 = vmatmul.bf16.gmra.mxu0 %v1248
    %v1381 = vpop.f32.mrf.mxu0
    %v1382 = vadd.f32 0.0, %v1381
    %v1383 = vpop.f32.mrf.mxu0
    %v1384 = vadd.f32 0.0, %v1383
    %1385 = vmatmul.bf16.gmra.mxu0 %v1249
    %v1386 = vpop.f32.mrf.mxu0
    %v1387 = vadd.f32 0.0, %v1386
    %v1388 = vpop.f32.mrf.mxu0
    %v1389 = vadd.f32 0.0, %v1388
    %1390 = vmatmul.bf16.gmra.mxu0 %v1250
    %v1391 = vpop.f32.mrf.mxu0
    %v1392 = vadd.f32 0.0, %v1391
    %v1393 = vpop.f32.mrf.mxu0
    %v1394 = vadd.f32 0.0, %v1393
    %1395 = vmatmul.bf16.gmra.mxu0 %v1251
    %v1396 = vpop.f32.mrf.mxu0
    %v1397 = vadd.f32 0.0, %v1396
    %v1398 = vpop.f32.mrf.mxu0
    %v1399 = vadd.f32 0.0, %v1398
    %1400 = vmatmul.bf16.gmra.mxu0 %v1252
    %v1401 = vpop.f32.mrf.mxu0
    %v1402 = vadd.f32 0.0, %v1401
    %v1403 = vpop.f32.mrf.mxu0
    %v1404 = vadd.f32 0.0, %v1403
    %1405 = vdwg.mxu0
    %v1406 = vadd.f32 %v1092, %v1327
    %v1407 = vadd.f32 %v1093, %v1329
    %v1408 = vadd.f32 %v1094, %v1332
    %v1409 = vadd.f32 %v1095, %v1334
    %v1410 = vadd.f32 %v1096, %v1337
    %v1411 = vadd.f32 %v1097, %v1339
    %v1412 = vadd.f32 %v1098, %v1342
    %v1413 = vadd.f32 %v1099, %v1344
    %v1414 = vadd.f32 %v1100, %v1347
    %v1415 = vadd.f32 %v1101, %v1349
    %v1416 = vadd.f32 %v1102, %v1352
    %v1417 = vadd.f32 %v1103, %v1354
    %v1418 = vadd.f32 %v1104, %v1357
    %v1419 = vadd.f32 %v1105, %v1359
    %v1420 = vadd.f32 %v1106, %v1362
    %v1421 = vadd.f32 %v1107, %v1364
    %v1422 = vadd.f32 %v1108, %v1367
    %v1423 = vadd.f32 %v1109, %v1369
    %v1424 = vadd.f32 %v1110, %v1372
    %v1425 = vadd.f32 %v1111, %v1374
    %v1426 = vadd.f32 %v1112, %v1377
    %v1427 = vadd.f32 %v1113, %v1379
    %v1428 = vadd.f32 %v1114, %v1382
    %v1429 = vadd.f32 %v1115, %v1384
    %v1430 = vadd.f32 %v1116, %v1387
    %v1431 = vadd.f32 %v1117, %v1389
    %v1432 = vadd.f32 %v1118, %v1392
    %v1433 = vadd.f32 %v1119, %v1394
    %v1434 = vadd.f32 %v1120, %v1397
    %v1435 = vadd.f32 %v1121, %v1399
    %v1436 = vadd.f32 %v1122, %v1402
    %v1437 = vadd.f32 %v1123, %v1404
    %v1438 = vld [vmem:[%s2] sm:$0x1]
    %v1440 = vperm.slane %v1438, 0
    %v1442 = vadd.f32 %v1406, %v1440
    %v1443 = vadd.f32 %v1407, %v1440
    %v1444 = vadd.f32 %v1408, %v1440
    %v1445 = vadd.f32 %v1409, %v1440
    %v1446 = vadd.f32 %v1410, %v1440
    %v1447 = vadd.f32 %v1411, %v1440
    %v1448 = vadd.f32 %v1412, %v1440
    %v1449 = vadd.f32 %v1413, %v1440
    %v1450 = vadd.f32 %v1414, %v1440
    %v1451 = vadd.f32 %v1415, %v1440
    %v1452 = vadd.f32 %v1416, %v1440
    %v1453 = vadd.f32 %v1417, %v1440
    %v1454 = vadd.f32 %v1418, %v1440
    %v1455 = vadd.f32 %v1419, %v1440
    %v1456 = vadd.f32 %v1420, %v1440
    %v1457 = vadd.f32 %v1421, %v1440
    %v1458 = vadd.f32 %v1422, %v1440
    %v1459 = vadd.f32 %v1423, %v1440
    %v1460 = vadd.f32 %v1424, %v1440
    %v1461 = vadd.f32 %v1425, %v1440
    %v1462 = vadd.f32 %v1426, %v1440
    %v1463 = vadd.f32 %v1427, %v1440
    %v1464 = vadd.f32 %v1428, %v1440
    %v1465 = vadd.f32 %v1429, %v1440
    %v1466 = vadd.f32 %v1430, %v1440
    %v1467 = vadd.f32 %v1431, %v1440
    %v1468 = vadd.f32 %v1432, %v1440
    %v1469 = vadd.f32 %v1433, %v1440
    %v1470 = vadd.f32 %v1434, %v1440
    %v1471 = vadd.f32 %v1435, %v1440
    %v1472 = vadd.f32 %v1436, %v1440
    %v1473 = vadd.f32 %v1437, %v1440
    %v1474 = vmax.f32 %v1442, 0.0
    %v1475 = vmax.f32 %v1443, 0.0
    %v1476 = vmax.f32 %v1444, 0.0
    %v1477 = vmax.f32 %v1445, 0.0
    %v1478 = vmax.f32 %v1446, 0.0
    %v1479 = vmax.f32 %v1447, 0.0
    %v1480 = vmax.f32 %v1448, 0.0
    %v1481 = vmax.f32 %v1449, 0.0
    %v1482 = vmax.f32 %v1450, 0.0
    %v1483 = vmax.f32 %v1451, 0.0
    %v1484 = vmax.f32 %v1452, 0.0
    %v1485 = vmax.f32 %v1453, 0.0
    %v1486 = vmax.f32 %v1454, 0.0
    %v1487 = vmax.f32 %v1455, 0.0
    %v1488 = vmax.f32 %v1456, 0.0
    %v1489 = vmax.f32 %v1457, 0.0
    %v1490 = vmax.f32 %v1458, 0.0
    %v1491 = vmax.f32 %v1459, 0.0
    %v1492 = vmax.f32 %v1460, 0.0
    %v1493 = vmax.f32 %v1461, 0.0
    %v1494 = vmax.f32 %v1462, 0.0
    %v1495 = vmax.f32 %v1463, 0.0
    %v1496 = vmax.f32 %v1464, 0.0
    %v1497 = vmax.f32 %v1465, 0.0
    %v1498 = vmax.f32 %v1466, 0.0
    %v1499 = vmax.f32 %v1467, 0.0
    %v1500 = vmax.f32 %v1468, 0.0
    %v1501 = vmax.f32 %v1469, 0.0
    %v1502 = vmax.f32 %v1470, 0.0
    %v1503 = vmax.f32 %v1471, 0.0
    %v1504 = vmax.f32 %v1472, 0.0
    %v1505 = vmax.f32 %v1473, 0.0
    %v1506 = vpack.c.bf16 %v1474, %v1474
    %v1507 = vpack.c.bf16 %v1475, %v1475
    %v1508 = vpack.c.bf16 %v1476, %v1476
    %v1509 = vpack.c.bf16 %v1477, %v1477
    %v1510 = vpack.c.bf16 %v1478, %v1478
    %v1511 = vpack.c.bf16 %v1479, %v1479
    %v1512 = vpack.c.bf16 %v1480, %v1480
    %v1513 = vpack.c.bf16 %v1481, %v1481
    %v1514 = vpack.c.bf16 %v1482, %v1482
    %v1515 = vpack.c.bf16 %v1483, %v1483
    %v1516 = vpack.c.bf16 %v1484, %v1484
    %v1517 = vpack.c.bf16 %v1485, %v1485
    %v1518 = vpack.c.bf16 %v1486, %v1486
    %v1519 = vpack.c.bf16 %v1487, %v1487
    %v1520 = vpack.c.bf16 %v1488, %v1488
    %v1521 = vpack.c.bf16 %v1489, %v1489
    %v1522 = vpack.c.bf16 %v1490, %v1490
    %v1523 = vpack.c.bf16 %v1491, %v1491
    %v1524 = vpack.c.bf16 %v1492, %v1492
    %v1525 = vpack.c.bf16 %v1493, %v1493
    %v1526 = vpack.c.bf16 %v1494, %v1494
    %v1527 = vpack.c.bf16 %v1495, %v1495
    %v1528 = vpack.c.bf16 %v1496, %v1496
    %v1529 = vpack.c.bf16 %v1497, %v1497
    %v1530 = vpack.c.bf16 %v1498, %v1498
    %v1531 = vpack.c.bf16 %v1499, %v1499
    %v1532 = vpack.c.bf16 %v1500, %v1500
    %v1533 = vpack.c.bf16 %v1501, %v1501
    %v1534 = vpack.c.bf16 %v1502, %v1502
    %v1535 = vpack.c.bf16 %v1503, %v1503
    %v1536 = vpack.c.bf16 %v1504, %v1504
    %v1537 = vpack.c.bf16 %v1505, %v1505
    %s1538 = scalar_lea.vmem [#allocation3], 48
    %1539 = vst [vmem:[%s1538] sm:$0xf] %v1506
    %1540 = vst [vmem:[%s1538 + $0x4] sm:$0xf] %v1507
    %1541 = vst [vmem:[%s1538 + $0x8] sm:$0xf] %v1508
    %1542 = vst [vmem:[%s1538 + $0xc] sm:$0xf] %v1509
    %1543 = vst [vmem:[%s1538 + $0x10] sm:$0xf] %v1510
    %1544 = vst [vmem:[%s1538 + $0x14] sm:$0xf] %v1511
    %1545 = vst [vmem:[%s1538 + $0x18] sm:$0xf] %v1512
    %1546 = vst [vmem:[%s1538 + $0x1c] sm:$0xf] %v1513
    %1547 = vst [vmem:[%s1538 + $0x20] sm:$0xf] %v1514
    %1548 = vst [vmem:[%s1538 + $0x24] sm:$0xf] %v1515
    %1549 = vst [vmem:[%s1538 + $0x28] sm:$0xf] %v1516
    %1550 = vst [vmem:[%s1538 + $0x2c] sm:$0xf] %v1517
    %1551 = vst [vmem:[%s1538 + $0x30] sm:$0xf] %v1518
    %1552 = vst [vmem:[%s1538 + $0x34] sm:$0xf] %v1519
    %1553 = vst [vmem:[%s1538 + $0x38] sm:$0xf] %v1520
    %1554 = vst [vmem:[%s1538 + $0x3c] sm:$0xf] %v1521
    %1555 = vst [vmem:[%s1538 + $0x40] sm:$0xf] %v1522
    %1556 = vst [vmem:[%s1538 + $0x44] sm:$0xf] %v1523
    %1557 = vst [vmem:[%s1538 + $0x48] sm:$0xf] %v1524
    %1558 = vst [vmem:[%s1538 + $0x4c] sm:$0xf] %v1525
    %1559 = vst [vmem:[%s1538 + $0x50] sm:$0xf] %v1526
    %1560 = vst [vmem:[%s1538 + $0x54] sm:$0xf] %v1527
    %1561 = vst [vmem:[%s1538 + $0x58] sm:$0xf] %v1528
    %1562 = vst [vmem:[%s1538 + $0x5c] sm:$0xf] %v1529
    %1563 = vst [vmem:[%s1538 + $0x60] sm:$0xf] %v1530
    %1564 = vst [vmem:[%s1538 + $0x64] sm:$0xf] %v1531
    %1565 = vst [vmem:[%s1538 + $0x68] sm:$0xf] %v1532
    %1566 = vst [vmem:[%s1538 + $0x6c] sm:$0xf] %v1533
    %1567 = vst [vmem:[%s1538 + $0x70] sm:$0xf] %v1534
    %1568 = vst [vmem:[%s1538 + $0x74] sm:$0xf] %v1535
    %1569 = vst [vmem:[%s1538 + $0x78] sm:$0xf] %v1536
    %1570 = vst [vmem:[%s1538 + $0x7c] sm:$0xf] %v1537
    %s1571 = scalar_lea.vmem [#allocation3], 24
    %v1572 = vld [vmem:[%s1571] sm:$0xf]
    %v1573 = vld [vmem:[%s1571 + $0x4] sm:$0xf]
    %v1574 = vld [vmem:[%s1571 + $0x8] sm:$0xf]
    %v1575 = vld [vmem:[%s1571 + $0xc] sm:$0xf]
    %v1576 = vld [vmem:[%s1571 + $0x10] sm:$0xf]
    %v1577 = vld [vmem:[%s1571 + $0x14] sm:$0xf]
    %v1578 = vld [vmem:[%s1571 + $0x18] sm:$0xf]
    %v1579 = vld [vmem:[%s1571 + $0x1c] sm:$0xf]
    %v1580 = vld [vmem:[%s1571 + $0x20] sm:$0xf]
    %v1581 = vld [vmem:[%s1571 + $0x24] sm:$0xf]
    %v1582 = vld [vmem:[%s1571 + $0x28] sm:$0xf]
    %v1583 = vld [vmem:[%s1571 + $0x2c] sm:$0xf]
    %v1584 = vld [vmem:[%s1571 + $0x30] sm:$0xf]
    %v1585 = vld [vmem:[%s1571 + $0x34] sm:$0xf]
    %v1586 = vld [vmem:[%s1571 + $0x38] sm:$0xf]
    %v1587 = vld [vmem:[%s1571 + $0x3c] sm:$0xf]
    %v1588 = vld [vmem:[%s1571 + $0x40] sm:$0xf]
    %v1589 = vld [vmem:[%s1571 + $0x44] sm:$0xf]
    %v1590 = vld [vmem:[%s1571 + $0x48] sm:$0xf]
    %v1591 = vld [vmem:[%s1571 + $0x4c] sm:$0xf]
    %v1592 = vld [vmem:[%s1571 + $0x50] sm:$0xf]
    %v1593 = vld [vmem:[%s1571 + $0x54] sm:$0xf]
    %v1594 = vld [vmem:[%s1571 + $0x58] sm:$0xf]
    %v1595 = vld [vmem:[%s1571 + $0x5c] sm:$0xf]
    %v1596 = vld [vmem:[%s1571 + $0x60] sm:$0xf]
    %v1597 = vld [vmem:[%s1571 + $0x64] sm:$0xf]
    %v1598 = vld [vmem:[%s1571 + $0x68] sm:$0xf]
    %v1599 = vld [vmem:[%s1571 + $0x6c] sm:$0xf]
    %v1600 = vld [vmem:[%s1571 + $0x70] sm:$0xf]
    %v1601 = vld [vmem:[%s1571 + $0x74] sm:$0xf]
    %v1602 = vld [vmem:[%s1571 + $0x78] sm:$0xf]
    %v1603 = vld [vmem:[%s1571 + $0x7c] sm:$0xf]
    %v1604 = vld [vmem:[#allocation9] sm:$0xf]
    %v1605 = vld [vmem:[#allocation9 + $0x4] sm:$0xf]
    %v1606 = vld [vmem:[#allocation9 + $0x8] sm:$0xf]
    %v1607 = vld [vmem:[#allocation9 + $0xc] sm:$0xf]
    %v1608 = vld [vmem:[#allocation9 + $0x10] sm:$0xf]
    %v1609 = vld [vmem:[#allocation9 + $0x14] sm:$0xf]
    %v1610 = vld [vmem:[#allocation9 + $0x18] sm:$0xf]
    %v1611 = vld [vmem:[#allocation9 + $0x1c] sm:$0xf]
    %v1612 = vld [vmem:[#allocation9 + $0x20] sm:$0xf]
    %v1613 = vld [vmem:[#allocation9 + $0x24] sm:$0xf]
    %v1614 = vld [vmem:[#allocation9 + $0x28] sm:$0xf]
    %v1615 = vld [vmem:[#allocation9 + $0x2c] sm:$0xf]
    %v1616 = vld [vmem:[#allocation9 + $0x30] sm:$0xf]
    %v1617 = vld [vmem:[#allocation9 + $0x34] sm:$0xf]
    %v1618 = vld [vmem:[#allocation9 + $0x38] sm:$0xf]
    %v1619 = vld [vmem:[#allocation9 + $0x3c] sm:$0xf]
    %s1620 = scalar_lea.vmem [#allocation3], 32
    %v1621 = vld [vmem:[%s1620] sm:$0xf]
    %v1622 = vld [vmem:[%s1620 + $0x4] sm:$0xf]
    %v1623 = vld [vmem:[%s1620 + $0x8] sm:$0xf]
    %v1624 = vld [vmem:[%s1620 + $0xc] sm:$0xf]
    %v1625 = vld [vmem:[%s1620 + $0x10] sm:$0xf]
    %v1626 = vld [vmem:[%s1620 + $0x14] sm:$0xf]
    %v1627 = vld [vmem:[%s1620 + $0x18] sm:$0xf]
    %v1628 = vld [vmem:[%s1620 + $0x1c] sm:$0xf]
    %v1629 = vld [vmem:[%s1620 + $0x20] sm:$0xf]
    %v1630 = vld [vmem:[%s1620 + $0x24] sm:$0xf]
    %v1631 = vld [vmem:[%s1620 + $0x28] sm:$0xf]
    %v1632 = vld [vmem:[%s1620 + $0x2c] sm:$0xf]
    %v1633 = vld [vmem:[%s1620 + $0x30] sm:$0xf]
    %v1634 = vld [vmem:[%s1620 + $0x34] sm:$0xf]
    %v1635 = vld [vmem:[%s1620 + $0x38] sm:$0xf]
    %v1636 = vld [vmem:[%s1620 + $0x3c] sm:$0xf]
    %v1637 = vld [vmem:[%s1620 + $0x40] sm:$0xf]
    %v1638 = vld [vmem:[%s1620 + $0x44] sm:$0xf]
    %v1639 = vld [vmem:[%s1620 + $0x48] sm:$0xf]
    %v1640 = vld [vmem:[%s1620 + $0x4c] sm:$0xf]
    %v1641 = vld [vmem:[%s1620 + $0x50] sm:$0xf]
    %v1642 = vld [vmem:[%s1620 + $0x54] sm:$0xf]
    %v1643 = vld [vmem:[%s1620 + $0x58] sm:$0xf]
    %v1644 = vld [vmem:[%s1620 + $0x5c] sm:$0xf]
    %v1645 = vld [vmem:[%s1620 + $0x60] sm:$0xf]
    %v1646 = vld [vmem:[%s1620 + $0x64] sm:$0xf]
    %v1647 = vld [vmem:[%s1620 + $0x68] sm:$0xf]
    %v1648 = vld [vmem:[%s1620 + $0x6c] sm:$0xf]
    %v1649 = vld [vmem:[%s1620 + $0x70] sm:$0xf]
    %v1650 = vld [vmem:[%s1620 + $0x74] sm:$0xf]
    %v1651 = vld [vmem:[%s1620 + $0x78] sm:$0xf]
    %v1652 = vld [vmem:[%s1620 + $0x7c] sm:$0xf]
    %s1653 = scalar_lea.vmem [#allocation9], 64
    %v1654 = vld [vmem:[%s1653] sm:$0xf]
    %v1655 = vld [vmem:[%s1653 + $0x4] sm:$0xf]
    %v1656 = vld [vmem:[%s1653 + $0x8] sm:$0xf]
    %v1657 = vld [vmem:[%s1653 + $0xc] sm:$0xf]
    %v1658 = vld [vmem:[%s1653 + $0x10] sm:$0xf]
    %v1659 = vld [vmem:[%s1653 + $0x14] sm:$0xf]
    %v1660 = vld [vmem:[%s1653 + $0x18] sm:$0xf]
    %v1661 = vld [vmem:[%s1653 + $0x1c] sm:$0xf]
    %v1662 = vld [vmem:[%s1653 + $0x20] sm:$0xf]
    %v1663 = vld [vmem:[%s1653 + $0x24] sm:$0xf]
    %v1664 = vld [vmem:[%s1653 + $0x28] sm:$0xf]
    %v1665 = vld [vmem:[%s1653 + $0x2c] sm:$0xf]
    %v1666 = vld [vmem:[%s1653 + $0x30] sm:$0xf]
    %v1667 = vld [vmem:[%s1653 + $0x34] sm:$0xf]
    %v1668 = vld [vmem:[%s1653 + $0x38] sm:$0xf]
    %v1669 = vld [vmem:[%s1653 + $0x3c] sm:$0xf]
    %v1702 = vunpack.c.l.b16 %v1621
    %v1703 = vunpack.c.l.b16 %v1622
    %v1704 = vunpack.c.l.b16 %v1623
    %v1705 = vunpack.c.l.b16 %v1624
    %v1706 = vunpack.c.l.b16 %v1625
    %v1707 = vunpack.c.l.b16 %v1626
    %v1708 = vunpack.c.l.b16 %v1627
    %v1709 = vunpack.c.l.b16 %v1628
    %v1710 = vunpack.c.l.b16 %v1629
    %v1711 = vunpack.c.l.b16 %v1630
    %v1712 = vunpack.c.l.b16 %v1631
    %v1713 = vunpack.c.l.b16 %v1632
    %v1714 = vunpack.c.l.b16 %v1633
    %v1715 = vunpack.c.l.b16 %v1634
    %v1716 = vunpack.c.l.b16 %v1635
    %v1717 = vunpack.c.l.b16 %v1636
    %v1718 = vunpack.c.l.b16 %v1637
    %v1719 = vunpack.c.l.b16 %v1638
    %v1720 = vunpack.c.l.b16 %v1639
    %v1721 = vunpack.c.l.b16 %v1640
    %v1722 = vunpack.c.l.b16 %v1641
    %v1723 = vunpack.c.l.b16 %v1642
    %v1724 = vunpack.c.l.b16 %v1643
    %v1725 = vunpack.c.l.b16 %v1644
    %v1726 = vunpack.c.l.b16 %v1645
    %v1727 = vunpack.c.l.b16 %v1646
    %v1728 = vunpack.c.l.b16 %v1647
    %v1729 = vunpack.c.l.b16 %v1648
    %v1730 = vunpack.c.l.b16 %v1649
    %v1731 = vunpack.c.l.b16 %v1650
    %v1732 = vunpack.c.l.b16 %v1651
    %v1733 = vunpack.c.l.b16 %v1652
    %v1734 = vpack.c.b16 %v1703, %v1702
    %v1735 = vpack.c.b16 %v1705, %v1704
    %v1736 = vpack.c.b16 %v1707, %v1706
    %v1737 = vpack.c.b16 %v1709, %v1708
    %v1738 = vpack.c.b16 %v1711, %v1710
    %v1739 = vpack.c.b16 %v1713, %v1712
    %v1740 = vpack.c.b16 %v1715, %v1714
    %v1741 = vpack.c.b16 %v1717, %v1716
    %v1742 = vpack.c.b16 %v1719, %v1718
    %v1743 = vpack.c.b16 %v1721, %v1720
    %v1744 = vpack.c.b16 %v1723, %v1722
    %v1745 = vpack.c.b16 %v1725, %v1724
    %v1746 = vpack.c.b16 %v1727, %v1726
    %v1747 = vpack.c.b16 %v1729, %v1728
    %v1748 = vpack.c.b16 %v1731, %v1730
    %v1749 = vpack.c.b16 %v1733, %v1732
    %v1782 = vunpack.c.l.b16 %v1654
    %v1783 = vunpack.c.l.b16 %v1655
    %v1784 = vunpack.c.l.b16 %v1656
    %v1785 = vunpack.c.l.b16 %v1657
    %v1786 = vunpack.c.l.b16 %v1658
    %v1787 = vunpack.c.l.b16 %v1659
    %v1788 = vunpack.c.l.b16 %v1660
    %v1789 = vunpack.c.l.b16 %v1661
    %v1790 = vunpack.c.l.b16 %v1662
    %v1791 = vunpack.c.l.b16 %v1663
    %v1792 = vunpack.c.l.b16 %v1664
    %v1793 = vunpack.c.l.b16 %v1665
    %v1794 = vunpack.c.l.b16 %v1666
    %v1795 = vunpack.c.l.b16 %v1667
    %v1796 = vunpack.c.l.b16 %v1668
    %v1797 = vunpack.c.l.b16 %v1669
    %v1798 = vpack.c.b16 %v1783, %v1782
    %v1799 = vpack.c.b16 %v1785, %v1784
    %v1800 = vpack.c.b16 %v1787, %v1786
    %v1801 = vpack.c.b16 %v1789, %v1788
    %v1802 = vpack.c.b16 %v1791, %v1790
    %v1803 = vpack.c.b16 %v1793, %v1792
    %v1804 = vpack.c.b16 %v1795, %v1794
    %v1805 = vpack.c.b16 %v1797, %v1796
    %1814 = vmatpush.bf16.msra.mxu0 %v1805
    %1815 = vmatpush.bf16.msra.mxu0 %v1804
    %1816 = vmatpush.bf16.msra.mxu0 %v1803
    %1817 = vmatpush.bf16.msra.mxu0 %v1802
    %1818 = vmatpush.bf16.msra.mxu0 %v1801
    %1819 = vmatpush.bf16.msra.mxu0 %v1800
    %1820 = vmatpush.bf16.msra.mxu0 %v1799
    %1821 = vmatpush.bf16.msra.mxu0 %v1798
    %1822 = vmatmul.bf16.gmra.mxu0 %v1734
    %v1823 = vpop.f32.mrf.mxu0
    %v1824 = vadd.f32 0.0, %v1823
    %v1825 = vpop.f32.mrf.mxu0
    %v1826 = vadd.f32 0.0, %v1825
    %1827 = vmatmul.bf16.gmra.mxu0 %v1735
    %v1828 = vpop.f32.mrf.mxu0
    %v1829 = vadd.f32 0.0, %v1828
    %v1830 = vpop.f32.mrf.mxu0
    %v1831 = vadd.f32 0.0, %v1830
    %1832 = vmatmul.bf16.gmra.mxu0 %v1736
    %v1833 = vpop.f32.mrf.mxu0
    %v1834 = vadd.f32 0.0, %v1833
    %v1835 = vpop.f32.mrf.mxu0
    %v1836 = vadd.f32 0.0, %v1835
    %1837 = vmatmul.bf16.gmra.mxu0 %v1737
    %v1838 = vpop.f32.mrf.mxu0
    %v1839 = vadd.f32 0.0, %v1838
    %v1840 = vpop.f32.mrf.mxu0
    %v1841 = vadd.f32 0.0, %v1840
    %1842 = vmatmul.bf16.gmra.mxu0 %v1738
    %v1843 = vpop.f32.mrf.mxu0
    %v1844 = vadd.f32 0.0, %v1843
    %v1845 = vpop.f32.mrf.mxu0
    %v1846 = vadd.f32 0.0, %v1845
    %1847 = vmatmul.bf16.gmra.mxu0 %v1739
    %v1848 = vpop.f32.mrf.mxu0
    %v1849 = vadd.f32 0.0, %v1848
    %v1850 = vpop.f32.mrf.mxu0
    %v1851 = vadd.f32 0.0, %v1850
    %1852 = vmatmul.bf16.gmra.mxu0 %v1740
    %v1853 = vpop.f32.mrf.mxu0
    %v1854 = vadd.f32 0.0, %v1853
    %v1855 = vpop.f32.mrf.mxu0
    %v1856 = vadd.f32 0.0, %v1855
    %1857 = vmatmul.bf16.gmra.mxu0 %v1741
    %v1858 = vpop.f32.mrf.mxu0
    %v1859 = vadd.f32 0.0, %v1858
    %v1860 = vpop.f32.mrf.mxu0
    %v1861 = vadd.f32 0.0, %v1860
    %1862 = vmatmul.bf16.gmra.mxu0 %v1742
    %v1863 = vpop.f32.mrf.mxu0
    %v1864 = vadd.f32 0.0, %v1863
    %v1865 = vpop.f32.mrf.mxu0
    %v1866 = vadd.f32 0.0, %v1865
    %1867 = vmatmul.bf16.gmra.mxu0 %v1743
    %v1868 = vpop.f32.mrf.mxu0
    %v1869 = vadd.f32 0.0, %v1868
    %v1870 = vpop.f32.mrf.mxu0
    %v1871 = vadd.f32 0.0, %v1870
    %1872 = vmatmul.bf16.gmra.mxu0 %v1744
    %v1873 = vpop.f32.mrf.mxu0
    %v1874 = vadd.f32 0.0, %v1873
    %v1875 = vpop.f32.mrf.mxu0
    %v1876 = vadd.f32 0.0, %v1875
    %1877 = vmatmul.bf16.gmra.mxu0 %v1745
    %v1878 = vpop.f32.mrf.mxu0
    %v1879 = vadd.f32 0.0, %v1878
    %v1880 = vpop.f32.mrf.mxu0
    %v1881 = vadd.f32 0.0, %v1880
    %1882 = vmatmul.bf16.gmra.mxu0 %v1746
    %v1883 = vpop.f32.mrf.mxu0
    %v1884 = vadd.f32 0.0, %v1883
    %v1885 = vpop.f32.mrf.mxu0
    %v1886 = vadd.f32 0.0, %v1885
    %1887 = vmatmul.bf16.gmra.mxu0 %v1747
    %v1888 = vpop.f32.mrf.mxu0
    %v1889 = vadd.f32 0.0, %v1888
    %v1890 = vpop.f32.mrf.mxu0
    %v1891 = vadd.f32 0.0, %v1890
    %1892 = vmatmul.bf16.gmra.mxu0 %v1748
    %v1893 = vpop.f32.mrf.mxu0
    %v1894 = vadd.f32 0.0, %v1893
    %v1895 = vpop.f32.mrf.mxu0
    %v1896 = vadd.f32 0.0, %v1895
    %1897 = vmatmul.bf16.gmra.mxu0 %v1749
    %v1898 = vpop.f32.mrf.mxu0
    %v1899 = vadd.f32 0.0, %v1898
    %v1900 = vpop.f32.mrf.mxu0
    %v1901 = vadd.f32 0.0, %v1900
    %1902 = vdwg.mxu0
    %v1935 = vunpack.c.l.b16 %v1572
    %v1936 = vunpack.c.l.b16 %v1573
    %v1937 = vunpack.c.l.b16 %v1574
    %v1938 = vunpack.c.l.b16 %v1575
    %v1939 = vunpack.c.l.b16 %v1576
    %v1940 = vunpack.c.l.b16 %v1577
    %v1941 = vunpack.c.l.b16 %v1578
    %v1942 = vunpack.c.l.b16 %v1579
    %v1943 = vunpack.c.l.b16 %v1580
    %v1944 = vunpack.c.l.b16 %v1581
    %v1945 = vunpack.c.l.b16 %v1582
    %v1946 = vunpack.c.l.b16 %v1583
    %v1947 = vunpack.c.l.b16 %v1584
    %v1948 = vunpack.c.l.b16 %v1585
    %v1949 = vunpack.c.l.b16 %v1586
    %v1950 = vunpack.c.l.b16 %v1587
    %v1951 = vunpack.c.l.b16 %v1588
    %v1952 = vunpack.c.l.b16 %v1589
    %v1953 = vunpack.c.l.b16 %v1590
    %v1954 = vunpack.c.l.b16 %v1591
    %v1955 = vunpack.c.l.b16 %v1592
    %v1956 = vunpack.c.l.b16 %v1593
    %v1957 = vunpack.c.l.b16 %v1594
    %v1958 = vunpack.c.l.b16 %v1595
    %v1959 = vunpack.c.l.b16 %v1596
    %v1960 = vunpack.c.l.b16 %v1597
    %v1961 = vunpack.c.l.b16 %v1598
    %v1962 = vunpack.c.l.b16 %v1599
    %v1963 = vunpack.c.l.b16 %v1600
    %v1964 = vunpack.c.l.b16 %v1601
    %v1965 = vunpack.c.l.b16 %v1602
    %v1966 = vunpack.c.l.b16 %v1603
    %v1967 = vpack.c.b16 %v1936, %v1935
    %v1968 = vpack.c.b16 %v1938, %v1937
    %v1969 = vpack.c.b16 %v1940, %v1939
    %v1970 = vpack.c.b16 %v1942, %v1941
    %v1971 = vpack.c.b16 %v1944, %v1943
    %v1972 = vpack.c.b16 %v1946, %v1945
    %v1973 = vpack.c.b16 %v1948, %v1947
    %v1974 = vpack.c.b16 %v1950, %v1949
    %v1975 = vpack.c.b16 %v1952, %v1951
    %v1976 = vpack.c.b16 %v1954, %v1953
    %v1977 = vpack.c.b16 %v1956, %v1955
    %v1978 = vpack.c.b16 %v1958, %v1957
    %v1979 = vpack.c.b16 %v1960, %v1959
    %v1980 = vpack.c.b16 %v1962, %v1961
    %v1981 = vpack.c.b16 %v1964, %v1963
    %v1982 = vpack.c.b16 %v1966, %v1965
    %v2015 = vunpack.c.l.b16 %v1604
    %v2016 = vunpack.c.l.b16 %v1605
    %v2017 = vunpack.c.l.b16 %v1606
    %v2018 = vunpack.c.l.b16 %v1607
    %v2019 = vunpack.c.l.b16 %v1608
    %v2020 = vunpack.c.l.b16 %v1609
    %v2021 = vunpack.c.l.b16 %v1610
    %v2022 = vunpack.c.l.b16 %v1611
    %v2023 = vunpack.c.l.b16 %v1612
    %v2024 = vunpack.c.l.b16 %v1613
    %v2025 = vunpack.c.l.b16 %v1614
    %v2026 = vunpack.c.l.b16 %v1615
    %v2027 = vunpack.c.l.b16 %v1616
    %v2028 = vunpack.c.l.b16 %v1617
    %v2029 = vunpack.c.l.b16 %v1618
    %v2030 = vunpack.c.l.b16 %v1619
    %v2031 = vpack.c.b16 %v2016, %v2015
    %v2032 = vpack.c.b16 %v2018, %v2017
    %v2033 = vpack.c.b16 %v2020, %v2019
    %v2034 = vpack.c.b16 %v2022, %v2021
    %v2035 = vpack.c.b16 %v2024, %v2023
    %v2036 = vpack.c.b16 %v2026, %v2025
    %v2037 = vpack.c.b16 %v2028, %v2027
    %v2038 = vpack.c.b16 %v2030, %v2029
    %2047 = vmatpush.bf16.msra.mxu0 %v2038
    %2048 = vmatpush.bf16.msra.mxu0 %v2037
    %2049 = vmatpush.bf16.msra.mxu0 %v2036
    %2050 = vmatpush.bf16.msra.mxu0 %v2035
    %2051 = vmatpush.bf16.msra.mxu0 %v2034
    %2052 = vmatpush.bf16.msra.mxu0 %v2033
    %2053 = vmatpush.bf16.msra.mxu0 %v2032
    %2054 = vmatpush.bf16.msra.mxu0 %v2031
    %2055 = vmatmul.bf16.gmra.mxu0 %v1967
    %v2056 = vpop.f32.mrf.mxu0
    %v2057 = vadd.f32 %v1824, %v2056
    %v2058 = vpop.f32.mrf.mxu0
    %v2059 = vadd.f32 %v1826, %v2058
    %2060 = vmatmul.bf16.gmra.mxu0 %v1968
    %v2061 = vpop.f32.mrf.mxu0
    %v2062 = vadd.f32 %v1829, %v2061
    %v2063 = vpop.f32.mrf.mxu0
    %v2064 = vadd.f32 %v1831, %v2063
    %2065 = vmatmul.bf16.gmra.mxu0 %v1969
    %v2066 = vpop.f32.mrf.mxu0
    %v2067 = vadd.f32 %v1834, %v2066
    %v2068 = vpop.f32.mrf.mxu0
    %v2069 = vadd.f32 %v1836, %v2068
    %2070 = vmatmul.bf16.gmra.mxu0 %v1970
    %v2071 = vpop.f32.mrf.mxu0
    %v2072 = vadd.f32 %v1839, %v2071
    %v2073 = vpop.f32.mrf.mxu0
    %v2074 = vadd.f32 %v1841, %v2073
    %2075 = vmatmul.bf16.gmra.mxu0 %v1971
    %v2076 = vpop.f32.mrf.mxu0
    %v2077 = vadd.f32 %v1844, %v2076
    %v2078 = vpop.f32.mrf.mxu0
    %v2079 = vadd.f32 %v1846, %v2078
    %2080 = vmatmul.bf16.gmra.mxu0 %v1972
    %v2081 = vpop.f32.mrf.mxu0
    %v2082 = vadd.f32 %v1849, %v2081
    %v2083 = vpop.f32.mrf.mxu0
    %v2084 = vadd.f32 %v1851, %v2083
    %2085 = vmatmul.bf16.gmra.mxu0 %v1973
    %v2086 = vpop.f32.mrf.mxu0
    %v2087 = vadd.f32 %v1854, %v2086
    %v2088 = vpop.f32.mrf.mxu0
    %v2089 = vadd.f32 %v1856, %v2088
    %2090 = vmatmul.bf16.gmra.mxu0 %v1974
    %v2091 = vpop.f32.mrf.mxu0
    %v2092 = vadd.f32 %v1859, %v2091
    %v2093 = vpop.f32.mrf.mxu0
    %v2094 = vadd.f32 %v1861, %v2093
    %2095 = vmatmul.bf16.gmra.mxu0 %v1975
    %v2096 = vpop.f32.mrf.mxu0
    %v2097 = vadd.f32 %v1864, %v2096
    %v2098 = vpop.f32.mrf.mxu0
    %v2099 = vadd.f32 %v1866, %v2098
    %2100 = vmatmul.bf16.gmra.mxu0 %v1976
    %v2101 = vpop.f32.mrf.mxu0
    %v2102 = vadd.f32 %v1869, %v2101
    %v2103 = vpop.f32.mrf.mxu0
    %v2104 = vadd.f32 %v1871, %v2103
    %2105 = vmatmul.bf16.gmra.mxu0 %v1977
    %v2106 = vpop.f32.mrf.mxu0
    %v2107 = vadd.f32 %v1874, %v2106
    %v2108 = vpop.f32.mrf.mxu0
    %v2109 = vadd.f32 %v1876, %v2108
    %2110 = vmatmul.bf16.gmra.mxu0 %v1978
    %v2111 = vpop.f32.mrf.mxu0
    %v2112 = vadd.f32 %v1879, %v2111
    %v2113 = vpop.f32.mrf.mxu0
    %v2114 = vadd.f32 %v1881, %v2113
    %2115 = vmatmul.bf16.gmra.mxu0 %v1979
    %v2116 = vpop.f32.mrf.mxu0
    %v2117 = vadd.f32 %v1884, %v2116
    %v2118 = vpop.f32.mrf.mxu0
    %v2119 = vadd.f32 %v1886, %v2118
    %2120 = vmatmul.bf16.gmra.mxu0 %v1980
    %v2121 = vpop.f32.mrf.mxu0
    %v2122 = vadd.f32 %v1889, %v2121
    %v2123 = vpop.f32.mrf.mxu0
    %v2124 = vadd.f32 %v1891, %v2123
    %2125 = vmatmul.bf16.gmra.mxu0 %v1981
    %v2126 = vpop.f32.mrf.mxu0
    %v2127 = vadd.f32 %v1894, %v2126
    %v2128 = vpop.f32.mrf.mxu0
    %v2129 = vadd.f32 %v1896, %v2128
    %2130 = vmatmul.bf16.gmra.mxu0 %v1982
    %v2131 = vpop.f32.mrf.mxu0
    %v2132 = vadd.f32 %v1899, %v2131
    %v2133 = vpop.f32.mrf.mxu0
    %v2134 = vadd.f32 %v1901, %v2133
    %2135 = vdwg.mxu0
    %s2136 = scalar_lea.vmem [#allocation3], 40
    %v2137 = vld [vmem:[%s2136] sm:$0xf]
    %v2138 = vld [vmem:[%s2136 + $0x4] sm:$0xf]
    %v2139 = vld [vmem:[%s2136 + $0x8] sm:$0xf]
    %v2140 = vld [vmem:[%s2136 + $0xc] sm:$0xf]
    %v2141 = vld [vmem:[%s2136 + $0x10] sm:$0xf]
    %v2142 = vld [vmem:[%s2136 + $0x14] sm:$0xf]
    %v2143 = vld [vmem:[%s2136 + $0x18] sm:$0xf]
    %v2144 = vld [vmem:[%s2136 + $0x1c] sm:$0xf]
    %v2145 = vld [vmem:[%s2136 + $0x20] sm:$0xf]
    %v2146 = vld [vmem:[%s2136 + $0x24] sm:$0xf]
    %v2147 = vld [vmem:[%s2136 + $0x28] sm:$0xf]
    %v2148 = vld [vmem:[%s2136 + $0x2c] sm:$0xf]
    %v2149 = vld [vmem:[%s2136 + $0x30] sm:$0xf]
    %v2150 = vld [vmem:[%s2136 + $0x34] sm:$0xf]
    %v2151 = vld [vmem:[%s2136 + $0x38] sm:$0xf]
    %v2152 = vld [vmem:[%s2136 + $0x3c] sm:$0xf]
    %v2153 = vld [vmem:[%s2136 + $0x40] sm:$0xf]
    %v2154 = vld [vmem:[%s2136 + $0x44] sm:$0xf]
    %v2155 = vld [vmem:[%s2136 + $0x48] sm:$0xf]
    %v2156 = vld [vmem:[%s2136 + $0x4c] sm:$0xf]
    %v2157 = vld [vmem:[%s2136 + $0x50] sm:$0xf]
    %v2158 = vld [vmem:[%s2136 + $0x54] sm:$0xf]
    %v2159 = vld [vmem:[%s2136 + $0x58] sm:$0xf]
    %v2160 = vld [vmem:[%s2136 + $0x5c] sm:$0xf]
    %v2161 = vld [vmem:[%s2136 + $0x60] sm:$0xf]
    %v2162 = vld [vmem:[%s2136 + $0x64] sm:$0xf]
    %v2163 = vld [vmem:[%s2136 + $0x68] sm:$0xf]
    %v2164 = vld [vmem:[%s2136 + $0x6c] sm:$0xf]
    %v2165 = vld [vmem:[%s2136 + $0x70] sm:$0xf]
    %v2166 = vld [vmem:[%s2136 + $0x74] sm:$0xf]
    %v2167 = vld [vmem:[%s2136 + $0x78] sm:$0xf]
    %v2168 = vld [vmem:[%s2136 + $0x7c] sm:$0xf]
    %s2169 = scalar_lea.vmem [#allocation9], 128
    %v2170 = vld [vmem:[%s2169] sm:$0xf]
    %v2171 = vld [vmem:[%s2169 + $0x4] sm:$0xf]
    %v2172 = vld [vmem:[%s2169 + $0x8] sm:$0xf]
    %v2173 = vld [vmem:[%s2169 + $0xc] sm:$0xf]
    %v2174 = vld [vmem:[%s2169 + $0x10] sm:$0xf]
    %v2175 = vld [vmem:[%s2169 + $0x14] sm:$0xf]
    %v2176 = vld [vmem:[%s2169 + $0x18] sm:$0xf]
    %v2177 = vld [vmem:[%s2169 + $0x1c] sm:$0xf]
    %v2178 = vld [vmem:[%s2169 + $0x20] sm:$0xf]
    %v2179 = vld [vmem:[%s2169 + $0x24] sm:$0xf]
    %v2180 = vld [vmem:[%s2169 + $0x28] sm:$0xf]
    %v2181 = vld [vmem:[%s2169 + $0x2c] sm:$0xf]
    %v2182 = vld [vmem:[%s2169 + $0x30] sm:$0xf]
    %v2183 = vld [vmem:[%s2169 + $0x34] sm:$0xf]
    %v2184 = vld [vmem:[%s2169 + $0x38] sm:$0xf]
    %v2185 = vld [vmem:[%s2169 + $0x3c] sm:$0xf]
    %v2218 = vunpack.c.l.b16 %v2137
    %v2219 = vunpack.c.l.b16 %v2138
    %v2220 = vunpack.c.l.b16 %v2139
    %v2221 = vunpack.c.l.b16 %v2140
    %v2222 = vunpack.c.l.b16 %v2141
    %v2223 = vunpack.c.l.b16 %v2142
    %v2224 = vunpack.c.l.b16 %v2143
    %v2225 = vunpack.c.l.b16 %v2144
    %v2226 = vunpack.c.l.b16 %v2145
    %v2227 = vunpack.c.l.b16 %v2146
    %v2228 = vunpack.c.l.b16 %v2147
    %v2229 = vunpack.c.l.b16 %v2148
    %v2230 = vunpack.c.l.b16 %v2149
    %v2231 = vunpack.c.l.b16 %v2150
    %v2232 = vunpack.c.l.b16 %v2151
    %v2233 = vunpack.c.l.b16 %v2152
    %v2234 = vunpack.c.l.b16 %v2153
    %v2235 = vunpack.c.l.b16 %v2154
    %v2236 = vunpack.c.l.b16 %v2155
    %v2237 = vunpack.c.l.b16 %v2156
    %v2238 = vunpack.c.l.b16 %v2157
    %v2239 = vunpack.c.l.b16 %v2158
    %v2240 = vunpack.c.l.b16 %v2159
    %v2241 = vunpack.c.l.b16 %v2160
    %v2242 = vunpack.c.l.b16 %v2161
    %v2243 = vunpack.c.l.b16 %v2162
    %v2244 = vunpack.c.l.b16 %v2163
    %v2245 = vunpack.c.l.b16 %v2164
    %v2246 = vunpack.c.l.b16 %v2165
    %v2247 = vunpack.c.l.b16 %v2166
    %v2248 = vunpack.c.l.b16 %v2167
    %v2249 = vunpack.c.l.b16 %v2168
    %v2250 = vpack.c.b16 %v2219, %v2218
    %v2251 = vpack.c.b16 %v2221, %v2220
    %v2252 = vpack.c.b16 %v2223, %v2222
    %v2253 = vpack.c.b16 %v2225, %v2224
    %v2254 = vpack.c.b16 %v2227, %v2226
    %v2255 = vpack.c.b16 %v2229, %v2228
    %v2256 = vpack.c.b16 %v2231, %v2230
    %v2257 = vpack.c.b16 %v2233, %v2232
    %v2258 = vpack.c.b16 %v2235, %v2234
    %v2259 = vpack.c.b16 %v2237, %v2236
    %v2260 = vpack.c.b16 %v2239, %v2238
    %v2261 = vpack.c.b16 %v2241, %v2240
    %v2262 = vpack.c.b16 %v2243, %v2242
    %v2263 = vpack.c.b16 %v2245, %v2244
    %v2264 = vpack.c.b16 %v2247, %v2246
    %v2265 = vpack.c.b16 %v2249, %v2248
    %v2298 = vunpack.c.l.b16 %v2170
    %v2299 = vunpack.c.l.b16 %v2171
    %v2300 = vunpack.c.l.b16 %v2172
    %v2301 = vunpack.c.l.b16 %v2173
    %v2302 = vunpack.c.l.b16 %v2174
    %v2303 = vunpack.c.l.b16 %v2175
    %v2304 = vunpack.c.l.b16 %v2176
    %v2305 = vunpack.c.l.b16 %v2177
    %v2306 = vunpack.c.l.b16 %v2178
    %v2307 = vunpack.c.l.b16 %v2179
    %v2308 = vunpack.c.l.b16 %v2180
    %v2309 = vunpack.c.l.b16 %v2181
    %v2310 = vunpack.c.l.b16 %v2182
    %v2311 = vunpack.c.l.b16 %v2183
    %v2312 = vunpack.c.l.b16 %v2184
    %v2313 = vunpack.c.l.b16 %v2185
    %v2314 = vpack.c.b16 %v2299, %v2298
    %v2315 = vpack.c.b16 %v2301, %v2300
    %v2316 = vpack.c.b16 %v2303, %v2302
    %v2317 = vpack.c.b16 %v2305, %v2304
    %v2318 = vpack.c.b16 %v2307, %v2306
    %v2319 = vpack.c.b16 %v2309, %v2308
    %v2320 = vpack.c.b16 %v2311, %v2310
    %v2321 = vpack.c.b16 %v2313, %v2312
    %2330 = vmatpush.bf16.msra.mxu0 %v2321
    %2331 = vmatpush.bf16.msra.mxu0 %v2320
    %2332 = vmatpush.bf16.msra.mxu0 %v2319
    %2333 = vmatpush.bf16.msra.mxu0 %v2318
    %2334 = vmatpush.bf16.msra.mxu0 %v2317
    %2335 = vmatpush.bf16.msra.mxu0 %v2316
    %2336 = vmatpush.bf16.msra.mxu0 %v2315
    %2337 = vmatpush.bf16.msra.mxu0 %v2314
    %2338 = vmatmul.bf16.gmra.mxu0 %v2250
    %v2339 = vpop.f32.mrf.mxu0
    %v2340 = vadd.f32 0.0, %v2339
    %v2341 = vpop.f32.mrf.mxu0
    %v2342 = vadd.f32 0.0, %v2341
    %2343 = vmatmul.bf16.gmra.mxu0 %v2251
    %v2344 = vpop.f32.mrf.mxu0
    %v2345 = vadd.f32 0.0, %v2344
    %v2346 = vpop.f32.mrf.mxu0
    %v2347 = vadd.f32 0.0, %v2346
    %2348 = vmatmul.bf16.gmra.mxu0 %v2252
    %v2349 = vpop.f32.mrf.mxu0
    %v2350 = vadd.f32 0.0, %v2349
    %v2351 = vpop.f32.mrf.mxu0
    %v2352 = vadd.f32 0.0, %v2351
    %2353 = vmatmul.bf16.gmra.mxu0 %v2253
    %v2354 = vpop.f32.mrf.mxu0
    %v2355 = vadd.f32 0.0, %v2354
    %v2356 = vpop.f32.mrf.mxu0
    %v2357 = vadd.f32 0.0, %v2356
    %2358 = vmatmul.bf16.gmra.mxu0 %v2254
    %v2359 = vpop.f32.mrf.mxu0
    %v2360 = vadd.f32 0.0, %v2359
    %v2361 = vpop.f32.mrf.mxu0
    %v2362 = vadd.f32 0.0, %v2361
    %2363 = vmatmul.bf16.gmra.mxu0 %v2255
    %v2364 = vpop.f32.mrf.mxu0
    %v2365 = vadd.f32 0.0, %v2364
    %v2366 = vpop.f32.mrf.mxu0
    %v2367 = vadd.f32 0.0, %v2366
    %2368 = vmatmul.bf16.gmra.mxu0 %v2256
    %v2369 = vpop.f32.mrf.mxu0
    %v2370 = vadd.f32 0.0, %v2369
    %v2371 = vpop.f32.mrf.mxu0
    %v2372 = vadd.f32 0.0, %v2371
    %2373 = vmatmul.bf16.gmra.mxu0 %v2257
    %v2374 = vpop.f32.mrf.mxu0
    %v2375 = vadd.f32 0.0, %v2374
    %v2376 = vpop.f32.mrf.mxu0
    %v2377 = vadd.f32 0.0, %v2376
    %2378 = vmatmul.bf16.gmra.mxu0 %v2258
    %v2379 = vpop.f32.mrf.mxu0
    %v2380 = vadd.f32 0.0, %v2379
    %v2381 = vpop.f32.mrf.mxu0
    %v2382 = vadd.f32 0.0, %v2381
    %2383 = vmatmul.bf16.gmra.mxu0 %v2259
    %v2384 = vpop.f32.mrf.mxu0
    %v2385 = vadd.f32 0.0, %v2384
    %v2386 = vpop.f32.mrf.mxu0
    %v2387 = vadd.f32 0.0, %v2386
    %2388 = vmatmul.bf16.gmra.mxu0 %v2260
    %v2389 = vpop.f32.mrf.mxu0
    %v2390 = vadd.f32 0.0, %v2389
    %v2391 = vpop.f32.mrf.mxu0
    %v2392 = vadd.f32 0.0, %v2391
    %2393 = vmatmul.bf16.gmra.mxu0 %v2261
    %v2394 = vpop.f32.mrf.mxu0
    %v2395 = vadd.f32 0.0, %v2394
    %v2396 = vpop.f32.mrf.mxu0
    %v2397 = vadd.f32 0.0, %v2396
    %2398 = vmatmul.bf16.gmra.mxu0 %v2262
    %v2399 = vpop.f32.mrf.mxu0
    %v2400 = vadd.f32 0.0, %v2399
    %v2401 = vpop.f32.mrf.mxu0
    %v2402 = vadd.f32 0.0, %v2401
    %2403 = vmatmul.bf16.gmra.mxu0 %v2263
    %v2404 = vpop.f32.mrf.mxu0
    %v2405 = vadd.f32 0.0, %v2404
    %v2406 = vpop.f32.mrf.mxu0
    %v2407 = vadd.f32 0.0, %v2406
    %2408 = vmatmul.bf16.gmra.mxu0 %v2264
    %v2409 = vpop.f32.mrf.mxu0
    %v2410 = vadd.f32 0.0, %v2409
    %v2411 = vpop.f32.mrf.mxu0
    %v2412 = vadd.f32 0.0, %v2411
    %2413 = vmatmul.bf16.gmra.mxu0 %v2265
    %v2414 = vpop.f32.mrf.mxu0
    %v2415 = vadd.f32 0.0, %v2414
    %v2416 = vpop.f32.mrf.mxu0
    %v2417 = vadd.f32 0.0, %v2416
    %2418 = vdwg.mxu0
    %v2419 = vadd.f32 %v2057, %v2340
    %v2420 = vadd.f32 %v2059, %v2342
    %v2421 = vadd.f32 %v2062, %v2345
    %v2422 = vadd.f32 %v2064, %v2347
    %v2423 = vadd.f32 %v2067, %v2350
    %v2424 = vadd.f32 %v2069, %v2352
    %v2425 = vadd.f32 %v2072, %v2355
    %v2426 = vadd.f32 %v2074, %v2357
    %v2427 = vadd.f32 %v2077, %v2360
    %v2428 = vadd.f32 %v2079, %v2362
    %v2429 = vadd.f32 %v2082, %v2365
    %v2430 = vadd.f32 %v2084, %v2367
    %v2431 = vadd.f32 %v2087, %v2370
    %v2432 = vadd.f32 %v2089, %v2372
    %v2433 = vadd.f32 %v2092, %v2375
    %v2434 = vadd.f32 %v2094, %v2377
    %v2435 = vadd.f32 %v2097, %v2380
    %v2436 = vadd.f32 %v2099, %v2382
    %v2437 = vadd.f32 %v2102, %v2385
    %v2438 = vadd.f32 %v2104, %v2387
    %v2439 = vadd.f32 %v2107, %v2390
    %v2440 = vadd.f32 %v2109, %v2392
    %v2441 = vadd.f32 %v2112, %v2395
    %v2442 = vadd.f32 %v2114, %v2397
    %v2443 = vadd.f32 %v2117, %v2400
    %v2444 = vadd.f32 %v2119, %v2402
    %v2445 = vadd.f32 %v2122, %v2405
    %v2446 = vadd.f32 %v2124, %v2407
    %v2447 = vadd.f32 %v2127, %v2410
    %v2448 = vadd.f32 %v2129, %v2412
    %v2449 = vadd.f32 %v2132, %v2415
    %v2450 = vadd.f32 %v2134, %v2417
    %v2451 = vld [vmem:[%s1538] sm:$0xf]
    %v2452 = vld [vmem:[%s1538 + $0x4] sm:$0xf]
    %v2453 = vld [vmem:[%s1538 + $0x8] sm:$0xf]
    %v2454 = vld [vmem:[%s1538 + $0xc] sm:$0xf]
    %v2455 = vld [vmem:[%s1538 + $0x10] sm:$0xf]
    %v2456 = vld [vmem:[%s1538 + $0x14] sm:$0xf]
    %v2457 = vld [vmem:[%s1538 + $0x18] sm:$0xf]
    %v2458 = vld [vmem:[%s1538 + $0x1c] sm:$0xf]
    %v2459 = vld [vmem:[%s1538 + $0x20] sm:$0xf]
    %v2460 = vld [vmem:[%s1538 + $0x24] sm:$0xf]
    %v2461 = vld [vmem:[%s1538 + $0x28] sm:$0xf]
    %v2462 = vld [vmem:[%s1538 + $0x2c] sm:$0xf]
    %v2463 = vld [vmem:[%s1538 + $0x30] sm:$0xf]
    %v2464 = vld [vmem:[%s1538 + $0x34] sm:$0xf]
    %v2465 = vld [vmem:[%s1538 + $0x38] sm:$0xf]
    %v2466 = vld [vmem:[%s1538 + $0x3c] sm:$0xf]
    %v2467 = vld [vmem:[%s1538 + $0x40] sm:$0xf]
    %v2468 = vld [vmem:[%s1538 + $0x44] sm:$0xf]
    %v2469 = vld [vmem:[%s1538 + $0x48] sm:$0xf]
    %v2470 = vld [vmem:[%s1538 + $0x4c] sm:$0xf]
    %v2471 = vld [vmem:[%s1538 + $0x50] sm:$0xf]
    %v2472 = vld [vmem:[%s1538 + $0x54] sm:$0xf]
    %v2473 = vld [vmem:[%s1538 + $0x58] sm:$0xf]
    %v2474 = vld [vmem:[%s1538 + $0x5c] sm:$0xf]
    %v2475 = vld [vmem:[%s1538 + $0x60] sm:$0xf]
    %v2476 = vld [vmem:[%s1538 + $0x64] sm:$0xf]
    %v2477 = vld [vmem:[%s1538 + $0x68] sm:$0xf]
    %v2478 = vld [vmem:[%s1538 + $0x6c] sm:$0xf]
    %v2479 = vld [vmem:[%s1538 + $0x70] sm:$0xf]
    %v2480 = vld [vmem:[%s1538 + $0x74] sm:$0xf]
    %v2481 = vld [vmem:[%s1538 + $0x78] sm:$0xf]
    %v2482 = vld [vmem:[%s1538 + $0x7c] sm:$0xf]
    %s2483 = scalar_lea.vmem [#allocation9], 192
    %v2484 = vld [vmem:[%s2483] sm:$0xf]
    %v2485 = vld [vmem:[%s2483 + $0x4] sm:$0xf]
    %v2486 = vld [vmem:[%s2483 + $0x8] sm:$0xf]
    %v2487 = vld [vmem:[%s2483 + $0xc] sm:$0xf]
    %v2488 = vld [vmem:[%s2483 + $0x10] sm:$0xf]
    %v2489 = vld [vmem:[%s2483 + $0x14] sm:$0xf]
    %v2490 = vld [vmem:[%s2483 + $0x18] sm:$0xf]
    %v2491 = vld [vmem:[%s2483 + $0x1c] sm:$0xf]
    %v2492 = vld [vmem:[%s2483 + $0x20] sm:$0xf]
    %v2493 = vld [vmem:[%s2483 + $0x24] sm:$0xf]
    %v2494 = vld [vmem:[%s2483 + $0x28] sm:$0xf]
    %v2495 = vld [vmem:[%s2483 + $0x2c] sm:$0xf]
    %v2496 = vld [vmem:[%s2483 + $0x30] sm:$0xf]
    %v2497 = vld [vmem:[%s2483 + $0x34] sm:$0xf]
    %v2498 = vld [vmem:[%s2483 + $0x38] sm:$0xf]
    %v2499 = vld [vmem:[%s2483 + $0x3c] sm:$0xf]
    %v2532 = vunpack.c.l.b16 %v2451
    %v2533 = vunpack.c.l.b16 %v2452
    %v2534 = vunpack.c.l.b16 %v2453
    %v2535 = vunpack.c.l.b16 %v2454
    %v2536 = vunpack.c.l.b16 %v2455
    %v2537 = vunpack.c.l.b16 %v2456
    %v2538 = vunpack.c.l.b16 %v2457
    %v2539 = vunpack.c.l.b16 %v2458
    %v2540 = vunpack.c.l.b16 %v2459
    %v2541 = vunpack.c.l.b16 %v2460
    %v2542 = vunpack.c.l.b16 %v2461
    %v2543 = vunpack.c.l.b16 %v2462
    %v2544 = vunpack.c.l.b16 %v2463
    %v2545 = vunpack.c.l.b16 %v2464
    %v2546 = vunpack.c.l.b16 %v2465
    %v2547 = vunpack.c.l.b16 %v2466
    %v2548 = vunpack.c.l.b16 %v2467
    %v2549 = vunpack.c.l.b16 %v2468
    %v2550 = vunpack.c.l.b16 %v2469
    %v2551 = vunpack.c.l.b16 %v2470
    %v2552 = vunpack.c.l.b16 %v2471
    %v2553 = vunpack.c.l.b16 %v2472
    %v2554 = vunpack.c.l.b16 %v2473
    %v2555 = vunpack.c.l.b16 %v2474
    %v2556 = vunpack.c.l.b16 %v2475
    %v2557 = vunpack.c.l.b16 %v2476
    %v2558 = vunpack.c.l.b16 %v2477
    %v2559 = vunpack.c.l.b16 %v2478
    %v2560 = vunpack.c.l.b16 %v2479
    %v2561 = vunpack.c.l.b16 %v2480
    %v2562 = vunpack.c.l.b16 %v2481
    %v2563 = vunpack.c.l.b16 %v2482
    %v2564 = vpack.c.b16 %v2533, %v2532
    %v2565 = vpack.c.b16 %v2535, %v2534
    %v2566 = vpack.c.b16 %v2537, %v2536
    %v2567 = vpack.c.b16 %v2539, %v2538
    %v2568 = vpack.c.b16 %v2541, %v2540
    %v2569 = vpack.c.b16 %v2543, %v2542
    %v2570 = vpack.c.b16 %v2545, %v2544
    %v2571 = vpack.c.b16 %v2547, %v2546
    %v2572 = vpack.c.b16 %v2549, %v2548
    %v2573 = vpack.c.b16 %v2551, %v2550
    %v2574 = vpack.c.b16 %v2553, %v2552
    %v2575 = vpack.c.b16 %v2555, %v2554
    %v2576 = vpack.c.b16 %v2557, %v2556
    %v2577 = vpack.c.b16 %v2559, %v2558
    %v2578 = vpack.c.b16 %v2561, %v2560
    %v2579 = vpack.c.b16 %v2563, %v2562
    %v2612 = vunpack.c.l.b16 %v2484
    %v2613 = vunpack.c.l.b16 %v2485
    %v2614 = vunpack.c.l.b16 %v2486
    %v2615 = vunpack.c.l.b16 %v2487
    %v2616 = vunpack.c.l.b16 %v2488
    %v2617 = vunpack.c.l.b16 %v2489
    %v2618 = vunpack.c.l.b16 %v2490
    %v2619 = vunpack.c.l.b16 %v2491
    %v2620 = vunpack.c.l.b16 %v2492
    %v2621 = vunpack.c.l.b16 %v2493
    %v2622 = vunpack.c.l.b16 %v2494
    %v2623 = vunpack.c.l.b16 %v2495
    %v2624 = vunpack.c.l.b16 %v2496
    %v2625 = vunpack.c.l.b16 %v2497
    %v2626 = vunpack.c.l.b16 %v2498
    %v2627 = vunpack.c.l.b16 %v2499
    %v2628 = vpack.c.b16 %v2613, %v2612
    %v2629 = vpack.c.b16 %v2615, %v2614
    %v2630 = vpack.c.b16 %v2617, %v2616
    %v2631 = vpack.c.b16 %v2619, %v2618
    %v2632 = vpack.c.b16 %v2621, %v2620
    %v2633 = vpack.c.b16 %v2623, %v2622
    %v2634 = vpack.c.b16 %v2625, %v2624
    %v2635 = vpack.c.b16 %v2627, %v2626
    %2644 = vmatpush.bf16.msra.mxu0 %v2635
    %2645 = vmatpush.bf16.msra.mxu0 %v2634
    %2646 = vmatpush.bf16.msra.mxu0 %v2633
    %2647 = vmatpush.bf16.msra.mxu0 %v2632
    %2648 = vmatpush.bf16.msra.mxu0 %v2631
    %2649 = vmatpush.bf16.msra.mxu0 %v2630
    %2650 = vmatpush.bf16.msra.mxu0 %v2629
    %2651 = vmatpush.bf16.msra.mxu0 %v2628
    %2652 = vmatmul.bf16.gmra.mxu0 %v2564
    %v2653 = vpop.f32.mrf.mxu0
    %v2654 = vadd.f32 0.0, %v2653
    %v2655 = vpop.f32.mrf.mxu0
    %v2656 = vadd.f32 0.0, %v2655
    %2657 = vmatmul.bf16.gmra.mxu0 %v2565
    %v2658 = vpop.f32.mrf.mxu0
    %v2659 = vadd.f32 0.0, %v2658
    %v2660 = vpop.f32.mrf.mxu0
    %v2661 = vadd.f32 0.0, %v2660
    %2662 = vmatmul.bf16.gmra.mxu0 %v2566
    %v2663 = vpop.f32.mrf.mxu0
    %v2664 = vadd.f32 0.0, %v2663
    %v2665 = vpop.f32.mrf.mxu0
    %v2666 = vadd.f32 0.0, %v2665
    %2667 = vmatmul.bf16.gmra.mxu0 %v2567
    %v2668 = vpop.f32.mrf.mxu0
    %v2669 = vadd.f32 0.0, %v2668
    %v2670 = vpop.f32.mrf.mxu0
    %v2671 = vadd.f32 0.0, %v2670
    %2672 = vmatmul.bf16.gmra.mxu0 %v2568
    %v2673 = vpop.f32.mrf.mxu0
    %v2674 = vadd.f32 0.0, %v2673
    %v2675 = vpop.f32.mrf.mxu0
    %v2676 = vadd.f32 0.0, %v2675
    %2677 = vmatmul.bf16.gmra.mxu0 %v2569
    %v2678 = vpop.f32.mrf.mxu0
    %v2679 = vadd.f32 0.0, %v2678
    %v2680 = vpop.f32.mrf.mxu0
    %v2681 = vadd.f32 0.0, %v2680
    %2682 = vmatmul.bf16.gmra.mxu0 %v2570
    %v2683 = vpop.f32.mrf.mxu0
    %v2684 = vadd.f32 0.0, %v2683
    %v2685 = vpop.f32.mrf.mxu0
    %v2686 = vadd.f32 0.0, %v2685
    %2687 = vmatmul.bf16.gmra.mxu0 %v2571
    %v2688 = vpop.f32.mrf.mxu0
    %v2689 = vadd.f32 0.0, %v2688
    %v2690 = vpop.f32.mrf.mxu0
    %v2691 = vadd.f32 0.0, %v2690
    %2692 = vmatmul.bf16.gmra.mxu0 %v2572
    %v2693 = vpop.f32.mrf.mxu0
    %v2694 = vadd.f32 0.0, %v2693
    %v2695 = vpop.f32.mrf.mxu0
    %v2696 = vadd.f32 0.0, %v2695
    %2697 = vmatmul.bf16.gmra.mxu0 %v2573
    %v2698 = vpop.f32.mrf.mxu0
    %v2699 = vadd.f32 0.0, %v2698
    %v2700 = vpop.f32.mrf.mxu0
    %v2701 = vadd.f32 0.0, %v2700
    %2702 = vmatmul.bf16.gmra.mxu0 %v2574
    %v2703 = vpop.f32.mrf.mxu0
    %v2704 = vadd.f32 0.0, %v2703
    %v2705 = vpop.f32.mrf.mxu0
    %v2706 = vadd.f32 0.0, %v2705
    %2707 = vmatmul.bf16.gmra.mxu0 %v2575
    %v2708 = vpop.f32.mrf.mxu0
    %v2709 = vadd.f32 0.0, %v2708
    %v2710 = vpop.f32.mrf.mxu0
    %v2711 = vadd.f32 0.0, %v2710
    %2712 = vmatmul.bf16.gmra.mxu0 %v2576
    %v2713 = vpop.f32.mrf.mxu0
    %v2714 = vadd.f32 0.0, %v2713
    %v2715 = vpop.f32.mrf.mxu0
    %v2716 = vadd.f32 0.0, %v2715
    %2717 = vmatmul.bf16.gmra.mxu0 %v2577
    %v2718 = vpop.f32.mrf.mxu0
    %v2719 = vadd.f32 0.0, %v2718
    %v2720 = vpop.f32.mrf.mxu0
    %v2721 = vadd.f32 0.0, %v2720
    %2722 = vmatmul.bf16.gmra.mxu0 %v2578
    %v2723 = vpop.f32.mrf.mxu0
    %v2724 = vadd.f32 0.0, %v2723
    %v2725 = vpop.f32.mrf.mxu0
    %v2726 = vadd.f32 0.0, %v2725
    %2727 = vmatmul.bf16.gmra.mxu0 %v2579
    %v2728 = vpop.f32.mrf.mxu0
    %v2729 = vadd.f32 0.0, %v2728
    %v2730 = vpop.f32.mrf.mxu0
    %v2731 = vadd.f32 0.0, %v2730
    %2732 = vdwg.mxu0
    %v2733 = vadd.f32 %v2419, %v2654
    %v2734 = vadd.f32 %v2420, %v2656
    %v2735 = vadd.f32 %v2421, %v2659
    %v2736 = vadd.f32 %v2422, %v2661
    %v2737 = vadd.f32 %v2423, %v2664
    %v2738 = vadd.f32 %v2424, %v2666
    %v2739 = vadd.f32 %v2425, %v2669
    %v2740 = vadd.f32 %v2426, %v2671
    %v2741 = vadd.f32 %v2427, %v2674
    %v2742 = vadd.f32 %v2428, %v2676
    %v2743 = vadd.f32 %v2429, %v2679
    %v2744 = vadd.f32 %v2430, %v2681
    %v2745 = vadd.f32 %v2431, %v2684
    %v2746 = vadd.f32 %v2432, %v2686
    %v2747 = vadd.f32 %v2433, %v2689
    %v2748 = vadd.f32 %v2434, %v2691
    %v2749 = vadd.f32 %v2435, %v2694
    %v2750 = vadd.f32 %v2436, %v2696
    %v2751 = vadd.f32 %v2437, %v2699
    %v2752 = vadd.f32 %v2438, %v2701
    %v2753 = vadd.f32 %v2439, %v2704
    %v2754 = vadd.f32 %v2440, %v2706
    %v2755 = vadd.f32 %v2441, %v2709
    %v2756 = vadd.f32 %v2442, %v2711
    %v2757 = vadd.f32 %v2443, %v2714
    %v2758 = vadd.f32 %v2444, %v2716
    %v2759 = vadd.f32 %v2445, %v2719
    %v2760 = vadd.f32 %v2446, %v2721
    %v2761 = vadd.f32 %v2447, %v2724
    %v2762 = vadd.f32 %v2448, %v2726
    %v2763 = vadd.f32 %v2449, %v2729
    %v2764 = vadd.f32 %v2450, %v2731
    %v2765 = vld [vmem:[%s4] sm:$0x1]
    %v2767 = vperm.slane %v2765, 0
    %v2769 = vadd.f32 %v2733, %v2767
    %v2770 = vadd.f32 %v2734, %v2767
    %v2771 = vadd.f32 %v2735, %v2767
    %v2772 = vadd.f32 %v2736, %v2767
    %v2773 = vadd.f32 %v2737, %v2767
    %v2774 = vadd.f32 %v2738, %v2767
    %v2775 = vadd.f32 %v2739, %v2767
    %v2776 = vadd.f32 %v2740, %v2767
    %v2777 = vadd.f32 %v2741, %v2767
    %v2778 = vadd.f32 %v2742, %v2767
    %v2779 = vadd.f32 %v2743, %v2767
    %v2780 = vadd.f32 %v2744, %v2767
    %v2781 = vadd.f32 %v2745, %v2767
    %v2782 = vadd.f32 %v2746, %v2767
    %v2783 = vadd.f32 %v2747, %v2767
    %v2784 = vadd.f32 %v2748, %v2767
    %v2785 = vadd.f32 %v2749, %v2767
    %v2786 = vadd.f32 %v2750, %v2767
    %v2787 = vadd.f32 %v2751, %v2767
    %v2788 = vadd.f32 %v2752, %v2767
    %v2789 = vadd.f32 %v2753, %v2767
    %v2790 = vadd.f32 %v2754, %v2767
    %v2791 = vadd.f32 %v2755, %v2767
    %v2792 = vadd.f32 %v2756, %v2767
    %v2793 = vadd.f32 %v2757, %v2767
    %v2794 = vadd.f32 %v2758, %v2767
    %v2795 = vadd.f32 %v2759, %v2767
    %v2796 = vadd.f32 %v2760, %v2767
    %v2797 = vadd.f32 %v2761, %v2767
    %v2798 = vadd.f32 %v2762, %v2767
    %v2799 = vadd.f32 %v2763, %v2767
    %v2800 = vadd.f32 %v2764, %v2767
    %v2801 = vmax.f32 %v2769, 0.0
    %v2802 = vmax.f32 %v2770, 0.0
    %v2803 = vmax.f32 %v2771, 0.0
    %v2804 = vmax.f32 %v2772, 0.0
    %v2805 = vmax.f32 %v2773, 0.0
    %v2806 = vmax.f32 %v2774, 0.0
    %v2807 = vmax.f32 %v2775, 0.0
    %v2808 = vmax.f32 %v2776, 0.0
    %v2809 = vmax.f32 %v2777, 0.0
    %v2810 = vmax.f32 %v2778, 0.0
    %v2811 = vmax.f32 %v2779, 0.0
    %v2812 = vmax.f32 %v2780, 0.0
    %v2813 = vmax.f32 %v2781, 0.0
    %v2814 = vmax.f32 %v2782, 0.0
    %v2815 = vmax.f32 %v2783, 0.0
    %v2816 = vmax.f32 %v2784, 0.0
    %v2817 = vmax.f32 %v2785, 0.0
    %v2818 = vmax.f32 %v2786, 0.0
    %v2819 = vmax.f32 %v2787, 0.0
    %v2820 = vmax.f32 %v2788, 0.0
    %v2821 = vmax.f32 %v2789, 0.0
    %v2822 = vmax.f32 %v2790, 0.0
    %v2823 = vmax.f32 %v2791, 0.0
    %v2824 = vmax.f32 %v2792, 0.0
    %v2825 = vmax.f32 %v2793, 0.0
    %v2826 = vmax.f32 %v2794, 0.0
    %v2827 = vmax.f32 %v2795, 0.0
    %v2828 = vmax.f32 %v2796, 0.0
    %v2829 = vmax.f32 %v2797, 0.0
    %v2830 = vmax.f32 %v2798, 0.0
    %v2831 = vmax.f32 %v2799, 0.0
    %v2832 = vmax.f32 %v2800, 0.0
    %v2833 = vld [vmem:[%s211] sm:$0xf]
    %v2834 = vld [vmem:[%s211 + $0x4] sm:$0xf]
    %v2835 = vld [vmem:[%s211 + $0x8] sm:$0xf]
    %v2836 = vld [vmem:[%s211 + $0xc] sm:$0xf]
    %v2837 = vld [vmem:[%s211 + $0x10] sm:$0xf]
    %v2838 = vld [vmem:[%s211 + $0x14] sm:$0xf]
    %v2839 = vld [vmem:[%s211 + $0x18] sm:$0xf]
    %v2840 = vld [vmem:[%s211 + $0x1c] sm:$0xf]
    %v2841 = vld [vmem:[%s211 + $0x20] sm:$0xf]
    %v2842 = vld [vmem:[%s211 + $0x24] sm:$0xf]
    %v2843 = vld [vmem:[%s211 + $0x28] sm:$0xf]
    %v2844 = vld [vmem:[%s211 + $0x2c] sm:$0xf]
    %v2845 = vld [vmem:[%s211 + $0x30] sm:$0xf]
    %v2846 = vld [vmem:[%s211 + $0x34] sm:$0xf]
    %v2847 = vld [vmem:[%s211 + $0x38] sm:$0xf]
    %v2848 = vld [vmem:[%s211 + $0x3c] sm:$0xf]
    %v2849 = vld [vmem:[%s211 + $0x40] sm:$0xf]
    %v2850 = vld [vmem:[%s211 + $0x44] sm:$0xf]
    %v2851 = vld [vmem:[%s211 + $0x48] sm:$0xf]
    %v2852 = vld [vmem:[%s211 + $0x4c] sm:$0xf]
    %v2853 = vld [vmem:[%s211 + $0x50] sm:$0xf]
    %v2854 = vld [vmem:[%s211 + $0x54] sm:$0xf]
    %v2855 = vld [vmem:[%s211 + $0x58] sm:$0xf]
    %v2856 = vld [vmem:[%s211 + $0x5c] sm:$0xf]
    %v2857 = vld [vmem:[%s211 + $0x60] sm:$0xf]
    %v2858 = vld [vmem:[%s211 + $0x64] sm:$0xf]
    %v2859 = vld [vmem:[%s211 + $0x68] sm:$0xf]
    %v2860 = vld [vmem:[%s211 + $0x6c] sm:$0xf]
    %v2861 = vld [vmem:[%s211 + $0x70] sm:$0xf]
    %v2862 = vld [vmem:[%s211 + $0x74] sm:$0xf]
    %v2863 = vld [vmem:[%s211 + $0x78] sm:$0xf]
    %v2864 = vld [vmem:[%s211 + $0x7c] sm:$0xf]
    %v2865 = vld [vmem:[#allocation10] sm:$0xf]
    %v2866 = vld [vmem:[#allocation10 + $0x4] sm:$0xf]
    %v2867 = vld [vmem:[#allocation10 + $0x8] sm:$0xf]
    %v2868 = vld [vmem:[#allocation10 + $0xc] sm:$0xf]
    %v2869 = vld [vmem:[#allocation10 + $0x10] sm:$0xf]
    %v2870 = vld [vmem:[#allocation10 + $0x14] sm:$0xf]
    %v2871 = vld [vmem:[#allocation10 + $0x18] sm:$0xf]
    %v2872 = vld [vmem:[#allocation10 + $0x1c] sm:$0xf]
    %v2873 = vld [vmem:[#allocation10 + $0x20] sm:$0xf]
    %v2874 = vld [vmem:[#allocation10 + $0x24] sm:$0xf]
    %v2875 = vld [vmem:[#allocation10 + $0x28] sm:$0xf]
    %v2876 = vld [vmem:[#allocation10 + $0x2c] sm:$0xf]
    %v2877 = vld [vmem:[#allocation10 + $0x30] sm:$0xf]
    %v2878 = vld [vmem:[#allocation10 + $0x34] sm:$0xf]
    %v2879 = vld [vmem:[#allocation10 + $0x38] sm:$0xf]
    %v2880 = vld [vmem:[#allocation10 + $0x3c] sm:$0xf]
    %v2881 = vld [vmem:[%s6] sm:$0x1]
    %v2883 = vperm.slane %v2881, 0
    %v2917 = vunpack.c.l.b16 %v2833
    %v2918 = vunpack.c.l.b16 %v2834
    %v2919 = vunpack.c.l.b16 %v2835
    %v2920 = vunpack.c.l.b16 %v2836
    %v2921 = vunpack.c.l.b16 %v2837
    %v2922 = vunpack.c.l.b16 %v2838
    %v2923 = vunpack.c.l.b16 %v2839
    %v2924 = vunpack.c.l.b16 %v2840
    %v2925 = vunpack.c.l.b16 %v2841
    %v2926 = vunpack.c.l.b16 %v2842
    %v2927 = vunpack.c.l.b16 %v2843
    %v2928 = vunpack.c.l.b16 %v2844
    %v2929 = vunpack.c.l.b16 %v2845
    %v2930 = vunpack.c.l.b16 %v2846
    %v2931 = vunpack.c.l.b16 %v2847
    %v2932 = vunpack.c.l.b16 %v2848
    %v2933 = vunpack.c.l.b16 %v2849
    %v2934 = vunpack.c.l.b16 %v2850
    %v2935 = vunpack.c.l.b16 %v2851
    %v2936 = vunpack.c.l.b16 %v2852
    %v2937 = vunpack.c.l.b16 %v2853
    %v2938 = vunpack.c.l.b16 %v2854
    %v2939 = vunpack.c.l.b16 %v2855
    %v2940 = vunpack.c.l.b16 %v2856
    %v2941 = vunpack.c.l.b16 %v2857
    %v2942 = vunpack.c.l.b16 %v2858
    %v2943 = vunpack.c.l.b16 %v2859
    %v2944 = vunpack.c.l.b16 %v2860
    %v2945 = vunpack.c.l.b16 %v2861
    %v2946 = vunpack.c.l.b16 %v2862
    %v2947 = vunpack.c.l.b16 %v2863
    %v2948 = vunpack.c.l.b16 %v2864
    %v2949 = vpack.c.b16 %v2918, %v2917
    %v2950 = vpack.c.b16 %v2920, %v2919
    %v2951 = vpack.c.b16 %v2922, %v2921
    %v2952 = vpack.c.b16 %v2924, %v2923
    %v2953 = vpack.c.b16 %v2926, %v2925
    %v2954 = vpack.c.b16 %v2928, %v2927
    %v2955 = vpack.c.b16 %v2930, %v2929
    %v2956 = vpack.c.b16 %v2932, %v2931
    %v2957 = vpack.c.b16 %v2934, %v2933
    %v2958 = vpack.c.b16 %v2936, %v2935
    %v2959 = vpack.c.b16 %v2938, %v2937
    %v2960 = vpack.c.b16 %v2940, %v2939
    %v2961 = vpack.c.b16 %v2942, %v2941
    %v2962 = vpack.c.b16 %v2944, %v2943
    %v2963 = vpack.c.b16 %v2946, %v2945
    %v2964 = vpack.c.b16 %v2948, %v2947
    %v2997 = vunpack.c.l.b16 %v2865
    %v2998 = vunpack.c.l.b16 %v2866
    %v2999 = vunpack.c.l.b16 %v2867
    %v3000 = vunpack.c.l.b16 %v2868
    %v3001 = vunpack.c.l.b16 %v2869
    %v3002 = vunpack.c.l.b16 %v2870
    %v3003 = vunpack.c.l.b16 %v2871
    %v3004 = vunpack.c.l.b16 %v2872
    %v3005 = vunpack.c.l.b16 %v2873
    %v3006 = vunpack.c.l.b16 %v2874
    %v3007 = vunpack.c.l.b16 %v2875
    %v3008 = vunpack.c.l.b16 %v2876
    %v3009 = vunpack.c.l.b16 %v2877
    %v3010 = vunpack.c.l.b16 %v2878
    %v3011 = vunpack.c.l.b16 %v2879
    %v3012 = vunpack.c.l.b16 %v2880
    %v3013 = vpack.c.b16 %v2998, %v2997
    %v3014 = vpack.c.b16 %v3000, %v2999
    %v3015 = vpack.c.b16 %v3002, %v3001
    %v3016 = vpack.c.b16 %v3004, %v3003
    %v3017 = vpack.c.b16 %v3006, %v3005
    %v3018 = vpack.c.b16 %v3008, %v3007
    %v3019 = vpack.c.b16 %v3010, %v3009
    %v3020 = vpack.c.b16 %v3012, %v3011
    %3029 = vmatpush.bf16.msra.mxu0 %v3020
    %3030 = vmatpush.bf16.msra.mxu0 %v3019
    %3031 = vmatpush.bf16.msra.mxu0 %v3018
    %3032 = vmatpush.bf16.msra.mxu0 %v3017
    %3033 = vmatpush.bf16.msra.mxu0 %v3016
    %3034 = vmatpush.bf16.msra.mxu0 %v3015
    %3035 = vmatpush.bf16.msra.mxu0 %v3014
    %3036 = vmatpush.bf16.msra.mxu0 %v3013
    %3037 = vmatmul.bf16.gmra.mxu0 %v2949
    %v3038 = vpop.f32.mrf.mxu0
    %v3039 = vadd.f32 %v2883, %v3038
    %v3040 = vpop.f32.mrf.mxu0
    %v3041 = vadd.f32 %v2883, %v3040
    %3042 = vmatmul.bf16.gmra.mxu0 %v2950
    %v3043 = vpop.f32.mrf.mxu0
    %v3044 = vadd.f32 %v2883, %v3043
    %v3045 = vpop.f32.mrf.mxu0
    %v3046 = vadd.f32 %v2883, %v3045
    %3047 = vmatmul.bf16.gmra.mxu0 %v2951
    %v3048 = vpop.f32.mrf.mxu0
    %v3049 = vadd.f32 %v2883, %v3048
    %v3050 = vpop.f32.mrf.mxu0
    %v3051 = vadd.f32 %v2883, %v3050
    %3052 = vmatmul.bf16.gmra.mxu0 %v2952
    %v3053 = vpop.f32.mrf.mxu0
    %v3054 = vadd.f32 %v2883, %v3053
    %v3055 = vpop.f32.mrf.mxu0
    %v3056 = vadd.f32 %v2883, %v3055
    %3057 = vmatmul.bf16.gmra.mxu0 %v2953
    %v3058 = vpop.f32.mrf.mxu0
    %v3059 = vadd.f32 %v2883, %v3058
    %v3060 = vpop.f32.mrf.mxu0
    %v3061 = vadd.f32 %v2883, %v3060
    %3062 = vmatmul.bf16.gmra.mxu0 %v2954
    %v3063 = vpop.f32.mrf.mxu0
    %v3064 = vadd.f32 %v2883, %v3063
    %v3065 = vpop.f32.mrf.mxu0
    %v3066 = vadd.f32 %v2883, %v3065
    %3067 = vmatmul.bf16.gmra.mxu0 %v2955
    %v3068 = vpop.f32.mrf.mxu0
    %v3069 = vadd.f32 %v2883, %v3068
    %v3070 = vpop.f32.mrf.mxu0
    %v3071 = vadd.f32 %v2883, %v3070
    %3072 = vmatmul.bf16.gmra.mxu0 %v2956
    %v3073 = vpop.f32.mrf.mxu0
    %v3074 = vadd.f32 %v2883, %v3073
    %v3075 = vpop.f32.mrf.mxu0
    %v3076 = vadd.f32 %v2883, %v3075
    %3077 = vmatmul.bf16.gmra.mxu0 %v2957
    %v3078 = vpop.f32.mrf.mxu0
    %v3079 = vadd.f32 %v2883, %v3078
    %v3080 = vpop.f32.mrf.mxu0
    %v3081 = vadd.f32 %v2883, %v3080
    %3082 = vmatmul.bf16.gmra.mxu0 %v2958
    %v3083 = vpop.f32.mrf.mxu0
    %v3084 = vadd.f32 %v2883, %v3083
    %v3085 = vpop.f32.mrf.mxu0
    %v3086 = vadd.f32 %v2883, %v3085
    %3087 = vmatmul.bf16.gmra.mxu0 %v2959
    %v3088 = vpop.f32.mrf.mxu0
    %v3089 = vadd.f32 %v2883, %v3088
    %v3090 = vpop.f32.mrf.mxu0
    %v3091 = vadd.f32 %v2883, %v3090
    %3092 = vmatmul.bf16.gmra.mxu0 %v2960
    %v3093 = vpop.f32.mrf.mxu0
    %v3094 = vadd.f32 %v2883, %v3093
    %v3095 = vpop.f32.mrf.mxu0
    %v3096 = vadd.f32 %v2883, %v3095
    %3097 = vmatmul.bf16.gmra.mxu0 %v2961
    %v3098 = vpop.f32.mrf.mxu0
    %v3099 = vadd.f32 %v2883, %v3098
    %v3100 = vpop.f32.mrf.mxu0
    %v3101 = vadd.f32 %v2883, %v3100
    %3102 = vmatmul.bf16.gmra.mxu0 %v2962
    %v3103 = vpop.f32.mrf.mxu0
    %v3104 = vadd.f32 %v2883, %v3103
    %v3105 = vpop.f32.mrf.mxu0
    %v3106 = vadd.f32 %v2883, %v3105
    %3107 = vmatmul.bf16.gmra.mxu0 %v2963
    %v3108 = vpop.f32.mrf.mxu0
    %v3109 = vadd.f32 %v2883, %v3108
    %v3110 = vpop.f32.mrf.mxu0
    %v3111 = vadd.f32 %v2883, %v3110
    %3112 = vmatmul.bf16.gmra.mxu0 %v2964
    %v3113 = vpop.f32.mrf.mxu0
    %v3114 = vadd.f32 %v2883, %v3113
    %v3115 = vpop.f32.mrf.mxu0
    %v3116 = vadd.f32 %v2883, %v3115
    %3117 = vdwg.mxu0
    %v3118 = vadd.f32 %v2801, %v3039
    %v3119 = vadd.f32 %v2802, %v3041
    %v3120 = vadd.f32 %v2803, %v3044
    %v3121 = vadd.f32 %v2804, %v3046
    %v3122 = vadd.f32 %v2805, %v3049
    %v3123 = vadd.f32 %v2806, %v3051
    %v3124 = vadd.f32 %v2807, %v3054
    %v3125 = vadd.f32 %v2808, %v3056
    %v3126 = vadd.f32 %v2809, %v3059
    %v3127 = vadd.f32 %v2810, %v3061
    %v3128 = vadd.f32 %v2811, %v3064
    %v3129 = vadd.f32 %v2812, %v3066
    %v3130 = vadd.f32 %v2813, %v3069
    %v3131 = vadd.f32 %v2814, %v3071
    %v3132 = vadd.f32 %v2815, %v3074
    %v3133 = vadd.f32 %v2816, %v3076
    %v3134 = vadd.f32 %v2817, %v3079
    %v3135 = vadd.f32 %v2818, %v3081
    %v3136 = vadd.f32 %v2819, %v3084
    %v3137 = vadd.f32 %v2820, %v3086
    %v3138 = vadd.f32 %v2821, %v3089
    %v3139 = vadd.f32 %v2822, %v3091
    %v3140 = vadd.f32 %v2823, %v3094
    %v3141 = vadd.f32 %v2824, %v3096
    %v3142 = vadd.f32 %v2825, %v3099
    %v3143 = vadd.f32 %v2826, %v3101
    %v3144 = vadd.f32 %v2827, %v3104
    %v3145 = vadd.f32 %v2828, %v3106
    %v3146 = vadd.f32 %v2829, %v3109
    %v3147 = vadd.f32 %v2830, %v3111
    %v3148 = vadd.f32 %v2831, %v3114
    %v3149 = vadd.f32 %v2832, %v3116
    %v3150 = vmax.f32 %v3118, 0.0
    %v3151 = vmax.f32 %v3119, 0.0
    %v3152 = vmax.f32 %v3120, 0.0
    %v3153 = vmax.f32 %v3121, 0.0
    %v3154 = vmax.f32 %v3122, 0.0
    %v3155 = vmax.f32 %v3123, 0.0
    %v3156 = vmax.f32 %v3124, 0.0
    %v3157 = vmax.f32 %v3125, 0.0
    %v3158 = vmax.f32 %v3126, 0.0
    %v3159 = vmax.f32 %v3127, 0.0
    %v3160 = vmax.f32 %v3128, 0.0
    %v3161 = vmax.f32 %v3129, 0.0
    %v3162 = vmax.f32 %v3130, 0.0
    %v3163 = vmax.f32 %v3131, 0.0
    %v3164 = vmax.f32 %v3132, 0.0
    %v3165 = vmax.f32 %v3133, 0.0
    %v3166 = vmax.f32 %v3134, 0.0
    %v3167 = vmax.f32 %v3135, 0.0
    %v3168 = vmax.f32 %v3136, 0.0
    %v3169 = vmax.f32 %v3137, 0.0
    %v3170 = vmax.f32 %v3138, 0.0
    %v3171 = vmax.f32 %v3139, 0.0
    %v3172 = vmax.f32 %v3140, 0.0
    %v3173 = vmax.f32 %v3141, 0.0
    %v3174 = vmax.f32 %v3142, 0.0
    %v3175 = vmax.f32 %v3143, 0.0
    %v3176 = vmax.f32 %v3144, 0.0
    %v3177 = vmax.f32 %v3145, 0.0
    %v3178 = vmax.f32 %v3146, 0.0
    %v3179 = vmax.f32 %v3147, 0.0
    %v3180 = vmax.f32 %v3148, 0.0
    %v3181 = vmax.f32 %v3149, 0.0
    %v3182 = vpack.c.bf16 %v3150, %v3150
    %v3183 = vpack.c.bf16 %v3151, %v3151
    %v3184 = vpack.c.bf16 %v3152, %v3152
    %v3185 = vpack.c.bf16 %v3153, %v3153
    %v3186 = vpack.c.bf16 %v3154, %v3154
    %v3187 = vpack.c.bf16 %v3155, %v3155
    %v3188 = vpack.c.bf16 %v3156, %v3156
    %v3189 = vpack.c.bf16 %v3157, %v3157
    %v3190 = vpack.c.bf16 %v3158, %v3158
    %v3191 = vpack.c.bf16 %v3159, %v3159
    %v3192 = vpack.c.bf16 %v3160, %v3160
    %v3193 = vpack.c.bf16 %v3161, %v3161
    %v3194 = vpack.c.bf16 %v3162, %v3162
    %v3195 = vpack.c.bf16 %v3163, %v3163
    %v3196 = vpack.c.bf16 %v3164, %v3164
    %v3197 = vpack.c.bf16 %v3165, %v3165
    %v3198 = vpack.c.bf16 %v3166, %v3166
    %v3199 = vpack.c.bf16 %v3167, %v3167
    %v3200 = vpack.c.bf16 %v3168, %v3168
    %v3201 = vpack.c.bf16 %v3169, %v3169
    %v3202 = vpack.c.bf16 %v3170, %v3170
    %v3203 = vpack.c.bf16 %v3171, %v3171
    %v3204 = vpack.c.bf16 %v3172, %v3172
    %v3205 = vpack.c.bf16 %v3173, %v3173
    %v3206 = vpack.c.bf16 %v3174, %v3174
    %v3207 = vpack.c.bf16 %v3175, %v3175
    %v3208 = vpack.c.bf16 %v3176, %v3176
    %v3209 = vpack.c.bf16 %v3177, %v3177
    %v3210 = vpack.c.bf16 %v3178, %v3178
    %v3211 = vpack.c.bf16 %v3179, %v3179
    %v3212 = vpack.c.bf16 %v3180, %v3180
    %v3213 = vpack.c.bf16 %v3181, %v3181
    %3214 = vst [vmem:[%s211] sm:$0xf] %v3182
    %3215 = vst [vmem:[%s211 + $0x4] sm:$0xf] %v3183
    %3216 = vst [vmem:[%s211 + $0x8] sm:$0xf] %v3184
    %3217 = vst [vmem:[%s211 + $0xc] sm:$0xf] %v3185
    %3218 = vst [vmem:[%s211 + $0x10] sm:$0xf] %v3186
    %3219 = vst [vmem:[%s211 + $0x14] sm:$0xf] %v3187
    %3220 = vst [vmem:[%s211 + $0x18] sm:$0xf] %v3188
    %3221 = vst [vmem:[%s211 + $0x1c] sm:$0xf] %v3189
    %3222 = vst [vmem:[%s211 + $0x20] sm:$0xf] %v3190
    %3223 = vst [vmem:[%s211 + $0x24] sm:$0xf] %v3191
    %3224 = vst [vmem:[%s211 + $0x28] sm:$0xf] %v3192
    %3225 = vst [vmem:[%s211 + $0x2c] sm:$0xf] %v3193
    %3226 = vst [vmem:[%s211 + $0x30] sm:$0xf] %v3194
    %3227 = vst [vmem:[%s211 + $0x34] sm:$0xf] %v3195
    %3228 = vst [vmem:[%s211 + $0x38] sm:$0xf] %v3196
    %3229 = vst [vmem:[%s211 + $0x3c] sm:$0xf] %v3197
    %3230 = vst [vmem:[%s211 + $0x40] sm:$0xf] %v3198
    %3231 = vst [vmem:[%s211 + $0x44] sm:$0xf] %v3199
    %3232 = vst [vmem:[%s211 + $0x48] sm:$0xf] %v3200
    %3233 = vst [vmem:[%s211 + $0x4c] sm:$0xf] %v3201
    %3234 = vst [vmem:[%s211 + $0x50] sm:$0xf] %v3202
    %3235 = vst [vmem:[%s211 + $0x54] sm:$0xf] %v3203
    %3236 = vst [vmem:[%s211 + $0x58] sm:$0xf] %v3204
    %3237 = vst [vmem:[%s211 + $0x5c] sm:$0xf] %v3205
    %3238 = vst [vmem:[%s211 + $0x60] sm:$0xf] %v3206
    %3239 = vst [vmem:[%s211 + $0x64] sm:$0xf] %v3207
    %3240 = vst [vmem:[%s211 + $0x68] sm:$0xf] %v3208
    %3241 = vst [vmem:[%s211 + $0x6c] sm:$0xf] %v3209
    %3242 = vst [vmem:[%s211 + $0x70] sm:$0xf] %v3210
    %3243 = vst [vmem:[%s211 + $0x74] sm:$0xf] %v3211
    %3244 = vst [vmem:[%s211 + $0x78] sm:$0xf] %v3212
    %3245 = vst [vmem:[%s211 + $0x7c] sm:$0xf] %v3213
    %v3246 = vld [vmem:[#allocation2] sm:$0xf]
    %v3247 = vld [vmem:[#allocation2 + $0x4] sm:$0xf]
    %v3248 = vld [vmem:[#allocation2 + $0x8] sm:$0xf]
    %v3249 = vld [vmem:[#allocation2 + $0xc] sm:$0xf]
    %v3250 = vld [vmem:[#allocation2 + $0x10] sm:$0xf]
    %v3251 = vld [vmem:[#allocation2 + $0x14] sm:$0xf]
    %v3252 = vld [vmem:[#allocation2 + $0x18] sm:$0xf]
    %v3253 = vld [vmem:[#allocation2 + $0x1c] sm:$0xf]
    %v3254 = vld [vmem:[#allocation2 + $0x20] sm:$0xf]
    %v3255 = vld [vmem:[#allocation2 + $0x24] sm:$0xf]
    %v3256 = vld [vmem:[#allocation2 + $0x28] sm:$0xf]
    %v3257 = vld [vmem:[#allocation2 + $0x2c] sm:$0xf]
    %v3258 = vld [vmem:[#allocation2 + $0x30] sm:$0xf]
    %v3259 = vld [vmem:[#allocation2 + $0x34] sm:$0xf]
    %v3260 = vld [vmem:[#allocation2 + $0x38] sm:$0xf]
    %v3261 = vld [vmem:[#allocation2 + $0x3c] sm:$0xf]
    %v3262 = vld [vmem:[#allocation2 + $0x40] sm:$0xf]
    %v3263 = vld [vmem:[#allocation2 + $0x44] sm:$0xf]
    %v3264 = vld [vmem:[#allocation2 + $0x48] sm:$0xf]
    %v3265 = vld [vmem:[#allocation2 + $0x4c] sm:$0xf]
    %v3266 = vld [vmem:[#allocation2 + $0x50] sm:$0xf]
    %v3267 = vld [vmem:[#allocation2 + $0x54] sm:$0xf]
    %v3268 = vld [vmem:[#allocation2 + $0x58] sm:$0xf]
    %v3269 = vld [vmem:[#allocation2 + $0x5c] sm:$0xf]
    %v3270 = vld [vmem:[#allocation2 + $0x60] sm:$0xf]
    %v3271 = vld [vmem:[#allocation2 + $0x64] sm:$0xf]
    %v3272 = vld [vmem:[#allocation2 + $0x68] sm:$0xf]
    %v3273 = vld [vmem:[#allocation2 + $0x6c] sm:$0xf]
    %v3274 = vld [vmem:[#allocation2 + $0x70] sm:$0xf]
    %v3275 = vld [vmem:[#allocation2 + $0x74] sm:$0xf]
    %v3276 = vld [vmem:[#allocation2 + $0x78] sm:$0xf]
    %v3277 = vld [vmem:[#allocation2 + $0x7c] sm:$0xf]
    %v3278 = vld [vmem:[#allocation12] sm:$0xf]
    %v3279 = vld [vmem:[#allocation12 + $0x4] sm:$0xf]
    %v3280 = vld [vmem:[#allocation12 + $0x8] sm:$0xf]
    %v3281 = vld [vmem:[#allocation12 + $0xc] sm:$0xf]
    %v3282 = vld [vmem:[#allocation12 + $0x10] sm:$0xf]
    %v3283 = vld [vmem:[#allocation12 + $0x14] sm:$0xf]
    %v3284 = vld [vmem:[#allocation12 + $0x18] sm:$0xf]
    %v3285 = vld [vmem:[#allocation12 + $0x1c] sm:$0xf]
    %v3286 = vld [vmem:[#allocation12 + $0x20] sm:$0xf]
    %v3287 = vld [vmem:[#allocation12 + $0x24] sm:$0xf]
    %v3288 = vld [vmem:[#allocation12 + $0x28] sm:$0xf]
    %v3289 = vld [vmem:[#allocation12 + $0x2c] sm:$0xf]
    %v3290 = vld [vmem:[#allocation12 + $0x30] sm:$0xf]
    %v3291 = vld [vmem:[#allocation12 + $0x34] sm:$0xf]
    %v3292 = vld [vmem:[#allocation12 + $0x38] sm:$0xf]
    %v3293 = vld [vmem:[#allocation12 + $0x3c] sm:$0xf]
    %s3294 = scalar_lea.vmem [#allocation2], 16
    %v3295 = vld [vmem:[%s3294] sm:$0xf]
    %v3296 = vld [vmem:[%s3294 + $0x4] sm:$0xf]
    %v3297 = vld [vmem:[%s3294 + $0x8] sm:$0xf]
    %v3298 = vld [vmem:[%s3294 + $0xc] sm:$0xf]
    %v3299 = vld [vmem:[%s3294 + $0x10] sm:$0xf]
    %v3300 = vld [vmem:[%s3294 + $0x14] sm:$0xf]
    %v3301 = vld [vmem:[%s3294 + $0x18] sm:$0xf]
    %v3302 = vld [vmem:[%s3294 + $0x1c] sm:$0xf]
    %v3303 = vld [vmem:[%s3294 + $0x20] sm:$0xf]
    %v3304 = vld [vmem:[%s3294 + $0x24] sm:$0xf]
    %v3305 = vld [vmem:[%s3294 + $0x28] sm:$0xf]
    %v3306 = vld [vmem:[%s3294 + $0x2c] sm:$0xf]
    %v3307 = vld [vmem:[%s3294 + $0x30] sm:$0xf]
    %v3308 = vld [vmem:[%s3294 + $0x34] sm:$0xf]
    %v3309 = vld [vmem:[%s3294 + $0x38] sm:$0xf]
    %v3310 = vld [vmem:[%s3294 + $0x3c] sm:$0xf]
    %v3311 = vld [vmem:[%s3294 + $0x40] sm:$0xf]
    %v3312 = vld [vmem:[%s3294 + $0x44] sm:$0xf]
    %v3313 = vld [vmem:[%s3294 + $0x48] sm:$0xf]
    %v3314 = vld [vmem:[%s3294 + $0x4c] sm:$0xf]
    %v3315 = vld [vmem:[%s3294 + $0x50] sm:$0xf]
    %v3316 = vld [vmem:[%s3294 + $0x54] sm:$0xf]
    %v3317 = vld [vmem:[%s3294 + $0x58] sm:$0xf]
    %v3318 = vld [vmem:[%s3294 + $0x5c] sm:$0xf]
    %v3319 = vld [vmem:[%s3294 + $0x60] sm:$0xf]
    %v3320 = vld [vmem:[%s3294 + $0x64] sm:$0xf]
    %v3321 = vld [vmem:[%s3294 + $0x68] sm:$0xf]
    %v3322 = vld [vmem:[%s3294 + $0x6c] sm:$0xf]
    %v3323 = vld [vmem:[%s3294 + $0x70] sm:$0xf]
    %v3324 = vld [vmem:[%s3294 + $0x74] sm:$0xf]
    %v3325 = vld [vmem:[%s3294 + $0x78] sm:$0xf]
    %v3326 = vld [vmem:[%s3294 + $0x7c] sm:$0xf]
    %s3327 = scalar_lea.vmem [#allocation12], 64
    %v3328 = vld [vmem:[%s3327] sm:$0xf]
    %v3329 = vld [vmem:[%s3327 + $0x4] sm:$0xf]
    %v3330 = vld [vmem:[%s3327 + $0x8] sm:$0xf]
    %v3331 = vld [vmem:[%s3327 + $0xc] sm:$0xf]
    %v3332 = vld [vmem:[%s3327 + $0x10] sm:$0xf]
    %v3333 = vld [vmem:[%s3327 + $0x14] sm:$0xf]
    %v3334 = vld [vmem:[%s3327 + $0x18] sm:$0xf]
    %v3335 = vld [vmem:[%s3327 + $0x1c] sm:$0xf]
    %v3336 = vld [vmem:[%s3327 + $0x20] sm:$0xf]
    %v3337 = vld [vmem:[%s3327 + $0x24] sm:$0xf]
    %v3338 = vld [vmem:[%s3327 + $0x28] sm:$0xf]
    %v3339 = vld [vmem:[%s3327 + $0x2c] sm:$0xf]
    %v3340 = vld [vmem:[%s3327 + $0x30] sm:$0xf]
    %v3341 = vld [vmem:[%s3327 + $0x34] sm:$0xf]
    %v3342 = vld [vmem:[%s3327 + $0x38] sm:$0xf]
    %v3343 = vld [vmem:[%s3327 + $0x3c] sm:$0xf]
    %v3376 = vunpack.c.l.b16 %v3295
    %v3377 = vunpack.c.l.b16 %v3296
    %v3378 = vunpack.c.l.b16 %v3297
    %v3379 = vunpack.c.l.b16 %v3298
    %v3380 = vunpack.c.l.b16 %v3299
    %v3381 = vunpack.c.l.b16 %v3300
    %v3382 = vunpack.c.l.b16 %v3301
    %v3383 = vunpack.c.l.b16 %v3302
    %v3384 = vunpack.c.l.b16 %v3303
    %v3385 = vunpack.c.l.b16 %v3304
    %v3386 = vunpack.c.l.b16 %v3305
    %v3387 = vunpack.c.l.b16 %v3306
    %v3388 = vunpack.c.l.b16 %v3307
    %v3389 = vunpack.c.l.b16 %v3308
    %v3390 = vunpack.c.l.b16 %v3309
    %v3391 = vunpack.c.l.b16 %v3310
    %v3392 = vunpack.c.l.b16 %v3311
    %v3393 = vunpack.c.l.b16 %v3312
    %v3394 = vunpack.c.l.b16 %v3313
    %v3395 = vunpack.c.l.b16 %v3314
    %v3396 = vunpack.c.l.b16 %v3315
    %v3397 = vunpack.c.l.b16 %v3316
    %v3398 = vunpack.c.l.b16 %v3317
    %v3399 = vunpack.c.l.b16 %v3318
    %v3400 = vunpack.c.l.b16 %v3319
    %v3401 = vunpack.c.l.b16 %v3320
    %v3402 = vunpack.c.l.b16 %v3321
    %v3403 = vunpack.c.l.b16 %v3322
    %v3404 = vunpack.c.l.b16 %v3323
    %v3405 = vunpack.c.l.b16 %v3324
    %v3406 = vunpack.c.l.b16 %v3325
    %v3407 = vunpack.c.l.b16 %v3326
    %v3408 = vpack.c.b16 %v3377, %v3376
    %v3409 = vpack.c.b16 %v3379, %v3378
    %v3410 = vpack.c.b16 %v3381, %v3380
    %v3411 = vpack.c.b16 %v3383, %v3382
    %v3412 = vpack.c.b16 %v3385, %v3384
    %v3413 = vpack.c.b16 %v3387, %v3386
    %v3414 = vpack.c.b16 %v3389, %v3388
    %v3415 = vpack.c.b16 %v3391, %v3390
    %v3416 = vpack.c.b16 %v3393, %v3392
    %v3417 = vpack.c.b16 %v3395, %v3394
    %v3418 = vpack.c.b16 %v3397, %v3396
    %v3419 = vpack.c.b16 %v3399, %v3398
    %v3420 = vpack.c.b16 %v3401, %v3400
    %v3421 = vpack.c.b16 %v3403, %v3402
    %v3422 = vpack.c.b16 %v3405, %v3404
    %v3423 = vpack.c.b16 %v3407, %v3406
    %v3456 = vunpack.c.l.b16 %v3328
    %v3457 = vunpack.c.l.b16 %v3329
    %v3458 = vunpack.c.l.b16 %v3330
    %v3459 = vunpack.c.l.b16 %v3331
    %v3460 = vunpack.c.l.b16 %v3332
    %v3461 = vunpack.c.l.b16 %v3333
    %v3462 = vunpack.c.l.b16 %v3334
    %v3463 = vunpack.c.l.b16 %v3335
    %v3464 = vunpack.c.l.b16 %v3336
    %v3465 = vunpack.c.l.b16 %v3337
    %v3466 = vunpack.c.l.b16 %v3338
    %v3467 = vunpack.c.l.b16 %v3339
    %v3468 = vunpack.c.l.b16 %v3340
    %v3469 = vunpack.c.l.b16 %v3341
    %v3470 = vunpack.c.l.b16 %v3342
    %v3471 = vunpack.c.l.b16 %v3343
    %v3472 = vpack.c.b16 %v3457, %v3456
    %v3473 = vpack.c.b16 %v3459, %v3458
    %v3474 = vpack.c.b16 %v3461, %v3460
    %v3475 = vpack.c.b16 %v3463, %v3462
    %v3476 = vpack.c.b16 %v3465, %v3464
    %v3477 = vpack.c.b16 %v3467, %v3466
    %v3478 = vpack.c.b16 %v3469, %v3468
    %v3479 = vpack.c.b16 %v3471, %v3470
    %3488 = vmatpush.bf16.msra.mxu0 %v3479
    %3489 = vmatpush.bf16.msra.mxu0 %v3478
    %3490 = vmatpush.bf16.msra.mxu0 %v3477
    %3491 = vmatpush.bf16.msra.mxu0 %v3476
    %3492 = vmatpush.bf16.msra.mxu0 %v3475
    %3493 = vmatpush.bf16.msra.mxu0 %v3474
    %3494 = vmatpush.bf16.msra.mxu0 %v3473
    %3495 = vmatpush.bf16.msra.mxu0 %v3472
    %3496 = vmatmul.bf16.gmra.mxu0 %v3408
    %v3497 = vpop.f32.mrf.mxu0
    %v3498 = vadd.f32 0.0, %v3497
    %v3499 = vpop.f32.mrf.mxu0
    %v3500 = vadd.f32 0.0, %v3499
    %3501 = vmatmul.bf16.gmra.mxu0 %v3409
    %v3502 = vpop.f32.mrf.mxu0
    %v3503 = vadd.f32 0.0, %v3502
    %v3504 = vpop.f32.mrf.mxu0
    %v3505 = vadd.f32 0.0, %v3504
    %3506 = vmatmul.bf16.gmra.mxu0 %v3410
    %v3507 = vpop.f32.mrf.mxu0
    %v3508 = vadd.f32 0.0, %v3507
    %v3509 = vpop.f32.mrf.mxu0
    %v3510 = vadd.f32 0.0, %v3509
    %3511 = vmatmul.bf16.gmra.mxu0 %v3411
    %v3512 = vpop.f32.mrf.mxu0
    %v3513 = vadd.f32 0.0, %v3512
    %v3514 = vpop.f32.mrf.mxu0
    %v3515 = vadd.f32 0.0, %v3514
    %3516 = vmatmul.bf16.gmra.mxu0 %v3412
    %v3517 = vpop.f32.mrf.mxu0
    %v3518 = vadd.f32 0.0, %v3517
    %v3519 = vpop.f32.mrf.mxu0
    %v3520 = vadd.f32 0.0, %v3519
    %3521 = vmatmul.bf16.gmra.mxu0 %v3413
    %v3522 = vpop.f32.mrf.mxu0
    %v3523 = vadd.f32 0.0, %v3522
    %v3524 = vpop.f32.mrf.mxu0
    %v3525 = vadd.f32 0.0, %v3524
    %3526 = vmatmul.bf16.gmra.mxu0 %v3414
    %v3527 = vpop.f32.mrf.mxu0
    %v3528 = vadd.f32 0.0, %v3527
    %v3529 = vpop.f32.mrf.mxu0
    %v3530 = vadd.f32 0.0, %v3529
    %3531 = vmatmul.bf16.gmra.mxu0 %v3415
    %v3532 = vpop.f32.mrf.mxu0
    %v3533 = vadd.f32 0.0, %v3532
    %v3534 = vpop.f32.mrf.mxu0
    %v3535 = vadd.f32 0.0, %v3534
    %3536 = vmatmul.bf16.gmra.mxu0 %v3416
    %v3537 = vpop.f32.mrf.mxu0
    %v3538 = vadd.f32 0.0, %v3537
    %v3539 = vpop.f32.mrf.mxu0
    %v3540 = vadd.f32 0.0, %v3539
    %3541 = vmatmul.bf16.gmra.mxu0 %v3417
    %v3542 = vpop.f32.mrf.mxu0
    %v3543 = vadd.f32 0.0, %v3542
    %v3544 = vpop.f32.mrf.mxu0
    %v3545 = vadd.f32 0.0, %v3544
    %3546 = vmatmul.bf16.gmra.mxu0 %v3418
    %v3547 = vpop.f32.mrf.mxu0
    %v3548 = vadd.f32 0.0, %v3547
    %v3549 = vpop.f32.mrf.mxu0
    %v3550 = vadd.f32 0.0, %v3549
    %3551 = vmatmul.bf16.gmra.mxu0 %v3419
    %v3552 = vpop.f32.mrf.mxu0
    %v3553 = vadd.f32 0.0, %v3552
    %v3554 = vpop.f32.mrf.mxu0
    %v3555 = vadd.f32 0.0, %v3554
    %3556 = vmatmul.bf16.gmra.mxu0 %v3420
    %v3557 = vpop.f32.mrf.mxu0
    %v3558 = vadd.f32 0.0, %v3557
    %v3559 = vpop.f32.mrf.mxu0
    %v3560 = vadd.f32 0.0, %v3559
    %3561 = vmatmul.bf16.gmra.mxu0 %v3421
    %v3562 = vpop.f32.mrf.mxu0
    %v3563 = vadd.f32 0.0, %v3562
    %v3564 = vpop.f32.mrf.mxu0
    %v3565 = vadd.f32 0.0, %v3564
    %3566 = vmatmul.bf16.gmra.mxu0 %v3422
    %v3567 = vpop.f32.mrf.mxu0
    %v3568 = vadd.f32 0.0, %v3567
    %v3569 = vpop.f32.mrf.mxu0
    %v3570 = vadd.f32 0.0, %v3569
    %3571 = vmatmul.bf16.gmra.mxu0 %v3423
    %v3572 = vpop.f32.mrf.mxu0
    %v3573 = vadd.f32 0.0, %v3572
    %v3574 = vpop.f32.mrf.mxu0
    %v3575 = vadd.f32 0.0, %v3574
    %3576 = vdwg.mxu0
    %v3609 = vunpack.c.l.b16 %v3246
    %v3610 = vunpack.c.l.b16 %v3247
    %v3611 = vunpack.c.l.b16 %v3248
    %v3612 = vunpack.c.l.b16 %v3249
    %v3613 = vunpack.c.l.b16 %v3250
    %v3614 = vunpack.c.l.b16 %v3251
    %v3615 = vunpack.c.l.b16 %v3252
    %v3616 = vunpack.c.l.b16 %v3253
    %v3617 = vunpack.c.l.b16 %v3254
    %v3618 = vunpack.c.l.b16 %v3255
    %v3619 = vunpack.c.l.b16 %v3256
    %v3620 = vunpack.c.l.b16 %v3257
    %v3621 = vunpack.c.l.b16 %v3258
    %v3622 = vunpack.c.l.b16 %v3259
    %v3623 = vunpack.c.l.b16 %v3260
    %v3624 = vunpack.c.l.b16 %v3261
    %v3625 = vunpack.c.l.b16 %v3262
    %v3626 = vunpack.c.l.b16 %v3263
    %v3627 = vunpack.c.l.b16 %v3264
    %v3628 = vunpack.c.l.b16 %v3265
    %v3629 = vunpack.c.l.b16 %v3266
    %v3630 = vunpack.c.l.b16 %v3267
    %v3631 = vunpack.c.l.b16 %v3268
    %v3632 = vunpack.c.l.b16 %v3269
    %v3633 = vunpack.c.l.b16 %v3270
    %v3634 = vunpack.c.l.b16 %v3271
    %v3635 = vunpack.c.l.b16 %v3272
    %v3636 = vunpack.c.l.b16 %v3273
    %v3637 = vunpack.c.l.b16 %v3274
    %v3638 = vunpack.c.l.b16 %v3275
    %v3639 = vunpack.c.l.b16 %v3276
    %v3640 = vunpack.c.l.b16 %v3277
    %v3641 = vpack.c.b16 %v3610, %v3609
    %v3642 = vpack.c.b16 %v3612, %v3611
    %v3643 = vpack.c.b16 %v3614, %v3613
    %v3644 = vpack.c.b16 %v3616, %v3615
    %v3645 = vpack.c.b16 %v3618, %v3617
    %v3646 = vpack.c.b16 %v3620, %v3619
    %v3647 = vpack.c.b16 %v3622, %v3621
    %v3648 = vpack.c.b16 %v3624, %v3623
    %v3649 = vpack.c.b16 %v3626, %v3625
    %v3650 = vpack.c.b16 %v3628, %v3627
    %v3651 = vpack.c.b16 %v3630, %v3629
    %v3652 = vpack.c.b16 %v3632, %v3631
    %v3653 = vpack.c.b16 %v3634, %v3633
    %v3654 = vpack.c.b16 %v3636, %v3635
    %v3655 = vpack.c.b16 %v3638, %v3637
    %v3656 = vpack.c.b16 %v3640, %v3639
    %v3689 = vunpack.c.l.b16 %v3278
    %v3690 = vunpack.c.l.b16 %v3279
    %v3691 = vunpack.c.l.b16 %v3280
    %v3692 = vunpack.c.l.b16 %v3281
    %v3693 = vunpack.c.l.b16 %v3282
    %v3694 = vunpack.c.l.b16 %v3283
    %v3695 = vunpack.c.l.b16 %v3284
    %v3696 = vunpack.c.l.b16 %v3285
    %v3697 = vunpack.c.l.b16 %v3286
    %v3698 = vunpack.c.l.b16 %v3287
    %v3699 = vunpack.c.l.b16 %v3288
    %v3700 = vunpack.c.l.b16 %v3289
    %v3701 = vunpack.c.l.b16 %v3290
    %v3702 = vunpack.c.l.b16 %v3291
    %v3703 = vunpack.c.l.b16 %v3292
    %v3704 = vunpack.c.l.b16 %v3293
    %v3705 = vpack.c.b16 %v3690, %v3689
    %v3706 = vpack.c.b16 %v3692, %v3691
    %v3707 = vpack.c.b16 %v3694, %v3693
    %v3708 = vpack.c.b16 %v3696, %v3695
    %v3709 = vpack.c.b16 %v3698, %v3697
    %v3710 = vpack.c.b16 %v3700, %v3699
    %v3711 = vpack.c.b16 %v3702, %v3701
    %v3712 = vpack.c.b16 %v3704, %v3703
    %3721 = vmatpush.bf16.msra.mxu0 %v3712
    %3722 = vmatpush.bf16.msra.mxu0 %v3711
    %3723 = vmatpush.bf16.msra.mxu0 %v3710
    %3724 = vmatpush.bf16.msra.mxu0 %v3709
    %3725 = vmatpush.bf16.msra.mxu0 %v3708
    %3726 = vmatpush.bf16.msra.mxu0 %v3707
    %3727 = vmatpush.bf16.msra.mxu0 %v3706
    %3728 = vmatpush.bf16.msra.mxu0 %v3705
    %3729 = vmatmul.bf16.gmra.mxu0 %v3641
    %v3730 = vpop.f32.mrf.mxu0
    %v3731 = vadd.f32 %v3498, %v3730
    %v3732 = vpop.f32.mrf.mxu0
    %v3733 = vadd.f32 %v3500, %v3732
    %3734 = vmatmul.bf16.gmra.mxu0 %v3642
    %v3735 = vpop.f32.mrf.mxu0
    %v3736 = vadd.f32 %v3503, %v3735
    %v3737 = vpop.f32.mrf.mxu0
    %v3738 = vadd.f32 %v3505, %v3737
    %3739 = vmatmul.bf16.gmra.mxu0 %v3643
    %v3740 = vpop.f32.mrf.mxu0
    %v3741 = vadd.f32 %v3508, %v3740
    %v3742 = vpop.f32.mrf.mxu0
    %v3743 = vadd.f32 %v3510, %v3742
    %3744 = vmatmul.bf16.gmra.mxu0 %v3644
    %v3745 = vpop.f32.mrf.mxu0
    %v3746 = vadd.f32 %v3513, %v3745
    %v3747 = vpop.f32.mrf.mxu0
    %v3748 = vadd.f32 %v3515, %v3747
    %3749 = vmatmul.bf16.gmra.mxu0 %v3645
    %v3750 = vpop.f32.mrf.mxu0
    %v3751 = vadd.f32 %v3518, %v3750
    %v3752 = vpop.f32.mrf.mxu0
    %v3753 = vadd.f32 %v3520, %v3752
    %3754 = vmatmul.bf16.gmra.mxu0 %v3646
    %v3755 = vpop.f32.mrf.mxu0
    %v3756 = vadd.f32 %v3523, %v3755
    %v3757 = vpop.f32.mrf.mxu0
    %v3758 = vadd.f32 %v3525, %v3757
    %3759 = vmatmul.bf16.gmra.mxu0 %v3647
    %v3760 = vpop.f32.mrf.mxu0
    %v3761 = vadd.f32 %v3528, %v3760
    %v3762 = vpop.f32.mrf.mxu0
    %v3763 = vadd.f32 %v3530, %v3762
    %3764 = vmatmul.bf16.gmra.mxu0 %v3648
    %v3765 = vpop.f32.mrf.mxu0
    %v3766 = vadd.f32 %v3533, %v3765
    %v3767 = vpop.f32.mrf.mxu0
    %v3768 = vadd.f32 %v3535, %v3767
    %3769 = vmatmul.bf16.gmra.mxu0 %v3649
    %v3770 = vpop.f32.mrf.mxu0
    %v3771 = vadd.f32 %v3538, %v3770
    %v3772 = vpop.f32.mrf.mxu0
    %v3773 = vadd.f32 %v3540, %v3772
    %3774 = vmatmul.bf16.gmra.mxu0 %v3650
    %v3775 = vpop.f32.mrf.mxu0
    %v3776 = vadd.f32 %v3543, %v3775
    %v3777 = vpop.f32.mrf.mxu0
    %v3778 = vadd.f32 %v3545, %v3777
    %3779 = vmatmul.bf16.gmra.mxu0 %v3651
    %v3780 = vpop.f32.mrf.mxu0
    %v3781 = vadd.f32 %v3548, %v3780
    %v3782 = vpop.f32.mrf.mxu0
    %v3783 = vadd.f32 %v3550, %v3782
    %3784 = vmatmul.bf16.gmra.mxu0 %v3652
    %v3785 = vpop.f32.mrf.mxu0
    %v3786 = vadd.f32 %v3553, %v3785
    %v3787 = vpop.f32.mrf.mxu0
    %v3788 = vadd.f32 %v3555, %v3787
    %3789 = vmatmul.bf16.gmra.mxu0 %v3653
    %v3790 = vpop.f32.mrf.mxu0
    %v3791 = vadd.f32 %v3558, %v3790
    %v3792 = vpop.f32.mrf.mxu0
    %v3793 = vadd.f32 %v3560, %v3792
    %3794 = vmatmul.bf16.gmra.mxu0 %v3654
    %v3795 = vpop.f32.mrf.mxu0
    %v3796 = vadd.f32 %v3563, %v3795
    %v3797 = vpop.f32.mrf.mxu0
    %v3798 = vadd.f32 %v3565, %v3797
    %3799 = vmatmul.bf16.gmra.mxu0 %v3655
    %v3800 = vpop.f32.mrf.mxu0
    %v3801 = vadd.f32 %v3568, %v3800
    %v3802 = vpop.f32.mrf.mxu0
    %v3803 = vadd.f32 %v3570, %v3802
    %3804 = vmatmul.bf16.gmra.mxu0 %v3656
    %v3805 = vpop.f32.mrf.mxu0
    %v3806 = vadd.f32 %v3573, %v3805
    %v3807 = vpop.f32.mrf.mxu0
    %v3808 = vadd.f32 %v3575, %v3807
    %3809 = vdwg.mxu0
    %v3810 = vld [vmem:[%s293] sm:$0xf]
    %v3811 = vld [vmem:[%s293 + $0x4] sm:$0xf]
    %v3812 = vld [vmem:[%s293 + $0x8] sm:$0xf]
    %v3813 = vld [vmem:[%s293 + $0xc] sm:$0xf]
    %v3814 = vld [vmem:[%s293 + $0x10] sm:$0xf]
    %v3815 = vld [vmem:[%s293 + $0x14] sm:$0xf]
    %v3816 = vld [vmem:[%s293 + $0x18] sm:$0xf]
    %v3817 = vld [vmem:[%s293 + $0x1c] sm:$0xf]
    %v3818 = vld [vmem:[%s293 + $0x20] sm:$0xf]
    %v3819 = vld [vmem:[%s293 + $0x24] sm:$0xf]
    %v3820 = vld [vmem:[%s293 + $0x28] sm:$0xf]
    %v3821 = vld [vmem:[%s293 + $0x2c] sm:$0xf]
    %v3822 = vld [vmem:[%s293 + $0x30] sm:$0xf]
    %v3823 = vld [vmem:[%s293 + $0x34] sm:$0xf]
    %v3824 = vld [vmem:[%s293 + $0x38] sm:$0xf]
    %v3825 = vld [vmem:[%s293 + $0x3c] sm:$0xf]
    %v3826 = vld [vmem:[%s293 + $0x40] sm:$0xf]
    %v3827 = vld [vmem:[%s293 + $0x44] sm:$0xf]
    %v3828 = vld [vmem:[%s293 + $0x48] sm:$0xf]
    %v3829 = vld [vmem:[%s293 + $0x4c] sm:$0xf]
    %v3830 = vld [vmem:[%s293 + $0x50] sm:$0xf]
    %v3831 = vld [vmem:[%s293 + $0x54] sm:$0xf]
    %v3832 = vld [vmem:[%s293 + $0x58] sm:$0xf]
    %v3833 = vld [vmem:[%s293 + $0x5c] sm:$0xf]
    %v3834 = vld [vmem:[%s293 + $0x60] sm:$0xf]
    %v3835 = vld [vmem:[%s293 + $0x64] sm:$0xf]
    %v3836 = vld [vmem:[%s293 + $0x68] sm:$0xf]
    %v3837 = vld [vmem:[%s293 + $0x6c] sm:$0xf]
    %v3838 = vld [vmem:[%s293 + $0x70] sm:$0xf]
    %v3839 = vld [vmem:[%s293 + $0x74] sm:$0xf]
    %v3840 = vld [vmem:[%s293 + $0x78] sm:$0xf]
    %v3841 = vld [vmem:[%s293 + $0x7c] sm:$0xf]
    %s3842 = scalar_lea.vmem [#allocation12], 128
    %v3843 = vld [vmem:[%s3842] sm:$0xf]
    %v3844 = vld [vmem:[%s3842 + $0x4] sm:$0xf]
    %v3845 = vld [vmem:[%s3842 + $0x8] sm:$0xf]
    %v3846 = vld [vmem:[%s3842 + $0xc] sm:$0xf]
    %v3847 = vld [vmem:[%s3842 + $0x10] sm:$0xf]
    %v3848 = vld [vmem:[%s3842 + $0x14] sm:$0xf]
    %v3849 = vld [vmem:[%s3842 + $0x18] sm:$0xf]
    %v3850 = vld [vmem:[%s3842 + $0x1c] sm:$0xf]
    %v3851 = vld [vmem:[%s3842 + $0x20] sm:$0xf]
    %v3852 = vld [vmem:[%s3842 + $0x24] sm:$0xf]
    %v3853 = vld [vmem:[%s3842 + $0x28] sm:$0xf]
    %v3854 = vld [vmem:[%s3842 + $0x2c] sm:$0xf]
    %v3855 = vld [vmem:[%s3842 + $0x30] sm:$0xf]
    %v3856 = vld [vmem:[%s3842 + $0x34] sm:$0xf]
    %v3857 = vld [vmem:[%s3842 + $0x38] sm:$0xf]
    %v3858 = vld [vmem:[%s3842 + $0x3c] sm:$0xf]
    %v3891 = vunpack.c.l.b16 %v3810
    %v3892 = vunpack.c.l.b16 %v3811
    %v3893 = vunpack.c.l.b16 %v3812
    %v3894 = vunpack.c.l.b16 %v3813
    %v3895 = vunpack.c.l.b16 %v3814
    %v3896 = vunpack.c.l.b16 %v3815
    %v3897 = vunpack.c.l.b16 %v3816
    %v3898 = vunpack.c.l.b16 %v3817
    %v3899 = vunpack.c.l.b16 %v3818
    %v3900 = vunpack.c.l.b16 %v3819
    %v3901 = vunpack.c.l.b16 %v3820
    %v3902 = vunpack.c.l.b16 %v3821
    %v3903 = vunpack.c.l.b16 %v3822
    %v3904 = vunpack.c.l.b16 %v3823
    %v3905 = vunpack.c.l.b16 %v3824
    %v3906 = vunpack.c.l.b16 %v3825
    %v3907 = vunpack.c.l.b16 %v3826
    %v3908 = vunpack.c.l.b16 %v3827
    %v3909 = vunpack.c.l.b16 %v3828
    %v3910 = vunpack.c.l.b16 %v3829
    %v3911 = vunpack.c.l.b16 %v3830
    %v3912 = vunpack.c.l.b16 %v3831
    %v3913 = vunpack.c.l.b16 %v3832
    %v3914 = vunpack.c.l.b16 %v3833
    %v3915 = vunpack.c.l.b16 %v3834
    %v3916 = vunpack.c.l.b16 %v3835
    %v3917 = vunpack.c.l.b16 %v3836
    %v3918 = vunpack.c.l.b16 %v3837
    %v3919 = vunpack.c.l.b16 %v3838
    %v3920 = vunpack.c.l.b16 %v3839
    %v3921 = vunpack.c.l.b16 %v3840
    %v3922 = vunpack.c.l.b16 %v3841
    %v3923 = vpack.c.b16 %v3892, %v3891
    %v3924 = vpack.c.b16 %v3894, %v3893
    %v3925 = vpack.c.b16 %v3896, %v3895
    %v3926 = vpack.c.b16 %v3898, %v3897
    %v3927 = vpack.c.b16 %v3900, %v3899
    %v3928 = vpack.c.b16 %v3902, %v3901
    %v3929 = vpack.c.b16 %v3904, %v3903
    %v3930 = vpack.c.b16 %v3906, %v3905
    %v3931 = vpack.c.b16 %v3908, %v3907
    %v3932 = vpack.c.b16 %v3910, %v3909
    %v3933 = vpack.c.b16 %v3912, %v3911
    %v3934 = vpack.c.b16 %v3914, %v3913
    %v3935 = vpack.c.b16 %v3916, %v3915
    %v3936 = vpack.c.b16 %v3918, %v3917
    %v3937 = vpack.c.b16 %v3920, %v3919
    %v3938 = vpack.c.b16 %v3922, %v3921
    %v3971 = vunpack.c.l.b16 %v3843
    %v3972 = vunpack.c.l.b16 %v3844
    %v3973 = vunpack.c.l.b16 %v3845
    %v3974 = vunpack.c.l.b16 %v3846
    %v3975 = vunpack.c.l.b16 %v3847
    %v3976 = vunpack.c.l.b16 %v3848
    %v3977 = vunpack.c.l.b16 %v3849
    %v3978 = vunpack.c.l.b16 %v3850
    %v3979 = vunpack.c.l.b16 %v3851
    %v3980 = vunpack.c.l.b16 %v3852
    %v3981 = vunpack.c.l.b16 %v3853
    %v3982 = vunpack.c.l.b16 %v3854
    %v3983 = vunpack.c.l.b16 %v3855
    %v3984 = vunpack.c.l.b16 %v3856
    %v3985 = vunpack.c.l.b16 %v3857
    %v3986 = vunpack.c.l.b16 %v3858
    %v3987 = vpack.c.b16 %v3972, %v3971
    %v3988 = vpack.c.b16 %v3974, %v3973
    %v3989 = vpack.c.b16 %v3976, %v3975
    %v3990 = vpack.c.b16 %v3978, %v3977
    %v3991 = vpack.c.b16 %v3980, %v3979
    %v3992 = vpack.c.b16 %v3982, %v3981
    %v3993 = vpack.c.b16 %v3984, %v3983
    %v3994 = vpack.c.b16 %v3986, %v3985
    %4003 = vmatpush.bf16.msra.mxu0 %v3994
    %4004 = vmatpush.bf16.msra.mxu0 %v3993
    %4005 = vmatpush.bf16.msra.mxu0 %v3992
    %4006 = vmatpush.bf16.msra.mxu0 %v3991
    %4007 = vmatpush.bf16.msra.mxu0 %v3990
    %4008 = vmatpush.bf16.msra.mxu0 %v3989
    %4009 = vmatpush.bf16.msra.mxu0 %v3988
    %4010 = vmatpush.bf16.msra.mxu0 %v3987
    %4011 = vmatmul.bf16.gmra.mxu0 %v3923
    %v4012 = vpop.f32.mrf.mxu0
    %v4013 = vadd.f32 0.0, %v4012
    %v4014 = vpop.f32.mrf.mxu0
    %v4015 = vadd.f32 0.0, %v4014
    %4016 = vmatmul.bf16.gmra.mxu0 %v3924
    %v4017 = vpop.f32.mrf.mxu0
    %v4018 = vadd.f32 0.0, %v4017
    %v4019 = vpop.f32.mrf.mxu0
    %v4020 = vadd.f32 0.0, %v4019
    %4021 = vmatmul.bf16.gmra.mxu0 %v3925
    %v4022 = vpop.f32.mrf.mxu0
    %v4023 = vadd.f32 0.0, %v4022
    %v4024 = vpop.f32.mrf.mxu0
    %v4025 = vadd.f32 0.0, %v4024
    %4026 = vmatmul.bf16.gmra.mxu0 %v3926
    %v4027 = vpop.f32.mrf.mxu0
    %v4028 = vadd.f32 0.0, %v4027
    %v4029 = vpop.f32.mrf.mxu0
    %v4030 = vadd.f32 0.0, %v4029
    %4031 = vmatmul.bf16.gmra.mxu0 %v3927
    %v4032 = vpop.f32.mrf.mxu0
    %v4033 = vadd.f32 0.0, %v4032
    %v4034 = vpop.f32.mrf.mxu0
    %v4035 = vadd.f32 0.0, %v4034
    %4036 = vmatmul.bf16.gmra.mxu0 %v3928
    %v4037 = vpop.f32.mrf.mxu0
    %v4038 = vadd.f32 0.0, %v4037
    %v4039 = vpop.f32.mrf.mxu0
    %v4040 = vadd.f32 0.0, %v4039
    %4041 = vmatmul.bf16.gmra.mxu0 %v3929
    %v4042 = vpop.f32.mrf.mxu0
    %v4043 = vadd.f32 0.0, %v4042
    %v4044 = vpop.f32.mrf.mxu0
    %v4045 = vadd.f32 0.0, %v4044
    %4046 = vmatmul.bf16.gmra.mxu0 %v3930
    %v4047 = vpop.f32.mrf.mxu0
    %v4048 = vadd.f32 0.0, %v4047
    %v4049 = vpop.f32.mrf.mxu0
    %v4050 = vadd.f32 0.0, %v4049
    %4051 = vmatmul.bf16.gmra.mxu0 %v3931
    %v4052 = vpop.f32.mrf.mxu0
    %v4053 = vadd.f32 0.0, %v4052
    %v4054 = vpop.f32.mrf.mxu0
    %v4055 = vadd.f32 0.0, %v4054
    %4056 = vmatmul.bf16.gmra.mxu0 %v3932
    %v4057 = vpop.f32.mrf.mxu0
    %v4058 = vadd.f32 0.0, %v4057
    %v4059 = vpop.f32.mrf.mxu0
    %v4060 = vadd.f32 0.0, %v4059
    %4061 = vmatmul.bf16.gmra.mxu0 %v3933
    %v4062 = vpop.f32.mrf.mxu0
    %v4063 = vadd.f32 0.0, %v4062
    %v4064 = vpop.f32.mrf.mxu0
    %v4065 = vadd.f32 0.0, %v4064
    %4066 = vmatmul.bf16.gmra.mxu0 %v3934
    %v4067 = vpop.f32.mrf.mxu0
    %v4068 = vadd.f32 0.0, %v4067
    %v4069 = vpop.f32.mrf.mxu0
    %v4070 = vadd.f32 0.0, %v4069
    %4071 = vmatmul.bf16.gmra.mxu0 %v3935
    %v4072 = vpop.f32.mrf.mxu0
    %v4073 = vadd.f32 0.0, %v4072
    %v4074 = vpop.f32.mrf.mxu0
    %v4075 = vadd.f32 0.0, %v4074
    %4076 = vmatmul.bf16.gmra.mxu0 %v3936
    %v4077 = vpop.f32.mrf.mxu0
    %v4078 = vadd.f32 0.0, %v4077
    %v4079 = vpop.f32.mrf.mxu0
    %v4080 = vadd.f32 0.0, %v4079
    %4081 = vmatmul.bf16.gmra.mxu0 %v3937
    %v4082 = vpop.f32.mrf.mxu0
    %v4083 = vadd.f32 0.0, %v4082
    %v4084 = vpop.f32.mrf.mxu0
    %v4085 = vadd.f32 0.0, %v4084
    %4086 = vmatmul.bf16.gmra.mxu0 %v3938
    %v4087 = vpop.f32.mrf.mxu0
    %v4088 = vadd.f32 0.0, %v4087
    %v4089 = vpop.f32.mrf.mxu0
    %v4090 = vadd.f32 0.0, %v4089
    %4091 = vdwg.mxu0
    %v4092 = vadd.f32 %v3731, %v4013
    %v4093 = vadd.f32 %v3733, %v4015
    %v4094 = vadd.f32 %v3736, %v4018
    %v4095 = vadd.f32 %v3738, %v4020
    %v4096 = vadd.f32 %v3741, %v4023
    %v4097 = vadd.f32 %v3743, %v4025
    %v4098 = vadd.f32 %v3746, %v4028
    %v4099 = vadd.f32 %v3748, %v4030
    %v4100 = vadd.f32 %v3751, %v4033
    %v4101 = vadd.f32 %v3753, %v4035
    %v4102 = vadd.f32 %v3756, %v4038
    %v4103 = vadd.f32 %v3758, %v4040
    %v4104 = vadd.f32 %v3761, %v4043
    %v4105 = vadd.f32 %v3763, %v4045
    %v4106 = vadd.f32 %v3766, %v4048
    %v4107 = vadd.f32 %v3768, %v4050
    %v4108 = vadd.f32 %v3771, %v4053
    %v4109 = vadd.f32 %v3773, %v4055
    %v4110 = vadd.f32 %v3776, %v4058
    %v4111 = vadd.f32 %v3778, %v4060
    %v4112 = vadd.f32 %v3781, %v4063
    %v4113 = vadd.f32 %v3783, %v4065
    %v4114 = vadd.f32 %v3786, %v4068
    %v4115 = vadd.f32 %v3788, %v4070
    %v4116 = vadd.f32 %v3791, %v4073
    %v4117 = vadd.f32 %v3793, %v4075
    %v4118 = vadd.f32 %v3796, %v4078
    %v4119 = vadd.f32 %v3798, %v4080
    %v4120 = vadd.f32 %v3801, %v4083
    %v4121 = vadd.f32 %v3803, %v4085
    %v4122 = vadd.f32 %v3806, %v4088
    %v4123 = vadd.f32 %v3808, %v4090
    %v4124 = vld [vmem:[%s211] sm:$0xf]
    %v4125 = vld [vmem:[%s211 + $0x4] sm:$0xf]
    %v4126 = vld [vmem:[%s211 + $0x8] sm:$0xf]
    %v4127 = vld [vmem:[%s211 + $0xc] sm:$0xf]
    %v4128 = vld [vmem:[%s211 + $0x10] sm:$0xf]
    %v4129 = vld [vmem:[%s211 + $0x14] sm:$0xf]
    %v4130 = vld [vmem:[%s211 + $0x18] sm:$0xf]
    %v4131 = vld [vmem:[%s211 + $0x1c] sm:$0xf]
    %v4132 = vld [vmem:[%s211 + $0x20] sm:$0xf]
    %v4133 = vld [vmem:[%s211 + $0x24] sm:$0xf]
    %v4134 = vld [vmem:[%s211 + $0x28] sm:$0xf]
    %v4135 = vld [vmem:[%s211 + $0x2c] sm:$0xf]
    %v4136 = vld [vmem:[%s211 + $0x30] sm:$0xf]
    %v4137 = vld [vmem:[%s211 + $0x34] sm:$0xf]
    %v4138 = vld [vmem:[%s211 + $0x38] sm:$0xf]
    %v4139 = vld [vmem:[%s211 + $0x3c] sm:$0xf]
    %v4140 = vld [vmem:[%s211 + $0x40] sm:$0xf]
    %v4141 = vld [vmem:[%s211 + $0x44] sm:$0xf]
    %v4142 = vld [vmem:[%s211 + $0x48] sm:$0xf]
    %v4143 = vld [vmem:[%s211 + $0x4c] sm:$0xf]
    %v4144 = vld [vmem:[%s211 + $0x50] sm:$0xf]
    %v4145 = vld [vmem:[%s211 + $0x54] sm:$0xf]
    %v4146 = vld [vmem:[%s211 + $0x58] sm:$0xf]
    %v4147 = vld [vmem:[%s211 + $0x5c] sm:$0xf]
    %v4148 = vld [vmem:[%s211 + $0x60] sm:$0xf]
    %v4149 = vld [vmem:[%s211 + $0x64] sm:$0xf]
    %v4150 = vld [vmem:[%s211 + $0x68] sm:$0xf]
    %v4151 = vld [vmem:[%s211 + $0x6c] sm:$0xf]
    %v4152 = vld [vmem:[%s211 + $0x70] sm:$0xf]
    %v4153 = vld [vmem:[%s211 + $0x74] sm:$0xf]
    %v4154 = vld [vmem:[%s211 + $0x78] sm:$0xf]
    %v4155 = vld [vmem:[%s211 + $0x7c] sm:$0xf]
    %s4156 = scalar_lea.vmem [#allocation12], 192
    %v4157 = vld [vmem:[%s4156] sm:$0xf]
    %v4158 = vld [vmem:[%s4156 + $0x4] sm:$0xf]
    %v4159 = vld [vmem:[%s4156 + $0x8] sm:$0xf]
    %v4160 = vld [vmem:[%s4156 + $0xc] sm:$0xf]
    %v4161 = vld [vmem:[%s4156 + $0x10] sm:$0xf]
    %v4162 = vld [vmem:[%s4156 + $0x14] sm:$0xf]
    %v4163 = vld [vmem:[%s4156 + $0x18] sm:$0xf]
    %v4164 = vld [vmem:[%s4156 + $0x1c] sm:$0xf]
    %v4165 = vld [vmem:[%s4156 + $0x20] sm:$0xf]
    %v4166 = vld [vmem:[%s4156 + $0x24] sm:$0xf]
    %v4167 = vld [vmem:[%s4156 + $0x28] sm:$0xf]
    %v4168 = vld [vmem:[%s4156 + $0x2c] sm:$0xf]
    %v4169 = vld [vmem:[%s4156 + $0x30] sm:$0xf]
    %v4170 = vld [vmem:[%s4156 + $0x34] sm:$0xf]
    %v4171 = vld [vmem:[%s4156 + $0x38] sm:$0xf]
    %v4172 = vld [vmem:[%s4156 + $0x3c] sm:$0xf]
    %v4205 = vunpack.c.l.b16 %v4124
    %v4206 = vunpack.c.l.b16 %v4125
    %v4207 = vunpack.c.l.b16 %v4126
    %v4208 = vunpack.c.l.b16 %v4127
    %v4209 = vunpack.c.l.b16 %v4128
    %v4210 = vunpack.c.l.b16 %v4129
    %v4211 = vunpack.c.l.b16 %v4130
    %v4212 = vunpack.c.l.b16 %v4131
    %v4213 = vunpack.c.l.b16 %v4132
    %v4214 = vunpack.c.l.b16 %v4133
    %v4215 = vunpack.c.l.b16 %v4134
    %v4216 = vunpack.c.l.b16 %v4135
    %v4217 = vunpack.c.l.b16 %v4136
    %v4218 = vunpack.c.l.b16 %v4137
    %v4219 = vunpack.c.l.b16 %v4138
    %v4220 = vunpack.c.l.b16 %v4139
    %v4221 = vunpack.c.l.b16 %v4140
    %v4222 = vunpack.c.l.b16 %v4141
    %v4223 = vunpack.c.l.b16 %v4142
    %v4224 = vunpack.c.l.b16 %v4143
    %v4225 = vunpack.c.l.b16 %v4144
    %v4226 = vunpack.c.l.b16 %v4145
    %v4227 = vunpack.c.l.b16 %v4146
    %v4228 = vunpack.c.l.b16 %v4147
    %v4229 = vunpack.c.l.b16 %v4148
    %v4230 = vunpack.c.l.b16 %v4149
    %v4231 = vunpack.c.l.b16 %v4150
    %v4232 = vunpack.c.l.b16 %v4151
    %v4233 = vunpack.c.l.b16 %v4152
    %v4234 = vunpack.c.l.b16 %v4153
    %v4235 = vunpack.c.l.b16 %v4154
    %v4236 = vunpack.c.l.b16 %v4155
    %v4237 = vpack.c.b16 %v4206, %v4205
    %v4238 = vpack.c.b16 %v4208, %v4207
    %v4239 = vpack.c.b16 %v4210, %v4209
    %v4240 = vpack.c.b16 %v4212, %v4211
    %v4241 = vpack.c.b16 %v4214, %v4213
    %v4242 = vpack.c.b16 %v4216, %v4215
    %v4243 = vpack.c.b16 %v4218, %v4217
    %v4244 = vpack.c.b16 %v4220, %v4219
    %v4245 = vpack.c.b16 %v4222, %v4221
    %v4246 = vpack.c.b16 %v4224, %v4223
    %v4247 = vpack.c.b16 %v4226, %v4225
    %v4248 = vpack.c.b16 %v4228, %v4227
    %v4249 = vpack.c.b16 %v4230, %v4229
    %v4250 = vpack.c.b16 %v4232, %v4231
    %v4251 = vpack.c.b16 %v4234, %v4233
    %v4252 = vpack.c.b16 %v4236, %v4235
    %v4285 = vunpack.c.l.b16 %v4157
    %v4286 = vunpack.c.l.b16 %v4158
    %v4287 = vunpack.c.l.b16 %v4159
    %v4288 = vunpack.c.l.b16 %v4160
    %v4289 = vunpack.c.l.b16 %v4161
    %v4290 = vunpack.c.l.b16 %v4162
    %v4291 = vunpack.c.l.b16 %v4163
    %v4292 = vunpack.c.l.b16 %v4164
    %v4293 = vunpack.c.l.b16 %v4165
    %v4294 = vunpack.c.l.b16 %v4166
    %v4295 = vunpack.c.l.b16 %v4167
    %v4296 = vunpack.c.l.b16 %v4168
    %v4297 = vunpack.c.l.b16 %v4169
    %v4298 = vunpack.c.l.b16 %v4170
    %v4299 = vunpack.c.l.b16 %v4171
    %v4300 = vunpack.c.l.b16 %v4172
    %v4301 = vpack.c.b16 %v4286, %v4285
    %v4302 = vpack.c.b16 %v4288, %v4287
    %v4303 = vpack.c.b16 %v4290, %v4289
    %v4304 = vpack.c.b16 %v4292, %v4291
    %v4305 = vpack.c.b16 %v4294, %v4293
    %v4306 = vpack.c.b16 %v4296, %v4295
    %v4307 = vpack.c.b16 %v4298, %v4297
    %v4308 = vpack.c.b16 %v4300, %v4299
    %4317 = vmatpush.bf16.msra.mxu0 %v4308
    %4318 = vmatpush.bf16.msra.mxu0 %v4307
    %4319 = vmatpush.bf16.msra.mxu0 %v4306
    %4320 = vmatpush.bf16.msra.mxu0 %v4305
    %4321 = vmatpush.bf16.msra.mxu0 %v4304
    %4322 = vmatpush.bf16.msra.mxu0 %v4303
    %4323 = vmatpush.bf16.msra.mxu0 %v4302
    %4324 = vmatpush.bf16.msra.mxu0 %v4301
    %4325 = vmatmul.bf16.gmra.mxu0 %v4237
    %v4326 = vpop.f32.mrf.mxu0
    %v4327 = vadd.f32 0.0, %v4326
    %v4328 = vpop.f32.mrf.mxu0
    %v4329 = vadd.f32 0.0, %v4328
    %4330 = vmatmul.bf16.gmra.mxu0 %v4238
    %v4331 = vpop.f32.mrf.mxu0
    %v4332 = vadd.f32 0.0, %v4331
    %v4333 = vpop.f32.mrf.mxu0
    %v4334 = vadd.f32 0.0, %v4333
    %4335 = vmatmul.bf16.gmra.mxu0 %v4239
    %v4336 = vpop.f32.mrf.mxu0
    %v4337 = vadd.f32 0.0, %v4336
    %v4338 = vpop.f32.mrf.mxu0
    %v4339 = vadd.f32 0.0, %v4338
    %4340 = vmatmul.bf16.gmra.mxu0 %v4240
    %v4341 = vpop.f32.mrf.mxu0
    %v4342 = vadd.f32 0.0, %v4341
    %v4343 = vpop.f32.mrf.mxu0
    %v4344 = vadd.f32 0.0, %v4343
    %4345 = vmatmul.bf16.gmra.mxu0 %v4241
    %v4346 = vpop.f32.mrf.mxu0
    %v4347 = vadd.f32 0.0, %v4346
    %v4348 = vpop.f32.mrf.mxu0
    %v4349 = vadd.f32 0.0, %v4348
    %4350 = vmatmul.bf16.gmra.mxu0 %v4242
    %v4351 = vpop.f32.mrf.mxu0
    %v4352 = vadd.f32 0.0, %v4351
    %v4353 = vpop.f32.mrf.mxu0
    %v4354 = vadd.f32 0.0, %v4353
    %4355 = vmatmul.bf16.gmra.mxu0 %v4243
    %v4356 = vpop.f32.mrf.mxu0
    %v4357 = vadd.f32 0.0, %v4356
    %v4358 = vpop.f32.mrf.mxu0
    %v4359 = vadd.f32 0.0, %v4358
    %4360 = vmatmul.bf16.gmra.mxu0 %v4244
    %v4361 = vpop.f32.mrf.mxu0
    %v4362 = vadd.f32 0.0, %v4361
    %v4363 = vpop.f32.mrf.mxu0
    %v4364 = vadd.f32 0.0, %v4363
    %4365 = vmatmul.bf16.gmra.mxu0 %v4245
    %v4366 = vpop.f32.mrf.mxu0
    %v4367 = vadd.f32 0.0, %v4366
    %v4368 = vpop.f32.mrf.mxu0
    %v4369 = vadd.f32 0.0, %v4368
    %4370 = vmatmul.bf16.gmra.mxu0 %v4246
    %v4371 = vpop.f32.mrf.mxu0
    %v4372 = vadd.f32 0.0, %v4371
    %v4373 = vpop.f32.mrf.mxu0
    %v4374 = vadd.f32 0.0, %v4373
    %4375 = vmatmul.bf16.gmra.mxu0 %v4247
    %v4376 = vpop.f32.mrf.mxu0
    %v4377 = vadd.f32 0.0, %v4376
    %v4378 = vpop.f32.mrf.mxu0
    %v4379 = vadd.f32 0.0, %v4378
    %4380 = vmatmul.bf16.gmra.mxu0 %v4248
    %v4381 = vpop.f32.mrf.mxu0
    %v4382 = vadd.f32 0.0, %v4381
    %v4383 = vpop.f32.mrf.mxu0
    %v4384 = vadd.f32 0.0, %v4383
    %4385 = vmatmul.bf16.gmra.mxu0 %v4249
    %v4386 = vpop.f32.mrf.mxu0
    %v4387 = vadd.f32 0.0, %v4386
    %v4388 = vpop.f32.mrf.mxu0
    %v4389 = vadd.f32 0.0, %v4388
    %4390 = vmatmul.bf16.gmra.mxu0 %v4250
    %v4391 = vpop.f32.mrf.mxu0
    %v4392 = vadd.f32 0.0, %v4391
    %v4393 = vpop.f32.mrf.mxu0
    %v4394 = vadd.f32 0.0, %v4393
    %4395 = vmatmul.bf16.gmra.mxu0 %v4251
    %v4396 = vpop.f32.mrf.mxu0
    %v4397 = vadd.f32 0.0, %v4396
    %v4398 = vpop.f32.mrf.mxu0
    %v4399 = vadd.f32 0.0, %v4398
    %4400 = vmatmul.bf16.gmra.mxu0 %v4252
    %v4401 = vpop.f32.mrf.mxu0
    %v4402 = vadd.f32 0.0, %v4401
    %v4403 = vpop.f32.mrf.mxu0
    %v4404 = vadd.f32 0.0, %v4403
    %4405 = vdwg.mxu0
    %v4406 = vadd.f32 %v4092, %v4327
    %v4407 = vadd.f32 %v4093, %v4329
    %v4408 = vadd.f32 %v4094, %v4332
    %v4409 = vadd.f32 %v4095, %v4334
    %v4410 = vadd.f32 %v4096, %v4337
    %v4411 = vadd.f32 %v4097, %v4339
    %v4412 = vadd.f32 %v4098, %v4342
    %v4413 = vadd.f32 %v4099, %v4344
    %v4414 = vadd.f32 %v4100, %v4347
    %v4415 = vadd.f32 %v4101, %v4349
    %v4416 = vadd.f32 %v4102, %v4352
    %v4417 = vadd.f32 %v4103, %v4354
    %v4418 = vadd.f32 %v4104, %v4357
    %v4419 = vadd.f32 %v4105, %v4359
    %v4420 = vadd.f32 %v4106, %v4362
    %v4421 = vadd.f32 %v4107, %v4364
    %v4422 = vadd.f32 %v4108, %v4367
    %v4423 = vadd.f32 %v4109, %v4369
    %v4424 = vadd.f32 %v4110, %v4372
    %v4425 = vadd.f32 %v4111, %v4374
    %v4426 = vadd.f32 %v4112, %v4377
    %v4427 = vadd.f32 %v4113, %v4379
    %v4428 = vadd.f32 %v4114, %v4382
    %v4429 = vadd.f32 %v4115, %v4384
    %v4430 = vadd.f32 %v4116, %v4387
    %v4431 = vadd.f32 %v4117, %v4389
    %v4432 = vadd.f32 %v4118, %v4392
    %v4433 = vadd.f32 %v4119, %v4394
    %v4434 = vadd.f32 %v4120, %v4397
    %v4435 = vadd.f32 %v4121, %v4399
    %v4436 = vadd.f32 %v4122, %v4402
    %v4437 = vadd.f32 %v4123, %v4404
    %v4438 = vld [vmem:[%s8] sm:$0x1]
    %v4440 = vperm.slane %v4438, 0
    %v4442 = vadd.f32 %v4406, %v4440
    %v4443 = vadd.f32 %v4407, %v4440
    %v4444 = vadd.f32 %v4408, %v4440
    %v4445 = vadd.f32 %v4409, %v4440
    %v4446 = vadd.f32 %v4410, %v4440
    %v4447 = vadd.f32 %v4411, %v4440
    %v4448 = vadd.f32 %v4412, %v4440
    %v4449 = vadd.f32 %v4413, %v4440
    %v4450 = vadd.f32 %v4414, %v4440
    %v4451 = vadd.f32 %v4415, %v4440
    %v4452 = vadd.f32 %v4416, %v4440
    %v4453 = vadd.f32 %v4417, %v4440
    %v4454 = vadd.f32 %v4418, %v4440
    %v4455 = vadd.f32 %v4419, %v4440
    %v4456 = vadd.f32 %v4420, %v4440
    %v4457 = vadd.f32 %v4421, %v4440
    %v4458 = vadd.f32 %v4422, %v4440
    %v4459 = vadd.f32 %v4423, %v4440
    %v4460 = vadd.f32 %v4424, %v4440
    %v4461 = vadd.f32 %v4425, %v4440
    %v4462 = vadd.f32 %v4426, %v4440
    %v4463 = vadd.f32 %v4427, %v4440
    %v4464 = vadd.f32 %v4428, %v4440
    %v4465 = vadd.f32 %v4429, %v4440
    %v4466 = vadd.f32 %v4430, %v4440
    %v4467 = vadd.f32 %v4431, %v4440
    %v4468 = vadd.f32 %v4432, %v4440
    %v4469 = vadd.f32 %v4433, %v4440
    %v4470 = vadd.f32 %v4434, %v4440
    %v4471 = vadd.f32 %v4435, %v4440
    %v4472 = vadd.f32 %v4436, %v4440
    %v4473 = vadd.f32 %v4437, %v4440
    %v4474 = vmax.f32 %v4442, 0.0
    %v4475 = vmax.f32 %v4443, 0.0
    %v4476 = vmax.f32 %v4444, 0.0
    %v4477 = vmax.f32 %v4445, 0.0
    %v4478 = vmax.f32 %v4446, 0.0
    %v4479 = vmax.f32 %v4447, 0.0
    %v4480 = vmax.f32 %v4448, 0.0
    %v4481 = vmax.f32 %v4449, 0.0
    %v4482 = vmax.f32 %v4450, 0.0
    %v4483 = vmax.f32 %v4451, 0.0
    %v4484 = vmax.f32 %v4452, 0.0
    %v4485 = vmax.f32 %v4453, 0.0
    %v4486 = vmax.f32 %v4454, 0.0
    %v4487 = vmax.f32 %v4455, 0.0
    %v4488 = vmax.f32 %v4456, 0.0
    %v4489 = vmax.f32 %v4457, 0.0
    %v4490 = vmax.f32 %v4458, 0.0
    %v4491 = vmax.f32 %v4459, 0.0
    %v4492 = vmax.f32 %v4460, 0.0
    %v4493 = vmax.f32 %v4461, 0.0
    %v4494 = vmax.f32 %v4462, 0.0
    %v4495 = vmax.f32 %v4463, 0.0
    %v4496 = vmax.f32 %v4464, 0.0
    %v4497 = vmax.f32 %v4465, 0.0
    %v4498 = vmax.f32 %v4466, 0.0
    %v4499 = vmax.f32 %v4467, 0.0
    %v4500 = vmax.f32 %v4468, 0.0
    %v4501 = vmax.f32 %v4469, 0.0
    %v4502 = vmax.f32 %v4470, 0.0
    %v4503 = vmax.f32 %v4471, 0.0
    %v4504 = vmax.f32 %v4472, 0.0
    %v4505 = vmax.f32 %v4473, 0.0
    %v4506 = vpack.c.bf16 %v4474, %v4474
    %v4507 = vpack.c.bf16 %v4475, %v4475
    %v4508 = vpack.c.bf16 %v4476, %v4476
    %v4509 = vpack.c.bf16 %v4477, %v4477
    %v4510 = vpack.c.bf16 %v4478, %v4478
    %v4511 = vpack.c.bf16 %v4479, %v4479
    %v4512 = vpack.c.bf16 %v4480, %v4480
    %v4513 = vpack.c.bf16 %v4481, %v4481
    %v4514 = vpack.c.bf16 %v4482, %v4482
    %v4515 = vpack.c.bf16 %v4483, %v4483
    %v4516 = vpack.c.bf16 %v4484, %v4484
    %v4517 = vpack.c.bf16 %v4485, %v4485
    %v4518 = vpack.c.bf16 %v4486, %v4486
    %v4519 = vpack.c.bf16 %v4487, %v4487
    %v4520 = vpack.c.bf16 %v4488, %v4488
    %v4521 = vpack.c.bf16 %v4489, %v4489
    %v4522 = vpack.c.bf16 %v4490, %v4490
    %v4523 = vpack.c.bf16 %v4491, %v4491
    %v4524 = vpack.c.bf16 %v4492, %v4492
    %v4525 = vpack.c.bf16 %v4493, %v4493
    %v4526 = vpack.c.bf16 %v4494, %v4494
    %v4527 = vpack.c.bf16 %v4495, %v4495
    %v4528 = vpack.c.bf16 %v4496, %v4496
    %v4529 = vpack.c.bf16 %v4497, %v4497
    %v4530 = vpack.c.bf16 %v4498, %v4498
    %v4531 = vpack.c.bf16 %v4499, %v4499
    %v4532 = vpack.c.bf16 %v4500, %v4500
    %v4533 = vpack.c.bf16 %v4501, %v4501
    %v4534 = vpack.c.bf16 %v4502, %v4502
    %v4535 = vpack.c.bf16 %v4503, %v4503
    %v4536 = vpack.c.bf16 %v4504, %v4504
    %v4537 = vpack.c.bf16 %v4505, %v4505
    %4538 = vst [vmem:[%s1538] sm:$0xf] %v4506
    %4539 = vst [vmem:[%s1538 + $0x4] sm:$0xf] %v4507
    %4540 = vst [vmem:[%s1538 + $0x8] sm:$0xf] %v4508
    %4541 = vst [vmem:[%s1538 + $0xc] sm:$0xf] %v4509
    %4542 = vst [vmem:[%s1538 + $0x10] sm:$0xf] %v4510
    %4543 = vst [vmem:[%s1538 + $0x14] sm:$0xf] %v4511
    %4544 = vst [vmem:[%s1538 + $0x18] sm:$0xf] %v4512
    %4545 = vst [vmem:[%s1538 + $0x1c] sm:$0xf] %v4513
    %4546 = vst [vmem:[%s1538 + $0x20] sm:$0xf] %v4514
    %4547 = vst [vmem:[%s1538 + $0x24] sm:$0xf] %v4515
    %4548 = vst [vmem:[%s1538 + $0x28] sm:$0xf] %v4516
    %4549 = vst [vmem:[%s1538 + $0x2c] sm:$0xf] %v4517
    %4550 = vst [vmem:[%s1538 + $0x30] sm:$0xf] %v4518
    %4551 = vst [vmem:[%s1538 + $0x34] sm:$0xf] %v4519
    %4552 = vst [vmem:[%s1538 + $0x38] sm:$0xf] %v4520
    %4553 = vst [vmem:[%s1538 + $0x3c] sm:$0xf] %v4521
    %4554 = vst [vmem:[%s1538 + $0x40] sm:$0xf] %v4522
    %4555 = vst [vmem:[%s1538 + $0x44] sm:$0xf] %v4523
    %4556 = vst [vmem:[%s1538 + $0x48] sm:$0xf] %v4524
    %4557 = vst [vmem:[%s1538 + $0x4c] sm:$0xf] %v4525
    %4558 = vst [vmem:[%s1538 + $0x50] sm:$0xf] %v4526
    %4559 = vst [vmem:[%s1538 + $0x54] sm:$0xf] %v4527
    %4560 = vst [vmem:[%s1538 + $0x58] sm:$0xf] %v4528
    %4561 = vst [vmem:[%s1538 + $0x5c] sm:$0xf] %v4529
    %4562 = vst [vmem:[%s1538 + $0x60] sm:$0xf] %v4530
    %4563 = vst [vmem:[%s1538 + $0x64] sm:$0xf] %v4531
    %4564 = vst [vmem:[%s1538 + $0x68] sm:$0xf] %v4532
    %4565 = vst [vmem:[%s1538 + $0x6c] sm:$0xf] %v4533
    %4566 = vst [vmem:[%s1538 + $0x70] sm:$0xf] %v4534
    %4567 = vst [vmem:[%s1538 + $0x74] sm:$0xf] %v4535
    %4568 = vst [vmem:[%s1538 + $0x78] sm:$0xf] %v4536
    %4569 = vst [vmem:[%s1538 + $0x7c] sm:$0xf] %v4537
    %v4570 = vld [vmem:[#allocation3] sm:$0xf]
    %v4571 = vld [vmem:[#allocation3 + $0x4] sm:$0xf]
    %v4572 = vld [vmem:[#allocation3 + $0x8] sm:$0xf]
    %v4573 = vld [vmem:[#allocation3 + $0xc] sm:$0xf]
    %v4574 = vld [vmem:[#allocation3 + $0x10] sm:$0xf]
    %v4575 = vld [vmem:[#allocation3 + $0x14] sm:$0xf]
    %v4576 = vld [vmem:[#allocation3 + $0x18] sm:$0xf]
    %v4577 = vld [vmem:[#allocation3 + $0x1c] sm:$0xf]
    %v4578 = vld [vmem:[#allocation3 + $0x20] sm:$0xf]
    %v4579 = vld [vmem:[#allocation3 + $0x24] sm:$0xf]
    %v4580 = vld [vmem:[#allocation3 + $0x28] sm:$0xf]
    %v4581 = vld [vmem:[#allocation3 + $0x2c] sm:$0xf]
    %v4582 = vld [vmem:[#allocation3 + $0x30] sm:$0xf]
    %v4583 = vld [vmem:[#allocation3 + $0x34] sm:$0xf]
    %v4584 = vld [vmem:[#allocation3 + $0x38] sm:$0xf]
    %v4585 = vld [vmem:[#allocation3 + $0x3c] sm:$0xf]
    %v4586 = vld [vmem:[#allocation3 + $0x40] sm:$0xf]
    %v4587 = vld [vmem:[#allocation3 + $0x44] sm:$0xf]
    %v4588 = vld [vmem:[#allocation3 + $0x48] sm:$0xf]
    %v4589 = vld [vmem:[#allocation3 + $0x4c] sm:$0xf]
    %v4590 = vld [vmem:[#allocation3 + $0x50] sm:$0xf]
    %v4591 = vld [vmem:[#allocation3 + $0x54] sm:$0xf]
    %v4592 = vld [vmem:[#allocation3 + $0x58] sm:$0xf]
    %v4593 = vld [vmem:[#allocation3 + $0x5c] sm:$0xf]
    %v4594 = vld [vmem:[#allocation3 + $0x60] sm:$0xf]
    %v4595 = vld [vmem:[#allocation3 + $0x64] sm:$0xf]
    %v4596 = vld [vmem:[#allocation3 + $0x68] sm:$0xf]
    %v4597 = vld [vmem:[#allocation3 + $0x6c] sm:$0xf]
    %v4598 = vld [vmem:[#allocation3 + $0x70] sm:$0xf]
    %v4599 = vld [vmem:[#allocation3 + $0x74] sm:$0xf]
    %v4600 = vld [vmem:[#allocation3 + $0x78] sm:$0xf]
    %v4601 = vld [vmem:[#allocation3 + $0x7c] sm:$0xf]
    %v4602 = vld [vmem:[#allocation13] sm:$0xf]
    %v4603 = vld [vmem:[#allocation13 + $0x4] sm:$0xf]
    %v4604 = vld [vmem:[#allocation13 + $0x8] sm:$0xf]
    %v4605 = vld [vmem:[#allocation13 + $0xc] sm:$0xf]
    %v4606 = vld [vmem:[#allocation13 + $0x10] sm:$0xf]
    %v4607 = vld [vmem:[#allocation13 + $0x14] sm:$0xf]
    %v4608 = vld [vmem:[#allocation13 + $0x18] sm:$0xf]
    %v4609 = vld [vmem:[#allocation13 + $0x1c] sm:$0xf]
    %v4610 = vld [vmem:[#allocation13 + $0x20] sm:$0xf]
    %v4611 = vld [vmem:[#allocation13 + $0x24] sm:$0xf]
    %v4612 = vld [vmem:[#allocation13 + $0x28] sm:$0xf]
    %v4613 = vld [vmem:[#allocation13 + $0x2c] sm:$0xf]
    %v4614 = vld [vmem:[#allocation13 + $0x30] sm:$0xf]
    %v4615 = vld [vmem:[#allocation13 + $0x34] sm:$0xf]
    %v4616 = vld [vmem:[#allocation13 + $0x38] sm:$0xf]
    %v4617 = vld [vmem:[#allocation13 + $0x3c] sm:$0xf]
    %s4618 = scalar_lea.vmem [#allocation3], 16
    %v4619 = vld [vmem:[%s4618] sm:$0xf]
    %v4620 = vld [vmem:[%s4618 + $0x4] sm:$0xf]
    %v4621 = vld [vmem:[%s4618 + $0x8] sm:$0xf]
    %v4622 = vld [vmem:[%s4618 + $0xc] sm:$0xf]
    %v4623 = vld [vmem:[%s4618 + $0x10] sm:$0xf]
    %v4624 = vld [vmem:[%s4618 + $0x14] sm:$0xf]
    %v4625 = vld [vmem:[%s4618 + $0x18] sm:$0xf]
    %v4626 = vld [vmem:[%s4618 + $0x1c] sm:$0xf]
    %v4627 = vld [vmem:[%s4618 + $0x20] sm:$0xf]
    %v4628 = vld [vmem:[%s4618 + $0x24] sm:$0xf]
    %v4629 = vld [vmem:[%s4618 + $0x28] sm:$0xf]
    %v4630 = vld [vmem:[%s4618 + $0x2c] sm:$0xf]
    %v4631 = vld [vmem:[%s4618 + $0x30] sm:$0xf]
    %v4632 = vld [vmem:[%s4618 + $0x34] sm:$0xf]
    %v4633 = vld [vmem:[%s4618 + $0x38] sm:$0xf]
    %v4634 = vld [vmem:[%s4618 + $0x3c] sm:$0xf]
    %v4635 = vld [vmem:[%s4618 + $0x40] sm:$0xf]
    %v4636 = vld [vmem:[%s4618 + $0x44] sm:$0xf]
    %v4637 = vld [vmem:[%s4618 + $0x48] sm:$0xf]
    %v4638 = vld [vmem:[%s4618 + $0x4c] sm:$0xf]
    %v4639 = vld [vmem:[%s4618 + $0x50] sm:$0xf]
    %v4640 = vld [vmem:[%s4618 + $0x54] sm:$0xf]
    %v4641 = vld [vmem:[%s4618 + $0x58] sm:$0xf]
    %v4642 = vld [vmem:[%s4618 + $0x5c] sm:$0xf]
    %v4643 = vld [vmem:[%s4618 + $0x60] sm:$0xf]
    %v4644 = vld [vmem:[%s4618 + $0x64] sm:$0xf]
    %v4645 = vld [vmem:[%s4618 + $0x68] sm:$0xf]
    %v4646 = vld [vmem:[%s4618 + $0x6c] sm:$0xf]
    %v4647 = vld [vmem:[%s4618 + $0x70] sm:$0xf]
    %v4648 = vld [vmem:[%s4618 + $0x74] sm:$0xf]
    %v4649 = vld [vmem:[%s4618 + $0x78] sm:$0xf]
    %v4650 = vld [vmem:[%s4618 + $0x7c] sm:$0xf]
    %s4651 = scalar_lea.vmem [#allocation13], 64
    %v4652 = vld [vmem:[%s4651] sm:$0xf]
    %v4653 = vld [vmem:[%s4651 + $0x4] sm:$0xf]
    %v4654 = vld [vmem:[%s4651 + $0x8] sm:$0xf]
    %v4655 = vld [vmem:[%s4651 + $0xc] sm:$0xf]
    %v4656 = vld [vmem:[%s4651 + $0x10] sm:$0xf]
    %v4657 = vld [vmem:[%s4651 + $0x14] sm:$0xf]
    %v4658 = vld [vmem:[%s4651 + $0x18] sm:$0xf]
    %v4659 = vld [vmem:[%s4651 + $0x1c] sm:$0xf]
    %v4660 = vld [vmem:[%s4651 + $0x20] sm:$0xf]
    %v4661 = vld [vmem:[%s4651 + $0x24] sm:$0xf]
    %v4662 = vld [vmem:[%s4651 + $0x28] sm:$0xf]
    %v4663 = vld [vmem:[%s4651 + $0x2c] sm:$0xf]
    %v4664 = vld [vmem:[%s4651 + $0x30] sm:$0xf]
    %v4665 = vld [vmem:[%s4651 + $0x34] sm:$0xf]
    %v4666 = vld [vmem:[%s4651 + $0x38] sm:$0xf]
    %v4667 = vld [vmem:[%s4651 + $0x3c] sm:$0xf]
    %v4700 = vunpack.c.l.b16 %v4619
    %v4701 = vunpack.c.l.b16 %v4620
    %v4702 = vunpack.c.l.b16 %v4621
    %v4703 = vunpack.c.l.b16 %v4622
    %v4704 = vunpack.c.l.b16 %v4623
    %v4705 = vunpack.c.l.b16 %v4624
    %v4706 = vunpack.c.l.b16 %v4625
    %v4707 = vunpack.c.l.b16 %v4626
    %v4708 = vunpack.c.l.b16 %v4627
    %v4709 = vunpack.c.l.b16 %v4628
    %v4710 = vunpack.c.l.b16 %v4629
    %v4711 = vunpack.c.l.b16 %v4630
    %v4712 = vunpack.c.l.b16 %v4631
    %v4713 = vunpack.c.l.b16 %v4632
    %v4714 = vunpack.c.l.b16 %v4633
    %v4715 = vunpack.c.l.b16 %v4634
    %v4716 = vunpack.c.l.b16 %v4635
    %v4717 = vunpack.c.l.b16 %v4636
    %v4718 = vunpack.c.l.b16 %v4637
    %v4719 = vunpack.c.l.b16 %v4638
    %v4720 = vunpack.c.l.b16 %v4639
    %v4721 = vunpack.c.l.b16 %v4640
    %v4722 = vunpack.c.l.b16 %v4641
    %v4723 = vunpack.c.l.b16 %v4642
    %v4724 = vunpack.c.l.b16 %v4643
    %v4725 = vunpack.c.l.b16 %v4644
    %v4726 = vunpack.c.l.b16 %v4645
    %v4727 = vunpack.c.l.b16 %v4646
    %v4728 = vunpack.c.l.b16 %v4647
    %v4729 = vunpack.c.l.b16 %v4648
    %v4730 = vunpack.c.l.b16 %v4649
    %v4731 = vunpack.c.l.b16 %v4650
    %v4732 = vpack.c.b16 %v4701, %v4700
    %v4733 = vpack.c.b16 %v4703, %v4702
    %v4734 = vpack.c.b16 %v4705, %v4704
    %v4735 = vpack.c.b16 %v4707, %v4706
    %v4736 = vpack.c.b16 %v4709, %v4708
    %v4737 = vpack.c.b16 %v4711, %v4710
    %v4738 = vpack.c.b16 %v4713, %v4712
    %v4739 = vpack.c.b16 %v4715, %v4714
    %v4740 = vpack.c.b16 %v4717, %v4716
    %v4741 = vpack.c.b16 %v4719, %v4718
    %v4742 = vpack.c.b16 %v4721, %v4720
    %v4743 = vpack.c.b16 %v4723, %v4722
    %v4744 = vpack.c.b16 %v4725, %v4724
    %v4745 = vpack.c.b16 %v4727, %v4726
    %v4746 = vpack.c.b16 %v4729, %v4728
    %v4747 = vpack.c.b16 %v4731, %v4730
    %v4780 = vunpack.c.l.b16 %v4652
    %v4781 = vunpack.c.l.b16 %v4653
    %v4782 = vunpack.c.l.b16 %v4654
    %v4783 = vunpack.c.l.b16 %v4655
    %v4784 = vunpack.c.l.b16 %v4656
    %v4785 = vunpack.c.l.b16 %v4657
    %v4786 = vunpack.c.l.b16 %v4658
    %v4787 = vunpack.c.l.b16 %v4659
    %v4788 = vunpack.c.l.b16 %v4660
    %v4789 = vunpack.c.l.b16 %v4661
    %v4790 = vunpack.c.l.b16 %v4662
    %v4791 = vunpack.c.l.b16 %v4663
    %v4792 = vunpack.c.l.b16 %v4664
    %v4793 = vunpack.c.l.b16 %v4665
    %v4794 = vunpack.c.l.b16 %v4666
    %v4795 = vunpack.c.l.b16 %v4667
    %v4796 = vpack.c.b16 %v4781, %v4780
    %v4797 = vpack.c.b16 %v4783, %v4782
    %v4798 = vpack.c.b16 %v4785, %v4784
    %v4799 = vpack.c.b16 %v4787, %v4786
    %v4800 = vpack.c.b16 %v4789, %v4788
    %v4801 = vpack.c.b16 %v4791, %v4790
    %v4802 = vpack.c.b16 %v4793, %v4792
    %v4803 = vpack.c.b16 %v4795, %v4794
    %4812 = vmatpush.bf16.msra.mxu0 %v4803
    %4813 = vmatpush.bf16.msra.mxu0 %v4802
    %4814 = vmatpush.bf16.msra.mxu0 %v4801
    %4815 = vmatpush.bf16.msra.mxu0 %v4800
    %4816 = vmatpush.bf16.msra.mxu0 %v4799
    %4817 = vmatpush.bf16.msra.mxu0 %v4798
    %4818 = vmatpush.bf16.msra.mxu0 %v4797
    %4819 = vmatpush.bf16.msra.mxu0 %v4796
    %4820 = vmatmul.bf16.gmra.mxu0 %v4732
    %v4821 = vpop.f32.mrf.mxu0
    %v4822 = vpop.f32.mrf.mxu0
    %4823 = vmatmul.bf16.gmra.mxu0 %v4733
    %v4824 = vpop.f32.mrf.mxu0
    %v4825 = vpop.f32.mrf.mxu0
    %4826 = vmatmul.bf16.gmra.mxu0 %v4734
    %v4827 = vpop.f32.mrf.mxu0
    %v4828 = vpop.f32.mrf.mxu0
    %4829 = vmatmul.bf16.gmra.mxu0 %v4735
    %v4830 = vpop.f32.mrf.mxu0
    %v4831 = vpop.f32.mrf.mxu0
    %4832 = vmatmul.bf16.gmra.mxu0 %v4736
    %v4833 = vpop.f32.mrf.mxu0
    %v4834 = vpop.f32.mrf.mxu0
    %4835 = vmatmul.bf16.gmra.mxu0 %v4737
    %v4836 = vpop.f32.mrf.mxu0
    %v4837 = vpop.f32.mrf.mxu0
    %4838 = vmatmul.bf16.gmra.mxu0 %v4738
    %v4839 = vpop.f32.mrf.mxu0
    %v4840 = vpop.f32.mrf.mxu0
    %4841 = vmatmul.bf16.gmra.mxu0 %v4739
    %v4842 = vpop.f32.mrf.mxu0
    %v4843 = vpop.f32.mrf.mxu0
    %4844 = vmatmul.bf16.gmra.mxu0 %v4740
    %v4845 = vpop.f32.mrf.mxu0
    %v4846 = vpop.f32.mrf.mxu0
    %4847 = vmatmul.bf16.gmra.mxu0 %v4741
    %v4848 = vpop.f32.mrf.mxu0
    %v4849 = vpop.f32.mrf.mxu0
    %4850 = vmatmul.bf16.gmra.mxu0 %v4742
    %v4851 = vpop.f32.mrf.mxu0
    %v4852 = vpop.f32.mrf.mxu0
    %4853 = vmatmul.bf16.gmra.mxu0 %v4743
    %v4854 = vpop.f32.mrf.mxu0
    %v4855 = vpop.f32.mrf.mxu0
    %4856 = vmatmul.bf16.gmra.mxu0 %v4744
    %v4857 = vpop.f32.mrf.mxu0
    %v4858 = vpop.f32.mrf.mxu0
    %4859 = vmatmul.bf16.gmra.mxu0 %v4745
    %v4860 = vpop.f32.mrf.mxu0
    %v4861 = vpop.f32.mrf.mxu0
    %4862 = vmatmul.bf16.gmra.mxu0 %v4746
    %v4863 = vpop.f32.mrf.mxu0
    %v4864 = vpop.f32.mrf.mxu0
    %4865 = vmatmul.bf16.gmra.mxu0 %v4747
    %v4866 = vpop.f32.mrf.mxu0
    %v4867 = vadd.f32 0.0, %v4866
    %v4868 = vpop.f32.mrf.mxu0
    %v4869 = vadd.f32 0.0, %v4868
    %4870 = vdwg.mxu0
    %v4903 = vunpack.c.l.b16 %v4570
    %v4904 = vunpack.c.l.b16 %v4571
    %v4905 = vunpack.c.l.b16 %v4572
    %v4906 = vunpack.c.l.b16 %v4573
    %v4907 = vunpack.c.l.b16 %v4574
    %v4908 = vunpack.c.l.b16 %v4575
    %v4909 = vunpack.c.l.b16 %v4576
    %v4910 = vunpack.c.l.b16 %v4577
    %v4911 = vunpack.c.l.b16 %v4578
    %v4912 = vunpack.c.l.b16 %v4579
    %v4913 = vunpack.c.l.b16 %v4580
    %v4914 = vunpack.c.l.b16 %v4581
    %v4915 = vunpack.c.l.b16 %v4582
    %v4916 = vunpack.c.l.b16 %v4583
    %v4917 = vunpack.c.l.b16 %v4584
    %v4918 = vunpack.c.l.b16 %v4585
    %v4919 = vunpack.c.l.b16 %v4586
    %v4920 = vunpack.c.l.b16 %v4587
    %v4921 = vunpack.c.l.b16 %v4588
    %v4922 = vunpack.c.l.b16 %v4589
    %v4923 = vunpack.c.l.b16 %v4590
    %v4924 = vunpack.c.l.b16 %v4591
    %v4925 = vunpack.c.l.b16 %v4592
    %v4926 = vunpack.c.l.b16 %v4593
    %v4927 = vunpack.c.l.b16 %v4594
    %v4928 = vunpack.c.l.b16 %v4595
    %v4929 = vunpack.c.l.b16 %v4596
    %v4930 = vunpack.c.l.b16 %v4597
    %v4931 = vunpack.c.l.b16 %v4598
    %v4932 = vunpack.c.l.b16 %v4599
    %v4933 = vunpack.c.l.b16 %v4600
    %v4934 = vunpack.c.l.b16 %v4601
    %v4935 = vpack.c.b16 %v4904, %v4903
    %v4936 = vpack.c.b16 %v4906, %v4905
    %v4937 = vpack.c.b16 %v4908, %v4907
    %v4938 = vpack.c.b16 %v4910, %v4909
    %v4939 = vpack.c.b16 %v4912, %v4911
    %v4940 = vpack.c.b16 %v4914, %v4913
    %v4941 = vpack.c.b16 %v4916, %v4915
    %v4942 = vpack.c.b16 %v4918, %v4917
    %v4943 = vpack.c.b16 %v4920, %v4919
    %v4944 = vpack.c.b16 %v4922, %v4921
    %v4945 = vpack.c.b16 %v4924, %v4923
    %v4946 = vpack.c.b16 %v4926, %v4925
    %v4947 = vpack.c.b16 %v4928, %v4927
    %v4948 = vpack.c.b16 %v4930, %v4929
    %v4949 = vpack.c.b16 %v4932, %v4931
    %v4950 = vpack.c.b16 %v4934, %v4933
    %v4983 = vunpack.c.l.b16 %v4602
    %v4984 = vunpack.c.l.b16 %v4603
    %v4985 = vunpack.c.l.b16 %v4604
    %v4986 = vunpack.c.l.b16 %v4605
    %v4987 = vunpack.c.l.b16 %v4606
    %v4988 = vunpack.c.l.b16 %v4607
    %v4989 = vunpack.c.l.b16 %v4608
    %v4990 = vunpack.c.l.b16 %v4609
    %v4991 = vunpack.c.l.b16 %v4610
    %v4992 = vunpack.c.l.b16 %v4611
    %v4993 = vunpack.c.l.b16 %v4612
    %v4994 = vunpack.c.l.b16 %v4613
    %v4995 = vunpack.c.l.b16 %v4614
    %v4996 = vunpack.c.l.b16 %v4615
    %v4997 = vunpack.c.l.b16 %v4616
    %v4998 = vunpack.c.l.b16 %v4617
    %v4999 = vpack.c.b16 %v4984, %v4983
    %v5000 = vpack.c.b16 %v4986, %v4985
    %v5001 = vpack.c.b16 %v4988, %v4987
    %v5002 = vpack.c.b16 %v4990, %v4989
    %v5003 = vpack.c.b16 %v4992, %v4991
    %v5004 = vpack.c.b16 %v4994, %v4993
    %v5005 = vpack.c.b16 %v4996, %v4995
    %v5006 = vpack.c.b16 %v4998, %v4997
    %5015 = vmatpush.bf16.msra.mxu0 %v5006
    %5016 = vmatpush.bf16.msra.mxu0 %v5005
    %5017 = vmatpush.bf16.msra.mxu0 %v5004
    %5018 = vmatpush.bf16.msra.mxu0 %v5003
    %5019 = vmatpush.bf16.msra.mxu0 %v5002
    %5020 = vmatpush.bf16.msra.mxu0 %v5001
    %5021 = vmatpush.bf16.msra.mxu0 %v5000
    %5022 = vmatpush.bf16.msra.mxu0 %v4999
    %5023 = vmatmul.bf16.gmra.mxu0 %v4935
    %v5024 = vpop.f32.mrf.mxu0
    %v5025 = vpop.f32.mrf.mxu0
    %5026 = vmatmul.bf16.gmra.mxu0 %v4936
    %v5027 = vpop.f32.mrf.mxu0
    %v5028 = vpop.f32.mrf.mxu0
    %5029 = vmatmul.bf16.gmra.mxu0 %v4937
    %v5030 = vpop.f32.mrf.mxu0
    %v5031 = vpop.f32.mrf.mxu0
    %5032 = vmatmul.bf16.gmra.mxu0 %v4938
    %v5033 = vpop.f32.mrf.mxu0
    %v5034 = vpop.f32.mrf.mxu0
    %5035 = vmatmul.bf16.gmra.mxu0 %v4939
    %v5036 = vpop.f32.mrf.mxu0
    %v5037 = vpop.f32.mrf.mxu0
    %5038 = vmatmul.bf16.gmra.mxu0 %v4940
    %v5039 = vpop.f32.mrf.mxu0
    %v5040 = vpop.f32.mrf.mxu0
    %5041 = vmatmul.bf16.gmra.mxu0 %v4941
    %v5042 = vpop.f32.mrf.mxu0
    %v5043 = vpop.f32.mrf.mxu0
    %5044 = vmatmul.bf16.gmra.mxu0 %v4942
    %v5045 = vpop.f32.mrf.mxu0
    %v5046 = vpop.f32.mrf.mxu0
    %5047 = vmatmul.bf16.gmra.mxu0 %v4943
    %v5048 = vpop.f32.mrf.mxu0
    %v5049 = vpop.f32.mrf.mxu0
    %5050 = vmatmul.bf16.gmra.mxu0 %v4944
    %v5051 = vpop.f32.mrf.mxu0
    %v5052 = vpop.f32.mrf.mxu0
    %5053 = vmatmul.bf16.gmra.mxu0 %v4945
    %v5054 = vpop.f32.mrf.mxu0
    %v5055 = vpop.f32.mrf.mxu0
    %5056 = vmatmul.bf16.gmra.mxu0 %v4946
    %v5057 = vpop.f32.mrf.mxu0
    %v5058 = vpop.f32.mrf.mxu0
    %5059 = vmatmul.bf16.gmra.mxu0 %v4947
    %v5060 = vpop.f32.mrf.mxu0
    %v5061 = vpop.f32.mrf.mxu0
    %5062 = vmatmul.bf16.gmra.mxu0 %v4948
    %v5063 = vpop.f32.mrf.mxu0
    %v5064 = vpop.f32.mrf.mxu0
    %5065 = vmatmul.bf16.gmra.mxu0 %v4949
    %v5066 = vpop.f32.mrf.mxu0
    %v5067 = vpop.f32.mrf.mxu0
    %5068 = vmatmul.bf16.gmra.mxu0 %v4950
    %v5069 = vpop.f32.mrf.mxu0
    %v5070 = vadd.f32 %v4867, %v5069
    %v5071 = vpop.f32.mrf.mxu0
    %v5072 = vadd.f32 %v4869, %v5071
    %5073 = vdwg.mxu0
    %v5074 = vld [vmem:[%s1620] sm:$0xf]
    %v5075 = vld [vmem:[%s1620 + $0x4] sm:$0xf]
    %v5076 = vld [vmem:[%s1620 + $0x8] sm:$0xf]
    %v5077 = vld [vmem:[%s1620 + $0xc] sm:$0xf]
    %v5078 = vld [vmem:[%s1620 + $0x10] sm:$0xf]
    %v5079 = vld [vmem:[%s1620 + $0x14] sm:$0xf]
    %v5080 = vld [vmem:[%s1620 + $0x18] sm:$0xf]
    %v5081 = vld [vmem:[%s1620 + $0x1c] sm:$0xf]
    %v5082 = vld [vmem:[%s1620 + $0x20] sm:$0xf]
    %v5083 = vld [vmem:[%s1620 + $0x24] sm:$0xf]
    %v5084 = vld [vmem:[%s1620 + $0x28] sm:$0xf]
    %v5085 = vld [vmem:[%s1620 + $0x2c] sm:$0xf]
    %v5086 = vld [vmem:[%s1620 + $0x30] sm:$0xf]
    %v5087 = vld [vmem:[%s1620 + $0x34] sm:$0xf]
    %v5088 = vld [vmem:[%s1620 + $0x38] sm:$0xf]
    %v5089 = vld [vmem:[%s1620 + $0x3c] sm:$0xf]
    %v5090 = vld [vmem:[%s1620 + $0x40] sm:$0xf]
    %v5091 = vld [vmem:[%s1620 + $0x44] sm:$0xf]
    %v5092 = vld [vmem:[%s1620 + $0x48] sm:$0xf]
    %v5093 = vld [vmem:[%s1620 + $0x4c] sm:$0xf]
    %v5094 = vld [vmem:[%s1620 + $0x50] sm:$0xf]
    %v5095 = vld [vmem:[%s1620 + $0x54] sm:$0xf]
    %v5096 = vld [vmem:[%s1620 + $0x58] sm:$0xf]
    %v5097 = vld [vmem:[%s1620 + $0x5c] sm:$0xf]
    %v5098 = vld [vmem:[%s1620 + $0x60] sm:$0xf]
    %v5099 = vld [vmem:[%s1620 + $0x64] sm:$0xf]
    %v5100 = vld [vmem:[%s1620 + $0x68] sm:$0xf]
    %v5101 = vld [vmem:[%s1620 + $0x6c] sm:$0xf]
    %v5102 = vld [vmem:[%s1620 + $0x70] sm:$0xf]
    %v5103 = vld [vmem:[%s1620 + $0x74] sm:$0xf]
    %v5104 = vld [vmem:[%s1620 + $0x78] sm:$0xf]
    %v5105 = vld [vmem:[%s1620 + $0x7c] sm:$0xf]
    %s5106 = scalar_lea.vmem [#allocation13], 128
    %v5107 = vld [vmem:[%s5106] sm:$0xf]
    %v5108 = vld [vmem:[%s5106 + $0x4] sm:$0xf]
    %v5109 = vld [vmem:[%s5106 + $0x8] sm:$0xf]
    %v5110 = vld [vmem:[%s5106 + $0xc] sm:$0xf]
    %v5111 = vld [vmem:[%s5106 + $0x10] sm:$0xf]
    %v5112 = vld [vmem:[%s5106 + $0x14] sm:$0xf]
    %v5113 = vld [vmem:[%s5106 + $0x18] sm:$0xf]
    %v5114 = vld [vmem:[%s5106 + $0x1c] sm:$0xf]
    %v5115 = vld [vmem:[%s5106 + $0x20] sm:$0xf]
    %v5116 = vld [vmem:[%s5106 + $0x24] sm:$0xf]
    %v5117 = vld [vmem:[%s5106 + $0x28] sm:$0xf]
    %v5118 = vld [vmem:[%s5106 + $0x2c] sm:$0xf]
    %v5119 = vld [vmem:[%s5106 + $0x30] sm:$0xf]
    %v5120 = vld [vmem:[%s5106 + $0x34] sm:$0xf]
    %v5121 = vld [vmem:[%s5106 + $0x38] sm:$0xf]
    %v5122 = vld [vmem:[%s5106 + $0x3c] sm:$0xf]
    %v5155 = vunpack.c.l.b16 %v5074
    %v5156 = vunpack.c.l.b16 %v5075
    %v5157 = vunpack.c.l.b16 %v5076
    %v5158 = vunpack.c.l.b16 %v5077
    %v5159 = vunpack.c.l.b16 %v5078
    %v5160 = vunpack.c.l.b16 %v5079
    %v5161 = vunpack.c.l.b16 %v5080
    %v5162 = vunpack.c.l.b16 %v5081
    %v5163 = vunpack.c.l.b16 %v5082
    %v5164 = vunpack.c.l.b16 %v5083
    %v5165 = vunpack.c.l.b16 %v5084
    %v5166 = vunpack.c.l.b16 %v5085
    %v5167 = vunpack.c.l.b16 %v5086
    %v5168 = vunpack.c.l.b16 %v5087
    %v5169 = vunpack.c.l.b16 %v5088
    %v5170 = vunpack.c.l.b16 %v5089
    %v5171 = vunpack.c.l.b16 %v5090
    %v5172 = vunpack.c.l.b16 %v5091
    %v5173 = vunpack.c.l.b16 %v5092
    %v5174 = vunpack.c.l.b16 %v5093
    %v5175 = vunpack.c.l.b16 %v5094
    %v5176 = vunpack.c.l.b16 %v5095
    %v5177 = vunpack.c.l.b16 %v5096
    %v5178 = vunpack.c.l.b16 %v5097
    %v5179 = vunpack.c.l.b16 %v5098
    %v5180 = vunpack.c.l.b16 %v5099
    %v5181 = vunpack.c.l.b16 %v5100
    %v5182 = vunpack.c.l.b16 %v5101
    %v5183 = vunpack.c.l.b16 %v5102
    %v5184 = vunpack.c.l.b16 %v5103
    %v5185 = vunpack.c.l.b16 %v5104
    %v5186 = vunpack.c.l.b16 %v5105
    %v5187 = vpack.c.b16 %v5156, %v5155
    %v5188 = vpack.c.b16 %v5158, %v5157
    %v5189 = vpack.c.b16 %v5160, %v5159
    %v5190 = vpack.c.b16 %v5162, %v5161
    %v5191 = vpack.c.b16 %v5164, %v5163
    %v5192 = vpack.c.b16 %v5166, %v5165
    %v5193 = vpack.c.b16 %v5168, %v5167
    %v5194 = vpack.c.b16 %v5170, %v5169
    %v5195 = vpack.c.b16 %v5172, %v5171
    %v5196 = vpack.c.b16 %v5174, %v5173
    %v5197 = vpack.c.b16 %v5176, %v5175
    %v5198 = vpack.c.b16 %v5178, %v5177
    %v5199 = vpack.c.b16 %v5180, %v5179
    %v5200 = vpack.c.b16 %v5182, %v5181
    %v5201 = vpack.c.b16 %v5184, %v5183
    %v5202 = vpack.c.b16 %v5186, %v5185
    %v5235 = vunpack.c.l.b16 %v5107
    %v5236 = vunpack.c.l.b16 %v5108
    %v5237 = vunpack.c.l.b16 %v5109
    %v5238 = vunpack.c.l.b16 %v5110
    %v5239 = vunpack.c.l.b16 %v5111
    %v5240 = vunpack.c.l.b16 %v5112
    %v5241 = vunpack.c.l.b16 %v5113
    %v5242 = vunpack.c.l.b16 %v5114
    %v5243 = vunpack.c.l.b16 %v5115
    %v5244 = vunpack.c.l.b16 %v5116
    %v5245 = vunpack.c.l.b16 %v5117
    %v5246 = vunpack.c.l.b16 %v5118
    %v5247 = vunpack.c.l.b16 %v5119
    %v5248 = vunpack.c.l.b16 %v5120
    %v5249 = vunpack.c.l.b16 %v5121
    %v5250 = vunpack.c.l.b16 %v5122
    %v5251 = vpack.c.b16 %v5236, %v5235
    %v5252 = vpack.c.b16 %v5238, %v5237
    %v5253 = vpack.c.b16 %v5240, %v5239
    %v5254 = vpack.c.b16 %v5242, %v5241
    %v5255 = vpack.c.b16 %v5244, %v5243
    %v5256 = vpack.c.b16 %v5246, %v5245
    %v5257 = vpack.c.b16 %v5248, %v5247
    %v5258 = vpack.c.b16 %v5250, %v5249
    %5267 = vmatpush.bf16.msra.mxu0 %v5258
    %5268 = vmatpush.bf16.msra.mxu0 %v5257
    %5269 = vmatpush.bf16.msra.mxu0 %v5256
    %5270 = vmatpush.bf16.msra.mxu0 %v5255
    %5271 = vmatpush.bf16.msra.mxu0 %v5254
    %5272 = vmatpush.bf16.msra.mxu0 %v5253
    %5273 = vmatpush.bf16.msra.mxu0 %v5252
    %5274 = vmatpush.bf16.msra.mxu0 %v5251
    %5275 = vmatmul.bf16.gmra.mxu0 %v5187
    %v5276 = vpop.f32.mrf.mxu0
    %v5277 = vpop.f32.mrf.mxu0
    %5278 = vmatmul.bf16.gmra.mxu0 %v5188
    %v5279 = vpop.f32.mrf.mxu0
    %v5280 = vpop.f32.mrf.mxu0
    %5281 = vmatmul.bf16.gmra.mxu0 %v5189
    %v5282 = vpop.f32.mrf.mxu0
    %v5283 = vpop.f32.mrf.mxu0
    %5284 = vmatmul.bf16.gmra.mxu0 %v5190
    %v5285 = vpop.f32.mrf.mxu0
    %v5286 = vpop.f32.mrf.mxu0
    %5287 = vmatmul.bf16.gmra.mxu0 %v5191
    %v5288 = vpop.f32.mrf.mxu0
    %v5289 = vpop.f32.mrf.mxu0
    %5290 = vmatmul.bf16.gmra.mxu0 %v5192
    %v5291 = vpop.f32.mrf.mxu0
    %v5292 = vpop.f32.mrf.mxu0
    %5293 = vmatmul.bf16.gmra.mxu0 %v5193
    %v5294 = vpop.f32.mrf.mxu0
    %v5295 = vpop.f32.mrf.mxu0
    %5296 = vmatmul.bf16.gmra.mxu0 %v5194
    %v5297 = vpop.f32.mrf.mxu0
    %v5298 = vpop.f32.mrf.mxu0
    %5299 = vmatmul.bf16.gmra.mxu0 %v5195
    %v5300 = vpop.f32.mrf.mxu0
    %v5301 = vpop.f32.mrf.mxu0
    %5302 = vmatmul.bf16.gmra.mxu0 %v5196
    %v5303 = vpop.f32.mrf.mxu0
    %v5304 = vpop.f32.mrf.mxu0
    %5305 = vmatmul.bf16.gmra.mxu0 %v5197
    %v5306 = vpop.f32.mrf.mxu0
    %v5307 = vpop.f32.mrf.mxu0
    %5308 = vmatmul.bf16.gmra.mxu0 %v5198
    %v5309 = vpop.f32.mrf.mxu0
    %v5310 = vpop.f32.mrf.mxu0
    %5311 = vmatmul.bf16.gmra.mxu0 %v5199
    %v5312 = vpop.f32.mrf.mxu0
    %v5313 = vpop.f32.mrf.mxu0
    %5314 = vmatmul.bf16.gmra.mxu0 %v5200
    %v5315 = vpop.f32.mrf.mxu0
    %v5316 = vpop.f32.mrf.mxu0
    %5317 = vmatmul.bf16.gmra.mxu0 %v5201
    %v5318 = vpop.f32.mrf.mxu0
    %v5319 = vpop.f32.mrf.mxu0
    %5320 = vmatmul.bf16.gmra.mxu0 %v5202
    %v5321 = vpop.f32.mrf.mxu0
    %v5322 = vadd.f32 0.0, %v5321
    %v5323 = vpop.f32.mrf.mxu0
    %v5324 = vadd.f32 0.0, %v5323
    %5325 = vdwg.mxu0
    %v5326 = vadd.f32 %v5070, %v5322
    %v5327 = vadd.f32 %v5072, %v5324
    %v5328 = vld [vmem:[%s1538] sm:$0xf]
    %v5329 = vld [vmem:[%s1538 + $0x4] sm:$0xf]
    %v5330 = vld [vmem:[%s1538 + $0x8] sm:$0xf]
    %v5331 = vld [vmem:[%s1538 + $0xc] sm:$0xf]
    %v5332 = vld [vmem:[%s1538 + $0x10] sm:$0xf]
    %v5333 = vld [vmem:[%s1538 + $0x14] sm:$0xf]
    %v5334 = vld [vmem:[%s1538 + $0x18] sm:$0xf]
    %v5335 = vld [vmem:[%s1538 + $0x1c] sm:$0xf]
    %v5336 = vld [vmem:[%s1538 + $0x20] sm:$0xf]
    %v5337 = vld [vmem:[%s1538 + $0x24] sm:$0xf]
    %v5338 = vld [vmem:[%s1538 + $0x28] sm:$0xf]
    %v5339 = vld [vmem:[%s1538 + $0x2c] sm:$0xf]
    %v5340 = vld [vmem:[%s1538 + $0x30] sm:$0xf]
    %v5341 = vld [vmem:[%s1538 + $0x34] sm:$0xf]
    %v5342 = vld [vmem:[%s1538 + $0x38] sm:$0xf]
    %v5343 = vld [vmem:[%s1538 + $0x3c] sm:$0xf]
    %v5344 = vld [vmem:[%s1538 + $0x40] sm:$0xf]
    %v5345 = vld [vmem:[%s1538 + $0x44] sm:$0xf]
    %v5346 = vld [vmem:[%s1538 + $0x48] sm:$0xf]
    %v5347 = vld [vmem:[%s1538 + $0x4c] sm:$0xf]
    %v5348 = vld [vmem:[%s1538 + $0x50] sm:$0xf]
    %v5349 = vld [vmem:[%s1538 + $0x54] sm:$0xf]
    %v5350 = vld [vmem:[%s1538 + $0x58] sm:$0xf]
    %v5351 = vld [vmem:[%s1538 + $0x5c] sm:$0xf]
    %v5352 = vld [vmem:[%s1538 + $0x60] sm:$0xf]
    %v5353 = vld [vmem:[%s1538 + $0x64] sm:$0xf]
    %v5354 = vld [vmem:[%s1538 + $0x68] sm:$0xf]
    %v5355 = vld [vmem:[%s1538 + $0x6c] sm:$0xf]
    %v5356 = vld [vmem:[%s1538 + $0x70] sm:$0xf]
    %v5357 = vld [vmem:[%s1538 + $0x74] sm:$0xf]
    %v5358 = vld [vmem:[%s1538 + $0x78] sm:$0xf]
    %v5359 = vld [vmem:[%s1538 + $0x7c] sm:$0xf]
    %s5360 = scalar_lea.vmem [#allocation13], 192
    %v5361 = vld [vmem:[%s5360] sm:$0xf]
    %v5362 = vld [vmem:[%s5360 + $0x4] sm:$0xf]
    %v5363 = vld [vmem:[%s5360 + $0x8] sm:$0xf]
    %v5364 = vld [vmem:[%s5360 + $0xc] sm:$0xf]
    %v5365 = vld [vmem:[%s5360 + $0x10] sm:$0xf]
    %v5366 = vld [vmem:[%s5360 + $0x14] sm:$0xf]
    %v5367 = vld [vmem:[%s5360 + $0x18] sm:$0xf]
    %v5368 = vld [vmem:[%s5360 + $0x1c] sm:$0xf]
    %v5369 = vld [vmem:[%s5360 + $0x20] sm:$0xf]
    %v5370 = vld [vmem:[%s5360 + $0x24] sm:$0xf]
    %v5371 = vld [vmem:[%s5360 + $0x28] sm:$0xf]
    %v5372 = vld [vmem:[%s5360 + $0x2c] sm:$0xf]
    %v5373 = vld [vmem:[%s5360 + $0x30] sm:$0xf]
    %v5374 = vld [vmem:[%s5360 + $0x34] sm:$0xf]
    %v5375 = vld [vmem:[%s5360 + $0x38] sm:$0xf]
    %v5376 = vld [vmem:[%s5360 + $0x3c] sm:$0xf]
    %v5409 = vunpack.c.l.b16 %v5328
    %v5410 = vunpack.c.l.b16 %v5329
    %v5411 = vunpack.c.l.b16 %v5330
    %v5412 = vunpack.c.l.b16 %v5331
    %v5413 = vunpack.c.l.b16 %v5332
    %v5414 = vunpack.c.l.b16 %v5333
    %v5415 = vunpack.c.l.b16 %v5334
    %v5416 = vunpack.c.l.b16 %v5335
    %v5417 = vunpack.c.l.b16 %v5336
    %v5418 = vunpack.c.l.b16 %v5337
    %v5419 = vunpack.c.l.b16 %v5338
    %v5420 = vunpack.c.l.b16 %v5339
    %v5421 = vunpack.c.l.b16 %v5340
    %v5422 = vunpack.c.l.b16 %v5341
    %v5423 = vunpack.c.l.b16 %v5342
    %v5424 = vunpack.c.l.b16 %v5343
    %v5425 = vunpack.c.l.b16 %v5344
    %v5426 = vunpack.c.l.b16 %v5345
    %v5427 = vunpack.c.l.b16 %v5346
    %v5428 = vunpack.c.l.b16 %v5347
    %v5429 = vunpack.c.l.b16 %v5348
    %v5430 = vunpack.c.l.b16 %v5349
    %v5431 = vunpack.c.l.b16 %v5350
    %v5432 = vunpack.c.l.b16 %v5351
    %v5433 = vunpack.c.l.b16 %v5352
    %v5434 = vunpack.c.l.b16 %v5353
    %v5435 = vunpack.c.l.b16 %v5354
    %v5436 = vunpack.c.l.b16 %v5355
    %v5437 = vunpack.c.l.b16 %v5356
    %v5438 = vunpack.c.l.b16 %v5357
    %v5439 = vunpack.c.l.b16 %v5358
    %v5440 = vunpack.c.l.b16 %v5359
    %v5441 = vpack.c.b16 %v5410, %v5409
    %v5442 = vpack.c.b16 %v5412, %v5411
    %v5443 = vpack.c.b16 %v5414, %v5413
    %v5444 = vpack.c.b16 %v5416, %v5415
    %v5445 = vpack.c.b16 %v5418, %v5417
    %v5446 = vpack.c.b16 %v5420, %v5419
    %v5447 = vpack.c.b16 %v5422, %v5421
    %v5448 = vpack.c.b16 %v5424, %v5423
    %v5449 = vpack.c.b16 %v5426, %v5425
    %v5450 = vpack.c.b16 %v5428, %v5427
    %v5451 = vpack.c.b16 %v5430, %v5429
    %v5452 = vpack.c.b16 %v5432, %v5431
    %v5453 = vpack.c.b16 %v5434, %v5433
    %v5454 = vpack.c.b16 %v5436, %v5435
    %v5455 = vpack.c.b16 %v5438, %v5437
    %v5456 = vpack.c.b16 %v5440, %v5439
    %v5489 = vunpack.c.l.b16 %v5361
    %v5490 = vunpack.c.l.b16 %v5362
    %v5491 = vunpack.c.l.b16 %v5363
    %v5492 = vunpack.c.l.b16 %v5364
    %v5493 = vunpack.c.l.b16 %v5365
    %v5494 = vunpack.c.l.b16 %v5366
    %v5495 = vunpack.c.l.b16 %v5367
    %v5496 = vunpack.c.l.b16 %v5368
    %v5497 = vunpack.c.l.b16 %v5369
    %v5498 = vunpack.c.l.b16 %v5370
    %v5499 = vunpack.c.l.b16 %v5371
    %v5500 = vunpack.c.l.b16 %v5372
    %v5501 = vunpack.c.l.b16 %v5373
    %v5502 = vunpack.c.l.b16 %v5374
    %v5503 = vunpack.c.l.b16 %v5375
    %v5504 = vunpack.c.l.b16 %v5376
    %v5505 = vpack.c.b16 %v5490, %v5489
    %v5506 = vpack.c.b16 %v5492, %v5491
    %v5507 = vpack.c.b16 %v5494, %v5493
    %v5508 = vpack.c.b16 %v5496, %v5495
    %v5509 = vpack.c.b16 %v5498, %v5497
    %v5510 = vpack.c.b16 %v5500, %v5499
    %v5511 = vpack.c.b16 %v5502, %v5501
    %v5512 = vpack.c.b16 %v5504, %v5503
    %5521 = vmatpush.bf16.msra.mxu0 %v5512
    %5522 = vmatpush.bf16.msra.mxu0 %v5511
    %5523 = vmatpush.bf16.msra.mxu0 %v5510
    %5524 = vmatpush.bf16.msra.mxu0 %v5509
    %5525 = vmatpush.bf16.msra.mxu0 %v5508
    %5526 = vmatpush.bf16.msra.mxu0 %v5507
    %5527 = vmatpush.bf16.msra.mxu0 %v5506
    %5528 = vmatpush.bf16.msra.mxu0 %v5505
    %5529 = vmatmul.bf16.gmra.mxu0 %v5441
    %v5530 = vpop.f32.mrf.mxu0
    %v5531 = vpop.f32.mrf.mxu0
    %5532 = vmatmul.bf16.gmra.mxu0 %v5442
    %v5533 = vpop.f32.mrf.mxu0
    %v5534 = vpop.f32.mrf.mxu0
    %5535 = vmatmul.bf16.gmra.mxu0 %v5443
    %v5536 = vpop.f32.mrf.mxu0
    %v5537 = vpop.f32.mrf.mxu0
    %5538 = vmatmul.bf16.gmra.mxu0 %v5444
    %v5539 = vpop.f32.mrf.mxu0
    %v5540 = vpop.f32.mrf.mxu0
    %5541 = vmatmul.bf16.gmra.mxu0 %v5445
    %v5542 = vpop.f32.mrf.mxu0
    %v5543 = vpop.f32.mrf.mxu0
    %5544 = vmatmul.bf16.gmra.mxu0 %v5446
    %v5545 = vpop.f32.mrf.mxu0
    %v5546 = vpop.f32.mrf.mxu0
    %5547 = vmatmul.bf16.gmra.mxu0 %v5447
    %v5548 = vpop.f32.mrf.mxu0
    %v5549 = vpop.f32.mrf.mxu0
    %5550 = vmatmul.bf16.gmra.mxu0 %v5448
    %v5551 = vpop.f32.mrf.mxu0
    %v5552 = vpop.f32.mrf.mxu0
    %5553 = vmatmul.bf16.gmra.mxu0 %v5449
    %v5554 = vpop.f32.mrf.mxu0
    %v5555 = vpop.f32.mrf.mxu0
    %5556 = vmatmul.bf16.gmra.mxu0 %v5450
    %v5557 = vpop.f32.mrf.mxu0
    %v5558 = vpop.f32.mrf.mxu0
    %5559 = vmatmul.bf16.gmra.mxu0 %v5451
    %v5560 = vpop.f32.mrf.mxu0
    %v5561 = vpop.f32.mrf.mxu0
    %5562 = vmatmul.bf16.gmra.mxu0 %v5452
    %v5563 = vpop.f32.mrf.mxu0
    %v5564 = vpop.f32.mrf.mxu0
    %5565 = vmatmul.bf16.gmra.mxu0 %v5453
    %v5566 = vpop.f32.mrf.mxu0
    %v5567 = vpop.f32.mrf.mxu0
    %5568 = vmatmul.bf16.gmra.mxu0 %v5454
    %v5569 = vpop.f32.mrf.mxu0
    %v5570 = vpop.f32.mrf.mxu0
    %5571 = vmatmul.bf16.gmra.mxu0 %v5455
    %v5572 = vpop.f32.mrf.mxu0
    %v5573 = vpop.f32.mrf.mxu0
    %5574 = vmatmul.bf16.gmra.mxu0 %v5456
    %v5575 = vpop.f32.mrf.mxu0
    %v5576 = vadd.f32 0.0, %v5575
    %v5577 = vpop.f32.mrf.mxu0
    %v5578 = vadd.f32 0.0, %v5577
    %5579 = vdwg.mxu0
    %v5580 = vadd.f32 %v5326, %v5576
    %v5581 = vadd.f32 %v5327, %v5578
    %v5582 = vld [vmem:[%s10] sm:$0x1]
    %v5584 = vperm.slane %v5582, 0
    %v5586 = vadd.f32 %v5580, %v5584
    %v5587 = vadd.f32 %v5581, %v5584
    %v5588 = vmax.f32 %v5586, 0.0
    %v5589 = vmax.f32 %v5587, 0.0
    %v5590 = vld [vmem:[%s211 + $0x78] sm:$0xf]
    %v5591 = vld [vmem:[%s211 + $0x7c] sm:$0xf]
    %v5592 = vunpack.c.l.bf16 %v5590
    %v5593 = vunpack.c.l.bf16 %v5591
    %v5594 = vadd.f32 %v5588, %v5592
    %v5595 = vadd.f32 %v5589, %v5593
    %v5596 = vmax.f32 %v5594, 0.0
    %v5597 = vmax.f32 %v5595, 0.0
    %v5598 = vpack.c.bf16 %v5597, %v5596
    %v5599 = vld [vmem:[#allocation15] sm:$0xf]
    %v5600 = vld [vmem:[#allocation15 + $0x4] sm:$0xf]
    %v5601 = vld [vmem:[#allocation15 + $0x8] sm:$0xf]
    %v5602 = vld [vmem:[#allocation15 + $0xc] sm:$0xf]
    %v5603 = vld [vmem:[#allocation15 + $0x10] sm:$0xf]
    %v5604 = vld [vmem:[#allocation15 + $0x14] sm:$0xf]
    %v5605 = vld [vmem:[#allocation15 + $0x18] sm:$0xf]
    %v5606 = vld [vmem:[#allocation15 + $0x1c] sm:$0xf]
    %v5607 = vld [vmem:[#allocation15 + $0x20] sm:$0xf]
    %v5608 = vld [vmem:[#allocation15 + $0x24] sm:$0xf]
    %v5609 = vld [vmem:[#allocation15 + $0x28] sm:$0xf]
    %v5610 = vld [vmem:[#allocation15 + $0x2c] sm:$0xf]
    %v5611 = vld [vmem:[#allocation15 + $0x30] sm:$0xf]
    %v5612 = vld [vmem:[#allocation15 + $0x34] sm:$0xf]
    %v5613 = vld [vmem:[#allocation15 + $0x38] sm:$0xf]
    %v5614 = vld [vmem:[#allocation15 + $0x3c] sm:$0xf]
    %v5615 = vld [vmem:[%s12] sm:$0x1]
    %v5617 = vperm.slane %v5615, 0
    %v5635 = vunpack.c.l.b16 %v5599
    %v5636 = vunpack.c.l.b16 %v5600
    %v5637 = vunpack.c.l.b16 %v5601
    %v5638 = vunpack.c.l.b16 %v5602
    %v5639 = vunpack.c.l.b16 %v5603
    %v5640 = vunpack.c.l.b16 %v5604
    %v5641 = vunpack.c.l.b16 %v5605
    %v5642 = vunpack.c.l.b16 %v5606
    %v5643 = vunpack.c.l.b16 %v5607
    %v5644 = vunpack.c.l.b16 %v5608
    %v5645 = vunpack.c.l.b16 %v5609
    %v5646 = vunpack.c.l.b16 %v5610
    %v5647 = vunpack.c.l.b16 %v5611
    %v5648 = vunpack.c.l.b16 %v5612
    %v5649 = vunpack.c.l.b16 %v5613
    %v5650 = vunpack.c.l.b16 %v5614
    %v5651 = vpack.c.b16 %v5636, %v5635
    %v5652 = vpack.c.b16 %v5638, %v5637
    %v5653 = vpack.c.b16 %v5640, %v5639
    %v5654 = vpack.c.b16 %v5642, %v5641
    %v5655 = vpack.c.b16 %v5644, %v5643
    %v5656 = vpack.c.b16 %v5646, %v5645
    %v5657 = vpack.c.b16 %v5648, %v5647
    %v5658 = vpack.c.b16 %v5650, %v5649
    %5667 = vmatpush.bf16.msra.mxu0 %v5658
    %5668 = vmatpush.bf16.msra.mxu0 %v5657
    %5669 = vmatpush.bf16.msra.mxu0 %v5656
    %5670 = vmatpush.bf16.msra.mxu0 %v5655
    %5671 = vmatpush.bf16.msra.mxu0 %v5654
    %5672 = vmatpush.bf16.msra.mxu0 %v5653
    %5673 = vmatpush.bf16.msra.mxu0 %v5652
    %5674 = vmatpush.bf16.msra.mxu0 %v5651
    %5675 = vmatmul.bf16.gmra.mxu0 %v5598
    %v5676 = vpop.f32.mrf.mxu0
    %v5677 = vadd.f32 %v5617, %v5676
    %v5678 = vpop.f32.mrf.mxu0
    %v5679 = vadd.f32 %v5617, %v5678
    %5680 = vdwg.mxu0
    %v5681 = vxor.u32 %v5677, 2147483648
    %v5682 = vxor.u32 %v5679, 2147483648
    %v5683 = vmul.f32 %v5681, 1.442695
    %v5684 = vpow.pop %v5683
    %v5685 = vmul.f32 %v5682, 1.442695
    %v5686 = vpow.pop %v5685
    %v5687 = vadd.f32 %v5684, 1.0
    %v5688 = vadd.f32 %v5686, 1.0
    %v5689 = vrcp.pop %v5687
    %v5690 = vmul.f32 %v5687, %v5689
    %v5691 = vsub.f32 1.0, %v5690
    %v5692 = vmul.f32 %v5689, %v5691
    %v5693 = vadd.f32 %v5689, %v5692
    %vm5694 = vweird.f32 %v5687
    %vm5695 = vweird.f32 %v5689
    %vm5696 = vmor %vm5694, %vm5695
    %v5697 = vsel %vm5696, %v5689, %v5693
    %v5698 = vand.u32 2147483647, %v5687
    %vm5699 = vcmp.eq.f32.partialorder %v5698, 8.507059e+37
    %v5700 = vand.u32 %v5687, 2147483648
    %v5701 = vor.u32 1.1754944e-38, %v5700
    %v5702 = vsel %vm5699, %v5701, %v5697
    %v5703 = vmul.f32 1.0, %v5702
    %v5704 = vrcp.pop %v5688
    %v5705 = vmul.f32 %v5688, %v5704
    %v5706 = vsub.f32 1.0, %v5705
    %v5707 = vmul.f32 %v5704, %v5706
    %v5708 = vadd.f32 %v5704, %v5707
    %vm5709 = vweird.f32 %v5688
    %vm5710 = vweird.f32 %v5704
    %vm5711 = vmor %vm5709, %vm5710
    %v5712 = vsel %vm5711, %v5704, %v5708
    %v5713 = vand.u32 2147483647, %v5688
    %vm5714 = vcmp.eq.f32.partialorder %v5713, 8.507059e+37
    %v5715 = vand.u32 %v5688, 2147483648
    %v5716 = vor.u32 1.1754944e-38, %v5715
    %v5717 = vsel %vm5714, %v5716, %v5712
    %v5718 = vmul.f32 1.0, %v5717
    %5719 = vst [vmem:[#allocation16] sm:$0xff] %v5703
    %5720 = vst [vmem:[#allocation16 + $0x8] sm:$0xff] %v5718
    // Predicated region
    $region82: #{tpu_custom_call.1} parent=1 // pred_check
      _
    $region83: #{tpu_custom_call.1} parent=1 // pred_check_branch
      %5722 = sbr.rel (0) target = $region85
    $region84: #{tpu_custom_call.1} parent=1 // pred_region
      %5724 = vsyncadd [#allocation6], 0
      %s5725 = sshll.u32 [#allocation16], 4
      %s5726 = int_to_ptr.vmem [resolvable:$true] %s5725
      %s5727 = sshll.u32 %s13, 4
      %s5728 = int_to_ptr.hbm [resolvable:$true] %s5727
      %5733 = dma.vmem_to_hbm [thread:$0]  %s5726, 256, %s5728, [#allocation6], 128, 128, 8
    $region85: #{tpu_custom_call.1} parent=1 // pred_fallthru
      _
    // Predicated region
    $region86: #{tpu_custom_call.1} parent=1 // pred_check
      _
    $region87: #{tpu_custom_call.1} parent=1 // pred_check_branch
      %5735 = sbr.rel (0) target = $region89
    $region88: #{tpu_custom_call.1} parent=1 // pred_region
      %5737 = dma.done [#allocation6], 256
    $region89: #{tpu_custom_call.1} parent=1 // pred_fallthru
      _
    %5738 = vsyncpa [#allocation5], 1
    %5739 = vsyncpa [#allocation8], 1
    %5740 = vsyncpa [#allocation11], 1
    %5741 = vsyncpa [#allocation14], 1
    %5742 = vsyncpa [#allocation6], 1

</llo_original>
